<compile_context>
chip_gen: v7x
topology: tpu7x:2x2x1
jax: 0.10.0
libtpu: 0.0.40
codegen_flags: <defaults>
</compile_context>

<pallas_src>
import functools

import jax
import jax.numpy as jnp
from jax.experimental import pallas as pl
from jax.experimental.pallas import tpu as pltpu


# ----------------------------- tiling helpers -----------------------------

def _pick_tile(n, candidates):
    """Largest candidate tile that divides n, else n itself (whole-dim block)."""
    for c in candidates:
        if n >= c and n % c == 0:
            return c
    return n


# --------------------------- GEMM (+ BN0 stats) ----------------------------

def _matmul_bias_stats_kernel(x_ref, w_ref, b_ref, o_ref, s_ref, q_ref):
    y = jnp.dot(x_ref[...], w_ref[...],
                preferred_element_type=jnp.float32) + b_ref[...]
    s_ref[...] = jnp.sum(y, axis=0, keepdims=True)
    q_ref[...] = jnp.sum(y * y, axis=0, keepdims=True)
    o_ref[...] = y.astype(o_ref.dtype)


def matmul_bias_stats(x, w, b):
    """y = x @ w + b (bf16 out) with fused per-column sum / sum-of-squares
    partials (f32, one row per M-tile).  x:[M,K] bf16, w:[K,N] bf16, b:[N] f32."""
    M, K = x.shape
    N = w.shape[1]
    tm = _pick_tile(M, (256, 128))
    tn = _pick_tile(N, (512, 256, 128))
    mt = M // tm
    return pl.pallas_call(
        _matmul_bias_stats_kernel,
        out_shape=(jax.ShapeDtypeStruct((M, N), jnp.bfloat16),
                   jax.ShapeDtypeStruct((mt, N), jnp.float32),
                   jax.ShapeDtypeStruct((mt, N), jnp.float32)),
        grid=(mt, N // tn),
        in_specs=[
            pl.BlockSpec((tm, K), lambda i, j: (i, 0)),
            pl.BlockSpec((K, tn), lambda i, j: (0, j)),
            pl.BlockSpec((1, tn), lambda i, j: (0, j)),
        ],
        out_specs=(pl.BlockSpec((tm, tn), lambda i, j: (i, j)),
                   pl.BlockSpec((1, tn), lambda i, j: (i, j)),
                   pl.BlockSpec((1, tn), lambda i, j: (i, j))),
        compiler_params=pltpu.CompilerParams(
            dimension_semantics=("parallel", "parallel")),
    )(x, w, b.reshape(1, N))


# ------------------ fused 3x3 conv (+ input BN, + out stats) ---------------

def _conv3x3_kernel(x_ref, w_ref, b_ref, sc_ref, sh_ref, o_ref, s_ref, q_ref,
                    *, H, W, input_relu):
    """One batch element per grid step.
    x_ref : [1, H+2, W+2, Cin]  RAW (pre-BN) zero-padded NHWC input (bf16)
    w_ref : [9*Cin, Cout]       bf16 weights, rows ordered (tap, cin)
    b_ref : [1, Cout]           bias (f32)
    sc/sh : [1, Cin]            fused BatchNorm affine of the input (f32)
    o_ref : [1, H*W, Cout]      conv output (bf16)
    s/q   : [1, 1, Cout]        per-batch sum / sum-of-squares of the output (f32)
    """
    Cin = x_ref.shape[-1]
    Cout = o_ref.shape[-1]
    x = x_ref[0].astype(jnp.float32)                       # [H+2, W+2, Cin]

    # BN affine of the input; only the shift needs interior gating (scale keeps
    # the zero padding exact on its own).
    row = jax.lax.broadcasted_iota(jnp.int32, (H + 2, W + 2, 1), 0)
    col = jax.lax.broadcasted_iota(jnp.int32, (H + 2, W + 2, 1), 1)
    interior = ((row >= 1) & (row <= H) & (col >= 1) & (col <= W)).astype(jnp.float32)
    x = x * sc_ref[...].reshape(1, 1, Cin) + sh_ref[...].reshape(1, 1, Cin) * interior
    if input_relu:
        x = jnp.maximum(x, 0.0)
    x = x.astype(jnp.bfloat16)

    # im2col in VMEM: 9 shifted slabs concatenated on the lane axis -> one MXU dot.
    slabs = [x[ky:ky + H, kx:kx + W, :].reshape(H * W, Cin)
             for ky in range(3) for kx in range(3)]
    patches = jnp.concatenate(slabs, axis=-1)              # [H*W, 9*Cin]
    y = jnp.dot(patches, w_ref[...], preferred_element_type=jnp.float32) + b_ref[...]

    s_ref[...] = jnp.sum(y, axis=0, keepdims=True).reshape(1, 1, Cout)
    q_ref[...] = jnp.sum(y * y, axis=0, keepdims=True).reshape(1, 1, Cout)
    o_ref[...] = y.reshape(1, H * W, Cout).astype(o_ref.dtype)


def conv3x3_fused(x_padded, w9, bias, scale, shift, *, input_relu):
    """x_padded: [B, H+2, W+2, Cin] raw pre-BN input, already zero-padded 1px.
    Returns (y [B,H*W,Cout] bf16, sums [B,1,Cout] f32, sumsq [B,1,Cout] f32)."""
    B, Hp, Wp, Cin = x_padded.shape
    H, W = Hp - 2, Wp - 2
    Cout = w9.shape[-1]
    kernel = functools.partial(_conv3x3_kernel, H=H, W=W, input_relu=input_relu)
    return pl.pallas_call(
        kernel,
        out_shape=(jax.ShapeDtypeStruct((B, H * W, Cout), jnp.bfloat16),
                   jax.ShapeDtypeStruct((B, 1, Cout), jnp.float32),
                   jax.ShapeDtypeStruct((B, 1, Cout), jnp.float32)),
        grid=(B,),
        in_specs=[
            pl.BlockSpec((1, Hp, Wp, Cin), lambda bb: (bb, 0, 0, 0)),
            pl.BlockSpec((9 * Cin, Cout), lambda bb: (0, 0)),
            pl.BlockSpec((1, Cout), lambda bb: (0, 0)),
            pl.BlockSpec((1, Cin), lambda bb: (0, 0)),
            pl.BlockSpec((1, Cin), lambda bb: (0, 0)),
        ],
        out_specs=(pl.BlockSpec((1, H * W, Cout), lambda bb: (bb, 0, 0)),
                   pl.BlockSpec((1, 1, Cout), lambda bb: (bb, 0, 0)),
                   pl.BlockSpec((1, 1, Cout), lambda bb: (bb, 0, 0))),
        compiler_params=pltpu.CompilerParams(
            dimension_semantics=("parallel",)),
    )(x_padded, w9, bias.reshape(1, Cout),
      scale.reshape(1, Cin), shift.reshape(1, Cin))


# -------------- final 3x3 conv to a single channel + Tanh ------------------

def _conv3x3_c1_kernel(x_ref, w_ref, b_ref, sc_ref, sh_ref, o_ref, *, H, W):
    """Single-output-channel conv: VPU multiply + lane reduce per tap, stores the
    image directly as [1, H, W, 1] (no 128-wide padded writeback)."""
    Cin = x_ref.shape[-1]
    x = x_ref[0].astype(jnp.float32)                       # [H+2, W+2, Cin]
    row = jax.lax.broadcasted_iota(jnp.int32, (H + 2, W + 2, 1), 0)
    col = jax.lax.broadcasted_iota(jnp.int32, (H + 2, W + 2, 1), 1)
    interior = ((row >= 1) & (row <= H) & (col >= 1) & (col <= W)).astype(jnp.float32)
    x = x * sc_ref[...].reshape(1, 1, Cin) + sh_ref[...].reshape(1, 1, Cin) * interior
    x = jnp.maximum(x, 0.0)                                # BN2 + ReLU fused

    w = w_ref[...]                                         # [9, Cin]
    acc = jnp.zeros((H, W, 1), jnp.float32)
    for k in range(9):
        ky, kx = k // 3, k % 3
        slab = x[ky:ky + H, kx:kx + W, :]
        acc += jnp.sum(slab * w[k].reshape(1, 1, Cin), axis=-1, keepdims=True)
    y = jnp.tanh(acc + b_ref[...])
    o_ref[...] = y.reshape(1, H, W, 1).astype(o_ref.dtype)


def conv3x3_single_out(x_padded, w9c, bias, scale, shift):
    B, Hp, Wp, Cin = x_padded.shape
    H, W = Hp - 2, Wp - 2
    kernel = functools.partial(_conv3x3_c1_kernel, H=H, W=W)
    return pl.pallas_call(
        kernel,
        out_shape=jax.ShapeDtypeStruct((B, H, W, 1), jnp.float32),
        grid=(B,),
        in_specs=[
            pl.BlockSpec((1, Hp, Wp, Cin), lambda bb: (bb, 0, 0, 0)),
            pl.BlockSpec((9, Cin), lambda bb: (0, 0)),
            pl.BlockSpec((1, 1), lambda bb: (0, 0)),
            pl.BlockSpec((1, Cin), lambda bb: (0, 0)),
            pl.BlockSpec((1, Cin), lambda bb: (0, 0)),
        ],
        out_specs=pl.BlockSpec((1, H, W, 1), lambda bb: (bb, 0, 0, 0)),
        compiler_params=pltpu.CompilerParams(dimension_semantics=("parallel",)),
    )(x_padded, w9c, bias.reshape(1, 1),
      scale.reshape(1, Cin), shift.reshape(1, Cin))


# ------------------------------- JAX glue ----------------------------------

def _bn_affine(total_sum, total_sq, count, gamma, beta, eps=1e-5):
    """Training-mode BatchNorm (biased variance) -> per-channel (scale, shift)."""
    mean = total_sum / count
    var = jnp.maximum(total_sq / count - mean * mean, 0.0)
    scale = gamma * jax.lax.rsqrt(var + eps)
    shift = beta - mean * scale
    return scale, shift


def upsample2x_pad(x_nhwc):
    # nn.Upsample(scale_factor=2, nearest) + 1px zero pad on the RAW tensor;
    # the per-channel BN affine (+ReLU) commutes with nearest upsample and is
    # applied inside the consumer conv kernel (shift interior-gated).
    x = jnp.repeat(jnp.repeat(x_nhwc, 2, axis=1), 2, axis=2)
    return jnp.pad(x, ((0, 0), (1, 1), (1, 1), (0, 0)))


def init_params(key, latent_dim, n_classes, img_size):
    s = img_size // 4
    ks = jax.random.split(key, 9)

    def nrm(k, shape, sc=0.05):
        return sc * jax.random.normal(k, shape, jnp.float32)

    return dict(
        emb=nrm(ks[0], (n_classes, n_classes), 1.0),
        l1_w=nrm(ks[1], (latent_dim + n_classes, 128 * s * s)),
        l1_b=nrm(ks[2], (128 * s * s,)),
        bn0_g=jnp.ones((128,), jnp.float32), bn0_b=jnp.zeros((128,), jnp.float32),
        conv1_w=nrm(ks[3], (3, 3, 128, 128)), conv1_b=nrm(ks[4], (128,)),
        bn1_g=jnp.ones((128,), jnp.float32), bn1_b=jnp.zeros((128,), jnp.float32),
        conv2_w=nrm(ks[5], (3, 3, 128, 64)), conv2_b=nrm(ks[6], (64,)),
        bn2_g=jnp.ones((64,), jnp.float32), bn2_b=jnp.zeros((64,), jnp.float32),
        conv3_w=nrm(ks[7], (3, 3, 64, 1)), conv3_b=nrm(ks[8], (1,)),
    )


def prepare_params(params, *, img_size):
    """One-time parameter re-layout (runs once, outside the jitted forward):
      * l1 weight/bias columns permuted + 4x duplicated so the GEMM directly emits
        the conv1 input: NHWC, nearest-upsampled 2x, zero-padded 1px.
      * conv1/conv2 weights reshaped to (9*Cin, Cout) matching the in-kernel
        im2col order; conv2 Cout padded 64->128 (lane-dense stores).
      * conv3 weights Cin-padded to 128 and flattened to (9, 128)."""
    s = img_size // 4
    hp = 2 * s + 2
    oy = jnp.arange(hp)[:, None, None]
    ox = jnp.arange(hp)[None, :, None]
    cc = jnp.arange(128)[None, None, :]
    interior = (oy >= 1) & (oy <= 2 * s) & (ox >= 1) & (ox <= 2 * s)
    sy = jnp.clip((oy - 1) // 2, 0, s - 1)
    sx = jnp.clip((ox - 1) // 2, 0, s - 1)
    # PyTorch view order of the l1 output is (c, y, x), c major.
    old_col = jnp.broadcast_to(cc * (s * s) + sy * s + sx, (hp, hp, 128)).reshape(-1)
    mask = jnp.broadcast_to(interior, (hp, hp, 128)).reshape(-1).astype(jnp.float32)
    l1_w_up = jnp.take(params["l1_w"], old_col, axis=1) * mask[None, :]
    l1_b_up = jnp.take(params["l1_b"], old_col, axis=0) * mask

    w2p = jnp.pad(params["conv2_w"], ((0, 0), (0, 0), (0, 0), (0, 64)))
    b2p = jnp.pad(params["conv2_b"], (0, 64))
    w3p = jnp.pad(params["conv3_w"], ((0, 0), (0, 0), (0, 64), (0, 0)))

    return dict(
        emb=params["emb"],
        l1_w_up=l1_w_up.astype(jnp.bfloat16),
        l1_b_up=l1_b_up,
        bn0_g=params["bn0_g"], bn0_b=params["bn0_b"],
        conv1_w9=params["conv1_w"].reshape(9 * 128, 128).astype(jnp.bfloat16),
        conv1_b=params["conv1_b"],
        bn1_g=params["bn1_g"], bn1_b=params["bn1_b"],
        conv2_w9=w2p.reshape(9 * 128, 128).astype(jnp.bfloat16),
        conv2_bp=b2p,
        bn2_g=params["bn2_g"], bn2_b=params["bn2_b"],
        conv3_w9=w3p.reshape(9, 128, 1)[..., 0],
        conv3_b=params["conv3_b"],
    )


def generator_forward(params, noise, labels, *, img_size):
    s = img_size // 4
    B = noise.shape[0]
    hp = 2 * s + 2
    eps = 1e-5

    # label embedding lookup + concat (tiny XLA glue)
    label_input = jnp.take(params["emb"], labels, axis=0)
    gen_input = jnp.concatenate([noise, label_input], axis=-1).astype(jnp.bfloat16)

    # l1: GEMM whose permuted weights emit the upsampled+padded NHWC conv1 input
    # directly; fused column sums give BN0 batch statistics.
    y0, cs0, cq0 = matmul_bias_stats(gen_input, params["l1_w_up"], params["l1_b_up"])
    x1 = y0.reshape(B, hp, hp, 128)

    # BN0 stats: the 4x nearest duplication leaves mean/var unchanged; exclude pads.
    csum = jnp.sum(cs0, axis=0).reshape(hp, hp, 128)[1:-1, 1:-1].sum((0, 1))
    csq = jnp.sum(cq0, axis=0).reshape(hp, hp, 128)[1:-1, 1:-1].sum((0, 1))
    n01 = B * (2 * s) * (2 * s)
    sc0, sh0 = _bn_affine(csum, csq, n01, params["bn0_g"], params["bn0_b"], eps)

    # Conv1 (128->128) with BN0 affine fused on the input; fused BN1 partial stats.
    y1, s1, q1 = conv3x3_fused(x1, params["conv1_w9"], params["conv1_b"],
                               sc0, sh0, input_relu=False)       # [B,(2s)^2,128]
    sc1, sh1 = _bn_affine(jnp.sum(s1, axis=0)[0], jnp.sum(q1, axis=0)[0], n01,
                          params["bn1_g"], params["bn1_b"], eps)

    # Upsample x2 + pad (XLA, bf16) -> Conv2 (128->128-padded) w/ fused BN1+ReLU.
    x2 = upsample2x_pad(y1.reshape(B, 2 * s, 2 * s, 128))
    y2, s2, q2 = conv3x3_fused(x2, params["conv2_w9"], params["conv2_bp"],
                               sc1, sh1, input_relu=True)        # [B,(4s)^2,128]
    n2 = B * (4 * s) * (4 * s)
    sc2, sh2 = _bn_affine(jnp.sum(s2, axis=0)[0, :64], jnp.sum(q2, axis=0)[0, :64],
                          n2, params["bn2_g"], params["bn2_b"], eps)
    sc2 = jnp.pad(sc2, (0, 64))   # padded channels stay exactly zero
    sh2 = jnp.pad(sh2, (0, 64))

    # Conv3 (64->1) + Tanh with BN2 affine + ReLU fused on the input.
    x3 = jnp.pad(y2.reshape(B, 4 * s, 4 * s, 128), ((0, 0), (1, 1), (1, 1), (0, 0)))
    y3 = conv3x3_single_out(x3, params["conv3_w9"], params["conv3_b"], sc2, sh2)

    return jnp.transpose(y3, (0, 3, 1, 2))                       # NCHW [B,1,img,img]


if __name__ == "__main__":
    latent_dim, n_classes, img_size, B = 32, 10, 16, 2
    key = jax.random.PRNGKey(0)
    kp, kn, kl = jax.random.split(key, 3)

    params = prepare_params(init_params(kp, latent_dim, n_classes, img_size),
                            img_size=img_size)
    noise = jax.random.normal(kn, (B, latent_dim), jnp.float32)
    labels = jax.random.randint(kl, (B,), 0, n_classes)

    fwd = jax.jit(functools.partial(generator_forward, img_size=img_size))
    img = fwd(params, noise, labels)
    jax.block_until_ready(img)

    assert img.shape == (B, 1, img_size, img_size), img.shape
    assert bool(jnp.all(jnp.isfinite(img)))
    print("KERNEL_OK")
</pallas_src>

<mosaic_0001>
module attributes {stable_mosaic.version = 11 : i64} {
  func.func @_matmul_bias_stats_kernel(%arg0: i32, %arg1: i32, %arg2: memref<2x42xbf16, #tpu.memory_space<vmem>>, %arg3: memref<42x512xbf16, #tpu.memory_space<vmem>>, %arg4: memref<1x512xf32, #tpu.memory_space<vmem>>, %arg5: memref<2x512xbf16, #tpu.memory_space<vmem>>, %arg6: memref<1x512xf32, #tpu.memory_space<vmem>>, %arg7: memref<1x512xf32, #tpu.memory_space<vmem>>) attributes {dimension_semantics = [#tpu.dimension_semantics<parallel>, #tpu.dimension_semantics<parallel>], iteration_bounds = array<i64: 1, 25>, scalar_prefetch = 0 : i64, scratch_operands = 0 : i64, tpu.core_type = #tpu.core_type<tc>, window_params = [{transform_indices = @transform_0, window_bounds = array<i64: 2, 42>}, {transform_indices = @transform_1, window_bounds = array<i64: 42, 512>}, {transform_indices = @transform_2, window_bounds = array<i64: 1, 512>}, {transform_indices = @transform_3, window_bounds = array<i64: 2, 512>}, {transform_indices = @transform_4, window_bounds = array<i64: 1, 512>}, {transform_indices = @transform_5, window_bounds = array<i64: 1, 512>}]} {
    %c0 = arith.constant 0 : index
    %c0_0 = arith.constant 0 : index
    %0 = vector.load %arg2[%c0, %c0_0] : memref<2x42xbf16, #tpu.memory_space<vmem>>, vector<2x42xbf16>
    %c0_1 = arith.constant 0 : index
    %c0_2 = arith.constant 0 : index
    %1 = vector.load %arg3[%c0_1, %c0_2] : memref<42x512xbf16, #tpu.memory_space<vmem>>, vector<42x512xbf16>
    %cst = arith.constant dense<0.000000e+00> : vector<2x512xf32>
    %2 = tpu.matmul %0, %1, %cst {dimension_numbers = #tpu.dot_dimension_numbers<[1], [0], [0], [1], [0, 0, 1, 1], [], []>} : vector<2x42xbf16>, vector<42x512xbf16>, vector<2x512xf32> -> vector<2x512xf32>
    %c0_3 = arith.constant 0 : index
    %c0_4 = arith.constant 0 : index
    %3 = vector.load %arg4[%c0_3, %c0_4] : memref<1x512xf32, #tpu.memory_space<vmem>>, vector<1x512xf32>
    %4 = vector.broadcast %3 : vector<1x512xf32> to vector<2x512xf32>
    %5 = arith.addf %2, %4 : vector<2x512xf32>
    %cst_5 = arith.constant dense<0.000000e+00> : vector<512xf32>
    %6 = vector.multi_reduction <add>, %5, %cst_5 [0] : vector<2x512xf32> to vector<512xf32>
    %7 = vector.shape_cast %6 : vector<512xf32> to vector<1x512xf32>
    %c0_6 = arith.constant 0 : index
    %c0_7 = arith.constant 0 : index
    %8 = vector.load %arg6[%c0_6, %c0_7] : memref<1x512xf32, #tpu.memory_space<vmem>>, vector<1x512xf32>
    tpu.vector_store %arg6[%c0_6, %c0_7], %7 {strides = array<i32>} : memref<1x512xf32, #tpu.memory_space<vmem>>, vector<1x512xf32>,
    %9 = arith.mulf %5, %5 : vector<2x512xf32>
    %cst_8 = arith.constant dense<0.000000e+00> : vector<512xf32>
    %10 = vector.multi_reduction <add>, %9, %cst_8 [0] : vector<2x512xf32> to vector<512xf32>
    %11 = vector.shape_cast %10 : vector<512xf32> to vector<1x512xf32>
    %c0_9 = arith.constant 0 : index
    %c0_10 = arith.constant 0 : index
    %12 = vector.load %arg7[%c0_9, %c0_10] : memref<1x512xf32, #tpu.memory_space<vmem>>, vector<1x512xf32>
    tpu.vector_store %arg7[%c0_9, %c0_10], %11 {strides = array<i32>} : memref<1x512xf32, #tpu.memory_space<vmem>>, vector<1x512xf32>,
    %13 = arith.truncf %5 : vector<2x512xf32> to vector<2x512xbf16>
    %c0_11 = arith.constant 0 : index
    %c0_12 = arith.constant 0 : index
    %14 = vector.load %arg5[%c0_11, %c0_12] : memref<2x512xbf16, #tpu.memory_space<vmem>>, vector<2x512xbf16>
    tpu.vector_store %arg5[%c0_11, %c0_12], %13 {strides = array<i32>} : memref<2x512xbf16, #tpu.memory_space<vmem>>, vector<2x512xbf16>,
    return
  }
  func.func @transform_0(%arg0: i32, %arg1: i32) -> (i32, i32) {
    %c0_i32 = arith.constant 0 : i32
    %c0_i32_0 = arith.constant 0 : i32
    return %arg0, %c0_i32 : i32, i32
  }
  func.func @transform_1(%arg0: i32, %arg1: i32) -> (i32, i32) {
    %c0_i32 = arith.constant 0 : i32
    %c0_i32_0 = arith.constant 0 : i32
    return %c0_i32, %arg1 : i32, i32
  }
  func.func @transform_2(%arg0: i32, %arg1: i32) -> (i32, i32) {
    %c0_i32 = arith.constant 0 : i32
    %c0_i32_0 = arith.constant 0 : i32
    return %c0_i32, %arg1 : i32, i32
  }
  func.func @transform_3(%arg0: i32, %arg1: i32) -> (i32, i32) {
    %c0_i32 = arith.constant 0 : i32
    return %arg0, %arg1 : i32, i32
  }
  func.func @transform_4(%arg0: i32, %arg1: i32) -> (i32, i32) {
    %c0_i32 = arith.constant 0 : i32
    return %arg0, %arg1 : i32, i32
  }
  func.func @transform_5(%arg0: i32, %arg1: i32) -> (i32, i32) {
    %c0_i32 = arith.constant 0 : i32
    return %arg0, %arg1 : i32, i32
  }
}

module attributes {stable_mosaic.version = 11 : i64} {
  func.func @_conv3x3_kernel(%arg0: i32, %arg1: memref<1x10x10x128xbf16, #tpu.memory_space<vmem>>, %arg2: memref<1152x128xbf16, #tpu.memory_space<vmem>>, %arg3: memref<1x128xf32, #tpu.memory_space<vmem>>, %arg4: memref<1x128xf32, #tpu.memory_space<vmem>>, %arg5: memref<1x128xf32, #tpu.memory_space<vmem>>, %arg6: memref<1x64x128xbf16, #tpu.memory_space<vmem>>, %arg7: memref<1x1x128xf32, #tpu.memory_space<vmem>>, %arg8: memref<1x1x128xf32, #tpu.memory_space<vmem>>) attributes {dimension_semantics = [#tpu.dimension_semantics<parallel>], iteration_bounds = array<i64: 2>, scalar_prefetch = 0 : i64, scratch_operands = 0 : i64, tpu.core_type = #tpu.core_type<tc>, window_params = [{transform_indices = @transform_0, window_bounds = array<i64: 1, 10, 10, 128>}, {pipeline_mode = #tpu.pipeline_mode<synchronous>, transform_indices = @transform_1, window_bounds = array<i64: 1152, 128>}, {pipeline_mode = #tpu.pipeline_mode<synchronous>, transform_indices = @transform_2, window_bounds = array<i64: 1, 128>}, {pipeline_mode = #tpu.pipeline_mode<synchronous>, transform_indices = @transform_3, window_bounds = array<i64: 1, 128>}, {pipeline_mode = #tpu.pipeline_mode<synchronous>, transform_indices = @transform_4, window_bounds = array<i64: 1, 128>}, {transform_indices = @transform_5, window_bounds = array<i64: 1, 64, 128>}, {transform_indices = @transform_6, window_bounds = array<i64: 1, 1, 128>}, {transform_indices = @transform_7, window_bounds = array<i64: 1, 1, 128>}]} {
    %c0 = arith.constant 0 : index
    %c0_0 = arith.constant 0 : index
    %c0_1 = arith.constant 0 : index
    %c0_2 = arith.constant 0 : index
    %0 = vector.load %arg1[%c0, %c0_0, %c0_1, %c0_2] : memref<1x10x10x128xbf16, #tpu.memory_space<vmem>>, vector<1x10x10x128xbf16>
    %1 = vector.shape_cast %0 : vector<1x10x10x128xbf16> to vector<10x10x128xbf16>
    %2 = arith.extf %1 : vector<10x10x128xbf16> to vector<10x10x128xf32>
    %3 = tpu.iota {dimensions = array<i32: 0>} : vector<10x10x1xi32>
    %4 = tpu.iota {dimensions = array<i32: 1>} : vector<10x10x1xi32>
    %c1_i32 = arith.constant 1 : i32
    %5 = vector.broadcast %c1_i32 : i32 to vector<10x10x1xi32>
    %6 = arith.cmpi sge, %3, %5 : vector<10x10x1xi32>
    %c8_i32 = arith.constant 8 : i32
    %7 = vector.broadcast %c8_i32 : i32 to vector<10x10x1xi32>
    %8 = arith.cmpi sle, %3, %7 : vector<10x10x1xi32>
    %9 = arith.andi %6, %8 : vector<10x10x1xi1>
    %c1_i32_3 = arith.constant 1 : i32
    %10 = vector.broadcast %c1_i32_3 : i32 to vector<10x10x1xi32>
    %11 = arith.cmpi sge, %4, %10 : vector<10x10x1xi32>
    %12 = arith.andi %9, %11 : vector<10x10x1xi1>
    %c8_i32_4 = arith.constant 8 : i32
    %13 = vector.broadcast %c8_i32_4 : i32 to vector<10x10x1xi32>
    %14 = arith.cmpi sle, %4, %13 : vector<10x10x1xi32>
    %15 = arith.andi %12, %14 : vector<10x10x1xi1>
    %16 = arith.extui %15 : vector<10x10x1xi1> to vector<10x10x1xi32>
    %17 = arith.sitofp %16 : vector<10x10x1xi32> to vector<10x10x1xf32>
    %c0_5 = arith.constant 0 : index
    %c0_6 = arith.constant 0 : index
    %18 = vector.load %arg4[%c0_5, %c0_6] : memref<1x128xf32, #tpu.memory_space<vmem>>, vector<1x128xf32>
    %19 = vector.shape_cast %18 : vector<1x128xf32> to vector<1x1x128xf32>
    %20 = vector.broadcast %19 : vector<1x1x128xf32> to vector<10x10x128xf32>
    %21 = arith.mulf %2, %20 : vector<10x10x128xf32>
    %c0_7 = arith.constant 0 : index
    %c0_8 = arith.constant 0 : index
    %22 = vector.load %arg5[%c0_7, %c0_8] : memref<1x128xf32, #tpu.memory_space<vmem>>, vector<1x128xf32>
    %23 = vector.shape_cast %22 : vector<1x128xf32> to vector<1x1x128xf32>
    %24 = vector.broadcast %23 : vector<1x1x128xf32> to vector<10x10x128xf32>
    %25 = vector.broadcast %17 : vector<10x10x1xf32> to vector<10x10x128xf32>
    %26 = arith.mulf %24, %25 : vector<10x10x128xf32>
    %27 = arith.addf %21, %26 : vector<10x10x128xf32>
    %28 = arith.truncf %27 : vector<10x10x128xf32> to vector<10x10x128xbf16>
    %29 = vector.extract_strided_slice %28 {offsets = [0, 0, 0], sizes = [8, 8, 128], strides = [1, 1, 1]} : vector<10x10x128xbf16> to vector<8x8x128xbf16>
    %30 = vector.shape_cast %29 : vector<8x8x128xbf16> to vector<64x128xbf16>
    %31 = vector.extract_strided_slice %28 {offsets = [0, 1, 0], sizes = [8, 8, 128], strides = [1, 1, 1]} : vector<10x10x128xbf16> to vector<8x8x128xbf16>
    %32 = vector.shape_cast %31 : vector<8x8x128xbf16> to vector<64x128xbf16>
    %33 = vector.extract_strided_slice %28 {offsets = [0, 2, 0], sizes = [8, 8, 128], strides = [1, 1, 1]} : vector<10x10x128xbf16> to vector<8x8x128xbf16>
    %34 = vector.shape_cast %33 : vector<8x8x128xbf16> to vector<64x128xbf16>
    %35 = vector.extract_strided_slice %28 {offsets = [1, 0, 0], sizes = [8, 8, 128], strides = [1, 1, 1]} : vector<10x10x128xbf16> to vector<8x8x128xbf16>
    %36 = vector.shape_cast %35 : vector<8x8x128xbf16> to vector<64x128xbf16>
    %37 = vector.extract_strided_slice %28 {offsets = [1, 1, 0], sizes = [8, 8, 128], strides = [1, 1, 1]} : vector<10x10x128xbf16> to vector<8x8x128xbf16>
    %38 = vector.shape_cast %37 : vector<8x8x128xbf16> to vector<64x128xbf16>
    %39 = vector.extract_strided_slice %28 {offsets = [1, 2, 0], sizes = [8, 8, 128], strides = [1, 1, 1]} : vector<10x10x128xbf16> to vector<8x8x128xbf16>
    %40 = vector.shape_cast %39 : vector<8x8x128xbf16> to vector<64x128xbf16>
    %41 = vector.extract_strided_slice %28 {offsets = [2, 0, 0], sizes = [8, 8, 128], strides = [1, 1, 1]} : vector<10x10x128xbf16> to vector<8x8x128xbf16>
    %42 = vector.shape_cast %41 : vector<8x8x128xbf16> to vector<64x128xbf16>
    %43 = vector.extract_strided_slice %28 {offsets = [2, 1, 0], sizes = [8, 8, 128], strides = [1, 1, 1]} : vector<10x10x128xbf16> to vector<8x8x128xbf16>
    %44 = vector.shape_cast %43 : vector<8x8x128xbf16> to vector<64x128xbf16>
    %45 = vector.extract_strided_slice %28 {offsets = [2, 2, 0], sizes = [8, 8, 128], strides = [1, 1, 1]} : vector<10x10x128xbf16> to vector<8x8x128xbf16>
    %46 = vector.shape_cast %45 : vector<8x8x128xbf16> to vector<64x128xbf16>
    %47 = tpu.concatenate %30, %32, %34, %36, %38, %40, %42, %44, %46 in 1 : vector<64x128xbf16>, vector<64x128xbf16>, vector<64x128xbf16>, vector<64x128xbf16>, vector<64x128xbf16>, vector<64x128xbf16>, vector<64x128xbf16>, vector<64x128xbf16>, vector<64x128xbf16> -> vector<64x1152xbf16>
    %c0_9 = arith.constant 0 : index
    %c0_10 = arith.constant 0 : index
    %48 = vector.load %arg2[%c0_9, %c0_10] : memref<1152x128xbf16, #tpu.memory_space<vmem>>, vector<1152x128xbf16>
    %cst = arith.constant dense<0.000000e+00> : vector<64x128xf32>
    %49 = tpu.matmul %47, %48, %cst {dimension_numbers = #tpu.dot_dimension_numbers<[1], [0], [0], [1], [0, 0, 1, 1], [], []>} : vector<64x1152xbf16>, vector<1152x128xbf16>, vector<64x128xf32> -> vector<64x128xf32>
    %c0_11 = arith.constant 0 : index
    %c0_12 = arith.constant 0 : index
    %50 = vector.load %arg3[%c0_11, %c0_12] : memref<1x128xf32, #tpu.memory_space<vmem>>, vector<1x128xf32>
    %51 = vector.broadcast %50 : vector<1x128xf32> to vector<64x128xf32>
    %52 = arith.addf %49, %51 : vector<64x128xf32>
    %cst_13 = arith.constant dense<0.000000e+00> : vector<128xf32>
    %53 = vector.multi_reduction <add>, %52, %cst_13 [0] : vector<64x128xf32> to vector<128xf32>
    %54 = vector.shape_cast %53 : vector<128xf32> to vector<1x128xf32>
    %55 = vector.shape_cast %54 : vector<1x128xf32> to vector<1x1x128xf32>
    %c0_14 = arith.constant 0 : index
    %c0_15 = arith.constant 0 : index
    %c0_16 = arith.constant 0 : index
    %56 = vector.load %arg7[%c0_14, %c0_15, %c0_16] : memref<1x1x128xf32, #tpu.memory_space<vmem>>, vector<1x1x128xf32>
    tpu.vector_store %arg7[%c0_14, %c0_15, %c0_16], %55 {strides = array<i32>} : memref<1x1x128xf32, #tpu.memory_space<vmem>>, vector<1x1x128xf32>,
    %57 = arith.mulf %52, %52 : vector<64x128xf32>
    %cst_17 = arith.constant dense<0.000000e+00> : vector<128xf32>
    %58 = vector.multi_reduction <add>, %57, %cst_17 [0] : vector<64x128xf32> to vector<128xf32>
    %59 = vector.shape_cast %58 : vector<128xf32> to vector<1x128xf32>
    %60 = vector.shape_cast %59 : vector<1x128xf32> to vector<1x1x128xf32>
    %c0_18 = arith.constant 0 : index
    %c0_19 = arith.constant 0 : index
    %c0_20 = arith.constant 0 : index
    %61 = vector.load %arg8[%c0_18, %c0_19, %c0_20] : memref<1x1x128xf32, #tpu.memory_space<vmem>>, vector<1x1x128xf32>
    tpu.vector_store %arg8[%c0_18, %c0_19, %c0_20], %60 {strides = array<i32>} : memref<1x1x128xf32, #tpu.memory_space<vmem>>, vector<1x1x128xf32>,
    %62 = vector.shape_cast %52 : vector<64x128xf32> to vector<1x64x128xf32>
    %63 = arith.truncf %62 : vector<1x64x128xf32> to vector<1x64x128xbf16>
    %c0_21 = arith.constant 0 : index
    %c0_22 = arith.constant 0 : index
    %c0_23 = arith.constant 0 : index
    %64 = vector.load %arg6[%c0_21, %c0_22, %c0_23] : memref<1x64x128xbf16, #tpu.memory_space<vmem>>, vector<1x64x128xbf16>
    tpu.vector_store %arg6[%c0_21, %c0_22, %c0_23], %63 {strides = array<i32>} : memref<1x64x128xbf16, #tpu.memory_space<vmem>>, vector<1x64x128xbf16>,
    return
  }
  func.func @transform_0(%arg0: i32) -> (i32, i32, i32, i32) {
    %c0_i32 = arith.constant 0 : i32
    %c0_i32_0 = arith.constant 0 : i32
    %c0_i32_1 = arith.constant 0 : i32
    %c0_i32_2 = arith.constant 0 : i32
    return %arg0, %c0_i32, %c0_i32_0, %c0_i32_1 : i32, i32, i32, i32
  }
  func.func @transform_1(%arg0: i32) -> (i32, i32) {
    %c0_i32 = arith.constant 0 : i32
    %c0_i32_0 = arith.constant 0 : i32
    %c0_i32_1 = arith.constant 0 : i32
    return %c0_i32, %c0_i32_0 : i32, i32
  }
  func.func @transform_2(%arg0: i32) -> (i32, i32) {
    %c0_i32 = arith.constant 0 : i32
    %c0_i32_0 = arith.constant 0 : i32
    %c0_i32_1 = arith.constant 0 : i32
    return %c0_i32, %c0_i32_0 : i32, i32
  }
  func.func @transform_3(%arg0: i32) -> (i32, i32) {
    %c0_i32 = arith.constant 0 : i32
    %c0_i32_0 = arith.constant 0 : i32
    %c0_i32_1 = arith.constant 0 : i32
    return %c0_i32, %c0_i32_0 : i32, i32
  }
  func.func @transform_4(%arg0: i32) -> (i32, i32) {
    %c0_i32 = arith.constant 0 : i32
    %c0_i32_0 = arith.constant 0 : i32
    %c0_i32_1 = arith.constant 0 : i32
    return %c0_i32, %c0_i32_0 : i32, i32
  }
  func.func @transform_5(%arg0: i32) -> (i32, i32, i32) {
    %c0_i32 = arith.constant 0 : i32
    %c0_i32_0 = arith.constant 0 : i32
    %c0_i32_1 = arith.constant 0 : i32
    return %arg0, %c0_i32, %c0_i32_0 : i32, i32, i32
  }
  func.func @transform_6(%arg0: i32) -> (i32, i32, i32) {
    %c0_i32 = arith.constant 0 : i32
    %c0_i32_0 = arith.constant 0 : i32
    %c0_i32_1 = arith.constant 0 : i32
    return %arg0, %c0_i32, %c0_i32_0 : i32, i32, i32
  }
  func.func @transform_7(%arg0: i32) -> (i32, i32, i32) {
    %c0_i32 = arith.constant 0 : i32
    %c0_i32_0 = arith.constant 0 : i32
    %c0_i32_1 = arith.constant 0 : i32
    return %arg0, %c0_i32, %c0_i32_0 : i32, i32, i32
  }
}

module attributes {stable_mosaic.version = 11 : i64} {
  func.func @_conv3x3_kernel(%arg0: i32, %arg1: memref<1x18x18x128xbf16, #tpu.memory_space<vmem>>, %arg2: memref<1152x128xbf16, #tpu.memory_space<vmem>>, %arg3: memref<1x128xf32, #tpu.memory_space<vmem>>, %arg4: memref<1x128xf32, #tpu.memory_space<vmem>>, %arg5: memref<1x128xf32, #tpu.memory_space<vmem>>, %arg6: memref<1x256x128xbf16, #tpu.memory_space<vmem>>, %arg7: memref<1x1x128xf32, #tpu.memory_space<vmem>>, %arg8: memref<1x1x128xf32, #tpu.memory_space<vmem>>) attributes {dimension_semantics = [#tpu.dimension_semantics<parallel>], iteration_bounds = array<i64: 2>, scalar_prefetch = 0 : i64, scratch_operands = 0 : i64, tpu.core_type = #tpu.core_type<tc>, window_params = [{transform_indices = @transform_0, window_bounds = array<i64: 1, 18, 18, 128>}, {pipeline_mode = #tpu.pipeline_mode<synchronous>, transform_indices = @transform_1, window_bounds = array<i64: 1152, 128>}, {pipeline_mode = #tpu.pipeline_mode<synchronous>, transform_indices = @transform_2, window_bounds = array<i64: 1, 128>}, {pipeline_mode = #tpu.pipeline_mode<synchronous>, transform_indices = @transform_3, window_bounds = array<i64: 1, 128>}, {pipeline_mode = #tpu.pipeline_mode<synchronous>, transform_indices = @transform_4, window_bounds = array<i64: 1, 128>}, {transform_indices = @transform_5, window_bounds = array<i64: 1, 256, 128>}, {transform_indices = @transform_6, window_bounds = array<i64: 1, 1, 128>}, {transform_indices = @transform_7, window_bounds = array<i64: 1, 1, 128>}]} {
    %c0 = arith.constant 0 : index
    %c0_0 = arith.constant 0 : index
    %c0_1 = arith.constant 0 : index
    %c0_2 = arith.constant 0 : index
    %0 = vector.load %arg1[%c0, %c0_0, %c0_1, %c0_2] : memref<1x18x18x128xbf16, #tpu.memory_space<vmem>>, vector<1x18x18x128xbf16>
    %1 = vector.shape_cast %0 : vector<1x18x18x128xbf16> to vector<18x18x128xbf16>
    %2 = arith.extf %1 : vector<18x18x128xbf16> to vector<18x18x128xf32>
    %3 = tpu.iota {dimensions = array<i32: 0>} : vector<18x18x1xi32>
    %4 = tpu.iota {dimensions = array<i32: 1>} : vector<18x18x1xi32>
    %c1_i32 = arith.constant 1 : i32
    %5 = vector.broadcast %c1_i32 : i32 to vector<18x18x1xi32>
    %6 = arith.cmpi sge, %3, %5 : vector<18x18x1xi32>
    %c16_i32 = arith.constant 16 : i32
    %7 = vector.broadcast %c16_i32 : i32 to vector<18x18x1xi32>
    %8 = arith.cmpi sle, %3, %7 : vector<18x18x1xi32>
    %9 = arith.andi %6, %8 : vector<18x18x1xi1>
    %c1_i32_3 = arith.constant 1 : i32
    %10 = vector.broadcast %c1_i32_3 : i32 to vector<18x18x1xi32>
    %11 = arith.cmpi sge, %4, %10 : vector<18x18x1xi32>
    %12 = arith.andi %9, %11 : vector<18x18x1xi1>
    %c16_i32_4 = arith.constant 16 : i32
    %13 = vector.broadcast %c16_i32_4 : i32 to vector<18x18x1xi32>
    %14 = arith.cmpi sle, %4, %13 : vector<18x18x1xi32>
    %15 = arith.andi %12, %14 : vector<18x18x1xi1>
    %16 = arith.extui %15 : vector<18x18x1xi1> to vector<18x18x1xi32>
    %17 = arith.sitofp %16 : vector<18x18x1xi32> to vector<18x18x1xf32>
    %c0_5 = arith.constant 0 : index
    %c0_6 = arith.constant 0 : index
    %18 = vector.load %arg4[%c0_5, %c0_6] : memref<1x128xf32, #tpu.memory_space<vmem>>, vector<1x128xf32>
    %19 = vector.shape_cast %18 : vector<1x128xf32> to vector<1x1x128xf32>
    %20 = vector.broadcast %19 : vector<1x1x128xf32> to vector<18x18x128xf32>
    %21 = arith.mulf %2, %20 : vector<18x18x128xf32>
    %c0_7 = arith.constant 0 : index
    %c0_8 = arith.constant 0 : index
    %22 = vector.load %arg5[%c0_7, %c0_8] : memref<1x128xf32, #tpu.memory_space<vmem>>, vector<1x128xf32>
    %23 = vector.shape_cast %22 : vector<1x128xf32> to vector<1x1x128xf32>
    %24 = vector.broadcast %23 : vector<1x1x128xf32> to vector<18x18x128xf32>
    %25 = vector.broadcast %17 : vector<18x18x1xf32> to vector<18x18x128xf32>
    %26 = arith.mulf %24, %25 : vector<18x18x128xf32>
    %27 = arith.addf %21, %26 : vector<18x18x128xf32>
    %cst = arith.constant 0.000000e+00 : f32
    %28 = vector.broadcast %cst : f32 to vector<18x18x128xf32>
    %29 = arith.maximumf %27, %28 : vector<18x18x128xf32>
    %30 = arith.truncf %29 : vector<18x18x128xf32> to vector<18x18x128xbf16>
    %31 = vector.extract_strided_slice %30 {offsets = [0, 0, 0], sizes = [16, 16, 128], strides = [1, 1, 1]} : vector<18x18x128xbf16> to vector<16x16x128xbf16>
    %32 = vector.shape_cast %31 : vector<16x16x128xbf16> to vector<256x128xbf16>
    %33 = vector.extract_strided_slice %30 {offsets = [0, 1, 0], sizes = [16, 16, 128], strides = [1, 1, 1]} : vector<18x18x128xbf16> to vector<16x16x128xbf16>
    %34 = vector.shape_cast %33 : vector<16x16x128xbf16> to vector<256x128xbf16>
    %35 = vector.extract_strided_slice %30 {offsets = [0, 2, 0], sizes = [16, 16, 128], strides = [1, 1, 1]} : vector<18x18x128xbf16> to vector<16x16x128xbf16>
    %36 = vector.shape_cast %35 : vector<16x16x128xbf16> to vector<256x128xbf16>
    %37 = vector.extract_strided_slice %30 {offsets = [1, 0, 0], sizes = [16, 16, 128], strides = [1, 1, 1]} : vector<18x18x128xbf16> to vector<16x16x128xbf16>
    %38 = vector.shape_cast %37 : vector<16x16x128xbf16> to vector<256x128xbf16>
    %39 = vector.extract_strided_slice %30 {offsets = [1, 1, 0], sizes = [16, 16, 128], strides = [1, 1, 1]} : vector<18x18x128xbf16> to vector<16x16x128xbf16>
    %40 = vector.shape_cast %39 : vector<16x16x128xbf16> to vector<256x128xbf16>
    %41 = vector.extract_strided_slice %30 {offsets = [1, 2, 0], sizes = [16, 16, 128], strides = [1, 1, 1]} : vector<18x18x128xbf16> to vector<16x16x128xbf16>
    %42 = vector.shape_cast %41 : vector<16x16x128xbf16> to vector<256x128xbf16>
    %43 = vector.extract_strided_slice %30 {offsets = [2, 0, 0], sizes = [16, 16, 128], strides = [1, 1, 1]} : vector<18x18x128xbf16> to vector<16x16x128xbf16>
    %44 = vector.shape_cast %43 : vector<16x16x128xbf16> to vector<256x128xbf16>
    %45 = vector.extract_strided_slice %30 {offsets = [2, 1, 0], sizes = [16, 16, 128], strides = [1, 1, 1]} : vector<18x18x128xbf16> to vector<16x16x128xbf16>
    %46 = vector.shape_cast %45 : vector<16x16x128xbf16> to vector<256x128xbf16>
    %47 = vector.extract_strided_slice %30 {offsets = [2, 2, 0], sizes = [16, 16, 128], strides = [1, 1, 1]} : vector<18x18x128xbf16> to vector<16x16x128xbf16>
    %48 = vector.shape_cast %47 : vector<16x16x128xbf16> to vector<256x128xbf16>
    %49 = tpu.concatenate %32, %34, %36, %38, %40, %42, %44, %46, %48 in 1 : vector<256x128xbf16>, vector<256x128xbf16>, vector<256x128xbf16>, vector<256x128xbf16>, vector<256x128xbf16>, vector<256x128xbf16>, vector<256x128xbf16>, vector<256x128xbf16>, vector<256x128xbf16> -> vector<256x1152xbf16>
    %c0_9 = arith.constant 0 : index
    %c0_10 = arith.constant 0 : index
    %50 = vector.load %arg2[%c0_9, %c0_10] : memref<1152x128xbf16, #tpu.memory_space<vmem>>, vector<1152x128xbf16>
    %cst_11 = arith.constant dense<0.000000e+00> : vector<256x128xf32>
    %51 = tpu.matmul %49, %50, %cst_11 {dimension_numbers = #tpu.dot_dimension_numbers<[1], [0], [0], [1], [0, 0, 1, 1], [], []>} : vector<256x1152xbf16>, vector<1152x128xbf16>, vector<256x128xf32> -> vector<256x128xf32>
    %c0_12 = arith.constant 0 : index
    %c0_13 = arith.constant 0 : index
    %52 = vector.load %arg3[%c0_12, %c0_13] : memref<1x128xf32, #tpu.memory_space<vmem>>, vector<1x128xf32>
    %53 = vector.broadcast %52 : vector<1x128xf32> to vector<256x128xf32>
    %54 = arith.addf %51, %53 : vector<256x128xf32>
    %cst_14 = arith.constant dense<0.000000e+00> : vector<128xf32>
    %55 = vector.multi_reduction <add>, %54, %cst_14 [0] : vector<256x128xf32> to vector<128xf32>
    %56 = vector.shape_cast %55 : vector<128xf32> to vector<1x128xf32>
    %57 = vector.shape_cast %56 : vector<1x128xf32> to vector<1x1x128xf32>
    %c0_15 = arith.constant 0 : index
    %c0_16 = arith.constant 0 : index
    %c0_17 = arith.constant 0 : index
    %58 = vector.load %arg7[%c0_15, %c0_16, %c0_17] : memref<1x1x128xf32, #tpu.memory_space<vmem>>, vector<1x1x128xf32>
    tpu.vector_store %arg7[%c0_15, %c0_16, %c0_17], %57 {strides = array<i32>} : memref<1x1x128xf32, #tpu.memory_space<vmem>>, vector<1x1x128xf32>,
    %59 = arith.mulf %54, %54 : vector<256x128xf32>
    %cst_18 = arith.constant dense<0.000000e+00> : vector<128xf32>
    %60 = vector.multi_reduction <add>, %59, %cst_18 [0] : vector<256x128xf32> to vector<128xf32>
    %61 = vector.shape_cast %60 : vector<128xf32> to vector<1x128xf32>
    %62 = vector.shape_cast %61 : vector<1x128xf32> to vector<1x1x128xf32>
    %c0_19 = arith.constant 0 : index
    %c0_20 = arith.constant 0 : index
    %c0_21 = arith.constant 0 : index
    %63 = vector.load %arg8[%c0_19, %c0_20, %c0_21] : memref<1x1x128xf32, #tpu.memory_space<vmem>>, vector<1x1x128xf32>
    tpu.vector_store %arg8[%c0_19, %c0_20, %c0_21], %62 {strides = array<i32>} : memref<1x1x128xf32, #tpu.memory_space<vmem>>, vector<1x1x128xf32>,
    %64 = vector.shape_cast %54 : vector<256x128xf32> to vector<1x256x128xf32>
    %65 = arith.truncf %64 : vector<1x256x128xf32> to vector<1x256x128xbf16>
    %c0_22 = arith.constant 0 : index
    %c0_23 = arith.constant 0 : index
    %c0_24 = arith.constant 0 : index
    %66 = vector.load %arg6[%c0_22, %c0_23, %c0_24] : memref<1x256x128xbf16, #tpu.memory_space<vmem>>, vector<1x256x128xbf16>
    tpu.vector_store %arg6[%c0_22, %c0_23, %c0_24], %65 {strides = array<i32>} : memref<1x256x128xbf16, #tpu.memory_space<vmem>>, vector<1x256x128xbf16>,
    return
  }
  func.func @transform_0(%arg0: i32) -> (i32, i32, i32, i32) {
    %c0_i32 = arith.constant 0 : i32
    %c0_i32_0 = arith.constant 0 : i32
    %c0_i32_1 = arith.constant 0 : i32
    %c0_i32_2 = arith.constant 0 : i32
    return %arg0, %c0_i32, %c0_i32_0, %c0_i32_1 : i32, i32, i32, i32
  }
  func.func @transform_1(%arg0: i32) -> (i32, i32) {
    %c0_i32 = arith.constant 0 : i32
    %c0_i32_0 = arith.constant 0 : i32
    %c0_i32_1 = arith.constant 0 : i32
    return %c0_i32, %c0_i32_0 : i32, i32
  }
  func.func @transform_2(%arg0: i32) -> (i32, i32) {
    %c0_i32 = arith.constant 0 : i32
    %c0_i32_0 = arith.constant 0 : i32
    %c0_i32_1 = arith.constant 0 : i32
    return %c0_i32, %c0_i32_0 : i32, i32
  }
  func.func @transform_3(%arg0: i32) -> (i32, i32) {
    %c0_i32 = arith.constant 0 : i32
    %c0_i32_0 = arith.constant 0 : i32
    %c0_i32_1 = arith.constant 0 : i32
    return %c0_i32, %c0_i32_0 : i32, i32
  }
  func.func @transform_4(%arg0: i32) -> (i32, i32) {
    %c0_i32 = arith.constant 0 : i32
    %c0_i32_0 = arith.constant 0 : i32
    %c0_i32_1 = arith.constant 0 : i32
    return %c0_i32, %c0_i32_0 : i32, i32
  }
  func.func @transform_5(%arg0: i32) -> (i32, i32, i32) {
    %c0_i32 = arith.constant 0 : i32
    %c0_i32_0 = arith.constant 0 : i32
    %c0_i32_1 = arith.constant 0 : i32
    return %arg0, %c0_i32, %c0_i32_0 : i32, i32, i32
  }
  func.func @transform_6(%arg0: i32) -> (i32, i32, i32) {
    %c0_i32 = arith.constant 0 : i32
    %c0_i32_0 = arith.constant 0 : i32
    %c0_i32_1 = arith.constant 0 : i32
    return %arg0, %c0_i32, %c0_i32_0 : i32, i32, i32
  }
  func.func @transform_7(%arg0: i32) -> (i32, i32, i32) {
    %c0_i32 = arith.constant 0 : i32
    %c0_i32_0 = arith.constant 0 : i32
    %c0_i32_1 = arith.constant 0 : i32
    return %arg0, %c0_i32, %c0_i32_0 : i32, i32, i32
  }
}

module attributes {stable_mosaic.version = 11 : i64} {
  func.func @_conv3x3_c1_kernel(%arg0: i32, %arg1: memref<1x18x18x128xbf16, #tpu.memory_space<vmem>>, %arg2: memref<9x128xf32, #tpu.memory_space<vmem>>, %arg3: memref<1x1xf32, #tpu.memory_space<vmem>>, %arg4: memref<1x128xf32, #tpu.memory_space<vmem>>, %arg5: memref<1x128xf32, #tpu.memory_space<vmem>>, %arg6: memref<1x16x16x1xf32, #tpu.memory_space<vmem>>) attributes {dimension_semantics = [#tpu.dimension_semantics<parallel>], iteration_bounds = array<i64: 2>, scalar_prefetch = 0 : i64, scratch_operands = 0 : i64, tpu.core_type = #tpu.core_type<tc>, window_params = [{transform_indices = @transform_0, window_bounds = array<i64: 1, 18, 18, 128>}, {pipeline_mode = #tpu.pipeline_mode<synchronous>, transform_indices = @transform_1, window_bounds = array<i64: 9, 128>}, {pipeline_mode = #tpu.pipeline_mode<synchronous>, transform_indices = @transform_2, window_bounds = array<i64: 1, 1>}, {pipeline_mode = #tpu.pipeline_mode<synchronous>, transform_indices = @transform_3, window_bounds = array<i64: 1, 128>}, {pipeline_mode = #tpu.pipeline_mode<synchronous>, transform_indices = @transform_4, window_bounds = array<i64: 1, 128>}, {transform_indices = @transform_5, window_bounds = array<i64: 1, 16, 16, 1>}]} {
    %c0 = arith.constant 0 : index
    %c0_0 = arith.constant 0 : index
    %c0_1 = arith.constant 0 : index
    %c0_2 = arith.constant 0 : index
    %0 = vector.load %arg1[%c0, %c0_0, %c0_1, %c0_2] : memref<1x18x18x128xbf16, #tpu.memory_space<vmem>>, vector<1x18x18x128xbf16>
    %1 = vector.shape_cast %0 : vector<1x18x18x128xbf16> to vector<18x18x128xbf16>
    %2 = arith.extf %1 : vector<18x18x128xbf16> to vector<18x18x128xf32>
    %3 = tpu.iota {dimensions = array<i32: 0>} : vector<18x18x1xi32>
    %4 = tpu.iota {dimensions = array<i32: 1>} : vector<18x18x1xi32>
    %c1_i32 = arith.constant 1 : i32
    %5 = vector.broadcast %c1_i32 : i32 to vector<18x18x1xi32>
    %6 = arith.cmpi sge, %3, %5 : vector<18x18x1xi32>
    %c16_i32 = arith.constant 16 : i32
    %7 = vector.broadcast %c16_i32 : i32 to vector<18x18x1xi32>
    %8 = arith.cmpi sle, %3, %7 : vector<18x18x1xi32>
    %9 = arith.andi %6, %8 : vector<18x18x1xi1>
    %c1_i32_3 = arith.constant 1 : i32
    %10 = vector.broadcast %c1_i32_3 : i32 to vector<18x18x1xi32>
    %11 = arith.cmpi sge, %4, %10 : vector<18x18x1xi32>
    %12 = arith.andi %9, %11 : vector<18x18x1xi1>
    %c16_i32_4 = arith.constant 16 : i32
    %13 = vector.broadcast %c16_i32_4 : i32 to vector<18x18x1xi32>
    %14 = arith.cmpi sle, %4, %13 : vector<18x18x1xi32>
    %15 = arith.andi %12, %14 : vector<18x18x1xi1>
    %16 = arith.extui %15 : vector<18x18x1xi1> to vector<18x18x1xi32>
    %17 = arith.sitofp %16 : vector<18x18x1xi32> to vector<18x18x1xf32>
    %c0_5 = arith.constant 0 : index
    %c0_6 = arith.constant 0 : index
    %18 = vector.load %arg4[%c0_5, %c0_6] : memref<1x128xf32, #tpu.memory_space<vmem>>, vector<1x128xf32>
    %19 = vector.shape_cast %18 : vector<1x128xf32> to vector<1x1x128xf32>
    %20 = vector.broadcast %19 : vector<1x1x128xf32> to vector<18x18x128xf32>
    %21 = arith.mulf %2, %20 : vector<18x18x128xf32>
    %c0_7 = arith.constant 0 : index
    %c0_8 = arith.constant 0 : index
    %22 = vector.load %arg5[%c0_7, %c0_8] : memref<1x128xf32, #tpu.memory_space<vmem>>, vector<1x128xf32>
    %23 = vector.shape_cast %22 : vector<1x128xf32> to vector<1x1x128xf32>
    %24 = vector.broadcast %23 : vector<1x1x128xf32> to vector<18x18x128xf32>
    %25 = vector.broadcast %17 : vector<18x18x1xf32> to vector<18x18x128xf32>
    %26 = arith.mulf %24, %25 : vector<18x18x128xf32>
    %27 = arith.addf %21, %26 : vector<18x18x128xf32>
    %cst = arith.constant 0.000000e+00 : f32
    %28 = vector.broadcast %cst : f32 to vector<18x18x128xf32>
    %29 = arith.maximumf %27, %28 : vector<18x18x128xf32>
    %c0_9 = arith.constant 0 : index
    %c0_10 = arith.constant 0 : index
    %30 = vector.load %arg2[%c0_9, %c0_10] : memref<9x128xf32, #tpu.memory_space<vmem>>, vector<9x128xf32>
    %cst_11 = arith.constant 0.000000e+00 : f32
    %31 = vector.broadcast %cst_11 : f32 to vector<16x16x1xf32>
    %32 = vector.extract_strided_slice %29 {offsets = [0, 0, 0], sizes = [16, 16, 128], strides = [1, 1, 1]} : vector<18x18x128xf32> to vector<16x16x128xf32>
    %33 = vector.extract_strided_slice %30 {offsets = [0, 0], sizes = [1, 128], strides = [1, 1]} : vector<9x128xf32> to vector<1x128xf32>
    %34 = vector.shape_cast %33 : vector<1x128xf32> to vector<128xf32>
    %35 = vector.shape_cast %34 : vector<128xf32> to vector<1x1x128xf32>
    %36 = vector.broadcast %35 : vector<1x1x128xf32> to vector<16x16x128xf32>
    %37 = arith.mulf %32, %36 : vector<16x16x128xf32>
    %cst_12 = arith.constant dense<0.000000e+00> : vector<16x16xf32>
    %38 = vector.multi_reduction <add>, %37, %cst_12 [2] : vector<16x16x128xf32> to vector<16x16xf32>
    %39 = vector.shape_cast %38 : vector<16x16xf32> to vector<16x16x1xf32>
    %40 = arith.addf %31, %39 : vector<16x16x1xf32>
    %41 = vector.extract_strided_slice %29 {offsets = [0, 1, 0], sizes = [16, 16, 128], strides = [1, 1, 1]} : vector<18x18x128xf32> to vector<16x16x128xf32>
    %42 = vector.extract_strided_slice %30 {offsets = [1, 0], sizes = [1, 128], strides = [1, 1]} : vector<9x128xf32> to vector<1x128xf32>
    %43 = vector.shape_cast %42 : vector<1x128xf32> to vector<128xf32>
    %44 = vector.shape_cast %43 : vector<128xf32> to vector<1x1x128xf32>
    %45 = vector.broadcast %44 : vector<1x1x128xf32> to vector<16x16x128xf32>
    %46 = arith.mulf %41, %45 : vector<16x16x128xf32>
    %cst_13 = arith.constant dense<0.000000e+00> : vector<16x16xf32>
    %47 = vector.multi_reduction <add>, %46, %cst_13 [2] : vector<16x16x128xf32> to vector<16x16xf32>
    %48 = vector.shape_cast %47 : vector<16x16xf32> to vector<16x16x1xf32>
    %49 = arith.addf %40, %48 : vector<16x16x1xf32>
    %50 = vector.extract_strided_slice %29 {offsets = [0, 2, 0], sizes = [16, 16, 128], strides = [1, 1, 1]} : vector<18x18x128xf32> to vector<16x16x128xf32>
    %51 = vector.extract_strided_slice %30 {offsets = [2, 0], sizes = [1, 128], strides = [1, 1]} : vector<9x128xf32> to vector<1x128xf32>
    %52 = vector.shape_cast %51 : vector<1x128xf32> to vector<128xf32>
    %53 = vector.shape_cast %52 : vector<128xf32> to vector<1x1x128xf32>
    %54 = vector.broadcast %53 : vector<1x1x128xf32> to vector<16x16x128xf32>
    %55 = arith.mulf %50, %54 : vector<16x16x128xf32>
    %cst_14 = arith.constant dense<0.000000e+00> : vector<16x16xf32>
    %56 = vector.multi_reduction <add>, %55, %cst_14 [2] : vector<16x16x128xf32> to vector<16x16xf32>
    %57 = vector.shape_cast %56 : vector<16x16xf32> to vector<16x16x1xf32>
    %58 = arith.addf %49, %57 : vector<16x16x1xf32>
    %59 = vector.extract_strided_slice %29 {offsets = [1, 0, 0], sizes = [16, 16, 128], strides = [1, 1, 1]} : vector<18x18x128xf32> to vector<16x16x128xf32>
    %60 = vector.extract_strided_slice %30 {offsets = [3, 0], sizes = [1, 128], strides = [1, 1]} : vector<9x128xf32> to vector<1x128xf32>
    %61 = vector.shape_cast %60 : vector<1x128xf32> to vector<128xf32>
    %62 = vector.shape_cast %61 : vector<128xf32> to vector<1x1x128xf32>
    %63 = vector.broadcast %62 : vector<1x1x128xf32> to vector<16x16x128xf32>
    %64 = arith.mulf %59, %63 : vector<16x16x128xf32>
    %cst_15 = arith.constant dense<0.000000e+00> : vector<16x16xf32>
    %65 = vector.multi_reduction <add>, %64, %cst_15 [2] : vector<16x16x128xf32> to vector<16x16xf32>
    %66 = vector.shape_cast %65 : vector<16x16xf32> to vector<16x16x1xf32>
    %67 = arith.addf %58, %66 : vector<16x16x1xf32>
    %68 = vector.extract_strided_slice %29 {offsets = [1, 1, 0], sizes = [16, 16, 128], strides = [1, 1, 1]} : vector<18x18x128xf32> to vector<16x16x128xf32>
    %69 = vector.extract_strided_slice %30 {offsets = [4, 0], sizes = [1, 128], strides = [1, 1]} : vector<9x128xf32> to vector<1x128xf32>
    %70 = vector.shape_cast %69 : vector<1x128xf32> to vector<128xf32>
    %71 = vector.shape_cast %70 : vector<128xf32> to vector<1x1x128xf32>
    %72 = vector.broadcast %71 : vector<1x1x128xf32> to vector<16x16x128xf32>
    %73 = arith.mulf %68, %72 : vector<16x16x128xf32>
    %cst_16 = arith.constant dense<0.000000e+00> : vector<16x16xf32>
    %74 = vector.multi_reduction <add>, %73, %cst_16 [2] : vector<16x16x128xf32> to vector<16x16xf32>
    %75 = vector.shape_cast %74 : vector<16x16xf32> to vector<16x16x1xf32>
    %76 = arith.addf %67, %75 : vector<16x16x1xf32>
    %77 = vector.extract_strided_slice %29 {offsets = [1, 2, 0], sizes = [16, 16, 128], strides = [1, 1, 1]} : vector<18x18x128xf32> to vector<16x16x128xf32>
    %78 = vector.extract_strided_slice %30 {offsets = [5, 0], sizes = [1, 128], strides = [1, 1]} : vector<9x128xf32> to vector<1x128xf32>
    %79 = vector.shape_cast %78 : vector<1x128xf32> to vector<128xf32>
    %80 = vector.shape_cast %79 : vector<128xf32> to vector<1x1x128xf32>
    %81 = vector.broadcast %80 : vector<1x1x128xf32> to vector<16x16x128xf32>
    %82 = arith.mulf %77, %81 : vector<16x16x128xf32>
    %cst_17 = arith.constant dense<0.000000e+00> : vector<16x16xf32>
    %83 = vector.multi_reduction <add>, %82, %cst_17 [2] : vector<16x16x128xf32> to vector<16x16xf32>
    %84 = vector.shape_cast %83 : vector<16x16xf32> to vector<16x16x1xf32>
    %85 = arith.addf %76, %84 : vector<16x16x1xf32>
    %86 = vector.extract_strided_slice %29 {offsets = [2, 0, 0], sizes = [16, 16, 128], strides = [1, 1, 1]} : vector<18x18x128xf32> to vector<16x16x128xf32>
    %87 = vector.extract_strided_slice %30 {offsets = [6, 0], sizes = [1, 128], strides = [1, 1]} : vector<9x128xf32> to vector<1x128xf32>
    %88 = vector.shape_cast %87 : vector<1x128xf32> to vector<128xf32>
    %89 = vector.shape_cast %88 : vector<128xf32> to vector<1x1x128xf32>
    %90 = vector.broadcast %89 : vector<1x1x128xf32> to vector<16x16x128xf32>
    %91 = arith.mulf %86, %90 : vector<16x16x128xf32>
    %cst_18 = arith.constant dense<0.000000e+00> : vector<16x16xf32>
    %92 = vector.multi_reduction <add>, %91, %cst_18 [2] : vector<16x16x128xf32> to vector<16x16xf32>
    %93 = vector.shape_cast %92 : vector<16x16xf32> to vector<16x16x1xf32>
    %94 = arith.addf %85, %93 : vector<16x16x1xf32>
    %95 = vector.extract_strided_slice %29 {offsets = [2, 1, 0], sizes = [16, 16, 128], strides = [1, 1, 1]} : vector<18x18x128xf32> to vector<16x16x128xf32>
    %96 = vector.extract_strided_slice %30 {offsets = [7, 0], sizes = [1, 128], strides = [1, 1]} : vector<9x128xf32> to vector<1x128xf32>
    %97 = vector.shape_cast %96 : vector<1x128xf32> to vector<128xf32>
    %98 = vector.shape_cast %97 : vector<128xf32> to vector<1x1x128xf32>
    %99 = vector.broadcast %98 : vector<1x1x128xf32> to vector<16x16x128xf32>
    %100 = arith.mulf %95, %99 : vector<16x16x128xf32>
    %cst_19 = arith.constant dense<0.000000e+00> : vector<16x16xf32>
    %101 = vector.multi_reduction <add>, %100, %cst_19 [2] : vector<16x16x128xf32> to vector<16x16xf32>
    %102 = vector.shape_cast %101 : vector<16x16xf32> to vector<16x16x1xf32>
    %103 = arith.addf %94, %102 : vector<16x16x1xf32>
    %104 = vector.extract_strided_slice %29 {offsets = [2, 2, 0], sizes = [16, 16, 128], strides = [1, 1, 1]} : vector<18x18x128xf32> to vector<16x16x128xf32>
    %105 = vector.extract_strided_slice %30 {offsets = [8, 0], sizes = [1, 128], strides = [1, 1]} : vector<9x128xf32> to vector<1x128xf32>
    %106 = vector.shape_cast %105 : vector<1x128xf32> to vector<128xf32>
    %107 = vector.shape_cast %106 : vector<128xf32> to vector<1x1x128xf32>
    %108 = vector.broadcast %107 : vector<1x1x128xf32> to vector<16x16x128xf32>
    %109 = arith.mulf %104, %108 : vector<16x16x128xf32>
    %cst_20 = arith.constant dense<0.000000e+00> : vector<16x16xf32>
    %110 = vector.multi_reduction <add>, %109, %cst_20 [2] : vector<16x16x128xf32> to vector<16x16xf32>
    %111 = vector.shape_cast %110 : vector<16x16xf32> to vector<16x16x1xf32>
    %112 = arith.addf %103, %111 : vector<16x16x1xf32>
    %c0_21 = arith.constant 0 : index
    %c0_22 = arith.constant 0 : index
    %113 = vector.load %arg3[%c0_21, %c0_22] : memref<1x1xf32, #tpu.memory_space<vmem>>, vector<1x1xf32>
    %114 = vector.shape_cast %113 : vector<1x1xf32> to vector<1x1x1xf32>
    %115 = vector.broadcast %114 : vector<1x1x1xf32> to vector<16x16x1xf32>
    %116 = arith.addf %112, %115 : vector<16x16x1xf32>
    %117 = math.tanh %116 : vector<16x16x1xf32>
    %118 = vector.shape_cast %117 : vector<16x16x1xf32> to vector<1x16x16x1xf32>
    %c0_23 = arith.constant 0 : index
    %c0_24 = arith.constant 0 : index
    %c0_25 = arith.constant 0 : index
    %c0_26 = arith.constant 0 : index
    %119 = vector.load %arg6[%c0_23, %c0_24, %c0_25, %c0_26] : memref<1x16x16x1xf32, #tpu.memory_space<vmem>>, vector<1x16x16x1xf32>
    tpu.vector_store %arg6[%c0_23, %c0_24, %c0_25, %c0_26], %118 {strides = array<i32>} : memref<1x16x16x1xf32, #tpu.memory_space<vmem>>, vector<1x16x16x1xf32>,
    return
  }
  func.func @transform_0(%arg0: i32) -> (i32, i32, i32, i32) {
    %c0_i32 = arith.constant 0 : i32
    %c0_i32_0 = arith.constant 0 : i32
    %c0_i32_1 = arith.constant 0 : i32
    %c0_i32_2 = arith.constant 0 : i32
    return %arg0, %c0_i32, %c0_i32_0, %c0_i32_1 : i32, i32, i32, i32
  }
  func.func @transform_1(%arg0: i32) -> (i32, i32) {
    %c0_i32 = arith.constant 0 : i32
    %c0_i32_0 = arith.constant 0 : i32
    %c0_i32_1 = arith.constant 0 : i32
    return %c0_i32, %c0_i32_0 : i32, i32
  }
  func.func @transform_2(%arg0: i32) -> (i32, i32) {
    %c0_i32 = arith.constant 0 : i32
    %c0_i32_0 = arith.constant 0 : i32
    %c0_i32_1 = arith.constant 0 : i32
    return %c0_i32, %c0_i32_0 : i32, i32
  }
  func.func @transform_3(%arg0: i32) -> (i32, i32) {
    %c0_i32 = arith.constant 0 : i32
    %c0_i32_0 = arith.constant 0 : i32
    %c0_i32_1 = arith.constant 0 : i32
    return %c0_i32, %c0_i32_0 : i32, i32
  }
  func.func @transform_4(%arg0: i32) -> (i32, i32) {
    %c0_i32 = arith.constant 0 : i32
    %c0_i32_0 = arith.constant 0 : i32
    %c0_i32_1 = arith.constant 0 : i32
    return %c0_i32, %c0_i32_0 : i32, i32
  }
  func.func @transform_5(%arg0: i32) -> (i32, i32, i32, i32) {
    %c0_i32 = arith.constant 0 : i32
    %c0_i32_0 = arith.constant 0 : i32
    %c0_i32_1 = arith.constant 0 : i32
    %c0_i32_2 = arith.constant 0 : i32
    return %arg0, %c0_i32, %c0_i32_0, %c0_i32_1 : i32, i32, i32, i32
  }
}

</mosaic_0001>

<llo_original>
// kernel: generator_forward.4
$region0: #{generator_forward.4}
  #allocation0 [shape = 'u32[]', space=smem, size = 0x4, offset = 0x4, fixed_abs, tag = 'smem constant byte address 0x4 - core index']
  #allocation1 [shape = 'u32[144,128]{1,0:T(1,128)}', space=vmem, size = 0x12000, scoped, tag = 'internal scratch']
  %s0 = inlined_call_operand.vmem [shape: bf16[2,42], index: 0, kind: input, shape index: {}]
  %s1 = inlined_call_operand.hbm [shape: bf16[42,12800], index: 1, kind: input, shape index: {}]
  %s2 = inlined_call_operand.vmem [shape: f32[1,12800], index: 2, kind: input, shape index: {}]
  %s3 = inlined_call_operand.vmem [shape: bf16[2,12800], index: 3, kind: output, shape index: {0}]
  %s4 = inlined_call_operand.vmem [shape: f32[1,12800], index: 4, kind: output, shape index: {1}]
  %s5 = inlined_call_operand.vmem [shape: f32[1,12800], index: 5, kind: output, shape index: {2}]
  %6 = xla_tuple %s3, %s4, %s5
  %s7 = sld [smem:[#allocation0]]
  $region65: #{generator_forward.4} parent=0
    _
  %s9 = ssub.s32 1, %s7
  %s10 = scalar_select 0, %s9, %s7
  $region1: #{generator_forward.4} parent=0
    #allocation2 [shape = 'u8[98304]{0}', space=vmem, size = 0x18000, scoped, tag = 'input window, operand 1']
    #allocation3 [shape = 's32[2]{0}', space=sflag, size = 0x8, scoped, tag = 'scoped memory for generator_forward.4']
    %11 = vsyncpa [#allocation3], 0
    %s12 = scalar_lea.sflag [#allocation3], 1
    %13 = vsyncpa %s12, 0
    loop: start=0, step=1, limit=27
    $region2: #{generator_forward.4} parent=1 // loop_pre_header
      _
    $region3: #{generator_forward.4} parent=1 // loop_header
      %s15 = sphi 0, %s19
      %p16 = scmp.ge.s32.totalorder %s15, 27
      %s22 = sphi 0, %s34
      %s23 = sphi 0, %s30
      %s24 = sphi 0, %s22
      %s25 = sphi 0, %s23
      %s26 = sphi 0, %s24
      %s27 = sphi 0, %s25
      %s37 = sphi 0, %s39
      %s40 = sphi 0, %s37
      %s41 = sphi 0, %s40
      %s57 = sphi 0, %s41
      %s63 = sphi 0, %s65
      %s66 = sphi 0, %s63
      %s67 = sphi 0, %s66
      %s83 = sphi 0, %s67
      %s89 = sphi 0, %s91
      %s92 = sphi 0, %s89
      %s93 = sphi 0, %s92
      %s109 = sphi 0, %s93
      %s117 = sphi 0, %s119
      %s120 = sphi 0, %s117
      %s121 = sphi 0, %s120
      %s137 = sphi 0, %s121
      %s145 = sphi 0, %s147
      %s148 = sphi 0, %s145
      %s149 = sphi 0, %s148
      %s165 = sphi 0, %s149
      %s173 = sphi 0, %s175
      %s176 = sphi 0, %s173
      %s177 = sphi 0, %s176
      %s193 = sphi 0, %s177
    $region4: #{generator_forward.4} parent=1 // loop_header_branch
      %18 = sbr.rel (%p16) target = $region8
    $region5: #{generator_forward.4} parent=1 // loop_body
      %s20 = ssub.s32 %s15, 1
      %s21 = ssub.s32 %s15, 2
      %s28 = sadd.s32 1, %s23
      %p29 = scmp.ge.s32.totalorder %s28, 25
      %s30 = scalar_select %p29, 0, %s28
      %s31 = sadd.s32 1, %s22
      %s32 = scalar_select %p29, %s31, %s22
      %p33 = scmp.ge.s32.totalorder %s32, 1
      %s34 = scalar_select %p33, 0, %s32
      %s35 = ssub.s32 %s22, %s34
      %p36 = scmp.eq.s32.totalorder %s35, 0
      %s38 = sadd.s32 %s37, 1
      %s39 = scalar_select %p36, %s37, %s38
      %p42 = pneg %p36
      %p43 = scmp.eq.s32.totalorder %s15, 24
      %p44 = por %p42, %p43
      %p45 = scmp.ne.s32.totalorder %s37, %s40
      %p46 = scmp.eq.s32.totalorder %s15, 0
      %p47 = por %p45, %p46
      %p48 = scmp.ne.s32.totalorder %s37, %s40
      %p49 = scmp.eq.s32.totalorder %s20, 24
      %p50 = por %p48, %p49
      %p51 = scmp.ne.s32.totalorder %s40, %s41
      %p52 = scmp.eq.s32.totalorder %s20, 0
      %p53 = por %p51, %p52
      %p54 = scmp.ne.s32.totalorder %s40, %s41
      %p55 = scmp.eq.s32.totalorder %s21, 24
      %p56 = por %p54, %p55
      %p58 = scmp.ne.s32.totalorder %s41, %s57
      %p59 = scmp.eq.s32.totalorder %s21, 0
      %p60 = por %p58, %p59
      %s61 = ssub.s32 %s23, %s30
      %p62 = scmp.eq.s32.totalorder %s61, 0
      %s64 = sadd.s32 %s63, 1
      %s65 = scalar_select %p62, %s63, %s64
      %p68 = pneg %p62
      %p69 = scmp.eq.s32.totalorder %s15, 24
      %p70 = por %p68, %p69
      %p71 = scmp.ne.s32.totalorder %s63, %s66
      %p72 = scmp.eq.s32.totalorder %s15, 0
      %p73 = por %p71, %p72
      %p74 = scmp.ne.s32.totalorder %s63, %s66
      %p75 = scmp.eq.s32.totalorder %s20, 24
      %p76 = por %p74, %p75
      %p77 = scmp.ne.s32.totalorder %s66, %s67
      %p78 = scmp.eq.s32.totalorder %s20, 0
      %p79 = por %p77, %p78
      %p80 = scmp.ne.s32.totalorder %s66, %s67
      %p81 = scmp.eq.s32.totalorder %s21, 24
      %p82 = por %p80, %p81
      %p84 = scmp.ne.s32.totalorder %s67, %s83
      %p85 = scmp.eq.s32.totalorder %s21, 0
      %p86 = por %p84, %p85
      %s87 = ssub.s32 %s23, %s30
      %p88 = scmp.eq.s32.totalorder %s87, 0
      %s90 = sadd.s32 %s89, 1
      %s91 = scalar_select %p88, %s89, %s90
      %p94 = pneg %p88
      %p95 = scmp.eq.s32.totalorder %s15, 24
      %p96 = por %p94, %p95
      %p97 = scmp.ne.s32.totalorder %s89, %s92
      %p98 = scmp.eq.s32.totalorder %s15, 0
      %p99 = por %p97, %p98
      %p100 = scmp.ne.s32.totalorder %s89, %s92
      %p101 = scmp.eq.s32.totalorder %s20, 24
      %p102 = por %p100, %p101
      %p103 = scmp.ne.s32.totalorder %s92, %s93
      %p104 = scmp.eq.s32.totalorder %s20, 0
      %p105 = por %p103, %p104
      %p106 = scmp.ne.s32.totalorder %s92, %s93
      %p107 = scmp.eq.s32.totalorder %s21, 24
      %p108 = por %p106, %p107
      %p110 = scmp.ne.s32.totalorder %s93, %s109
      %p111 = scmp.eq.s32.totalorder %s21, 0
      %p112 = por %p110, %p111
      %s113 = ssub.s32 %s22, %s34
      %s114 = ssub.s32 %s23, %s30
      %s115 = sor.u32 %s113, %s114
      %p116 = scmp.eq.s32.totalorder %s115, 0
      %s118 = sadd.s32 %s117, 1
      %s119 = scalar_select %p116, %s117, %s118
      %p122 = pneg %p116
      %p123 = scmp.eq.s32.totalorder %s15, 24
      %p124 = por %p122, %p123
      %p125 = scmp.ne.s32.totalorder %s117, %s120
      %p126 = scmp.eq.s32.totalorder %s15, 0
      %p127 = por %p125, %p126
      %p128 = scmp.ne.s32.totalorder %s117, %s120
      %p129 = scmp.eq.s32.totalorder %s20, 24
      %p130 = por %p128, %p129
      %p131 = scmp.ne.s32.totalorder %s120, %s121
      %p132 = scmp.eq.s32.totalorder %s20, 0
      %p133 = por %p131, %p132
      %p134 = scmp.ne.s32.totalorder %s120, %s121
      %p135 = scmp.eq.s32.totalorder %s21, 24
      %p136 = por %p134, %p135
      %p138 = scmp.ne.s32.totalorder %s121, %s137
      %p139 = scmp.eq.s32.totalorder %s21, 0
      %p140 = por %p138, %p139
      %s141 = ssub.s32 %s22, %s34
      %s142 = ssub.s32 %s23, %s30
      %s143 = sor.u32 %s141, %s142
      %p144 = scmp.eq.s32.totalorder %s143, 0
      %s146 = sadd.s32 %s145, 1
      %s147 = scalar_select %p144, %s145, %s146
      %p150 = pneg %p144
      %p151 = scmp.eq.s32.totalorder %s15, 24
      %p152 = por %p150, %p151
      %p153 = scmp.ne.s32.totalorder %s145, %s148
      %p154 = scmp.eq.s32.totalorder %s15, 0
      %p155 = por %p153, %p154
      %p156 = scmp.ne.s32.totalorder %s145, %s148
      %p157 = scmp.eq.s32.totalorder %s20, 24
      %p158 = por %p156, %p157
      %p159 = scmp.ne.s32.totalorder %s148, %s149
      %p160 = scmp.eq.s32.totalorder %s20, 0
      %p161 = por %p159, %p160
      %p162 = scmp.ne.s32.totalorder %s148, %s149
      %p163 = scmp.eq.s32.totalorder %s21, 24
      %p164 = por %p162, %p163
      %p166 = scmp.ne.s32.totalorder %s149, %s165
      %p167 = scmp.eq.s32.totalorder %s21, 0
      %p168 = por %p166, %p167
      %s169 = ssub.s32 %s22, %s34
      %s170 = ssub.s32 %s23, %s30
      %s171 = sor.u32 %s169, %s170
      %p172 = scmp.eq.s32.totalorder %s171, 0
      %s174 = sadd.s32 %s173, 1
      %s175 = scalar_select %p172, %s173, %s174
      %p178 = pneg %p172
      %p179 = scmp.eq.s32.totalorder %s15, 24
      %p180 = por %p178, %p179
      %p181 = scmp.ne.s32.totalorder %s173, %s176
      %p182 = scmp.eq.s32.totalorder %s15, 0
      %p183 = por %p181, %p182
      %p184 = scmp.ne.s32.totalorder %s173, %s176
      %p185 = scmp.eq.s32.totalorder %s20, 24
      %p186 = por %p184, %p185
      %p187 = scmp.ne.s32.totalorder %s176, %s177
      %p188 = scmp.eq.s32.totalorder %s20, 0
      %p189 = por %p187, %p188
      %p190 = scmp.ne.s32.totalorder %s176, %s177
      %p191 = scmp.eq.s32.totalorder %s21, 24
      %p192 = por %p190, %p191
      %p194 = scmp.ne.s32.totalorder %s177, %s193
      %p195 = scmp.eq.s32.totalorder %s21, 0
      %p196 = por %p194, %p195
      %p197 = scmp.le.s32.totalorder 1, %s15
      %p198 = scmp.lt.s32.totalorder %s15, 26
      %p199 = pnand %p197, %p198
      %p200 = pneg %p199
      // Predicated region
      $region9: #{generator_forward.4} parent=5 // pred_check
        _
      $region10: #{generator_forward.4} parent=5 // pred_check_branch
        %202 = sbr.rel (%p199) target = $region12
      $region11: #{generator_forward.4} parent=5 // pred_region
        %s203 = ssub.s32 %s15, 1
        // Predicated region
        $region13: #{generator_forward.4} parent=11 // pred_check
          %p204 = pneg %p53
        $region14: #{generator_forward.4} parent=11 // pred_check_branch
          %206 = sbr.rel (%p204) target = $region16
        $region15: #{generator_forward.4} parent=11 // pred_region
          %p207 = scmp.lt.s32.totalorder %s24, 0
          %s208 = scalar_select %p207, %s24, 0
          %s209 = scalar_lea.vmem %s0, %s208
        $region16: #{generator_forward.4} parent=11 // pred_fallthru
          _
      $region12: #{generator_forward.4} parent=5 // pred_fallthru
        _
      %p210 = scmp.lt.s32.totalorder %s15, 25
      // Predicated region
      $region17: #{generator_forward.4} parent=5 // pred_check
        %p211 = pneg %p210
      $region18: #{generator_forward.4} parent=5 // pred_check_branch
        %213 = sbr.rel (%p211) target = $region20
      $region19: #{generator_forward.4} parent=5 // pred_region
        // Predicated region
        $region21: #{generator_forward.4} parent=19 // pred_check
          %p214 = pneg %p73
        $region22: #{generator_forward.4} parent=19 // pred_check_branch
          %216 = sbr.rel (%p214) target = $region24
        $region23: #{generator_forward.4} parent=19 // pred_region
          %s217 = sand.u32 %s63, 1
          %s218 = scalar_lea.sflag [#allocation3], %s217
          %s219 = sand.u32 %s63, 1
          %s220 = smul.addr %s219, 96
          %s221 = scalar_lea.vmem [#allocation2], %s220
          %s222 = smul.u32 4, %s23
          %s224 = ssub.s32 1536, 1536
          %225 = vsyncadd %s218, %s224
          %s226 = smul.addr %s222, 64
          %s227 = scalar_lea.hbm %s1, %s226
          %s228 = sshll.u32 %s221, 4
          %s229 = int_to_ptr.vmem [resolvable:$true] %s228
          %234 = dma.hbm_to_vmem [thread:$0]  %s227, 1536, %s229, %s218, 6400, 256, 16
        $region24: #{generator_forward.4} parent=19 // pred_fallthru
          _
        // Predicated region
        $region25: #{generator_forward.4} parent=19 // pred_check
          %p235 = pneg %p99
        $region26: #{generator_forward.4} parent=19 // pred_check_branch
          %237 = sbr.rel (%p235) target = $region28
        $region27: #{generator_forward.4} parent=19 // pred_region
          %s238 = smul.u32 4, %s23
          %p239 = scmp.lt.s32.totalorder %s238, 99
          %s240 = scalar_select %p239, %s238, 99
          %s241 = scalar_lea.vmem %s2, %s240
          %s242 = smul.u32 4, %s23
        $region28: #{generator_forward.4} parent=19 // pred_fallthru
          _
      $region20: #{generator_forward.4} parent=5 // pred_fallthru
        _
      %p243 = scmp.le.s32.totalorder 1, %s15
      %p244 = scmp.lt.s32.totalorder %s15, 26
      %p245 = pnand %p243, %p244
      %p246 = pneg %p245
      // Predicated region
      $region29: #{generator_forward.4} parent=5 // pred_check
        _
      $region30: #{generator_forward.4} parent=5 // pred_check_branch
        %248 = sbr.rel (%p245) target = $region32
      $region31: #{generator_forward.4} parent=5 // pred_region
        %s249 = ssub.s32 %s15, 1
        %s250 = sand.u32 %s66, 1
        %s251 = scalar_lea.sflag [#allocation3], %s250
        %s252 = sand.u32 %s66, 1
        %s253 = smul.addr %s252, 96
        %s254 = scalar_lea.vmem [#allocation2], %s253
        // Predicated region
        $region33: #{generator_forward.4} parent=31 // pred_check
          %p255 = pneg %p79
        $region34: #{generator_forward.4} parent=31 // pred_check_branch
          %257 = sbr.rel (%p255) target = $region36
        $region35: #{generator_forward.4} parent=31 // pred_region
          %258 = dma.done %s251, 1536
        $region36: #{generator_forward.4} parent=31 // pred_fallthru
          _
        %p259 = scmp.lt.s32.totalorder %s24, 0
        %s260 = scalar_select %p259, %s24, 0
        %s261 = scalar_lea.vmem %s0, %s260
        %p262 = pneg %p53
        %p263 = pneg %p50
        %s264 = sand.u32 %s66, 1
        %s265 = scalar_lea.sflag [#allocation3], %s264
        %s266 = sand.u32 %s66, 1
        %s267 = smul.addr %s266, 96
        %s268 = scalar_lea.vmem [#allocation2], %s267
        %p269 = pneg %p79
        %p270 = pneg %p76
        %s271 = smul.u32 4, %s25
        %p272 = scmp.lt.s32.totalorder %s271, 99
        %s273 = scalar_select %p272, %s271, 99
        %s274 = scalar_lea.vmem %s2, %s273
        %p275 = pneg %p105
        %p276 = pneg %p102
        %p277 = pneg %p133
        %p278 = pneg %p130
        %s279 = smul.u32 4, %s25
        %p280 = scmp.lt.s32.totalorder %s24, 0
        %s281 = scalar_select %p280, %s24, 0
        %p282 = scmp.lt.s32.totalorder %s279, 99
        %s283 = scalar_select %p282, %s279, 99
        %s284 = smul.addr %s281, 100
        %s285 = sadd.s32 %s283, %s284
        %s286 = scalar_lea.vmem %s3, %s285
        %p287 = pneg %p161
        %p288 = pneg %p158
        %s289 = smul.u32 4, %s25
        %p290 = scmp.lt.s32.totalorder %s24, 0
        %s291 = scalar_select %p290, %s24, 0
        %p292 = scmp.lt.s32.totalorder %s289, 99
        %s293 = scalar_select %p292, %s289, 99
        %s294 = smul.addr %s291, 100
        %s295 = sadd.s32 %s293, %s294
        %s296 = scalar_lea.vmem %s4, %s295
        %p297 = pneg %p189
        %p298 = pneg %p186
        %s299 = smul.u32 4, %s25
        %p300 = scmp.lt.s32.totalorder %s24, 0
        %s301 = scalar_select %p300, %s24, 0
        %p302 = scmp.lt.s32.totalorder %s299, 99
        %s303 = scalar_select %p302, %s299, 99
        %s304 = smul.addr %s301, 100
        %s305 = sadd.s32 %s303, %s304
        %s306 = scalar_lea.vmem %s5, %s305
        %p307 = scmp.lt.s32.totalorder %s24, 0
        %s308 = scalar_select %p307, %s24, 0
        %s309 = scalar_lea.vmem %s0, %s308
        %s310 = smul.u32 4, %s25
        %s311 = smul.u32 4, %s25
        %p312 = scmp.lt.s32.totalorder %s311, 99
        %s313 = scalar_select %p312, %s311, 99
        %s314 = scalar_lea.vmem %s2, %s313
        %s315 = smul.u32 4, %s25
        %s316 = smul.u32 4, %s25
        %p317 = scmp.lt.s32.totalorder %s24, 0
        %s318 = scalar_select %p317, %s24, 0
        %p319 = scmp.lt.s32.totalorder %s316, 99
        %s320 = scalar_select %p319, %s316, 99
        %s321 = smul.addr %s318, 100
        %s322 = sadd.s32 %s320, %s321
        %s323 = scalar_lea.vmem %s3, %s322
        %s324 = smul.u32 4, %s25
        %s325 = smul.u32 4, %s25
        %p326 = scmp.lt.s32.totalorder %s24, 0
        %s327 = scalar_select %p326, %s24, 0
        %p328 = scmp.lt.s32.totalorder %s325, 99
        %s329 = scalar_select %p328, %s325, 99
        %s330 = smul.addr %s327, 100
        %s331 = sadd.s32 %s329, %s330
        %s332 = scalar_lea.vmem %s4, %s331
        %s333 = smul.u32 4, %s25
        %s334 = smul.u32 4, %s25
        %p335 = scmp.lt.s32.totalorder %s24, 0
        %s336 = scalar_select %p335, %s24, 0
        %p337 = scmp.lt.s32.totalorder %s334, 99
        %s338 = scalar_select %p337, %s334, 99
        %s339 = smul.addr %s336, 100
        %s340 = sadd.s32 %s338, %s339
        %s341 = scalar_lea.vmem %s5, %s340
        %s342 = smul.u32 4, %s25
        %v344 = vld [vmem:[%s309] sm:$0x1]
        %v345 = vld [vmem:[%s254] sm:$0xff]
        %v346 = vld [vmem:[%s254 + $0x8] sm:$0xff]
        %v347 = vld [vmem:[%s254 + $0x10] sm:$0xff]
        %v348 = vld [vmem:[%s254 + $0x18] sm:$0xff]
        %v349 = vld [vmem:[%s254 + $0x20] sm:$0xff]
        %v350 = vld [vmem:[%s254 + $0x28] sm:$0xff]
        %v351 = vld [vmem:[%s254 + $0x30] sm:$0xff]
        %v352 = vld [vmem:[%s254 + $0x38] sm:$0xff]
        %v353 = vld [vmem:[%s254 + $0x40] sm:$0xff]
        %v354 = vld [vmem:[%s254 + $0x48] sm:$0xff]
        %v355 = vld [vmem:[%s254 + $0x50] sm:$0x11]
        %v356 = vld [vmem:[%s254 + $0x58] sm:$0x11]
        %v357 = vld [vmem:[%s314] sm:$0xf]
        %v359 = vlaneseq
        %v360 = vshrl.u32 %v359, 7
        %v361 = vsub.s32 0, %v360
        %v362 = vrot.slane %v357, %v361
        %v363 = vlaneseq
        %v364 = vshrl.u32 %v363, 7
        %v365 = vsub.s32 1, %v364
        %v366 = vrot.slane %v357, %v365
        %v367 = vlaneseq
        %v368 = vshrl.u32 %v367, 7
        %v369 = vsub.s32 2, %v368
        %v370 = vrot.slane %v357, %v369
        %v371 = vlaneseq
        %v372 = vshrl.u32 %v371, 7
        %v373 = vsub.s32 3, %v372
        %v374 = vrot.slane %v357, %v373
        %v391 = vunpack.c.l.b16 %v345
        %v392 = vunpack.c.h.b16 %v345
        %v393 = vunpack.c.l.b16 %v346
        %v394 = vunpack.c.h.b16 %v346
        %v395 = vunpack.c.l.b16 %v347
        %v396 = vunpack.c.h.b16 %v347
        %v397 = vunpack.c.l.b16 %v348
        %v398 = vunpack.c.h.b16 %v348
        %v399 = vunpack.c.l.b16 %v349
        %v400 = vunpack.c.h.b16 %v349
        %v401 = vunpack.c.l.b16 %v350
        %v402 = vunpack.c.h.b16 %v350
        %v403 = vunpack.c.l.b16 %v351
        %v404 = vunpack.c.h.b16 %v351
        %v405 = vunpack.c.l.b16 %v352
        %v406 = vunpack.c.h.b16 %v352
        %v407 = vunpack.c.l.b16 %v353
        %v408 = vunpack.c.h.b16 %v353
        %v409 = vunpack.c.l.b16 %v354
        %v410 = vunpack.c.h.b16 %v354
        %v411 = vunpack.c.l.b16 %v355
        %v412 = vunpack.c.h.b16 %v355
        %v413 = vunpack.c.l.b16 %v356
        %v414 = vunpack.c.h.b16 %v356
        %v415 = vpack.c.b16 %v395, %v391
        %v416 = vpack.c.b16 %v396, %v392
        %v417 = vpack.c.b16 %v397, %v393
        %v418 = vpack.c.b16 %v398, %v394
        %v419 = vpack.c.b16 %v403, %v399
        %v420 = vpack.c.b16 %v404, %v400
        %v421 = vpack.c.b16 %v405, %v401
        %v422 = vpack.c.b16 %v406, %v402
        %v423 = vpack.c.b16 %v411, %v407
        %v424 = vpack.c.b16 %v412, %v408
        %v425 = vpack.c.b16 %v413, %v409
        %v426 = vpack.c.b16 %v414, %v410
        %vm435 = vcmask 343040
        %v437 = vsel %vm435, %v344, 0
        %vm439 = vcmask 1044480
        %v441 = vsel %vm439, %v423, 0
        %v444 = vsel %vm439, %v424, 0
        %v447 = vsel %vm439, %v425, 0
        %v450 = vsel %vm439, %v426, 0
        %452 = vmatprep.subr.bf16.mxu0 %v416
        %453 = vmatpush1.bf16.msra.mxu0 %v415
        %454 = vmatprep.subr.bf16.mxu0 %v420
        %455 = vmatpush1.bf16.msra.mxu0 %v419
        %456 = vmatprep.subr.bf16.mxu0 %v444
        %457 = vmatpush1.bf16.msra.mxu0 %v441
        %458 = vmatprep.subr.bf16.mxu0 0
        %459 = vmatpush1.bf16.msra.mxu0 0
        %460 = vmatprep.subr.bf16.mxu0 0
        %461 = vmatpush1.bf16.msra.mxu0 0
        %462 = vmatprep.subr.bf16.mxu0 0
        %463 = vmatpush1.bf16.msra.mxu0 0
        %464 = vmatprep.subr.bf16.mxu0 0
        %465 = vmatpush1.bf16.msra.mxu0 0
        %466 = vmatprep.subr.bf16.mxu0 0
        %467 = vmatpush1.bf16.msra.mxu0 0
        %468 = vmatprep.subr.bf16.mxu0 0
        %469 = vmatpush1.bf16.msra.mxu0 0
        %470 = vmatprep.subr.bf16.mxu0 0
        %471 = vmatpush1.bf16.msra.mxu0 0
        %472 = vmatprep.subr.bf16.mxu0 0
        %473 = vmatpush1.bf16.msra.mxu0 0
        %474 = vmatprep.subr.bf16.mxu0 0
        %475 = vmatpush1.bf16.msra.mxu0 0
        %476 = vmatprep.subr.bf16.mxu0 0
        %477 = vmatpush1.bf16.msra.mxu0 0
        %478 = vmatprep.subr.bf16.mxu0 0
        %479 = vmatpush1.bf16.msra.mxu0 0
        %480 = vmatprep.subr.bf16.mxu0 0
        %481 = vmatpush1.bf16.msra.mxu0 0
        %482 = vmatprep.subr.bf16.mxu0 0
        %483 = vmatpush1.bf16.msra.mxu0 0
        %484 = vmatprep.mubr.bf16.mxu0 0
        %485 = vmatmul.mubr.bf16.gmra.mrb[0].mxu0 %v437
        %v486 = vpop.f32.mrb[0].mxu0
        %v487 = vadd.f32 %v362, %v486
        %v488 = vpop.f32.mrb[0].mxu0
        %v489 = vadd.f32 %v366, %v488
        %v490 = vpop.f32.mrb[0].mxu0
        %v491 = vpop.f32.mrb[0].mxu0
        %492 = vdwg.mxu0
        %493 = vmatprep.subr.bf16.mxu0 %v418
        %494 = vmatpush1.bf16.msra.mxu0 %v417
        %495 = vmatprep.subr.bf16.mxu0 %v422
        %496 = vmatpush1.bf16.msra.mxu0 %v421
        %497 = vmatprep.subr.bf16.mxu0 %v450
        %498 = vmatpush1.bf16.msra.mxu0 %v447
        %499 = vmatprep.subr.bf16.mxu0 0
        %500 = vmatpush1.bf16.msra.mxu0 0
        %501 = vmatprep.subr.bf16.mxu0 0
        %502 = vmatpush1.bf16.msra.mxu0 0
        %503 = vmatprep.subr.bf16.mxu0 0
        %504 = vmatpush1.bf16.msra.mxu0 0
        %505 = vmatprep.subr.bf16.mxu0 0
        %506 = vmatpush1.bf16.msra.mxu0 0
        %507 = vmatprep.subr.bf16.mxu0 0
        %508 = vmatpush1.bf16.msra.mxu0 0
        %509 = vmatprep.subr.bf16.mxu0 0
        %510 = vmatpush1.bf16.msra.mxu0 0
        %511 = vmatprep.subr.bf16.mxu0 0
        %512 = vmatpush1.bf16.msra.mxu0 0
        %513 = vmatprep.subr.bf16.mxu0 0
        %514 = vmatpush1.bf16.msra.mxu0 0
        %515 = vmatprep.subr.bf16.mxu0 0
        %516 = vmatpush1.bf16.msra.mxu0 0
        %517 = vmatprep.subr.bf16.mxu0 0
        %518 = vmatpush1.bf16.msra.mxu0 0
        %519 = vmatprep.subr.bf16.mxu0 0
        %520 = vmatpush1.bf16.msra.mxu0 0
        %521 = vmatprep.subr.bf16.mxu0 0
        %522 = vmatpush1.bf16.msra.mxu0 0
        %523 = vmatprep.subr.bf16.mxu0 0
        %524 = vmatpush1.bf16.msra.mxu0 0
        %525 = vmatprep.mubr.bf16.mxu0 0
        %526 = vmatmul.mubr.bf16.gmra.mrb[0].mxu0 %v437
        %v527 = vpop.f32.mrb[0].mxu0
        %v528 = vadd.f32 %v370, %v527
        %v529 = vpop.f32.mrb[0].mxu0
        %v530 = vadd.f32 %v374, %v529
        %v531 = vpop.f32.mrb[0].mxu0
        %v532 = vpop.f32.mrb[0].mxu0
        %533 = vdwg.mxu0
        %vm534 = vcmask 1041408
        %v535 = vsel %vm534, %v487, 0.0
        %v536 = vrot.slane %v535, 4
        %v537 = vadd.f32 %v535, %v536
        %v538 = vrot.slane %v537, 2
        %v539 = vadd.f32 %v537, %v538
        %v540 = vrot.slane %v539, 1
        %v541 = vadd.f32 %v539, %v540
        %v542 = vsel %vm534, %v489, 0.0
        %v543 = vrot.slane %v542, 4
        %v544 = vadd.f32 %v542, %v543
        %v545 = vrot.slane %v544, 2
        %v546 = vadd.f32 %v544, %v545
        %v547 = vrot.slane %v546, 1
        %v548 = vadd.f32 %v546, %v547
        %v549 = vsel %vm534, %v528, 0.0
        %v550 = vrot.slane %v549, 4
        %v551 = vadd.f32 %v549, %v550
        %v552 = vrot.slane %v551, 2
        %v553 = vadd.f32 %v551, %v552
        %v554 = vrot.slane %v553, 1
        %v555 = vadd.f32 %v553, %v554
        %v556 = vsel %vm534, %v530, 0.0
        %v557 = vrot.slane %v556, 4
        %v558 = vadd.f32 %v556, %v557
        %v559 = vrot.slane %v558, 2
        %v560 = vadd.f32 %v558, %v559
        %v561 = vrot.slane %v560, 1
        %v562 = vadd.f32 %v560, %v561
        %v567 = vcombine.low %v541, %v548
        %v568 = vcombine.low %v555, %v562
        %v570 = vunpack.c.l.s4 1966171168
        %v571 = vunpack.c.0.s8 %v570
        %v572 = vlaneseq
        %v573 = vshrl.u32 %v572, 7
        %v574 = vsub.s32 %v571, %v573
        %v575 = vrot.slane %v567, %v574
        %v577 = vunpack.c.l.s4 1966171168
        %v578 = vunpack.c.0.s8 %v577
        %v579 = vlaneseq
        %v580 = vshrl.u32 %v579, 7
        %v581 = vsub.s32 %v578, %v580
        %v582 = vrot.slane %v568, %v581
        %v583 = vcombine.low %v575, %v582
        %v585 = vunpack.c.l.s4 1966171168
        %v586 = vunpack.c.0.s8 %v585
        %v587 = vlaneseq
        %v588 = vshrl.u32 %v587, 7
        %v589 = vsub.s32 %v586, %v588
        %v590 = vrot.slane %v583, %v589
        %v592 = vlaneseq
        %vm593 = vcmp.ge.s32.totalorder %v592, 0
        %vm594 = vcmp.lt.s32.totalorder %v592, 512
        %vm595 = vmand %vm593, %vm594
        %596 = vst.msk [vmem:[%s332] sm:$0xf] %vm595, %v590
        %v597 = vmul.f32 %v487, %v487
        %v598 = vmul.f32 %v489, %v489
        %v599 = vmul.f32 %v528, %v528
        %v600 = vmul.f32 %v530, %v530
        %v601 = vsel %vm534, %v597, 0.0
        %v602 = vrot.slane %v601, 4
        %v603 = vadd.f32 %v601, %v602
        %v604 = vrot.slane %v603, 2
        %v605 = vadd.f32 %v603, %v604
        %v606 = vrot.slane %v605, 1
        %v607 = vadd.f32 %v605, %v606
        %v608 = vsel %vm534, %v598, 0.0
        %v609 = vrot.slane %v608, 4
        %v610 = vadd.f32 %v608, %v609
        %v611 = vrot.slane %v610, 2
        %v612 = vadd.f32 %v610, %v611
        %v613 = vrot.slane %v612, 1
        %v614 = vadd.f32 %v612, %v613
        %v615 = vsel %vm534, %v599, 0.0
        %v616 = vrot.slane %v615, 4
        %v617 = vadd.f32 %v615, %v616
        %v618 = vrot.slane %v617, 2
        %v619 = vadd.f32 %v617, %v618
        %v620 = vrot.slane %v619, 1
        %v621 = vadd.f32 %v619, %v620
        %v622 = vsel %vm534, %v600, 0.0
        %v623 = vrot.slane %v622, 4
        %v624 = vadd.f32 %v622, %v623
        %v625 = vrot.slane %v624, 2
        %v626 = vadd.f32 %v624, %v625
        %v627 = vrot.slane %v626, 1
        %v628 = vadd.f32 %v626, %v627
        %v633 = vcombine.low %v607, %v614
        %v634 = vcombine.low %v621, %v628
        %v636 = vunpack.c.l.s4 1966171168
        %v637 = vunpack.c.0.s8 %v636
        %v638 = vlaneseq
        %v639 = vshrl.u32 %v638, 7
        %v640 = vsub.s32 %v637, %v639
        %v641 = vrot.slane %v633, %v640
        %v643 = vunpack.c.l.s4 1966171168
        %v644 = vunpack.c.0.s8 %v643
        %v645 = vlaneseq
        %v646 = vshrl.u32 %v645, 7
        %v647 = vsub.s32 %v644, %v646
        %v648 = vrot.slane %v634, %v647
        %v649 = vcombine.low %v641, %v648
        %v651 = vunpack.c.l.s4 1966171168
        %v652 = vunpack.c.0.s8 %v651
        %v653 = vlaneseq
        %v654 = vshrl.u32 %v653, 7
        %v655 = vsub.s32 %v652, %v654
        %v656 = vrot.slane %v649, %v655
        %658 = vst.msk [vmem:[%s341] sm:$0xf] %vm595, %v656
        %v659 = vpack.c.bf16 %v487, %v487
        %v660 = vpack.c.bf16 %v489, %v489
        %v661 = vpack.c.bf16 %v528, %v528
        %v662 = vpack.c.bf16 %v530, %v530
        %v667 = vcombine.low %v659, %v660
        %v668 = vcombine.low %v661, %v662
        %v670 = vunpack.c.l.s4 1966171168
        %v671 = vunpack.c.0.s8 %v670
        %v672 = vlaneseq
        %v673 = vshrl.u32 %v672, 7
        %v674 = vsub.s32 %v671, %v673
        %v675 = vrot.slane %v667, %v674
        %v677 = vunpack.c.l.s4 1966171168
        %v678 = vunpack.c.0.s8 %v677
        %v679 = vlaneseq
        %v680 = vshrl.u32 %v679, 7
        %v681 = vsub.s32 %v678, %v680
        %v682 = vrot.slane %v668, %v681
        %v683 = vcombine.low %v675, %v682
        %v685 = vunpack.c.l.s4 1966171168
        %v686 = vunpack.c.0.s8 %v685
        %v687 = vlaneseq
        %v688 = vshrl.u32 %v687, 7
        %v689 = vsub.s32 %v686, %v688
        %v690 = vrot.slane %v683, %v689
        %692 = vst [vmem:[%s323] sm:$0xf] %v690
        %s693 = smul.u32 4, %s25
        %p694 = scmp.lt.s32.totalorder %s24, 0
        %s695 = scalar_select %p694, %s24, 0
        %p696 = scmp.lt.s32.totalorder %s693, 99
        %s697 = scalar_select %p696, %s693, 99
        %s698 = smul.addr %s695, 100
        %s699 = sadd.s32 %s697, %s698
        %s700 = scalar_lea.vmem %s3, %s699
        %s701 = smul.u32 4, %s25
        %p702 = scmp.lt.s32.totalorder %s24, 0
        %s703 = scalar_select %p702, %s24, 0
        %p704 = scmp.lt.s32.totalorder %s701, 99
        %s705 = scalar_select %p704, %s701, 99
        %s706 = smul.addr %s703, 100
        %s707 = sadd.s32 %s705, %s706
        %s708 = scalar_lea.vmem %s4, %s707
        %s709 = smul.u32 4, %s25
        %p710 = scmp.lt.s32.totalorder %s24, 0
        %s711 = scalar_select %p710, %s24, 0
        %p712 = scmp.lt.s32.totalorder %s709, 99
        %s713 = scalar_select %p712, %s709, 99
        %s714 = smul.addr %s711, 100
        %s715 = sadd.s32 %s713, %s714
        %s716 = scalar_lea.vmem %s5, %s715
        // Predicated region
        $region37: #{generator_forward.4} parent=31 // pred_check
          %p717 = pneg %p130
        $region38: #{generator_forward.4} parent=31 // pred_check_branch
          %719 = sbr.rel (%p717) target = $region40
        $region39: #{generator_forward.4} parent=31 // pred_region
          %s720 = smul.u32 4, %s25
        $region40: #{generator_forward.4} parent=31 // pred_fallthru
          _
        // Predicated region
        $region41: #{generator_forward.4} parent=31 // pred_check
          %p721 = pneg %p158
        $region42: #{generator_forward.4} parent=31 // pred_check_branch
          %723 = sbr.rel (%p721) target = $region44
        $region43: #{generator_forward.4} parent=31 // pred_region
          %s724 = smul.u32 4, %s25
        $region44: #{generator_forward.4} parent=31 // pred_fallthru
          _
        // Predicated region
        $region45: #{generator_forward.4} parent=31 // pred_check
          %p725 = pneg %p186
        $region46: #{generator_forward.4} parent=31 // pred_check_branch
          %727 = sbr.rel (%p725) target = $region48
        $region47: #{generator_forward.4} parent=31 // pred_region
          %s728 = smul.u32 4, %s25
        $region48: #{generator_forward.4} parent=31 // pred_fallthru
          _
      $region32: #{generator_forward.4} parent=5 // pred_fallthru
        _
      %p729 = scmp.le.s32.totalorder 2, %s15
      // Predicated region
      $region49: #{generator_forward.4} parent=5 // pred_check
        %p730 = pneg %p729
      $region50: #{generator_forward.4} parent=5 // pred_check_branch
        %732 = sbr.rel (%p730) target = $region52
      $region51: #{generator_forward.4} parent=5 // pred_region
        %s733 = ssub.s32 %s15, 2
        // Predicated region
        $region53: #{generator_forward.4} parent=51 // pred_check
          %p734 = pneg %p136
        $region54: #{generator_forward.4} parent=51 // pred_check_branch
          %736 = sbr.rel (%p734) target = $region56
        $region55: #{generator_forward.4} parent=51 // pred_region
          %s737 = smul.u32 4, %s27
          %p738 = scmp.lt.s32.totalorder %s26, 0
          %s739 = scalar_select %p738, %s26, 0
          %p740 = scmp.lt.s32.totalorder %s737, 99
          %s741 = scalar_select %p740, %s737, 99
          %s742 = smul.addr %s739, 100
          %s743 = sadd.s32 %s741, %s742
          %s744 = scalar_lea.vmem %s3, %s743
        $region56: #{generator_forward.4} parent=51 // pred_fallthru
          _
        // Predicated region
        $region57: #{generator_forward.4} parent=51 // pred_check
          %p745 = pneg %p164
        $region58: #{generator_forward.4} parent=51 // pred_check_branch
          %747 = sbr.rel (%p745) target = $region60
        $region59: #{generator_forward.4} parent=51 // pred_region
          %s748 = smul.u32 4, %s27
          %p749 = scmp.lt.s32.totalorder %s26, 0
          %s750 = scalar_select %p749, %s26, 0
          %p751 = scmp.lt.s32.totalorder %s748, 99
          %s752 = scalar_select %p751, %s748, 99
          %s753 = smul.addr %s750, 100
          %s754 = sadd.s32 %s752, %s753
          %s755 = scalar_lea.vmem %s4, %s754
        $region60: #{generator_forward.4} parent=51 // pred_fallthru
          _
        // Predicated region
        $region61: #{generator_forward.4} parent=51 // pred_check
          %p756 = pneg %p192
        $region62: #{generator_forward.4} parent=51 // pred_check_branch
          %758 = sbr.rel (%p756) target = $region64
        $region63: #{generator_forward.4} parent=51 // pred_region
          %s759 = smul.u32 4, %s27
          %p760 = scmp.lt.s32.totalorder %s26, 0
          %s761 = scalar_select %p760, %s26, 0
          %p762 = scmp.lt.s32.totalorder %s759, 99
          %s763 = scalar_select %p762, %s759, 99
          %s764 = smul.addr %s761, 100
          %s765 = sadd.s32 %s763, %s764
          %s766 = scalar_lea.vmem %s5, %s765
        $region64: #{generator_forward.4} parent=51 // pred_fallthru
          _
      $region52: #{generator_forward.4} parent=5 // pred_fallthru
        _
    $region6: #{generator_forward.4} parent=1 // loop_footer
      %s19 = sadd.s32 1, %s15
    $region7: #{generator_forward.4} parent=1 // loop_footer_branch
      %14 = sbr.rel target = $region3
    $region8: #{generator_forward.4} parent=1 // loop_exit
      _
    %767 = vsyncpa [#allocation3], 1
    %s768 = scalar_lea.sflag [#allocation3], 1
    %769 = vsyncpa %s768, 1

// kernel: generator_forward.5
$region0: #{generator_forward.5}
  #allocation0 [shape = 'u32[]', space=smem, size = 0x4, offset = 0x4, fixed_abs, tag = 'smem constant byte address 0x4 - core index']
  #allocation1 [shape = 'u32[144,128]{1,0:T(1,128)}', space=vmem, size = 0x12000, scoped, tag = 'internal scratch']
  %s0 = inlined_call_operand.vmem [shape: bf16[2,10,10,128], index: 0, kind: input, shape index: {}]
  %s1 = inlined_call_operand.vmem [shape: bf16[1152,128], index: 1, kind: input, shape index: {}]
  %s2 = inlined_call_operand.vmem [shape: f32[1,128], index: 2, kind: input, shape index: {}]
  %s3 = inlined_call_operand.vmem [shape: f32[1,128], index: 3, kind: input, shape index: {}]
  %s4 = inlined_call_operand.vmem [shape: f32[1,128], index: 4, kind: input, shape index: {}]
  %s5 = inlined_call_operand.vmem [shape: bf16[2,64,128], index: 5, kind: output, shape index: {0}]
  %s6 = inlined_call_operand.vmem [shape: f32[2,1,128], index: 6, kind: output, shape index: {1}]
  %s7 = inlined_call_operand.vmem [shape: f32[2,1,128], index: 7, kind: output, shape index: {2}]
  %8 = xla_tuple %s5, %s6, %s7
  %s9 = sld [smem:[#allocation0]]
  $region69: #{generator_forward.5} parent=0
    _
  %s11 = ssub.s32 1, %s9
  %s12 = scalar_select 0, %s11, %s9
  loop: start=0, step=1, limit=4
  $region2: #{generator_forward.5} parent=0 // loop_pre_header
    _
  $region3: #{generator_forward.5} parent=0 // loop_header
    %s14 = sphi 0, %s18
    %p15 = scmp.ge.s32.totalorder %s14, 4
    %s24 = sphi 0, %s26
    %s27 = sphi 0, %s24
    %s28 = sphi 0, %s27
    %s44 = sphi 0, %s28
    %s48 = sphi 0, %s48
    %s50 = sphi 0, %s48
    %s51 = sphi 0, %s50
    %s65 = sphi 0, %s51
    %s69 = sphi 0, %s69
    %s71 = sphi 0, %s69
    %s72 = sphi 0, %s71
    %s86 = sphi 0, %s72
    %s90 = sphi 0, %s90
    %s92 = sphi 0, %s90
    %s93 = sphi 0, %s92
    %s107 = sphi 0, %s93
    %s111 = sphi 0, %s111
    %s113 = sphi 0, %s111
    %s114 = sphi 0, %s113
    %s128 = sphi 0, %s114
    %s134 = sphi 0, %s136
    %s137 = sphi 0, %s134
    %s138 = sphi 0, %s137
    %s154 = sphi 0, %s138
    %s160 = sphi 0, %s162
    %s163 = sphi 0, %s160
    %s164 = sphi 0, %s163
    %s180 = sphi 0, %s164
    %s186 = sphi 0, %s188
    %s189 = sphi 0, %s186
    %s190 = sphi 0, %s189
    %s206 = sphi 0, %s190
  $region4: #{generator_forward.5} parent=0 // loop_header_branch
    %17 = sbr.rel (%p15) target = $region8
  $region5: #{generator_forward.5} parent=0 // loop_body
    %s19 = ssub.s32 %s14, 1
    %s20 = ssub.s32 %s14, 2
    %s21 = sadd.s32 %s14, 1
    %s22 = ssub.s32 %s14, %s21
    %p23 = scmp.eq.s32.totalorder %s22, 0
    %s25 = sadd.s32 %s24, 1
    %s26 = scalar_select %p23, %s24, %s25
    %p29 = pneg %p23
    %p30 = scmp.eq.s32.totalorder %s14, 1
    %p31 = por %p29, %p30
    %p32 = scmp.ne.s32.totalorder %s24, %s27
    %p33 = scmp.eq.s32.totalorder %s14, 0
    %p34 = por %p32, %p33
    %p35 = scmp.ne.s32.totalorder %s24, %s27
    %p36 = scmp.eq.s32.totalorder %s19, 1
    %p37 = por %p35, %p36
    %p38 = scmp.ne.s32.totalorder %s27, %s28
    %p39 = scmp.eq.s32.totalorder %s19, 0
    %p40 = por %p38, %p39
    %p41 = scmp.ne.s32.totalorder %s27, %s28
    %p42 = scmp.eq.s32.totalorder %s20, 1
    %p43 = por %p41, %p42
    %p45 = scmp.ne.s32.totalorder %s28, %s44
    %p46 = scmp.eq.s32.totalorder %s20, 0
    %p47 = por %p45, %p46
    %s49 = sadd.s32 %s48, 1
    %p52 = scmp.eq.s32.totalorder %s14, 1
    %p53 = scmp.ne.s32.totalorder %s48, %s50
    %p54 = scmp.eq.s32.totalorder %s14, 0
    %p55 = por %p53, %p54
    %p56 = scmp.ne.s32.totalorder %s48, %s50
    %p57 = scmp.eq.s32.totalorder %s19, 1
    %p58 = por %p56, %p57
    %p59 = scmp.ne.s32.totalorder %s50, %s51
    %p60 = scmp.eq.s32.totalorder %s19, 0
    %p61 = por %p59, %p60
    %p62 = scmp.ne.s32.totalorder %s50, %s51
    %p63 = scmp.eq.s32.totalorder %s20, 1
    %p64 = por %p62, %p63
    %p66 = scmp.ne.s32.totalorder %s51, %s65
    %p67 = scmp.eq.s32.totalorder %s20, 0
    %p68 = por %p66, %p67
    %s70 = sadd.s32 %s69, 1
    %p73 = scmp.eq.s32.totalorder %s14, 1
    %p74 = scmp.ne.s32.totalorder %s69, %s71
    %p75 = scmp.eq.s32.totalorder %s14, 0
    %p76 = por %p74, %p75
    %p77 = scmp.ne.s32.totalorder %s69, %s71
    %p78 = scmp.eq.s32.totalorder %s19, 1
    %p79 = por %p77, %p78
    %p80 = scmp.ne.s32.totalorder %s71, %s72
    %p81 = scmp.eq.s32.totalorder %s19, 0
    %p82 = por %p80, %p81
    %p83 = scmp.ne.s32.totalorder %s71, %s72
    %p84 = scmp.eq.s32.totalorder %s20, 1
    %p85 = por %p83, %p84
    %p87 = scmp.ne.s32.totalorder %s72, %s86
    %p88 = scmp.eq.s32.totalorder %s20, 0
    %p89 = por %p87, %p88
    %s91 = sadd.s32 %s90, 1
    %p94 = scmp.eq.s32.totalorder %s14, 1
    %p95 = scmp.ne.s32.totalorder %s90, %s92
    %p96 = scmp.eq.s32.totalorder %s14, 0
    %p97 = por %p95, %p96
    %p98 = scmp.ne.s32.totalorder %s90, %s92
    %p99 = scmp.eq.s32.totalorder %s19, 1
    %p100 = por %p98, %p99
    %p101 = scmp.ne.s32.totalorder %s92, %s93
    %p102 = scmp.eq.s32.totalorder %s19, 0
    %p103 = por %p101, %p102
    %p104 = scmp.ne.s32.totalorder %s92, %s93
    %p105 = scmp.eq.s32.totalorder %s20, 1
    %p106 = por %p104, %p105
    %p108 = scmp.ne.s32.totalorder %s93, %s107
    %p109 = scmp.eq.s32.totalorder %s20, 0
    %p110 = por %p108, %p109
    %s112 = sadd.s32 %s111, 1
    %p115 = scmp.eq.s32.totalorder %s14, 1
    %p116 = scmp.ne.s32.totalorder %s111, %s113
    %p117 = scmp.eq.s32.totalorder %s14, 0
    %p118 = por %p116, %p117
    %p119 = scmp.ne.s32.totalorder %s111, %s113
    %p120 = scmp.eq.s32.totalorder %s19, 1
    %p121 = por %p119, %p120
    %p122 = scmp.ne.s32.totalorder %s113, %s114
    %p123 = scmp.eq.s32.totalorder %s19, 0
    %p124 = por %p122, %p123
    %p125 = scmp.ne.s32.totalorder %s113, %s114
    %p126 = scmp.eq.s32.totalorder %s20, 1
    %p127 = por %p125, %p126
    %p129 = scmp.ne.s32.totalorder %s114, %s128
    %p130 = scmp.eq.s32.totalorder %s20, 0
    %p131 = por %p129, %p130
    %s132 = ssub.s32 %s14, %s21
    %p133 = scmp.eq.s32.totalorder %s132, 0
    %s135 = sadd.s32 %s134, 1
    %s136 = scalar_select %p133, %s134, %s135
    %p139 = pneg %p133
    %p140 = scmp.eq.s32.totalorder %s14, 1
    %p141 = por %p139, %p140
    %p142 = scmp.ne.s32.totalorder %s134, %s137
    %p143 = scmp.eq.s32.totalorder %s14, 0
    %p144 = por %p142, %p143
    %p145 = scmp.ne.s32.totalorder %s134, %s137
    %p146 = scmp.eq.s32.totalorder %s19, 1
    %p147 = por %p145, %p146
    %p148 = scmp.ne.s32.totalorder %s137, %s138
    %p149 = scmp.eq.s32.totalorder %s19, 0
    %p150 = por %p148, %p149
    %p151 = scmp.ne.s32.totalorder %s137, %s138
    %p152 = scmp.eq.s32.totalorder %s20, 1
    %p153 = por %p151, %p152
    %p155 = scmp.ne.s32.totalorder %s138, %s154
    %p156 = scmp.eq.s32.totalorder %s20, 0
    %p157 = por %p155, %p156
    %s158 = ssub.s32 %s14, %s21
    %p159 = scmp.eq.s32.totalorder %s158, 0
    %s161 = sadd.s32 %s160, 1
    %s162 = scalar_select %p159, %s160, %s161
    %p165 = pneg %p159
    %p166 = scmp.eq.s32.totalorder %s14, 1
    %p167 = por %p165, %p166
    %p168 = scmp.ne.s32.totalorder %s160, %s163
    %p169 = scmp.eq.s32.totalorder %s14, 0
    %p170 = por %p168, %p169
    %p171 = scmp.ne.s32.totalorder %s160, %s163
    %p172 = scmp.eq.s32.totalorder %s19, 1
    %p173 = por %p171, %p172
    %p174 = scmp.ne.s32.totalorder %s163, %s164
    %p175 = scmp.eq.s32.totalorder %s19, 0
    %p176 = por %p174, %p175
    %p177 = scmp.ne.s32.totalorder %s163, %s164
    %p178 = scmp.eq.s32.totalorder %s20, 1
    %p179 = por %p177, %p178
    %p181 = scmp.ne.s32.totalorder %s164, %s180
    %p182 = scmp.eq.s32.totalorder %s20, 0
    %p183 = por %p181, %p182
    %s184 = ssub.s32 %s14, %s21
    %p185 = scmp.eq.s32.totalorder %s184, 0
    %s187 = sadd.s32 %s186, 1
    %s188 = scalar_select %p185, %s186, %s187
    %p191 = pneg %p185
    %p192 = scmp.eq.s32.totalorder %s14, 1
    %p193 = por %p191, %p192
    %p194 = scmp.ne.s32.totalorder %s186, %s189
    %p195 = scmp.eq.s32.totalorder %s14, 0
    %p196 = por %p194, %p195
    %p197 = scmp.ne.s32.totalorder %s186, %s189
    %p198 = scmp.eq.s32.totalorder %s19, 1
    %p199 = por %p197, %p198
    %p200 = scmp.ne.s32.totalorder %s189, %s190
    %p201 = scmp.eq.s32.totalorder %s19, 0
    %p202 = por %p200, %p201
    %p203 = scmp.ne.s32.totalorder %s189, %s190
    %p204 = scmp.eq.s32.totalorder %s20, 1
    %p205 = por %p203, %p204
    %p207 = scmp.ne.s32.totalorder %s190, %s206
    %p208 = scmp.eq.s32.totalorder %s20, 0
    %p209 = por %p207, %p208
    %p210 = scmp.le.s32.totalorder 1, %s14
    %p211 = scmp.lt.s32.totalorder %s14, 3
    %p212 = pnand %p210, %p211
    %p213 = pneg %p212
    // Predicated region
    $region9: #{generator_forward.5} parent=5 // pred_check
      _
    $region10: #{generator_forward.5} parent=5 // pred_check_branch
      %215 = sbr.rel (%p212) target = $region12
    $region11: #{generator_forward.5} parent=5 // pred_region
      %s216 = ssub.s32 %s14, 1
      // Predicated region
      $region13: #{generator_forward.5} parent=11 // pred_check
        %p217 = pneg %p61
      $region14: #{generator_forward.5} parent=11 // pred_check_branch
        %219 = sbr.rel (%p217) target = $region16
      $region15: #{generator_forward.5} parent=11 // pred_region
        _
      $region16: #{generator_forward.5} parent=11 // pred_fallthru
        _
      // Predicated region
      $region17: #{generator_forward.5} parent=11 // pred_check
        %p220 = pneg %p82
      $region18: #{generator_forward.5} parent=11 // pred_check_branch
        %222 = sbr.rel (%p220) target = $region20
      $region19: #{generator_forward.5} parent=11 // pred_region
        _
      $region20: #{generator_forward.5} parent=11 // pred_fallthru
        _
      // Predicated region
      $region21: #{generator_forward.5} parent=11 // pred_check
        %p223 = pneg %p103
      $region22: #{generator_forward.5} parent=11 // pred_check_branch
        %225 = sbr.rel (%p223) target = $region24
      $region23: #{generator_forward.5} parent=11 // pred_region
        _
      $region24: #{generator_forward.5} parent=11 // pred_fallthru
        _
      // Predicated region
      $region25: #{generator_forward.5} parent=11 // pred_check
        %p226 = pneg %p124
      $region26: #{generator_forward.5} parent=11 // pred_check_branch
        %228 = sbr.rel (%p226) target = $region28
      $region27: #{generator_forward.5} parent=11 // pred_region
        _
      $region28: #{generator_forward.5} parent=11 // pred_fallthru
        _
    $region12: #{generator_forward.5} parent=5 // pred_fallthru
      _
    %p229 = scmp.lt.s32.totalorder %s14, 2
    // Predicated region
    $region29: #{generator_forward.5} parent=5 // pred_check
      %p230 = pneg %p229
    $region30: #{generator_forward.5} parent=5 // pred_check_branch
      %232 = sbr.rel (%p230) target = $region32
    $region31: #{generator_forward.5} parent=5 // pred_region
      // Predicated region
      $region33: #{generator_forward.5} parent=31 // pred_check
        %p233 = pneg %p34
      $region34: #{generator_forward.5} parent=31 // pred_check_branch
        %235 = sbr.rel (%p233) target = $region36
      $region35: #{generator_forward.5} parent=31 // pred_region
        %p236 = scmp.lt.s32.totalorder %s14, 1
        %s237 = scalar_select %p236, %s14, 1
        %s238 = smul.addr %s237, 20
        %s239 = smul.addr %s238, 4
        %s240 = scalar_lea.vmem %s0, %s239
      $region36: #{generator_forward.5} parent=31 // pred_fallthru
        _
    $region32: #{generator_forward.5} parent=5 // pred_fallthru
      _
    %p241 = scmp.le.s32.totalorder 1, %s14
    %p242 = scmp.lt.s32.totalorder %s14, 3
    %p243 = pnand %p241, %p242
    %p244 = pneg %p243
    // Predicated region
    $region37: #{generator_forward.5} parent=5 // pred_check
      _
    $region38: #{generator_forward.5} parent=5 // pred_check_branch
      %246 = sbr.rel (%p243) target = $region40
    $region39: #{generator_forward.5} parent=5 // pred_region
      %s247 = ssub.s32 %s14, 1
      %p248 = scmp.lt.s32.totalorder %s19, 1
      %s249 = scalar_select %p248, %s19, 1
      %s250 = smul.addr %s249, 20
      %s251 = smul.addr %s250, 4
      %s252 = scalar_lea.vmem %s0, %s251
      %p253 = pneg %p40
      %p254 = pneg %p37
      %p255 = pneg %p61
      %p256 = pneg %p58
      %p257 = pneg %p82
      %p258 = pneg %p79
      %p259 = pneg %p103
      %p260 = pneg %p100
      %p261 = pneg %p124
      %p262 = pneg %p121
      %p263 = pneg %p150
      %p264 = pneg %p147
      %p265 = scmp.lt.s32.totalorder %s19, 1
      %s266 = scalar_select %p265, %s19, 1
      %s267 = smul.addr %s266, 8
      %s268 = smul.addr %s267, 4
      %s269 = scalar_lea.vmem %s5, %s268
      %p270 = pneg %p176
      %p271 = pneg %p173
      %p272 = scmp.lt.s32.totalorder %s19, 1
      %s273 = scalar_select %p272, %s19, 1
      %s274 = scalar_lea.vmem %s6, %s273
      %p275 = pneg %p202
      %p276 = pneg %p199
      %p277 = scmp.lt.s32.totalorder %s19, 1
      %s278 = scalar_select %p277, %s19, 1
      %s279 = scalar_lea.vmem %s7, %s278
      %p280 = scmp.lt.s32.totalorder %s19, 1
      %s281 = scalar_select %p280, %s19, 1
      %s282 = smul.addr %s281, 20
      %s283 = smul.addr %s282, 4
      %s284 = scalar_lea.vmem %s0, %s283
      %p285 = scmp.lt.s32.totalorder %s19, 1
      %s286 = scalar_select %p285, %s19, 1
      %s287 = smul.addr %s286, 8
      %s288 = smul.addr %s287, 4
      %s289 = scalar_lea.vmem %s5, %s288
      %p290 = scmp.lt.s32.totalorder %s19, 1
      %s291 = scalar_select %p290, %s19, 1
      %s292 = scalar_lea.vmem %s6, %s291
      %p293 = scmp.lt.s32.totalorder %s19, 1
      %s294 = scalar_select %p293, %s19, 1
      %s295 = scalar_lea.vmem %s7, %s294
      %v297 = vld [vmem:[%s284] sm:$0xf]
      %v298 = vld [vmem:[%s284 + $0x4] sm:$0x1]
      %v299 = vld [vmem:[%s284 + $0x8] sm:$0xf]
      %v300 = vld [vmem:[%s284 + $0xc] sm:$0x1]
      %v301 = vld [vmem:[%s284 + $0x10] sm:$0xf]
      %v302 = vld [vmem:[%s284 + $0x14] sm:$0x1]
      %v303 = vld [vmem:[%s284 + $0x18] sm:$0xf]
      %v304 = vld [vmem:[%s284 + $0x1c] sm:$0x1]
      %v305 = vld [vmem:[%s284 + $0x20] sm:$0xf]
      %v306 = vld [vmem:[%s284 + $0x24] sm:$0x1]
      %v307 = vld [vmem:[%s284 + $0x28] sm:$0xf]
      %v308 = vld [vmem:[%s284 + $0x2c] sm:$0x1]
      %v309 = vld [vmem:[%s284 + $0x30] sm:$0xf]
      %v310 = vld [vmem:[%s284 + $0x34] sm:$0x1]
      %v311 = vld [vmem:[%s284 + $0x38] sm:$0xf]
      %v312 = vld [vmem:[%s284 + $0x3c] sm:$0x1]
      %v313 = vld [vmem:[%s284 + $0x40] sm:$0xf]
      %v314 = vld [vmem:[%s284 + $0x44] sm:$0x1]
      %v315 = vld [vmem:[%s284 + $0x48] sm:$0xf]
      %v316 = vld [vmem:[%s284 + $0x4c] sm:$0x1]
      %v317 = vunpack.c.l.bf16 %v297
      %v318 = vunpack.c.l.bf16 %v298
      %v319 = vunpack.c.l.bf16 %v299
      %v320 = vunpack.c.l.bf16 %v300
      %v321 = vunpack.c.l.bf16 %v301
      %v322 = vunpack.c.l.bf16 %v302
      %v323 = vunpack.c.l.bf16 %v303
      %v324 = vunpack.c.l.bf16 %v304
      %v325 = vunpack.c.l.bf16 %v305
      %v326 = vunpack.c.l.bf16 %v306
      %v327 = vunpack.c.l.bf16 %v307
      %v328 = vunpack.c.l.bf16 %v308
      %v329 = vunpack.c.l.bf16 %v309
      %v330 = vunpack.c.l.bf16 %v310
      %v331 = vunpack.c.l.bf16 %v311
      %v332 = vunpack.c.l.bf16 %v312
      %v333 = vunpack.c.l.bf16 %v313
      %v334 = vunpack.c.l.bf16 %v314
      %v335 = vunpack.c.l.bf16 %v315
      %v336 = vunpack.c.l.bf16 %v316
      %v337 = vlaneseq
      %v338 = vshrl.u32 %v337, 7
      %v339 = vadd.s32 %v338, 8
      %vm340 = vcmp.ge.s32.totalorder %v338, 1
      %vm341 = vcmp.ge.s32.totalorder %v339, 1
      %vm342 = vmand 0, %vm340
      %vm343 = vmand 0, %vm341
      %vm344 = vmand 1, %vm340
      %vm345 = vmand 1, %vm341
      %vm346 = vcmp.le.s32.totalorder %v338, 8
      %vm347 = vcmp.le.s32.totalorder %v339, 8
      %vm348 = vmand %vm342, %vm346
      %vm349 = vmand %vm343, %vm347
      %vm350 = vmand %vm344, %vm346
      %vm351 = vmand %vm345, %vm347
      %v352 = vsel %vm348, 1, 0
      %v353 = vsel %vm349, 1, 0
      %v354 = vsel %vm350, 1, 0
      %v355 = vsel %vm351, 1, 0
      %v356 = vcvt.s32.f32 %v352
      %v357 = vcvt.s32.f32 %v353
      %v358 = vcvt.s32.f32 %v354
      %v359 = vcvt.s32.f32 %v355
      %v360 = vld [vmem:[%s3] sm:$0x1]
      %v362 = vlaneseq
      %v363 = vshrl.u32 %v362, 7
      %v364 = vsub.s32 0, %v363
      %v365 = vrot.slane %v360, %v364
      %v367 = vmul.f32 %v317, %v365
      %v368 = vmul.f32 %v318, %v365
      %v369 = vmul.f32 %v319, %v365
      %v370 = vmul.f32 %v320, %v365
      %v371 = vmul.f32 %v321, %v365
      %v372 = vmul.f32 %v322, %v365
      %v373 = vmul.f32 %v323, %v365
      %v374 = vmul.f32 %v324, %v365
      %v375 = vmul.f32 %v325, %v365
      %v376 = vmul.f32 %v326, %v365
      %v377 = vmul.f32 %v327, %v365
      %v378 = vmul.f32 %v328, %v365
      %v379 = vmul.f32 %v329, %v365
      %v380 = vmul.f32 %v330, %v365
      %v381 = vmul.f32 %v331, %v365
      %v382 = vmul.f32 %v332, %v365
      %v383 = vmul.f32 %v333, %v365
      %v384 = vmul.f32 %v334, %v365
      %v385 = vmul.f32 %v335, %v365
      %v386 = vmul.f32 %v336, %v365
      %v387 = vld [vmem:[%s4] sm:$0x1]
      %v389 = vlaneseq
      %v390 = vshrl.u32 %v389, 7
      %v391 = vsub.s32 0, %v390
      %v392 = vrot.slane %v387, %v391
      %v394 = vmul.f32 %v392, %v356
      %v395 = vmul.f32 %v392, %v357
      %v396 = vmul.f32 %v392, %v358
      %v397 = vmul.f32 %v392, %v359
      %v398 = vadd.f32 %v367, %v394
      %v399 = vadd.f32 %v368, %v395
      %v400 = vadd.f32 %v369, %v396
      %v401 = vadd.f32 %v370, %v397
      %v402 = vadd.f32 %v371, %v396
      %v403 = vadd.f32 %v372, %v397
      %v404 = vadd.f32 %v373, %v396
      %v405 = vadd.f32 %v374, %v397
      %v406 = vadd.f32 %v375, %v396
      %v407 = vadd.f32 %v376, %v397
      %v408 = vadd.f32 %v377, %v396
      %v409 = vadd.f32 %v378, %v397
      %v410 = vadd.f32 %v379, %v396
      %v411 = vadd.f32 %v380, %v397
      %v412 = vadd.f32 %v381, %v396
      %v413 = vadd.f32 %v382, %v397
      %v414 = vadd.f32 %v383, %v396
      %v415 = vadd.f32 %v384, %v397
      %v416 = vadd.f32 %v385, %v394
      %v417 = vadd.f32 %v386, %v395
      %v418 = vpack.c.bf16 %v399, %v398
      %v419 = vpack.c.bf16 %v401, %v400
      %v420 = vpack.c.bf16 %v403, %v402
      %v421 = vpack.c.bf16 %v405, %v404
      %v422 = vpack.c.bf16 %v407, %v406
      %v423 = vpack.c.bf16 %v409, %v408
      %v424 = vpack.c.bf16 %v411, %v410
      %v425 = vpack.c.bf16 %v413, %v412
      %v426 = vpack.c.bf16 %v415, %v414
      %v427 = vpack.c.bf16 %v417, %v416
      %v436 = vunpack.c.l.b16 %v418
      %v437 = vunpack.c.h.b16 %v418
      %v438 = vunpack.c.l.b16 %v419
      %v439 = vunpack.c.h.b16 %v419
      %v440 = vunpack.c.l.b16 %v420
      %v441 = vunpack.c.h.b16 %v420
      %v442 = vunpack.c.l.b16 %v421
      %v443 = vunpack.c.h.b16 %v421
      %v444 = vunpack.c.l.b16 %v422
      %v445 = vunpack.c.h.b16 %v422
      %v446 = vunpack.c.l.b16 %v423
      %v447 = vunpack.c.h.b16 %v423
      %v448 = vunpack.c.l.b16 %v424
      %v449 = vunpack.c.h.b16 %v424
      %v450 = vunpack.c.l.b16 %v425
      %v451 = vunpack.c.h.b16 %v425
      %v452 = vpack.c.b16 %v436, %v436
      %v453 = vpack.c.b16 %v437, %v437
      %v454 = vpack.c.b16 %v438, %v438
      %v455 = vpack.c.b16 %v439, %v439
      %v456 = vpack.c.b16 %v440, %v440
      %v457 = vpack.c.b16 %v441, %v441
      %v458 = vpack.c.b16 %v442, %v442
      %v459 = vpack.c.b16 %v443, %v443
      %v460 = vpack.c.b16 %v444, %v444
      %v461 = vpack.c.b16 %v445, %v445
      %v462 = vpack.c.b16 %v446, %v446
      %v463 = vpack.c.b16 %v447, %v447
      %v464 = vpack.c.b16 %v448, %v448
      %v465 = vpack.c.b16 %v449, %v449
      %v466 = vpack.c.b16 %v450, %v450
      %v467 = vpack.c.b16 %v451, %v451
      %vm468 = vsmask.f32 3328
      %vm469 = vsmask.f32 7440
      %vm470 = vmor %vm468, %vm469
      %v472 = vshrl.u32 %v452, 16
      %v474 = vrot.slane %v472, 4
      %v475 = vshll.u32 %v452, 16
      %v477 = vrot.slane %v475, 5
      %v478 = vor.u32 %v474, %v477
      %v479 = vrot.slane %v478, 4
      %v481 = vshll.u32 %v453, 16
      %v483 = vrot.slane %v481, 5
      %v484 = vsel %vm470, %v479, %v483
      %v486 = vshrl.u32 %v454, 16
      %v488 = vrot.slane %v486, 4
      %v489 = vshll.u32 %v454, 16
      %v491 = vrot.slane %v489, 5
      %v492 = vor.u32 %v488, %v491
      %v493 = vrot.slane %v492, 4
      %v495 = vshll.u32 %v455, 16
      %v497 = vrot.slane %v495, 5
      %v498 = vsel %vm470, %v493, %v497
      %v500 = vshrl.u32 %v456, 16
      %v502 = vrot.slane %v500, 4
      %v503 = vshll.u32 %v456, 16
      %v505 = vrot.slane %v503, 5
      %v506 = vor.u32 %v502, %v505
      %v507 = vrot.slane %v506, 4
      %v509 = vshll.u32 %v457, 16
      %v511 = vrot.slane %v509, 5
      %v512 = vsel %vm470, %v507, %v511
      %v514 = vshrl.u32 %v458, 16
      %v516 = vrot.slane %v514, 4
      %v517 = vshll.u32 %v458, 16
      %v519 = vrot.slane %v517, 5
      %v520 = vor.u32 %v516, %v519
      %v521 = vrot.slane %v520, 4
      %v523 = vshll.u32 %v459, 16
      %v525 = vrot.slane %v523, 5
      %v526 = vsel %vm470, %v521, %v525
      %v528 = vshrl.u32 %v460, 16
      %v530 = vrot.slane %v528, 4
      %v531 = vshll.u32 %v460, 16
      %v533 = vrot.slane %v531, 5
      %v534 = vor.u32 %v530, %v533
      %v535 = vrot.slane %v534, 4
      %v537 = vshll.u32 %v461, 16
      %v539 = vrot.slane %v537, 5
      %v540 = vsel %vm470, %v535, %v539
      %v542 = vshrl.u32 %v462, 16
      %v544 = vrot.slane %v542, 4
      %v545 = vshll.u32 %v462, 16
      %v547 = vrot.slane %v545, 5
      %v548 = vor.u32 %v544, %v547
      %v549 = vrot.slane %v548, 4
      %v551 = vshll.u32 %v463, 16
      %v553 = vrot.slane %v551, 5
      %v554 = vsel %vm470, %v549, %v553
      %v556 = vshrl.u32 %v464, 16
      %v558 = vrot.slane %v556, 4
      %v559 = vshll.u32 %v464, 16
      %v561 = vrot.slane %v559, 5
      %v562 = vor.u32 %v558, %v561
      %v563 = vrot.slane %v562, 4
      %v565 = vshll.u32 %v465, 16
      %v567 = vrot.slane %v565, 5
      %v568 = vsel %vm470, %v563, %v567
      %v570 = vshrl.u32 %v466, 16
      %v572 = vrot.slane %v570, 4
      %v573 = vshll.u32 %v466, 16
      %v575 = vrot.slane %v573, 5
      %v576 = vor.u32 %v572, %v575
      %v577 = vrot.slane %v576, 4
      %v579 = vshll.u32 %v467, 16
      %v581 = vrot.slane %v579, 5
      %v582 = vsel %vm470, %v577, %v581
      %vm583 = vcmask 1042432
      %vm584 = vcmask 1046532
      %vm585 = vmor %vm583, %vm584
      %v586 = vrot.slane %v452, 5
      %v587 = vrot.slane %v586, 4
      %v588 = vrot.slane %v453, 5
      %v589 = vsel %vm585, %v587, %v588
      %v590 = vrot.slane %v454, 5
      %v591 = vrot.slane %v590, 4
      %v592 = vrot.slane %v455, 5
      %v593 = vsel %vm585, %v591, %v592
      %v594 = vrot.slane %v456, 5
      %v595 = vrot.slane %v594, 4
      %v596 = vrot.slane %v457, 5
      %v597 = vsel %vm585, %v595, %v596
      %v598 = vrot.slane %v458, 5
      %v599 = vrot.slane %v598, 4
      %v600 = vrot.slane %v459, 5
      %v601 = vsel %vm585, %v599, %v600
      %v602 = vrot.slane %v460, 5
      %v603 = vrot.slane %v602, 4
      %v604 = vrot.slane %v461, 5
      %v605 = vsel %vm585, %v603, %v604
      %v606 = vrot.slane %v462, 5
      %v607 = vrot.slane %v606, 4
      %v608 = vrot.slane %v463, 5
      %v609 = vsel %vm585, %v607, %v608
      %v610 = vrot.slane %v464, 5
      %v611 = vrot.slane %v610, 4
      %v612 = vrot.slane %v465, 5
      %v613 = vsel %vm585, %v611, %v612
      %v614 = vrot.slane %v466, 5
      %v615 = vrot.slane %v614, 4
      %v616 = vrot.slane %v467, 5
      %v617 = vsel %vm585, %v615, %v616
      %v619 = vunpack.c.l.b16 %v426
      %v620 = vunpack.c.h.b16 %v426
      %v621 = vpack.c.b16 %v619, %v619
      %v622 = vpack.c.b16 %v620, %v620
      %v624 = vshrl.u32 %v621, 16
      %v626 = vrot.slane %v624, 4
      %v627 = vshll.u32 %v621, 16
      %v629 = vrot.slane %v627, 5
      %v630 = vor.u32 %v626, %v629
      %v631 = vrot.slane %v630, 4
      %v633 = vshll.u32 %v622, 16
      %v635 = vrot.slane %v633, 5
      %v636 = vsel %vm470, %v631, %v635
      %v637 = vrot.slane %v621, 5
      %v638 = vrot.slane %v637, 4
      %v639 = vrot.slane %v622, 5
      %v640 = vsel %vm585, %v638, %v639
      %v642 = vunpack.c.l.b16 %v427
      %v643 = vunpack.c.h.b16 %v427
      %v644 = vpack.c.b16 %v642, %v642
      %v645 = vpack.c.b16 %v643, %v643
      %v647 = vshrl.u32 %v644, 16
      %v649 = vrot.slane %v647, 4
      %v650 = vshll.u32 %v644, 16
      %v652 = vrot.slane %v650, 5
      %v653 = vor.u32 %v649, %v652
      %v654 = vrot.slane %v653, 4
      %v656 = vshll.u32 %v645, 16
      %v658 = vrot.slane %v656, 5
      %v659 = vsel %vm470, %v654, %v658
      %v660 = vrot.slane %v644, 5
      %v661 = vrot.slane %v660, 4
      %v662 = vrot.slane %v645, 5
      %v663 = vsel %vm585, %v661, %v662
      %v664 = vpack.c.b16 %v438, %v436
      %v665 = vpack.c.b16 %v442, %v440
      %v666 = vpack.c.b16 %v446, %v444
      %v667 = vpack.c.b16 %v450, %v448
      %v672 = vunpack.c.l.b16 %v484
      %v673 = vunpack.c.l.b16 %v498
      %v674 = vunpack.c.l.b16 %v512
      %v675 = vunpack.c.l.b16 %v526
      %v676 = vunpack.c.l.b16 %v540
      %v677 = vunpack.c.l.b16 %v554
      %v678 = vunpack.c.l.b16 %v568
      %v679 = vunpack.c.l.b16 %v582
      %v680 = vpack.c.b16 %v673, %v672
      %v681 = vpack.c.b16 %v675, %v674
      %v682 = vpack.c.b16 %v677, %v676
      %v683 = vpack.c.b16 %v679, %v678
      %v688 = vunpack.c.l.b16 %v589
      %v689 = vunpack.c.l.b16 %v593
      %v690 = vunpack.c.l.b16 %v597
      %v691 = vunpack.c.l.b16 %v601
      %v692 = vunpack.c.l.b16 %v605
      %v693 = vunpack.c.l.b16 %v609
      %v694 = vunpack.c.l.b16 %v613
      %v695 = vunpack.c.l.b16 %v617
      %v696 = vpack.c.b16 %v689, %v688
      %v697 = vpack.c.b16 %v691, %v690
      %v698 = vpack.c.b16 %v693, %v692
      %v699 = vpack.c.b16 %v695, %v694
      %v704 = vpack.c.b16 %v440, %v438
      %v705 = vpack.c.b16 %v444, %v442
      %v706 = vpack.c.b16 %v448, %v446
      %v707 = vpack.c.b16 %v619, %v450
      %v712 = vunpack.c.l.b16 %v636
      %v713 = vpack.c.b16 %v674, %v673
      %v714 = vpack.c.b16 %v676, %v675
      %v715 = vpack.c.b16 %v678, %v677
      %v716 = vpack.c.b16 %v712, %v679
      %v721 = vunpack.c.l.b16 %v640
      %v722 = vpack.c.b16 %v690, %v689
      %v723 = vpack.c.b16 %v692, %v691
      %v724 = vpack.c.b16 %v694, %v693
      %v725 = vpack.c.b16 %v721, %v695
      %v730 = vpack.c.b16 %v642, %v619
      %v732 = vunpack.c.l.b16 %v659
      %v733 = vpack.c.b16 %v732, %v712
      %v735 = vunpack.c.l.b16 %v663
      %v736 = vpack.c.b16 %v735, %v721
      %v738 = vld [vmem:[%s1] sm:$0xf]
      %v739 = vld [vmem:[%s1 + $0x4] sm:$0xf]
      %v740 = vld [vmem:[%s1 + $0x8] sm:$0xf]
      %v741 = vld [vmem:[%s1 + $0xc] sm:$0xf]
      %v742 = vld [vmem:[%s1 + $0x10] sm:$0xf]
      %v743 = vld [vmem:[%s1 + $0x14] sm:$0xf]
      %v744 = vld [vmem:[%s1 + $0x18] sm:$0xf]
      %v745 = vld [vmem:[%s1 + $0x1c] sm:$0xf]
      %v746 = vld [vmem:[%s1 + $0x20] sm:$0xf]
      %v747 = vld [vmem:[%s1 + $0x24] sm:$0xf]
      %v748 = vld [vmem:[%s1 + $0x28] sm:$0xf]
      %v749 = vld [vmem:[%s1 + $0x2c] sm:$0xf]
      %v750 = vld [vmem:[%s1 + $0x30] sm:$0xf]
      %v751 = vld [vmem:[%s1 + $0x34] sm:$0xf]
      %v752 = vld [vmem:[%s1 + $0x38] sm:$0xf]
      %v753 = vld [vmem:[%s1 + $0x3c] sm:$0xf]
      %v754 = vld [vmem:[%s1 + $0x40] sm:$0xf]
      %v755 = vld [vmem:[%s1 + $0x44] sm:$0xf]
      %v756 = vld [vmem:[%s1 + $0x48] sm:$0xf]
      %v757 = vld [vmem:[%s1 + $0x4c] sm:$0xf]
      %v758 = vld [vmem:[%s1 + $0x50] sm:$0xf]
      %v759 = vld [vmem:[%s1 + $0x54] sm:$0xf]
      %v760 = vld [vmem:[%s1 + $0x58] sm:$0xf]
      %v761 = vld [vmem:[%s1 + $0x5c] sm:$0xf]
      %v762 = vld [vmem:[%s1 + $0x60] sm:$0xf]
      %v763 = vld [vmem:[%s1 + $0x64] sm:$0xf]
      %v764 = vld [vmem:[%s1 + $0x68] sm:$0xf]
      %v765 = vld [vmem:[%s1 + $0x6c] sm:$0xf]
      %v766 = vld [vmem:[%s1 + $0x70] sm:$0xf]
      %v767 = vld [vmem:[%s1 + $0x74] sm:$0xf]
      %v768 = vld [vmem:[%s1 + $0x78] sm:$0xf]
      %v769 = vld [vmem:[%s1 + $0x7c] sm:$0xf]
      %v770 = vld [vmem:[%s1 + $0x80] sm:$0xf]
      %v771 = vld [vmem:[%s1 + $0x84] sm:$0xf]
      %v772 = vld [vmem:[%s1 + $0x88] sm:$0xf]
      %v773 = vld [vmem:[%s1 + $0x8c] sm:$0xf]
      %v774 = vld [vmem:[%s1 + $0x90] sm:$0xf]
      %v775 = vld [vmem:[%s1 + $0x94] sm:$0xf]
      %v776 = vld [vmem:[%s1 + $0x98] sm:$0xf]
      %v777 = vld [vmem:[%s1 + $0x9c] sm:$0xf]
      %v778 = vld [vmem:[%s1 + $0xa0] sm:$0xf]
      %v779 = vld [vmem:[%s1 + $0xa4] sm:$0xf]
      %v780 = vld [vmem:[%s1 + $0xa8] sm:$0xf]
      %v781 = vld [vmem:[%s1 + $0xac] sm:$0xf]
      %v782 = vld [vmem:[%s1 + $0xb0] sm:$0xf]
      %v783 = vld [vmem:[%s1 + $0xb4] sm:$0xf]
      %v784 = vld [vmem:[%s1 + $0xb8] sm:$0xf]
      %v785 = vld [vmem:[%s1 + $0xbc] sm:$0xf]
      %v786 = vld [vmem:[%s1 + $0xc0] sm:$0xf]
      %v787 = vld [vmem:[%s1 + $0xc4] sm:$0xf]
      %v788 = vld [vmem:[%s1 + $0xc8] sm:$0xf]
      %v789 = vld [vmem:[%s1 + $0xcc] sm:$0xf]
      %v790 = vld [vmem:[%s1 + $0xd0] sm:$0xf]
      %v791 = vld [vmem:[%s1 + $0xd4] sm:$0xf]
      %v792 = vld [vmem:[%s1 + $0xd8] sm:$0xf]
      %v793 = vld [vmem:[%s1 + $0xdc] sm:$0xf]
      %v794 = vld [vmem:[%s1 + $0xe0] sm:$0xf]
      %v795 = vld [vmem:[%s1 + $0xe4] sm:$0xf]
      %v796 = vld [vmem:[%s1 + $0xe8] sm:$0xf]
      %v797 = vld [vmem:[%s1 + $0xec] sm:$0xf]
      %v798 = vld [vmem:[%s1 + $0xf0] sm:$0xf]
      %v799 = vld [vmem:[%s1 + $0xf4] sm:$0xf]
      %v800 = vld [vmem:[%s1 + $0xf8] sm:$0xf]
      %v801 = vld [vmem:[%s1 + $0xfc] sm:$0xf]
      %v802 = vld [vmem:[%s1 + $0x100] sm:$0xf]
      %v803 = vld [vmem:[%s1 + $0x104] sm:$0xf]
      %v804 = vld [vmem:[%s1 + $0x108] sm:$0xf]
      %v805 = vld [vmem:[%s1 + $0x10c] sm:$0xf]
      %v806 = vld [vmem:[%s1 + $0x110] sm:$0xf]
      %v807 = vld [vmem:[%s1 + $0x114] sm:$0xf]
      %v808 = vld [vmem:[%s1 + $0x118] sm:$0xf]
      %v809 = vld [vmem:[%s1 + $0x11c] sm:$0xf]
      %v810 = vld [vmem:[%s1 + $0x120] sm:$0xf]
      %v811 = vld [vmem:[%s1 + $0x124] sm:$0xf]
      %v812 = vld [vmem:[%s1 + $0x128] sm:$0xf]
      %v813 = vld [vmem:[%s1 + $0x12c] sm:$0xf]
      %v814 = vld [vmem:[%s1 + $0x130] sm:$0xf]
      %v815 = vld [vmem:[%s1 + $0x134] sm:$0xf]
      %v816 = vld [vmem:[%s1 + $0x138] sm:$0xf]
      %v817 = vld [vmem:[%s1 + $0x13c] sm:$0xf]
      %v818 = vld [vmem:[%s1 + $0x140] sm:$0xf]
      %v819 = vld [vmem:[%s1 + $0x144] sm:$0xf]
      %v820 = vld [vmem:[%s1 + $0x148] sm:$0xf]
      %v821 = vld [vmem:[%s1 + $0x14c] sm:$0xf]
      %v822 = vld [vmem:[%s1 + $0x150] sm:$0xf]
      %v823 = vld [vmem:[%s1 + $0x154] sm:$0xf]
      %v824 = vld [vmem:[%s1 + $0x158] sm:$0xf]
      %v825 = vld [vmem:[%s1 + $0x15c] sm:$0xf]
      %v826 = vld [vmem:[%s1 + $0x160] sm:$0xf]
      %v827 = vld [vmem:[%s1 + $0x164] sm:$0xf]
      %v828 = vld [vmem:[%s1 + $0x168] sm:$0xf]
      %v829 = vld [vmem:[%s1 + $0x16c] sm:$0xf]
      %v830 = vld [vmem:[%s1 + $0x170] sm:$0xf]
      %v831 = vld [vmem:[%s1 + $0x174] sm:$0xf]
      %v832 = vld [vmem:[%s1 + $0x178] sm:$0xf]
      %v833 = vld [vmem:[%s1 + $0x17c] sm:$0xf]
      %v834 = vld [vmem:[%s1 + $0x180] sm:$0xf]
      %v835 = vld [vmem:[%s1 + $0x184] sm:$0xf]
      %v836 = vld [vmem:[%s1 + $0x188] sm:$0xf]
      %v837 = vld [vmem:[%s1 + $0x18c] sm:$0xf]
      %v838 = vld [vmem:[%s1 + $0x190] sm:$0xf]
      %v839 = vld [vmem:[%s1 + $0x194] sm:$0xf]
      %v840 = vld [vmem:[%s1 + $0x198] sm:$0xf]
      %v841 = vld [vmem:[%s1 + $0x19c] sm:$0xf]
      %v842 = vld [vmem:[%s1 + $0x1a0] sm:$0xf]
      %v843 = vld [vmem:[%s1 + $0x1a4] sm:$0xf]
      %v844 = vld [vmem:[%s1 + $0x1a8] sm:$0xf]
      %v845 = vld [vmem:[%s1 + $0x1ac] sm:$0xf]
      %v846 = vld [vmem:[%s1 + $0x1b0] sm:$0xf]
      %v847 = vld [vmem:[%s1 + $0x1b4] sm:$0xf]
      %v848 = vld [vmem:[%s1 + $0x1b8] sm:$0xf]
      %v849 = vld [vmem:[%s1 + $0x1bc] sm:$0xf]
      %v850 = vld [vmem:[%s1 + $0x1c0] sm:$0xf]
      %v851 = vld [vmem:[%s1 + $0x1c4] sm:$0xf]
      %v852 = vld [vmem:[%s1 + $0x1c8] sm:$0xf]
      %v853 = vld [vmem:[%s1 + $0x1cc] sm:$0xf]
      %v854 = vld [vmem:[%s1 + $0x1d0] sm:$0xf]
      %v855 = vld [vmem:[%s1 + $0x1d4] sm:$0xf]
      %v856 = vld [vmem:[%s1 + $0x1d8] sm:$0xf]
      %v857 = vld [vmem:[%s1 + $0x1dc] sm:$0xf]
      %v858 = vld [vmem:[%s1 + $0x1e0] sm:$0xf]
      %v859 = vld [vmem:[%s1 + $0x1e4] sm:$0xf]
      %v860 = vld [vmem:[%s1 + $0x1e8] sm:$0xf]
      %v861 = vld [vmem:[%s1 + $0x1ec] sm:$0xf]
      %v862 = vld [vmem:[%s1 + $0x1f0] sm:$0xf]
      %v863 = vld [vmem:[%s1 + $0x1f4] sm:$0xf]
      %v864 = vld [vmem:[%s1 + $0x1f8] sm:$0xf]
      %v865 = vld [vmem:[%s1 + $0x1fc] sm:$0xf]
      %v866 = vld [vmem:[%s1 + $0x200] sm:$0xf]
      %v867 = vld [vmem:[%s1 + $0x204] sm:$0xf]
      %v868 = vld [vmem:[%s1 + $0x208] sm:$0xf]
      %v869 = vld [vmem:[%s1 + $0x20c] sm:$0xf]
      %v870 = vld [vmem:[%s1 + $0x210] sm:$0xf]
      %v871 = vld [vmem:[%s1 + $0x214] sm:$0xf]
      %v872 = vld [vmem:[%s1 + $0x218] sm:$0xf]
      %v873 = vld [vmem:[%s1 + $0x21c] sm:$0xf]
      %v874 = vld [vmem:[%s1 + $0x220] sm:$0xf]
      %v875 = vld [vmem:[%s1 + $0x224] sm:$0xf]
      %v876 = vld [vmem:[%s1 + $0x228] sm:$0xf]
      %v877 = vld [vmem:[%s1 + $0x22c] sm:$0xf]
      %v878 = vld [vmem:[%s1 + $0x230] sm:$0xf]
      %v879 = vld [vmem:[%s1 + $0x234] sm:$0xf]
      %v880 = vld [vmem:[%s1 + $0x238] sm:$0xf]
      %v881 = vld [vmem:[%s1 + $0x23c] sm:$0xf]
      %v882 = vld [vmem:[%s2] sm:$0x1]
      %v884 = vlaneseq
      %v885 = vshrl.u32 %v884, 7
      %v886 = vsub.s32 0, %v885
      %v887 = vrot.slane %v882, %v886
      %v1033 = vunpack.c.l.b16 %v738
      %v1034 = vunpack.c.l.b16 %v739
      %v1035 = vunpack.c.l.b16 %v740
      %v1036 = vunpack.c.l.b16 %v741
      %v1037 = vunpack.c.l.b16 %v742
      %v1038 = vunpack.c.l.b16 %v743
      %v1039 = vunpack.c.l.b16 %v744
      %v1040 = vunpack.c.l.b16 %v745
      %v1041 = vunpack.c.l.b16 %v746
      %v1042 = vunpack.c.l.b16 %v747
      %v1043 = vunpack.c.l.b16 %v748
      %v1044 = vunpack.c.l.b16 %v749
      %v1045 = vunpack.c.l.b16 %v750
      %v1046 = vunpack.c.l.b16 %v751
      %v1047 = vunpack.c.l.b16 %v752
      %v1048 = vunpack.c.l.b16 %v753
      %v1049 = vunpack.c.l.b16 %v754
      %v1050 = vunpack.c.l.b16 %v755
      %v1051 = vunpack.c.l.b16 %v756
      %v1052 = vunpack.c.l.b16 %v757
      %v1053 = vunpack.c.l.b16 %v758
      %v1054 = vunpack.c.l.b16 %v759
      %v1055 = vunpack.c.l.b16 %v760
      %v1056 = vunpack.c.l.b16 %v761
      %v1057 = vunpack.c.l.b16 %v762
      %v1058 = vunpack.c.l.b16 %v763
      %v1059 = vunpack.c.l.b16 %v764
      %v1060 = vunpack.c.l.b16 %v765
      %v1061 = vunpack.c.l.b16 %v766
      %v1062 = vunpack.c.l.b16 %v767
      %v1063 = vunpack.c.l.b16 %v768
      %v1064 = vunpack.c.l.b16 %v769
      %v1065 = vunpack.c.l.b16 %v770
      %v1066 = vunpack.c.l.b16 %v771
      %v1067 = vunpack.c.l.b16 %v772
      %v1068 = vunpack.c.l.b16 %v773
      %v1069 = vunpack.c.l.b16 %v774
      %v1070 = vunpack.c.l.b16 %v775
      %v1071 = vunpack.c.l.b16 %v776
      %v1072 = vunpack.c.l.b16 %v777
      %v1073 = vunpack.c.l.b16 %v778
      %v1074 = vunpack.c.l.b16 %v779
      %v1075 = vunpack.c.l.b16 %v780
      %v1076 = vunpack.c.l.b16 %v781
      %v1077 = vunpack.c.l.b16 %v782
      %v1078 = vunpack.c.l.b16 %v783
      %v1079 = vunpack.c.l.b16 %v784
      %v1080 = vunpack.c.l.b16 %v785
      %v1081 = vunpack.c.l.b16 %v786
      %v1082 = vunpack.c.l.b16 %v787
      %v1083 = vunpack.c.l.b16 %v788
      %v1084 = vunpack.c.l.b16 %v789
      %v1085 = vunpack.c.l.b16 %v790
      %v1086 = vunpack.c.l.b16 %v791
      %v1087 = vunpack.c.l.b16 %v792
      %v1088 = vunpack.c.l.b16 %v793
      %v1089 = vunpack.c.l.b16 %v794
      %v1090 = vunpack.c.l.b16 %v795
      %v1091 = vunpack.c.l.b16 %v796
      %v1092 = vunpack.c.l.b16 %v797
      %v1093 = vunpack.c.l.b16 %v798
      %v1094 = vunpack.c.l.b16 %v799
      %v1095 = vunpack.c.l.b16 %v800
      %v1096 = vunpack.c.l.b16 %v801
      %v1097 = vunpack.c.l.b16 %v802
      %v1098 = vunpack.c.l.b16 %v803
      %v1099 = vunpack.c.l.b16 %v804
      %v1100 = vunpack.c.l.b16 %v805
      %v1101 = vunpack.c.l.b16 %v806
      %v1102 = vunpack.c.l.b16 %v807
      %v1103 = vunpack.c.l.b16 %v808
      %v1104 = vunpack.c.l.b16 %v809
      %v1105 = vunpack.c.l.b16 %v810
      %v1106 = vunpack.c.l.b16 %v811
      %v1107 = vunpack.c.l.b16 %v812
      %v1108 = vunpack.c.l.b16 %v813
      %v1109 = vunpack.c.l.b16 %v814
      %v1110 = vunpack.c.l.b16 %v815
      %v1111 = vunpack.c.l.b16 %v816
      %v1112 = vunpack.c.l.b16 %v817
      %v1113 = vunpack.c.l.b16 %v818
      %v1114 = vunpack.c.l.b16 %v819
      %v1115 = vunpack.c.l.b16 %v820
      %v1116 = vunpack.c.l.b16 %v821
      %v1117 = vunpack.c.l.b16 %v822
      %v1118 = vunpack.c.l.b16 %v823
      %v1119 = vunpack.c.l.b16 %v824
      %v1120 = vunpack.c.l.b16 %v825
      %v1121 = vunpack.c.l.b16 %v826
      %v1122 = vunpack.c.l.b16 %v827
      %v1123 = vunpack.c.l.b16 %v828
      %v1124 = vunpack.c.l.b16 %v829
      %v1125 = vunpack.c.l.b16 %v830
      %v1126 = vunpack.c.l.b16 %v831
      %v1127 = vunpack.c.l.b16 %v832
      %v1128 = vunpack.c.l.b16 %v833
      %v1129 = vunpack.c.l.b16 %v834
      %v1130 = vunpack.c.l.b16 %v835
      %v1131 = vunpack.c.l.b16 %v836
      %v1132 = vunpack.c.l.b16 %v837
      %v1133 = vunpack.c.l.b16 %v838
      %v1134 = vunpack.c.l.b16 %v839
      %v1135 = vunpack.c.l.b16 %v840
      %v1136 = vunpack.c.l.b16 %v841
      %v1137 = vunpack.c.l.b16 %v842
      %v1138 = vunpack.c.l.b16 %v843
      %v1139 = vunpack.c.l.b16 %v844
      %v1140 = vunpack.c.l.b16 %v845
      %v1141 = vunpack.c.l.b16 %v846
      %v1142 = vunpack.c.l.b16 %v847
      %v1143 = vunpack.c.l.b16 %v848
      %v1144 = vunpack.c.l.b16 %v849
      %v1145 = vunpack.c.l.b16 %v850
      %v1146 = vunpack.c.l.b16 %v851
      %v1147 = vunpack.c.l.b16 %v852
      %v1148 = vunpack.c.l.b16 %v853
      %v1149 = vunpack.c.l.b16 %v854
      %v1150 = vunpack.c.l.b16 %v855
      %v1151 = vunpack.c.l.b16 %v856
      %v1152 = vunpack.c.l.b16 %v857
      %v1153 = vunpack.c.l.b16 %v858
      %v1154 = vunpack.c.l.b16 %v859
      %v1155 = vunpack.c.l.b16 %v860
      %v1156 = vunpack.c.l.b16 %v861
      %v1157 = vunpack.c.l.b16 %v862
      %v1158 = vunpack.c.l.b16 %v863
      %v1159 = vunpack.c.l.b16 %v864
      %v1160 = vunpack.c.l.b16 %v865
      %v1161 = vunpack.c.l.b16 %v866
      %v1162 = vunpack.c.l.b16 %v867
      %v1163 = vunpack.c.l.b16 %v868
      %v1164 = vunpack.c.l.b16 %v869
      %v1165 = vunpack.c.l.b16 %v870
      %v1166 = vunpack.c.l.b16 %v871
      %v1167 = vunpack.c.l.b16 %v872
      %v1168 = vunpack.c.l.b16 %v873
      %v1169 = vunpack.c.l.b16 %v874
      %v1170 = vunpack.c.l.b16 %v875
      %v1171 = vunpack.c.l.b16 %v876
      %v1172 = vunpack.c.l.b16 %v877
      %v1173 = vunpack.c.l.b16 %v878
      %v1174 = vunpack.c.l.b16 %v879
      %v1175 = vunpack.c.l.b16 %v880
      %v1176 = vunpack.c.l.b16 %v881
      %v1177 = vpack.c.b16 %v1034, %v1033
      %v1178 = vpack.c.b16 %v1036, %v1035
      %v1179 = vpack.c.b16 %v1038, %v1037
      %v1180 = vpack.c.b16 %v1040, %v1039
      %v1181 = vpack.c.b16 %v1042, %v1041
      %v1182 = vpack.c.b16 %v1044, %v1043
      %v1183 = vpack.c.b16 %v1046, %v1045
      %v1184 = vpack.c.b16 %v1048, %v1047
      %v1185 = vpack.c.b16 %v1050, %v1049
      %v1186 = vpack.c.b16 %v1052, %v1051
      %v1187 = vpack.c.b16 %v1054, %v1053
      %v1188 = vpack.c.b16 %v1056, %v1055
      %v1189 = vpack.c.b16 %v1058, %v1057
      %v1190 = vpack.c.b16 %v1060, %v1059
      %v1191 = vpack.c.b16 %v1062, %v1061
      %v1192 = vpack.c.b16 %v1064, %v1063
      %v1193 = vpack.c.b16 %v1066, %v1065
      %v1194 = vpack.c.b16 %v1068, %v1067
      %v1195 = vpack.c.b16 %v1070, %v1069
      %v1196 = vpack.c.b16 %v1072, %v1071
      %v1197 = vpack.c.b16 %v1074, %v1073
      %v1198 = vpack.c.b16 %v1076, %v1075
      %v1199 = vpack.c.b16 %v1078, %v1077
      %v1200 = vpack.c.b16 %v1080, %v1079
      %v1201 = vpack.c.b16 %v1082, %v1081
      %v1202 = vpack.c.b16 %v1084, %v1083
      %v1203 = vpack.c.b16 %v1086, %v1085
      %v1204 = vpack.c.b16 %v1088, %v1087
      %v1205 = vpack.c.b16 %v1090, %v1089
      %v1206 = vpack.c.b16 %v1092, %v1091
      %v1207 = vpack.c.b16 %v1094, %v1093
      %v1208 = vpack.c.b16 %v1096, %v1095
      %v1209 = vpack.c.b16 %v1098, %v1097
      %v1210 = vpack.c.b16 %v1100, %v1099
      %v1211 = vpack.c.b16 %v1102, %v1101
      %v1212 = vpack.c.b16 %v1104, %v1103
      %v1213 = vpack.c.b16 %v1106, %v1105
      %v1214 = vpack.c.b16 %v1108, %v1107
      %v1215 = vpack.c.b16 %v1110, %v1109
      %v1216 = vpack.c.b16 %v1112, %v1111
      %v1217 = vpack.c.b16 %v1114, %v1113
      %v1218 = vpack.c.b16 %v1116, %v1115
      %v1219 = vpack.c.b16 %v1118, %v1117
      %v1220 = vpack.c.b16 %v1120, %v1119
      %v1221 = vpack.c.b16 %v1122, %v1121
      %v1222 = vpack.c.b16 %v1124, %v1123
      %v1223 = vpack.c.b16 %v1126, %v1125
      %v1224 = vpack.c.b16 %v1128, %v1127
      %v1225 = vpack.c.b16 %v1130, %v1129
      %v1226 = vpack.c.b16 %v1132, %v1131
      %v1227 = vpack.c.b16 %v1134, %v1133
      %v1228 = vpack.c.b16 %v1136, %v1135
      %v1229 = vpack.c.b16 %v1138, %v1137
      %v1230 = vpack.c.b16 %v1140, %v1139
      %v1231 = vpack.c.b16 %v1142, %v1141
      %v1232 = vpack.c.b16 %v1144, %v1143
      %v1233 = vpack.c.b16 %v1146, %v1145
      %v1234 = vpack.c.b16 %v1148, %v1147
      %v1235 = vpack.c.b16 %v1150, %v1149
      %v1236 = vpack.c.b16 %v1152, %v1151
      %v1237 = vpack.c.b16 %v1154, %v1153
      %v1238 = vpack.c.b16 %v1156, %v1155
      %v1239 = vpack.c.b16 %v1158, %v1157
      %v1240 = vpack.c.b16 %v1160, %v1159
      %v1241 = vpack.c.b16 %v1162, %v1161
      %v1242 = vpack.c.b16 %v1164, %v1163
      %v1243 = vpack.c.b16 %v1166, %v1165
      %v1244 = vpack.c.b16 %v1168, %v1167
      %v1245 = vpack.c.b16 %v1170, %v1169
      %v1246 = vpack.c.b16 %v1172, %v1171
      %v1247 = vpack.c.b16 %v1174, %v1173
      %v1248 = vpack.c.b16 %v1176, %v1175
      %1321 = vmatprep.subr.bf16.mxu0 0
      %1322 = vmatpush1.bf16.msra.mxu0 %v1177
      %1323 = vmatprep.subr.bf16.mxu0 0
      %1324 = vmatpush1.bf16.msra.mxu0 %v1178
      %1325 = vmatprep.subr.bf16.mxu0 0
      %1326 = vmatpush1.bf16.msra.mxu0 %v1179
      %1327 = vmatprep.subr.bf16.mxu0 0
      %1328 = vmatpush1.bf16.msra.mxu0 %v1180
      %1329 = vmatprep.subr.bf16.mxu0 0
      %1330 = vmatpush1.bf16.msra.mxu0 %v1181
      %1331 = vmatprep.subr.bf16.mxu0 0
      %1332 = vmatpush1.bf16.msra.mxu0 %v1182
      %1333 = vmatprep.subr.bf16.mxu0 0
      %1334 = vmatpush1.bf16.msra.mxu0 %v1183
      %1335 = vmatprep.subr.bf16.mxu0 0
      %1336 = vmatpush1.bf16.msra.mxu0 %v1184
      %1337 = vmatprep.subr.bf16.mxu0 0
      %1338 = vmatpush1.bf16.msra.mxu0 %v1185
      %1339 = vmatprep.subr.bf16.mxu0 0
      %1340 = vmatpush1.bf16.msra.mxu0 %v1186
      %1341 = vmatprep.subr.bf16.mxu0 0
      %1342 = vmatpush1.bf16.msra.mxu0 %v1187
      %1343 = vmatprep.subr.bf16.mxu0 0
      %1344 = vmatpush1.bf16.msra.mxu0 %v1188
      %1345 = vmatprep.subr.bf16.mxu0 0
      %1346 = vmatpush1.bf16.msra.mxu0 %v1189
      %1347 = vmatprep.subr.bf16.mxu0 0
      %1348 = vmatpush1.bf16.msra.mxu0 %v1190
      %1349 = vmatprep.subr.bf16.mxu0 0
      %1350 = vmatpush1.bf16.msra.mxu0 %v1191
      %1351 = vmatprep.subr.bf16.mxu0 0
      %1352 = vmatpush1.bf16.msra.mxu0 %v1192
      %1353 = vmatprep.mubr.bf16.mxu0 %v680
      %1354 = vmatmul.mubr.bf16.gmra.mrb[0].mxu0 %v664
      %v1355 = vpop.f32.mrb[0].mxu0
      %v1356 = vadd.f32 %v887, %v1355
      %v1357 = vpop.f32.mrb[0].mxu0
      %v1358 = vpop.f32.mrb[0].mxu0
      %v1359 = vadd.f32 %v887, %v1358
      %v1360 = vpop.f32.mrb[0].mxu0
      %1361 = vmatprep.mubr.bf16.mxu0 %v681
      %1362 = vmatmul.mubr.bf16.gmra.mrb[0].mxu0 %v665
      %v1363 = vpop.f32.mrb[0].mxu0
      %v1364 = vadd.f32 %v887, %v1363
      %v1365 = vpop.f32.mrb[0].mxu0
      %v1366 = vpop.f32.mrb[0].mxu0
      %v1367 = vadd.f32 %v887, %v1366
      %v1368 = vpop.f32.mrb[0].mxu0
      %1369 = vmatprep.mubr.bf16.mxu0 %v682
      %1370 = vmatmul.mubr.bf16.gmra.mrb[0].mxu0 %v666
      %v1371 = vpop.f32.mrb[0].mxu0
      %v1372 = vadd.f32 %v887, %v1371
      %v1373 = vpop.f32.mrb[0].mxu0
      %v1374 = vpop.f32.mrb[0].mxu0
      %v1375 = vadd.f32 %v887, %v1374
      %v1376 = vpop.f32.mrb[0].mxu0
      %1377 = vmatprep.mubr.bf16.mxu0 %v683
      %1378 = vmatmul.mubr.bf16.gmra.mrb[0].mxu0 %v667
      %v1379 = vpop.f32.mrb[0].mxu0
      %v1380 = vadd.f32 %v887, %v1379
      %v1381 = vpop.f32.mrb[0].mxu0
      %v1382 = vpop.f32.mrb[0].mxu0
      %v1383 = vadd.f32 %v887, %v1382
      %v1384 = vpop.f32.mrb[0].mxu0
      %1385 = vdwg.mxu0
      %1386 = vmatprep.subr.bf16.mxu0 0
      %1387 = vmatpush1.bf16.msra.mxu0 %v1193
      %1388 = vmatprep.subr.bf16.mxu0 0
      %1389 = vmatpush1.bf16.msra.mxu0 %v1194
      %1390 = vmatprep.subr.bf16.mxu0 0
      %1391 = vmatpush1.bf16.msra.mxu0 %v1195
      %1392 = vmatprep.subr.bf16.mxu0 0
      %1393 = vmatpush1.bf16.msra.mxu0 %v1196
      %1394 = vmatprep.subr.bf16.mxu0 0
      %1395 = vmatpush1.bf16.msra.mxu0 %v1197
      %1396 = vmatprep.subr.bf16.mxu0 0
      %1397 = vmatpush1.bf16.msra.mxu0 %v1198
      %1398 = vmatprep.subr.bf16.mxu0 0
      %1399 = vmatpush1.bf16.msra.mxu0 %v1199
      %1400 = vmatprep.subr.bf16.mxu0 0
      %1401 = vmatpush1.bf16.msra.mxu0 %v1200
      %1402 = vmatprep.subr.bf16.mxu0 0
      %1403 = vmatpush1.bf16.msra.mxu0 %v1201
      %1404 = vmatprep.subr.bf16.mxu0 0
      %1405 = vmatpush1.bf16.msra.mxu0 %v1202
      %1406 = vmatprep.subr.bf16.mxu0 0
      %1407 = vmatpush1.bf16.msra.mxu0 %v1203
      %1408 = vmatprep.subr.bf16.mxu0 0
      %1409 = vmatpush1.bf16.msra.mxu0 %v1204
      %1410 = vmatprep.subr.bf16.mxu0 0
      %1411 = vmatpush1.bf16.msra.mxu0 %v1205
      %1412 = vmatprep.subr.bf16.mxu0 0
      %1413 = vmatpush1.bf16.msra.mxu0 %v1206
      %1414 = vmatprep.subr.bf16.mxu0 0
      %1415 = vmatpush1.bf16.msra.mxu0 %v1207
      %1416 = vmatprep.subr.bf16.mxu0 0
      %1417 = vmatpush1.bf16.msra.mxu0 %v1208
      %1418 = vmatprep.mubr.bf16.mxu0 %v704
      %1419 = vmatmul.mubr.bf16.gmra.mrb[0].mxu0 %v696
      %v1420 = vpop.f32.mrb[0].mxu0
      %v1421 = vadd.f32 %v1356, %v1420
      %v1422 = vpop.f32.mrb[0].mxu0
      %v1423 = vpop.f32.mrb[0].mxu0
      %v1424 = vadd.f32 %v1359, %v1423
      %v1425 = vpop.f32.mrb[0].mxu0
      %1426 = vmatprep.mubr.bf16.mxu0 %v705
      %1427 = vmatmul.mubr.bf16.gmra.mrb[0].mxu0 %v697
      %v1428 = vpop.f32.mrb[0].mxu0
      %v1429 = vadd.f32 %v1364, %v1428
      %v1430 = vpop.f32.mrb[0].mxu0
      %v1431 = vpop.f32.mrb[0].mxu0
      %v1432 = vadd.f32 %v1367, %v1431
      %v1433 = vpop.f32.mrb[0].mxu0
      %1434 = vmatprep.mubr.bf16.mxu0 %v706
      %1435 = vmatmul.mubr.bf16.gmra.mrb[0].mxu0 %v698
      %v1436 = vpop.f32.mrb[0].mxu0
      %v1437 = vadd.f32 %v1372, %v1436
      %v1438 = vpop.f32.mrb[0].mxu0
      %v1439 = vpop.f32.mrb[0].mxu0
      %v1440 = vadd.f32 %v1375, %v1439
      %v1441 = vpop.f32.mrb[0].mxu0
      %1442 = vmatprep.mubr.bf16.mxu0 %v707
      %1443 = vmatmul.mubr.bf16.gmra.mrb[0].mxu0 %v699
      %v1444 = vpop.f32.mrb[0].mxu0
      %v1445 = vadd.f32 %v1380, %v1444
      %v1446 = vpop.f32.mrb[0].mxu0
      %v1447 = vpop.f32.mrb[0].mxu0
      %v1448 = vadd.f32 %v1383, %v1447
      %v1449 = vpop.f32.mrb[0].mxu0
      %1450 = vdwg.mxu0
      %1451 = vmatprep.subr.bf16.mxu0 0
      %1452 = vmatpush1.bf16.msra.mxu0 %v1209
      %1453 = vmatprep.subr.bf16.mxu0 0
      %1454 = vmatpush1.bf16.msra.mxu0 %v1210
      %1455 = vmatprep.subr.bf16.mxu0 0
      %1456 = vmatpush1.bf16.msra.mxu0 %v1211
      %1457 = vmatprep.subr.bf16.mxu0 0
      %1458 = vmatpush1.bf16.msra.mxu0 %v1212
      %1459 = vmatprep.subr.bf16.mxu0 0
      %1460 = vmatpush1.bf16.msra.mxu0 %v1213
      %1461 = vmatprep.subr.bf16.mxu0 0
      %1462 = vmatpush1.bf16.msra.mxu0 %v1214
      %1463 = vmatprep.subr.bf16.mxu0 0
      %1464 = vmatpush1.bf16.msra.mxu0 %v1215
      %1465 = vmatprep.subr.bf16.mxu0 0
      %1466 = vmatpush1.bf16.msra.mxu0 %v1216
      %1467 = vmatprep.subr.bf16.mxu0 0
      %1468 = vmatpush1.bf16.msra.mxu0 %v1217
      %1469 = vmatprep.subr.bf16.mxu0 0
      %1470 = vmatpush1.bf16.msra.mxu0 %v1218
      %1471 = vmatprep.subr.bf16.mxu0 0
      %1472 = vmatpush1.bf16.msra.mxu0 %v1219
      %1473 = vmatprep.subr.bf16.mxu0 0
      %1474 = vmatpush1.bf16.msra.mxu0 %v1220
      %1475 = vmatprep.subr.bf16.mxu0 0
      %1476 = vmatpush1.bf16.msra.mxu0 %v1221
      %1477 = vmatprep.subr.bf16.mxu0 0
      %1478 = vmatpush1.bf16.msra.mxu0 %v1222
      %1479 = vmatprep.subr.bf16.mxu0 0
      %1480 = vmatpush1.bf16.msra.mxu0 %v1223
      %1481 = vmatprep.subr.bf16.mxu0 0
      %1482 = vmatpush1.bf16.msra.mxu0 %v1224
      %1483 = vmatprep.mubr.bf16.mxu0 %v722
      %1484 = vmatmul.mubr.bf16.gmra.mrb[0].mxu0 %v713
      %v1485 = vpop.f32.mrb[0].mxu0
      %v1486 = vadd.f32 %v1421, %v1485
      %v1487 = vpop.f32.mrb[0].mxu0
      %v1488 = vpop.f32.mrb[0].mxu0
      %v1489 = vadd.f32 %v1424, %v1488
      %v1490 = vpop.f32.mrb[0].mxu0
      %1491 = vmatprep.mubr.bf16.mxu0 %v723
      %1492 = vmatmul.mubr.bf16.gmra.mrb[0].mxu0 %v714
      %v1493 = vpop.f32.mrb[0].mxu0
      %v1494 = vadd.f32 %v1429, %v1493
      %v1495 = vpop.f32.mrb[0].mxu0
      %v1496 = vpop.f32.mrb[0].mxu0
      %v1497 = vadd.f32 %v1432, %v1496
      %v1498 = vpop.f32.mrb[0].mxu0
      %1499 = vmatprep.mubr.bf16.mxu0 %v724
      %1500 = vmatmul.mubr.bf16.gmra.mrb[0].mxu0 %v715
      %v1501 = vpop.f32.mrb[0].mxu0
      %v1502 = vadd.f32 %v1437, %v1501
      %v1503 = vpop.f32.mrb[0].mxu0
      %v1504 = vpop.f32.mrb[0].mxu0
      %v1505 = vadd.f32 %v1440, %v1504
      %v1506 = vpop.f32.mrb[0].mxu0
      %1507 = vmatprep.mubr.bf16.mxu0 %v725
      %1508 = vmatmul.mubr.bf16.gmra.mrb[0].mxu0 %v716
      %v1509 = vpop.f32.mrb[0].mxu0
      %v1510 = vadd.f32 %v1445, %v1509
      %v1511 = vpop.f32.mrb[0].mxu0
      %v1512 = vpop.f32.mrb[0].mxu0
      %v1513 = vadd.f32 %v1448, %v1512
      %v1514 = vpop.f32.mrb[0].mxu0
      %1515 = vdwg.mxu0
      %1516 = vmatprep.subr.bf16.mxu0 0
      %1517 = vmatpush1.bf16.msra.mxu0 %v1225
      %1518 = vmatprep.subr.bf16.mxu0 0
      %1519 = vmatpush1.bf16.msra.mxu0 %v1226
      %1520 = vmatprep.subr.bf16.mxu0 0
      %1521 = vmatpush1.bf16.msra.mxu0 %v1227
      %1522 = vmatprep.subr.bf16.mxu0 0
      %1523 = vmatpush1.bf16.msra.mxu0 %v1228
      %1524 = vmatprep.subr.bf16.mxu0 0
      %1525 = vmatpush1.bf16.msra.mxu0 %v1229
      %1526 = vmatprep.subr.bf16.mxu0 0
      %1527 = vmatpush1.bf16.msra.mxu0 %v1230
      %1528 = vmatprep.subr.bf16.mxu0 0
      %1529 = vmatpush1.bf16.msra.mxu0 %v1231
      %1530 = vmatprep.subr.bf16.mxu0 0
      %1531 = vmatpush1.bf16.msra.mxu0 %v1232
      %1532 = vmatprep.subr.bf16.mxu0 0
      %1533 = vmatpush1.bf16.msra.mxu0 %v1233
      %1534 = vmatprep.subr.bf16.mxu0 0
      %1535 = vmatpush1.bf16.msra.mxu0 %v1234
      %1536 = vmatprep.subr.bf16.mxu0 0
      %1537 = vmatpush1.bf16.msra.mxu0 %v1235
      %1538 = vmatprep.subr.bf16.mxu0 0
      %1539 = vmatpush1.bf16.msra.mxu0 %v1236
      %1540 = vmatprep.subr.bf16.mxu0 0
      %1541 = vmatpush1.bf16.msra.mxu0 %v1237
      %1542 = vmatprep.subr.bf16.mxu0 0
      %1543 = vmatpush1.bf16.msra.mxu0 %v1238
      %1544 = vmatprep.subr.bf16.mxu0 0
      %1545 = vmatpush1.bf16.msra.mxu0 %v1239
      %1546 = vmatprep.subr.bf16.mxu0 0
      %1547 = vmatpush1.bf16.msra.mxu0 %v1240
      %1548 = vmatprep.mubr.bf16.mxu0 %v681
      %1549 = vmatmul.mubr.bf16.gmra.mrb[0].mxu0 %v665
      %v1550 = vpop.f32.mrb[0].mxu0
      %v1551 = vadd.f32 %v1486, %v1550
      %v1552 = vpop.f32.mrb[0].mxu0
      %v1553 = vpop.f32.mrb[0].mxu0
      %v1554 = vadd.f32 %v1489, %v1553
      %v1555 = vpop.f32.mrb[0].mxu0
      %1556 = vmatprep.mubr.bf16.mxu0 %v682
      %1557 = vmatmul.mubr.bf16.gmra.mrb[0].mxu0 %v666
      %v1558 = vpop.f32.mrb[0].mxu0
      %v1559 = vadd.f32 %v1494, %v1558
      %v1560 = vpop.f32.mrb[0].mxu0
      %v1561 = vpop.f32.mrb[0].mxu0
      %v1562 = vadd.f32 %v1497, %v1561
      %v1563 = vpop.f32.mrb[0].mxu0
      %1564 = vmatprep.mubr.bf16.mxu0 %v683
      %1565 = vmatmul.mubr.bf16.gmra.mrb[0].mxu0 %v667
      %v1566 = vpop.f32.mrb[0].mxu0
      %v1567 = vadd.f32 %v1502, %v1566
      %v1568 = vpop.f32.mrb[0].mxu0
      %v1569 = vpop.f32.mrb[0].mxu0
      %v1570 = vadd.f32 %v1505, %v1569
      %v1571 = vpop.f32.mrb[0].mxu0
      %1572 = vmatprep.mubr.bf16.mxu0 %v733
      %1573 = vmatmul.mubr.bf16.gmra.mrb[0].mxu0 %v730
      %v1574 = vpop.f32.mrb[0].mxu0
      %v1575 = vadd.f32 %v1510, %v1574
      %v1576 = vpop.f32.mrb[0].mxu0
      %v1577 = vpop.f32.mrb[0].mxu0
      %v1578 = vadd.f32 %v1513, %v1577
      %v1579 = vpop.f32.mrb[0].mxu0
      %1580 = vdwg.mxu0
      %1581 = vmatprep.subr.bf16.mxu0 0
      %1582 = vmatpush1.bf16.msra.mxu0 %v1241
      %1583 = vmatprep.subr.bf16.mxu0 0
      %1584 = vmatpush1.bf16.msra.mxu0 %v1242
      %1585 = vmatprep.subr.bf16.mxu0 0
      %1586 = vmatpush1.bf16.msra.mxu0 %v1243
      %1587 = vmatprep.subr.bf16.mxu0 0
      %1588 = vmatpush1.bf16.msra.mxu0 %v1244
      %1589 = vmatprep.subr.bf16.mxu0 0
      %1590 = vmatpush1.bf16.msra.mxu0 %v1245
      %1591 = vmatprep.subr.bf16.mxu0 0
      %1592 = vmatpush1.bf16.msra.mxu0 %v1246
      %1593 = vmatprep.subr.bf16.mxu0 0
      %1594 = vmatpush1.bf16.msra.mxu0 %v1247
      %1595 = vmatprep.subr.bf16.mxu0 0
      %1596 = vmatpush1.bf16.msra.mxu0 %v1248
      %1597 = vmatprep.subr.bf16.mxu0 0
      %1598 = vmatpush1.bf16.msra.mxu0 0
      %1599 = vmatprep.subr.bf16.mxu0 0
      %1600 = vmatpush1.bf16.msra.mxu0 0
      %1601 = vmatprep.subr.bf16.mxu0 0
      %1602 = vmatpush1.bf16.msra.mxu0 0
      %1603 = vmatprep.subr.bf16.mxu0 0
      %1604 = vmatpush1.bf16.msra.mxu0 0
      %1605 = vmatprep.subr.bf16.mxu0 0
      %1606 = vmatpush1.bf16.msra.mxu0 0
      %1607 = vmatprep.subr.bf16.mxu0 0
      %1608 = vmatpush1.bf16.msra.mxu0 0
      %1609 = vmatprep.subr.bf16.mxu0 0
      %1610 = vmatpush1.bf16.msra.mxu0 0
      %1611 = vmatprep.subr.bf16.mxu0 0
      %1612 = vmatpush1.bf16.msra.mxu0 0
      %1613 = vmatprep.mubr.bf16.mxu0 0
      %1614 = vmatmul.mubr.bf16.gmra.mrb[0].mxu0 %v697
      %v1615 = vpop.f32.mrb[0].mxu0
      %v1616 = vadd.f32 %v1551, %v1615
      %v1617 = vpop.f32.mrb[0].mxu0
      %v1618 = vpop.f32.mrb[0].mxu0
      %v1619 = vadd.f32 %v1554, %v1618
      %v1620 = vpop.f32.mrb[0].mxu0
      %1621 = vmatprep.mubr.bf16.mxu0 0
      %1622 = vmatmul.mubr.bf16.gmra.mrb[0].mxu0 %v698
      %v1623 = vpop.f32.mrb[0].mxu0
      %v1624 = vadd.f32 %v1559, %v1623
      %v1625 = vpop.f32.mrb[0].mxu0
      %v1626 = vpop.f32.mrb[0].mxu0
      %v1627 = vadd.f32 %v1562, %v1626
      %v1628 = vpop.f32.mrb[0].mxu0
      %1629 = vmatprep.mubr.bf16.mxu0 0
      %1630 = vmatmul.mubr.bf16.gmra.mrb[0].mxu0 %v699
      %v1631 = vpop.f32.mrb[0].mxu0
      %v1632 = vadd.f32 %v1567, %v1631
      %v1633 = vpop.f32.mrb[0].mxu0
      %v1634 = vpop.f32.mrb[0].mxu0
      %v1635 = vadd.f32 %v1570, %v1634
      %v1636 = vpop.f32.mrb[0].mxu0
      %1637 = vmatprep.mubr.bf16.mxu0 0
      %1638 = vmatmul.mubr.bf16.gmra.mrb[0].mxu0 %v736
      %v1639 = vpop.f32.mrb[0].mxu0
      %v1640 = vadd.f32 %v1575, %v1639
      %v1641 = vpop.f32.mrb[0].mxu0
      %v1642 = vpop.f32.mrb[0].mxu0
      %v1643 = vadd.f32 %v1578, %v1642
      %v1644 = vpop.f32.mrb[0].mxu0
      %1645 = vdwg.mxu0
      %v1646 = vadd.f32 %v1616, %v1619
      %v1647 = vadd.f32 %v1646, %v1624
      %v1648 = vadd.f32 %v1647, %v1627
      %v1649 = vadd.f32 %v1648, %v1632
      %v1650 = vadd.f32 %v1649, %v1635
      %v1651 = vadd.f32 %v1650, %v1640
      %v1652 = vadd.f32 %v1651, %v1643
      %v1653 = vrot.slane %v1652, 4
      %v1654 = vadd.f32 %v1652, %v1653
      %v1655 = vrot.slane %v1654, 2
      %v1656 = vadd.f32 %v1654, %v1655
      %v1657 = vrot.slane %v1656, 1
      %v1658 = vadd.f32 %v1656, %v1657
      %1659 = vst [vmem:[%s292] sm:$0x1] %v1658
      %v1660 = vmul.f32 %v1616, %v1616
      %v1661 = vmul.f32 %v1619, %v1619
      %v1662 = vmul.f32 %v1624, %v1624
      %v1663 = vmul.f32 %v1627, %v1627
      %v1664 = vmul.f32 %v1632, %v1632
      %v1665 = vmul.f32 %v1635, %v1635
      %v1666 = vmul.f32 %v1640, %v1640
      %v1667 = vmul.f32 %v1643, %v1643
      %v1668 = vadd.f32 %v1660, %v1661
      %v1669 = vadd.f32 %v1668, %v1662
      %v1670 = vadd.f32 %v1669, %v1663
      %v1671 = vadd.f32 %v1670, %v1664
      %v1672 = vadd.f32 %v1671, %v1665
      %v1673 = vadd.f32 %v1672, %v1666
      %v1674 = vadd.f32 %v1673, %v1667
      %v1675 = vrot.slane %v1674, 4
      %v1676 = vadd.f32 %v1674, %v1675
      %v1677 = vrot.slane %v1676, 2
      %v1678 = vadd.f32 %v1676, %v1677
      %v1679 = vrot.slane %v1678, 1
      %v1680 = vadd.f32 %v1678, %v1679
      %1681 = vst [vmem:[%s295] sm:$0x1] %v1680
      %v1682 = vpack.c.bf16 %v1619, %v1616
      %v1683 = vpack.c.bf16 %v1627, %v1624
      %v1684 = vpack.c.bf16 %v1635, %v1632
      %v1685 = vpack.c.bf16 %v1643, %v1640
      %v1690 = vunpack.c.l.b16 %v1682
      %v1691 = vunpack.c.h.b16 %v1682
      %v1692 = vunpack.c.l.b16 %v1683
      %v1693 = vunpack.c.h.b16 %v1683
      %v1694 = vunpack.c.l.b16 %v1684
      %v1695 = vunpack.c.h.b16 %v1684
      %v1696 = vunpack.c.l.b16 %v1685
      %v1697 = vunpack.c.h.b16 %v1685
      %v1698 = vpack.c.b16 %v1690, %v1690
      %v1699 = vpack.c.b16 %v1691, %v1691
      %v1700 = vpack.c.b16 %v1692, %v1692
      %v1701 = vpack.c.b16 %v1693, %v1693
      %v1702 = vpack.c.b16 %v1694, %v1694
      %v1703 = vpack.c.b16 %v1695, %v1695
      %v1704 = vpack.c.b16 %v1696, %v1696
      %v1705 = vpack.c.b16 %v1697, %v1697
      %1714 = vst [vmem:[%s289] sm:$0xf] %v1698
      %1715 = vst [vmem:[%s289 + $0x4] sm:$0xf] %v1699
      %1716 = vst [vmem:[%s289 + $0x8] sm:$0xf] %v1700
      %1717 = vst [vmem:[%s289 + $0xc] sm:$0xf] %v1701
      %1718 = vst [vmem:[%s289 + $0x10] sm:$0xf] %v1702
      %1719 = vst [vmem:[%s289 + $0x14] sm:$0xf] %v1703
      %1720 = vst [vmem:[%s289 + $0x18] sm:$0xf] %v1704
      %1721 = vst [vmem:[%s289 + $0x1c] sm:$0xf] %v1705
      %p1722 = scmp.lt.s32.totalorder %s19, 1
      %s1723 = scalar_select %p1722, %s19, 1
      %s1724 = smul.addr %s1723, 8
      %s1725 = smul.addr %s1724, 4
      %s1726 = scalar_lea.vmem %s5, %s1725
      %p1727 = scmp.lt.s32.totalorder %s19, 1
      %s1728 = scalar_select %p1727, %s19, 1
      %s1729 = scalar_lea.vmem %s6, %s1728
      %p1730 = scmp.lt.s32.totalorder %s19, 1
      %s1731 = scalar_select %p1730, %s19, 1
      %s1732 = scalar_lea.vmem %s7, %s1731
      // Predicated region
      $region41: #{generator_forward.5} parent=39 // pred_check
        %p1733 = pneg %p147
      $region42: #{generator_forward.5} parent=39 // pred_check_branch
        %1735 = sbr.rel (%p1733) target = $region44
      $region43: #{generator_forward.5} parent=39 // pred_region
        _
      $region44: #{generator_forward.5} parent=39 // pred_fallthru
        _
      // Predicated region
      $region45: #{generator_forward.5} parent=39 // pred_check
        %p1736 = pneg %p173
      $region46: #{generator_forward.5} parent=39 // pred_check_branch
        %1738 = sbr.rel (%p1736) target = $region48
      $region47: #{generator_forward.5} parent=39 // pred_region
        _
      $region48: #{generator_forward.5} parent=39 // pred_fallthru
        _
      // Predicated region
      $region49: #{generator_forward.5} parent=39 // pred_check
        %p1739 = pneg %p199
      $region50: #{generator_forward.5} parent=39 // pred_check_branch
        %1741 = sbr.rel (%p1739) target = $region52
      $region51: #{generator_forward.5} parent=39 // pred_region
        _
      $region52: #{generator_forward.5} parent=39 // pred_fallthru
        _
    $region40: #{generator_forward.5} parent=5 // pred_fallthru
      _
    %p1742 = scmp.le.s32.totalorder 2, %s14
    // Predicated region
    $region53: #{generator_forward.5} parent=5 // pred_check
      %p1743 = pneg %p1742
    $region54: #{generator_forward.5} parent=5 // pred_check_branch
      %1745 = sbr.rel (%p1743) target = $region56
    $region55: #{generator_forward.5} parent=5 // pred_region
      %s1746 = ssub.s32 %s14, 2
      // Predicated region
      $region57: #{generator_forward.5} parent=55 // pred_check
        %p1747 = pneg %p153
      $region58: #{generator_forward.5} parent=55 // pred_check_branch
        %1749 = sbr.rel (%p1747) target = $region60
      $region59: #{generator_forward.5} parent=55 // pred_region
        %p1750 = scmp.lt.s32.totalorder %s20, 1
        %s1751 = scalar_select %p1750, %s20, 1
        %s1752 = smul.addr %s1751, 8
        %s1753 = smul.addr %s1752, 4
        %s1754 = scalar_lea.vmem %s5, %s1753
      $region60: #{generator_forward.5} parent=55 // pred_fallthru
        _
      // Predicated region
      $region61: #{generator_forward.5} parent=55 // pred_check
        %p1755 = pneg %p179
      $region62: #{generator_forward.5} parent=55 // pred_check_branch
        %1757 = sbr.rel (%p1755) target = $region64
      $region63: #{generator_forward.5} parent=55 // pred_region
        %p1758 = scmp.lt.s32.totalorder %s20, 1
        %s1759 = scalar_select %p1758, %s20, 1
        %s1760 = scalar_lea.vmem %s6, %s1759
      $region64: #{generator_forward.5} parent=55 // pred_fallthru
        _
      // Predicated region
      $region65: #{generator_forward.5} parent=55 // pred_check
        %p1761 = pneg %p205
      $region66: #{generator_forward.5} parent=55 // pred_check_branch
        %1763 = sbr.rel (%p1761) target = $region68
      $region67: #{generator_forward.5} parent=55 // pred_region
        %p1764 = scmp.lt.s32.totalorder %s20, 1
        %s1765 = scalar_select %p1764, %s20, 1
        %s1766 = scalar_lea.vmem %s7, %s1765
      $region68: #{generator_forward.5} parent=55 // pred_fallthru
        _
    $region56: #{generator_forward.5} parent=5 // pred_fallthru
      _
  $region6: #{generator_forward.5} parent=0 // loop_footer
    %s18 = sadd.s32 1, %s14
  $region7: #{generator_forward.5} parent=0 // loop_footer_branch
    %13 = sbr.rel target = $region3
  $region8: #{generator_forward.5} parent=0 // loop_exit
    _

// kernel: generator_forward.6
$region0: #{generator_forward.6}
  #allocation0 [shape = 'u32[]', space=smem, size = 0x4, offset = 0x4, fixed_abs, tag = 'smem constant byte address 0x4 - core index']
  #allocation1 [shape = 'u32[144,128]{1,0:T(1,128)}', space=vmem, size = 0x12000, scoped, tag = 'internal scratch']
  %s0 = inlined_call_operand.vmem [shape: bf16[2,18,18,128], index: 0, kind: input, shape index: {}]
  %s1 = inlined_call_operand.vmem [shape: bf16[1152,128], index: 1, kind: input, shape index: {}]
  %s2 = inlined_call_operand.vmem [shape: f32[1,128], index: 2, kind: input, shape index: {}]
  %s3 = inlined_call_operand.vmem [shape: f32[1,128], index: 3, kind: input, shape index: {}]
  %s4 = inlined_call_operand.vmem [shape: f32[1,128], index: 4, kind: input, shape index: {}]
  %s5 = inlined_call_operand.vmem [shape: bf16[2,256,128], index: 5, kind: output, shape index: {0}]
  %s6 = inlined_call_operand.vmem [shape: f32[2,1,128], index: 6, kind: output, shape index: {1}]
  %s7 = inlined_call_operand.vmem [shape: f32[2,1,128], index: 7, kind: output, shape index: {2}]
  %8 = xla_tuple %s5, %s6, %s7
  %s9 = sld [smem:[#allocation0]]
  $region69: #{generator_forward.6} parent=0
    _
  %s11 = ssub.s32 1, %s9
  %s12 = scalar_select 0, %s11, %s9
  loop: start=0, step=1, limit=4
  $region2: #{generator_forward.6} parent=0 // loop_pre_header
    _
  $region3: #{generator_forward.6} parent=0 // loop_header
    %s14 = sphi 0, %s18
    %p15 = scmp.ge.s32.totalorder %s14, 4
    %s24 = sphi 0, %s26
    %s27 = sphi 0, %s24
    %s28 = sphi 0, %s27
    %s44 = sphi 0, %s28
    %s48 = sphi 0, %s48
    %s50 = sphi 0, %s48
    %s51 = sphi 0, %s50
    %s65 = sphi 0, %s51
    %s69 = sphi 0, %s69
    %s71 = sphi 0, %s69
    %s72 = sphi 0, %s71
    %s86 = sphi 0, %s72
    %s90 = sphi 0, %s90
    %s92 = sphi 0, %s90
    %s93 = sphi 0, %s92
    %s107 = sphi 0, %s93
    %s111 = sphi 0, %s111
    %s113 = sphi 0, %s111
    %s114 = sphi 0, %s113
    %s128 = sphi 0, %s114
    %s134 = sphi 0, %s136
    %s137 = sphi 0, %s134
    %s138 = sphi 0, %s137
    %s154 = sphi 0, %s138
    %s160 = sphi 0, %s162
    %s163 = sphi 0, %s160
    %s164 = sphi 0, %s163
    %s180 = sphi 0, %s164
    %s186 = sphi 0, %s188
    %s189 = sphi 0, %s186
    %s190 = sphi 0, %s189
    %s206 = sphi 0, %s190
  $region4: #{generator_forward.6} parent=0 // loop_header_branch
    %17 = sbr.rel (%p15) target = $region8
  $region5: #{generator_forward.6} parent=0 // loop_body
    %s19 = ssub.s32 %s14, 1
    %s20 = ssub.s32 %s14, 2
    %s21 = sadd.s32 %s14, 1
    %s22 = ssub.s32 %s14, %s21
    %p23 = scmp.eq.s32.totalorder %s22, 0
    %s25 = sadd.s32 %s24, 1
    %s26 = scalar_select %p23, %s24, %s25
    %p29 = pneg %p23
    %p30 = scmp.eq.s32.totalorder %s14, 1
    %p31 = por %p29, %p30
    %p32 = scmp.ne.s32.totalorder %s24, %s27
    %p33 = scmp.eq.s32.totalorder %s14, 0
    %p34 = por %p32, %p33
    %p35 = scmp.ne.s32.totalorder %s24, %s27
    %p36 = scmp.eq.s32.totalorder %s19, 1
    %p37 = por %p35, %p36
    %p38 = scmp.ne.s32.totalorder %s27, %s28
    %p39 = scmp.eq.s32.totalorder %s19, 0
    %p40 = por %p38, %p39
    %p41 = scmp.ne.s32.totalorder %s27, %s28
    %p42 = scmp.eq.s32.totalorder %s20, 1
    %p43 = por %p41, %p42
    %p45 = scmp.ne.s32.totalorder %s28, %s44
    %p46 = scmp.eq.s32.totalorder %s20, 0
    %p47 = por %p45, %p46
    %s49 = sadd.s32 %s48, 1
    %p52 = scmp.eq.s32.totalorder %s14, 1
    %p53 = scmp.ne.s32.totalorder %s48, %s50
    %p54 = scmp.eq.s32.totalorder %s14, 0
    %p55 = por %p53, %p54
    %p56 = scmp.ne.s32.totalorder %s48, %s50
    %p57 = scmp.eq.s32.totalorder %s19, 1
    %p58 = por %p56, %p57
    %p59 = scmp.ne.s32.totalorder %s50, %s51
    %p60 = scmp.eq.s32.totalorder %s19, 0
    %p61 = por %p59, %p60
    %p62 = scmp.ne.s32.totalorder %s50, %s51
    %p63 = scmp.eq.s32.totalorder %s20, 1
    %p64 = por %p62, %p63
    %p66 = scmp.ne.s32.totalorder %s51, %s65
    %p67 = scmp.eq.s32.totalorder %s20, 0
    %p68 = por %p66, %p67
    %s70 = sadd.s32 %s69, 1
    %p73 = scmp.eq.s32.totalorder %s14, 1
    %p74 = scmp.ne.s32.totalorder %s69, %s71
    %p75 = scmp.eq.s32.totalorder %s14, 0
    %p76 = por %p74, %p75
    %p77 = scmp.ne.s32.totalorder %s69, %s71
    %p78 = scmp.eq.s32.totalorder %s19, 1
    %p79 = por %p77, %p78
    %p80 = scmp.ne.s32.totalorder %s71, %s72
    %p81 = scmp.eq.s32.totalorder %s19, 0
    %p82 = por %p80, %p81
    %p83 = scmp.ne.s32.totalorder %s71, %s72
    %p84 = scmp.eq.s32.totalorder %s20, 1
    %p85 = por %p83, %p84
    %p87 = scmp.ne.s32.totalorder %s72, %s86
    %p88 = scmp.eq.s32.totalorder %s20, 0
    %p89 = por %p87, %p88
    %s91 = sadd.s32 %s90, 1
    %p94 = scmp.eq.s32.totalorder %s14, 1
    %p95 = scmp.ne.s32.totalorder %s90, %s92
    %p96 = scmp.eq.s32.totalorder %s14, 0
    %p97 = por %p95, %p96
    %p98 = scmp.ne.s32.totalorder %s90, %s92
    %p99 = scmp.eq.s32.totalorder %s19, 1
    %p100 = por %p98, %p99
    %p101 = scmp.ne.s32.totalorder %s92, %s93
    %p102 = scmp.eq.s32.totalorder %s19, 0
    %p103 = por %p101, %p102
    %p104 = scmp.ne.s32.totalorder %s92, %s93
    %p105 = scmp.eq.s32.totalorder %s20, 1
    %p106 = por %p104, %p105
    %p108 = scmp.ne.s32.totalorder %s93, %s107
    %p109 = scmp.eq.s32.totalorder %s20, 0
    %p110 = por %p108, %p109
    %s112 = sadd.s32 %s111, 1
    %p115 = scmp.eq.s32.totalorder %s14, 1
    %p116 = scmp.ne.s32.totalorder %s111, %s113
    %p117 = scmp.eq.s32.totalorder %s14, 0
    %p118 = por %p116, %p117
    %p119 = scmp.ne.s32.totalorder %s111, %s113
    %p120 = scmp.eq.s32.totalorder %s19, 1
    %p121 = por %p119, %p120
    %p122 = scmp.ne.s32.totalorder %s113, %s114
    %p123 = scmp.eq.s32.totalorder %s19, 0
    %p124 = por %p122, %p123
    %p125 = scmp.ne.s32.totalorder %s113, %s114
    %p126 = scmp.eq.s32.totalorder %s20, 1
    %p127 = por %p125, %p126
    %p129 = scmp.ne.s32.totalorder %s114, %s128
    %p130 = scmp.eq.s32.totalorder %s20, 0
    %p131 = por %p129, %p130
    %s132 = ssub.s32 %s14, %s21
    %p133 = scmp.eq.s32.totalorder %s132, 0
    %s135 = sadd.s32 %s134, 1
    %s136 = scalar_select %p133, %s134, %s135
    %p139 = pneg %p133
    %p140 = scmp.eq.s32.totalorder %s14, 1
    %p141 = por %p139, %p140
    %p142 = scmp.ne.s32.totalorder %s134, %s137
    %p143 = scmp.eq.s32.totalorder %s14, 0
    %p144 = por %p142, %p143
    %p145 = scmp.ne.s32.totalorder %s134, %s137
    %p146 = scmp.eq.s32.totalorder %s19, 1
    %p147 = por %p145, %p146
    %p148 = scmp.ne.s32.totalorder %s137, %s138
    %p149 = scmp.eq.s32.totalorder %s19, 0
    %p150 = por %p148, %p149
    %p151 = scmp.ne.s32.totalorder %s137, %s138
    %p152 = scmp.eq.s32.totalorder %s20, 1
    %p153 = por %p151, %p152
    %p155 = scmp.ne.s32.totalorder %s138, %s154
    %p156 = scmp.eq.s32.totalorder %s20, 0
    %p157 = por %p155, %p156
    %s158 = ssub.s32 %s14, %s21
    %p159 = scmp.eq.s32.totalorder %s158, 0
    %s161 = sadd.s32 %s160, 1
    %s162 = scalar_select %p159, %s160, %s161
    %p165 = pneg %p159
    %p166 = scmp.eq.s32.totalorder %s14, 1
    %p167 = por %p165, %p166
    %p168 = scmp.ne.s32.totalorder %s160, %s163
    %p169 = scmp.eq.s32.totalorder %s14, 0
    %p170 = por %p168, %p169
    %p171 = scmp.ne.s32.totalorder %s160, %s163
    %p172 = scmp.eq.s32.totalorder %s19, 1
    %p173 = por %p171, %p172
    %p174 = scmp.ne.s32.totalorder %s163, %s164
    %p175 = scmp.eq.s32.totalorder %s19, 0
    %p176 = por %p174, %p175
    %p177 = scmp.ne.s32.totalorder %s163, %s164
    %p178 = scmp.eq.s32.totalorder %s20, 1
    %p179 = por %p177, %p178
    %p181 = scmp.ne.s32.totalorder %s164, %s180
    %p182 = scmp.eq.s32.totalorder %s20, 0
    %p183 = por %p181, %p182
    %s184 = ssub.s32 %s14, %s21
    %p185 = scmp.eq.s32.totalorder %s184, 0
    %s187 = sadd.s32 %s186, 1
    %s188 = scalar_select %p185, %s186, %s187
    %p191 = pneg %p185
    %p192 = scmp.eq.s32.totalorder %s14, 1
    %p193 = por %p191, %p192
    %p194 = scmp.ne.s32.totalorder %s186, %s189
    %p195 = scmp.eq.s32.totalorder %s14, 0
    %p196 = por %p194, %p195
    %p197 = scmp.ne.s32.totalorder %s186, %s189
    %p198 = scmp.eq.s32.totalorder %s19, 1
    %p199 = por %p197, %p198
    %p200 = scmp.ne.s32.totalorder %s189, %s190
    %p201 = scmp.eq.s32.totalorder %s19, 0
    %p202 = por %p200, %p201
    %p203 = scmp.ne.s32.totalorder %s189, %s190
    %p204 = scmp.eq.s32.totalorder %s20, 1
    %p205 = por %p203, %p204
    %p207 = scmp.ne.s32.totalorder %s190, %s206
    %p208 = scmp.eq.s32.totalorder %s20, 0
    %p209 = por %p207, %p208
    %p210 = scmp.le.s32.totalorder 1, %s14
    %p211 = scmp.lt.s32.totalorder %s14, 3
    %p212 = pnand %p210, %p211
    %p213 = pneg %p212
    // Predicated region
    $region9: #{generator_forward.6} parent=5 // pred_check
      _
    $region10: #{generator_forward.6} parent=5 // pred_check_branch
      %215 = sbr.rel (%p212) target = $region12
    $region11: #{generator_forward.6} parent=5 // pred_region
      %s216 = ssub.s32 %s14, 1
      // Predicated region
      $region13: #{generator_forward.6} parent=11 // pred_check
        %p217 = pneg %p61
      $region14: #{generator_forward.6} parent=11 // pred_check_branch
        %219 = sbr.rel (%p217) target = $region16
      $region15: #{generator_forward.6} parent=11 // pred_region
        _
      $region16: #{generator_forward.6} parent=11 // pred_fallthru
        _
      // Predicated region
      $region17: #{generator_forward.6} parent=11 // pred_check
        %p220 = pneg %p82
      $region18: #{generator_forward.6} parent=11 // pred_check_branch
        %222 = sbr.rel (%p220) target = $region20
      $region19: #{generator_forward.6} parent=11 // pred_region
        _
      $region20: #{generator_forward.6} parent=11 // pred_fallthru
        _
      // Predicated region
      $region21: #{generator_forward.6} parent=11 // pred_check
        %p223 = pneg %p103
      $region22: #{generator_forward.6} parent=11 // pred_check_branch
        %225 = sbr.rel (%p223) target = $region24
      $region23: #{generator_forward.6} parent=11 // pred_region
        _
      $region24: #{generator_forward.6} parent=11 // pred_fallthru
        _
      // Predicated region
      $region25: #{generator_forward.6} parent=11 // pred_check
        %p226 = pneg %p124
      $region26: #{generator_forward.6} parent=11 // pred_check_branch
        %228 = sbr.rel (%p226) target = $region28
      $region27: #{generator_forward.6} parent=11 // pred_region
        _
      $region28: #{generator_forward.6} parent=11 // pred_fallthru
        _
    $region12: #{generator_forward.6} parent=5 // pred_fallthru
      _
    %p229 = scmp.lt.s32.totalorder %s14, 2
    // Predicated region
    $region29: #{generator_forward.6} parent=5 // pred_check
      %p230 = pneg %p229
    $region30: #{generator_forward.6} parent=5 // pred_check_branch
      %232 = sbr.rel (%p230) target = $region32
    $region31: #{generator_forward.6} parent=5 // pred_region
      // Predicated region
      $region33: #{generator_forward.6} parent=31 // pred_check
        %p233 = pneg %p34
      $region34: #{generator_forward.6} parent=31 // pred_check_branch
        %235 = sbr.rel (%p233) target = $region36
      $region35: #{generator_forward.6} parent=31 // pred_region
        %p236 = scmp.lt.s32.totalorder %s14, 1
        %s237 = scalar_select %p236, %s14, 1
        %s238 = smul.addr %s237, 54
        %s239 = smul.addr %s238, 4
        %s240 = scalar_lea.vmem %s0, %s239
      $region36: #{generator_forward.6} parent=31 // pred_fallthru
        _
    $region32: #{generator_forward.6} parent=5 // pred_fallthru
      _
    %p241 = scmp.le.s32.totalorder 1, %s14
    %p242 = scmp.lt.s32.totalorder %s14, 3
    %p243 = pnand %p241, %p242
    %p244 = pneg %p243
    // Predicated region
    $region37: #{generator_forward.6} parent=5 // pred_check
      _
    $region38: #{generator_forward.6} parent=5 // pred_check_branch
      %246 = sbr.rel (%p243) target = $region40
    $region39: #{generator_forward.6} parent=5 // pred_region
      %s247 = ssub.s32 %s14, 1
      %p248 = scmp.lt.s32.totalorder %s19, 1
      %s249 = scalar_select %p248, %s19, 1
      %s250 = smul.addr %s249, 54
      %s251 = smul.addr %s250, 4
      %s252 = scalar_lea.vmem %s0, %s251
      %p253 = pneg %p40
      %p254 = pneg %p37
      %p255 = pneg %p61
      %p256 = pneg %p58
      %p257 = pneg %p82
      %p258 = pneg %p79
      %p259 = pneg %p103
      %p260 = pneg %p100
      %p261 = pneg %p124
      %p262 = pneg %p121
      %p263 = pneg %p150
      %p264 = pneg %p147
      %p265 = scmp.lt.s32.totalorder %s19, 1
      %s266 = scalar_select %p265, %s19, 1
      %s267 = smul.addr %s266, 32
      %s268 = smul.addr %s267, 4
      %s269 = scalar_lea.vmem %s5, %s268
      %p270 = pneg %p176
      %p271 = pneg %p173
      %p272 = scmp.lt.s32.totalorder %s19, 1
      %s273 = scalar_select %p272, %s19, 1
      %s274 = scalar_lea.vmem %s6, %s273
      %p275 = pneg %p202
      %p276 = pneg %p199
      %p277 = scmp.lt.s32.totalorder %s19, 1
      %s278 = scalar_select %p277, %s19, 1
      %s279 = scalar_lea.vmem %s7, %s278
      %p280 = scmp.lt.s32.totalorder %s19, 1
      %s281 = scalar_select %p280, %s19, 1
      %s282 = smul.addr %s281, 54
      %s283 = smul.addr %s282, 4
      %s284 = scalar_lea.vmem %s0, %s283
      %p285 = scmp.lt.s32.totalorder %s19, 1
      %s286 = scalar_select %p285, %s19, 1
      %s287 = smul.addr %s286, 32
      %s288 = smul.addr %s287, 4
      %s289 = scalar_lea.vmem %s5, %s288
      %p290 = scmp.lt.s32.totalorder %s19, 1
      %s291 = scalar_select %p290, %s19, 1
      %s292 = scalar_lea.vmem %s6, %s291
      %p293 = scmp.lt.s32.totalorder %s19, 1
      %s294 = scalar_select %p293, %s19, 1
      %s295 = scalar_lea.vmem %s7, %s294
      %v297 = vld [vmem:[%s284] sm:$0xf]
      %v298 = vld [vmem:[%s284 + $0x4] sm:$0xf]
      %v299 = vld [vmem:[%s284 + $0x8] sm:$0x1]
      %v300 = vld [vmem:[%s284 + $0xc] sm:$0xf]
      %v301 = vld [vmem:[%s284 + $0x10] sm:$0xf]
      %v302 = vld [vmem:[%s284 + $0x14] sm:$0x1]
      %v303 = vld [vmem:[%s284 + $0x18] sm:$0xf]
      %v304 = vld [vmem:[%s284 + $0x1c] sm:$0xf]
      %v305 = vld [vmem:[%s284 + $0x20] sm:$0x1]
      %v306 = vld [vmem:[%s284 + $0x24] sm:$0xf]
      %v307 = vld [vmem:[%s284 + $0x28] sm:$0xf]
      %v308 = vld [vmem:[%s284 + $0x2c] sm:$0x1]
      %v309 = vld [vmem:[%s284 + $0x30] sm:$0xf]
      %v310 = vld [vmem:[%s284 + $0x34] sm:$0xf]
      %v311 = vld [vmem:[%s284 + $0x38] sm:$0x1]
      %v312 = vld [vmem:[%s284 + $0x3c] sm:$0xf]
      %v313 = vld [vmem:[%s284 + $0x40] sm:$0xf]
      %v314 = vld [vmem:[%s284 + $0x44] sm:$0x1]
      %v315 = vld [vmem:[%s284 + $0x48] sm:$0xf]
      %v316 = vld [vmem:[%s284 + $0x4c] sm:$0xf]
      %v317 = vld [vmem:[%s284 + $0x50] sm:$0x1]
      %v318 = vld [vmem:[%s284 + $0x54] sm:$0xf]
      %v319 = vld [vmem:[%s284 + $0x58] sm:$0xf]
      %v320 = vld [vmem:[%s284 + $0x5c] sm:$0x1]
      %v321 = vld [vmem:[%s284 + $0x60] sm:$0xf]
      %v322 = vld [vmem:[%s284 + $0x64] sm:$0xf]
      %v323 = vld [vmem:[%s284 + $0x68] sm:$0x1]
      %v324 = vld [vmem:[%s284 + $0x6c] sm:$0xf]
      %v325 = vld [vmem:[%s284 + $0x70] sm:$0xf]
      %v326 = vld [vmem:[%s284 + $0x74] sm:$0x1]
      %v327 = vld [vmem:[%s284 + $0x78] sm:$0xf]
      %v328 = vld [vmem:[%s284 + $0x7c] sm:$0xf]
      %v329 = vld [vmem:[%s284 + $0x80] sm:$0x1]
      %v330 = vld [vmem:[%s284 + $0x84] sm:$0xf]
      %v331 = vld [vmem:[%s284 + $0x88] sm:$0xf]
      %v332 = vld [vmem:[%s284 + $0x8c] sm:$0x1]
      %v333 = vld [vmem:[%s284 + $0x90] sm:$0xf]
      %v334 = vld [vmem:[%s284 + $0x94] sm:$0xf]
      %v335 = vld [vmem:[%s284 + $0x98] sm:$0x1]
      %v336 = vld [vmem:[%s284 + $0x9c] sm:$0xf]
      %v337 = vld [vmem:[%s284 + $0xa0] sm:$0xf]
      %v338 = vld [vmem:[%s284 + $0xa4] sm:$0x1]
      %v339 = vld [vmem:[%s284 + $0xa8] sm:$0xf]
      %v340 = vld [vmem:[%s284 + $0xac] sm:$0xf]
      %v341 = vld [vmem:[%s284 + $0xb0] sm:$0x1]
      %v342 = vld [vmem:[%s284 + $0xb4] sm:$0xf]
      %v343 = vld [vmem:[%s284 + $0xb8] sm:$0xf]
      %v344 = vld [vmem:[%s284 + $0xbc] sm:$0x1]
      %v345 = vld [vmem:[%s284 + $0xc0] sm:$0xf]
      %v346 = vld [vmem:[%s284 + $0xc4] sm:$0xf]
      %v347 = vld [vmem:[%s284 + $0xc8] sm:$0x1]
      %v348 = vld [vmem:[%s284 + $0xcc] sm:$0xf]
      %v349 = vld [vmem:[%s284 + $0xd0] sm:$0xf]
      %v350 = vld [vmem:[%s284 + $0xd4] sm:$0x1]
      %v351 = vunpack.c.l.bf16 %v297
      %v352 = vunpack.c.l.bf16 %v298
      %v353 = vunpack.c.l.bf16 %v299
      %v354 = vunpack.c.l.bf16 %v300
      %v355 = vunpack.c.l.bf16 %v301
      %v356 = vunpack.c.l.bf16 %v302
      %v357 = vunpack.c.l.bf16 %v303
      %v358 = vunpack.c.l.bf16 %v304
      %v359 = vunpack.c.l.bf16 %v305
      %v360 = vunpack.c.l.bf16 %v306
      %v361 = vunpack.c.l.bf16 %v307
      %v362 = vunpack.c.l.bf16 %v308
      %v363 = vunpack.c.l.bf16 %v309
      %v364 = vunpack.c.l.bf16 %v310
      %v365 = vunpack.c.l.bf16 %v311
      %v366 = vunpack.c.l.bf16 %v312
      %v367 = vunpack.c.l.bf16 %v313
      %v368 = vunpack.c.l.bf16 %v314
      %v369 = vunpack.c.l.bf16 %v315
      %v370 = vunpack.c.l.bf16 %v316
      %v371 = vunpack.c.l.bf16 %v317
      %v372 = vunpack.c.l.bf16 %v318
      %v373 = vunpack.c.l.bf16 %v319
      %v374 = vunpack.c.l.bf16 %v320
      %v375 = vunpack.c.l.bf16 %v321
      %v376 = vunpack.c.l.bf16 %v322
      %v377 = vunpack.c.l.bf16 %v323
      %v378 = vunpack.c.l.bf16 %v324
      %v379 = vunpack.c.l.bf16 %v325
      %v380 = vunpack.c.l.bf16 %v326
      %v381 = vunpack.c.l.bf16 %v327
      %v382 = vunpack.c.l.bf16 %v328
      %v383 = vunpack.c.l.bf16 %v329
      %v384 = vunpack.c.l.bf16 %v330
      %v385 = vunpack.c.l.bf16 %v331
      %v386 = vunpack.c.l.bf16 %v332
      %v387 = vunpack.c.l.bf16 %v333
      %v388 = vunpack.c.l.bf16 %v334
      %v389 = vunpack.c.l.bf16 %v335
      %v390 = vunpack.c.l.bf16 %v336
      %v391 = vunpack.c.l.bf16 %v337
      %v392 = vunpack.c.l.bf16 %v338
      %v393 = vunpack.c.l.bf16 %v339
      %v394 = vunpack.c.l.bf16 %v340
      %v395 = vunpack.c.l.bf16 %v341
      %v396 = vunpack.c.l.bf16 %v342
      %v397 = vunpack.c.l.bf16 %v343
      %v398 = vunpack.c.l.bf16 %v344
      %v399 = vunpack.c.l.bf16 %v345
      %v400 = vunpack.c.l.bf16 %v346
      %v401 = vunpack.c.l.bf16 %v347
      %v402 = vunpack.c.l.bf16 %v348
      %v403 = vunpack.c.l.bf16 %v349
      %v404 = vunpack.c.l.bf16 %v350
      %v405 = vlaneseq
      %v406 = vshrl.u32 %v405, 7
      %v407 = vadd.s32 %v406, 8
      %v408 = vadd.s32 %v406, 16
      %vm409 = vcmp.ge.s32.totalorder %v406, 1
      %vm410 = vcmp.ge.s32.totalorder %v407, 1
      %vm411 = vcmp.ge.s32.totalorder %v408, 1
      %vm412 = vmand 0, %vm409
      %vm413 = vmand 0, %vm410
      %vm414 = vmand 0, %vm411
      %vm415 = vmand 1, %vm409
      %vm416 = vmand 1, %vm410
      %vm417 = vmand 1, %vm411
      %vm418 = vcmp.le.s32.totalorder %v406, 16
      %vm419 = vcmp.le.s32.totalorder %v407, 16
      %vm420 = vcmp.le.s32.totalorder %v408, 16
      %vm421 = vmand %vm412, %vm418
      %vm422 = vmand %vm413, %vm419
      %vm423 = vmand %vm414, %vm420
      %vm424 = vmand %vm415, %vm418
      %vm425 = vmand %vm416, %vm419
      %vm426 = vmand %vm417, %vm420
      %v427 = vsel %vm421, 1, 0
      %v428 = vsel %vm422, 1, 0
      %v429 = vsel %vm423, 1, 0
      %v430 = vsel %vm424, 1, 0
      %v431 = vsel %vm425, 1, 0
      %v432 = vsel %vm426, 1, 0
      %v433 = vcvt.s32.f32 %v427
      %v434 = vcvt.s32.f32 %v428
      %v435 = vcvt.s32.f32 %v429
      %v436 = vcvt.s32.f32 %v430
      %v437 = vcvt.s32.f32 %v431
      %v438 = vcvt.s32.f32 %v432
      %v439 = vld [vmem:[%s3] sm:$0x1]
      %v441 = vlaneseq
      %v442 = vshrl.u32 %v441, 7
      %v443 = vsub.s32 0, %v442
      %v444 = vrot.slane %v439, %v443
      %v446 = vmul.f32 %v351, %v444
      %v447 = vmul.f32 %v352, %v444
      %v448 = vmul.f32 %v353, %v444
      %v449 = vmul.f32 %v354, %v444
      %v450 = vmul.f32 %v355, %v444
      %v451 = vmul.f32 %v356, %v444
      %v452 = vmul.f32 %v357, %v444
      %v453 = vmul.f32 %v358, %v444
      %v454 = vmul.f32 %v359, %v444
      %v455 = vmul.f32 %v360, %v444
      %v456 = vmul.f32 %v361, %v444
      %v457 = vmul.f32 %v362, %v444
      %v458 = vmul.f32 %v363, %v444
      %v459 = vmul.f32 %v364, %v444
      %v460 = vmul.f32 %v365, %v444
      %v461 = vmul.f32 %v366, %v444
      %v462 = vmul.f32 %v367, %v444
      %v463 = vmul.f32 %v368, %v444
      %v464 = vmul.f32 %v369, %v444
      %v465 = vmul.f32 %v370, %v444
      %v466 = vmul.f32 %v371, %v444
      %v467 = vmul.f32 %v372, %v444
      %v468 = vmul.f32 %v373, %v444
      %v469 = vmul.f32 %v374, %v444
      %v470 = vmul.f32 %v375, %v444
      %v471 = vmul.f32 %v376, %v444
      %v472 = vmul.f32 %v377, %v444
      %v473 = vmul.f32 %v378, %v444
      %v474 = vmul.f32 %v379, %v444
      %v475 = vmul.f32 %v380, %v444
      %v476 = vmul.f32 %v381, %v444
      %v477 = vmul.f32 %v382, %v444
      %v478 = vmul.f32 %v383, %v444
      %v479 = vmul.f32 %v384, %v444
      %v480 = vmul.f32 %v385, %v444
      %v481 = vmul.f32 %v386, %v444
      %v482 = vmul.f32 %v387, %v444
      %v483 = vmul.f32 %v388, %v444
      %v484 = vmul.f32 %v389, %v444
      %v485 = vmul.f32 %v390, %v444
      %v486 = vmul.f32 %v391, %v444
      %v487 = vmul.f32 %v392, %v444
      %v488 = vmul.f32 %v393, %v444
      %v489 = vmul.f32 %v394, %v444
      %v490 = vmul.f32 %v395, %v444
      %v491 = vmul.f32 %v396, %v444
      %v492 = vmul.f32 %v397, %v444
      %v493 = vmul.f32 %v398, %v444
      %v494 = vmul.f32 %v399, %v444
      %v495 = vmul.f32 %v400, %v444
      %v496 = vmul.f32 %v401, %v444
      %v497 = vmul.f32 %v402, %v444
      %v498 = vmul.f32 %v403, %v444
      %v499 = vmul.f32 %v404, %v444
      %v500 = vld [vmem:[%s4] sm:$0x1]
      %v502 = vlaneseq
      %v503 = vshrl.u32 %v502, 7
      %v504 = vsub.s32 0, %v503
      %v505 = vrot.slane %v500, %v504
      %v507 = vmul.f32 %v505, %v433
      %v508 = vmul.f32 %v505, %v434
      %v509 = vmul.f32 %v505, %v435
      %v510 = vmul.f32 %v505, %v436
      %v511 = vmul.f32 %v505, %v437
      %v512 = vmul.f32 %v505, %v438
      %v513 = vadd.f32 %v446, %v507
      %v514 = vadd.f32 %v447, %v508
      %v515 = vadd.f32 %v448, %v509
      %v516 = vadd.f32 %v449, %v510
      %v517 = vadd.f32 %v450, %v511
      %v518 = vadd.f32 %v451, %v512
      %v519 = vadd.f32 %v452, %v510
      %v520 = vadd.f32 %v453, %v511
      %v521 = vadd.f32 %v454, %v512
      %v522 = vadd.f32 %v455, %v510
      %v523 = vadd.f32 %v456, %v511
      %v524 = vadd.f32 %v457, %v512
      %v525 = vadd.f32 %v458, %v510
      %v526 = vadd.f32 %v459, %v511
      %v527 = vadd.f32 %v460, %v512
      %v528 = vadd.f32 %v461, %v510
      %v529 = vadd.f32 %v462, %v511
      %v530 = vadd.f32 %v463, %v512
      %v531 = vadd.f32 %v464, %v510
      %v532 = vadd.f32 %v465, %v511
      %v533 = vadd.f32 %v466, %v512
      %v534 = vadd.f32 %v467, %v510
      %v535 = vadd.f32 %v468, %v511
      %v536 = vadd.f32 %v469, %v512
      %v537 = vadd.f32 %v470, %v510
      %v538 = vadd.f32 %v471, %v511
      %v539 = vadd.f32 %v472, %v512
      %v540 = vadd.f32 %v473, %v510
      %v541 = vadd.f32 %v474, %v511
      %v542 = vadd.f32 %v475, %v512
      %v543 = vadd.f32 %v476, %v510
      %v544 = vadd.f32 %v477, %v511
      %v545 = vadd.f32 %v478, %v512
      %v546 = vadd.f32 %v479, %v510
      %v547 = vadd.f32 %v480, %v511
      %v548 = vadd.f32 %v481, %v512
      %v549 = vadd.f32 %v482, %v510
      %v550 = vadd.f32 %v483, %v511
      %v551 = vadd.f32 %v484, %v512
      %v552 = vadd.f32 %v485, %v510
      %v553 = vadd.f32 %v486, %v511
      %v554 = vadd.f32 %v487, %v512
      %v555 = vadd.f32 %v488, %v510
      %v556 = vadd.f32 %v489, %v511
      %v557 = vadd.f32 %v490, %v512
      %v558 = vadd.f32 %v491, %v510
      %v559 = vadd.f32 %v492, %v511
      %v560 = vadd.f32 %v493, %v512
      %v561 = vadd.f32 %v494, %v510
      %v562 = vadd.f32 %v495, %v511
      %v563 = vadd.f32 %v496, %v512
      %v564 = vadd.f32 %v497, %v507
      %v565 = vadd.f32 %v498, %v508
      %v566 = vadd.f32 %v499, %v509
      %v567 = vmax.f32 %v513, 0.0
      %v568 = vmax.f32 %v514, 0.0
      %v569 = vmax.f32 %v515, 0.0
      %v570 = vmax.f32 %v516, 0.0
      %v571 = vmax.f32 %v517, 0.0
      %v572 = vmax.f32 %v518, 0.0
      %v573 = vmax.f32 %v519, 0.0
      %v574 = vmax.f32 %v520, 0.0
      %v575 = vmax.f32 %v521, 0.0
      %v576 = vmax.f32 %v522, 0.0
      %v577 = vmax.f32 %v523, 0.0
      %v578 = vmax.f32 %v524, 0.0
      %v579 = vmax.f32 %v525, 0.0
      %v580 = vmax.f32 %v526, 0.0
      %v581 = vmax.f32 %v527, 0.0
      %v582 = vmax.f32 %v528, 0.0
      %v583 = vmax.f32 %v529, 0.0
      %v584 = vmax.f32 %v530, 0.0
      %v585 = vmax.f32 %v531, 0.0
      %v586 = vmax.f32 %v532, 0.0
      %v587 = vmax.f32 %v533, 0.0
      %v588 = vmax.f32 %v534, 0.0
      %v589 = vmax.f32 %v535, 0.0
      %v590 = vmax.f32 %v536, 0.0
      %v591 = vmax.f32 %v537, 0.0
      %v592 = vmax.f32 %v538, 0.0
      %v593 = vmax.f32 %v539, 0.0
      %v594 = vmax.f32 %v540, 0.0
      %v595 = vmax.f32 %v541, 0.0
      %v596 = vmax.f32 %v542, 0.0
      %v597 = vmax.f32 %v543, 0.0
      %v598 = vmax.f32 %v544, 0.0
      %v599 = vmax.f32 %v545, 0.0
      %v600 = vmax.f32 %v546, 0.0
      %v601 = vmax.f32 %v547, 0.0
      %v602 = vmax.f32 %v548, 0.0
      %v603 = vmax.f32 %v549, 0.0
      %v604 = vmax.f32 %v550, 0.0
      %v605 = vmax.f32 %v551, 0.0
      %v606 = vmax.f32 %v552, 0.0
      %v607 = vmax.f32 %v553, 0.0
      %v608 = vmax.f32 %v554, 0.0
      %v609 = vmax.f32 %v555, 0.0
      %v610 = vmax.f32 %v556, 0.0
      %v611 = vmax.f32 %v557, 0.0
      %v612 = vmax.f32 %v558, 0.0
      %v613 = vmax.f32 %v559, 0.0
      %v614 = vmax.f32 %v560, 0.0
      %v615 = vmax.f32 %v561, 0.0
      %v616 = vmax.f32 %v562, 0.0
      %v617 = vmax.f32 %v563, 0.0
      %v618 = vmax.f32 %v564, 0.0
      %v619 = vmax.f32 %v565, 0.0
      %v620 = vmax.f32 %v566, 0.0
      %v621 = vpack.c.bf16 %v568, %v567
      %v622 = vpack.c.bf16 %v569, %v569
      %v623 = vpack.c.bf16 %v571, %v570
      %v624 = vpack.c.bf16 %v572, %v572
      %v625 = vpack.c.bf16 %v574, %v573
      %v626 = vpack.c.bf16 %v575, %v575
      %v627 = vpack.c.bf16 %v577, %v576
      %v628 = vpack.c.bf16 %v578, %v578
      %v629 = vpack.c.bf16 %v580, %v579
      %v630 = vpack.c.bf16 %v581, %v581
      %v631 = vpack.c.bf16 %v583, %v582
      %v632 = vpack.c.bf16 %v584, %v584
      %v633 = vpack.c.bf16 %v586, %v585
      %v634 = vpack.c.bf16 %v587, %v587
      %v635 = vpack.c.bf16 %v589, %v588
      %v636 = vpack.c.bf16 %v590, %v590
      %v637 = vpack.c.bf16 %v592, %v591
      %v638 = vpack.c.bf16 %v593, %v593
      %v639 = vpack.c.bf16 %v595, %v594
      %v640 = vpack.c.bf16 %v596, %v596
      %v641 = vpack.c.bf16 %v598, %v597
      %v642 = vpack.c.bf16 %v599, %v599
      %v643 = vpack.c.bf16 %v601, %v600
      %v644 = vpack.c.bf16 %v602, %v602
      %v645 = vpack.c.bf16 %v604, %v603
      %v646 = vpack.c.bf16 %v605, %v605
      %v647 = vpack.c.bf16 %v607, %v606
      %v648 = vpack.c.bf16 %v608, %v608
      %v649 = vpack.c.bf16 %v610, %v609
      %v650 = vpack.c.bf16 %v611, %v611
      %v651 = vpack.c.bf16 %v613, %v612
      %v652 = vpack.c.bf16 %v614, %v614
      %v653 = vpack.c.bf16 %v616, %v615
      %v654 = vpack.c.bf16 %v617, %v617
      %v655 = vpack.c.bf16 %v619, %v618
      %v656 = vpack.c.bf16 %v620, %v620
      %vm657 = vsmask.f32 7424
      %v659 = vshrl.u32 %v621, 16
      %v661 = vshll.u32 %v621, 16
      %v663 = vrot.slane %v661, 1
      %v664 = vor.u32 %v659, %v663
      %v666 = vshll.u32 %v622, 16
      %v668 = vrot.slane %v666, 1
      %v669 = vsel %vm657, %v664, %v668
      %v671 = vshrl.u32 %v623, 16
      %v673 = vshll.u32 %v623, 16
      %v675 = vrot.slane %v673, 1
      %v676 = vor.u32 %v671, %v675
      %v678 = vshll.u32 %v624, 16
      %v680 = vrot.slane %v678, 1
      %v681 = vsel %vm657, %v676, %v680
      %v683 = vshrl.u32 %v625, 16
      %v685 = vshll.u32 %v625, 16
      %v687 = vrot.slane %v685, 1
      %v688 = vor.u32 %v683, %v687
      %v690 = vshll.u32 %v626, 16
      %v692 = vrot.slane %v690, 1
      %v693 = vsel %vm657, %v688, %v692
      %v695 = vshrl.u32 %v627, 16
      %v697 = vshll.u32 %v627, 16
      %v699 = vrot.slane %v697, 1
      %v700 = vor.u32 %v695, %v699
      %v702 = vshll.u32 %v628, 16
      %v704 = vrot.slane %v702, 1
      %v705 = vsel %vm657, %v700, %v704
      %v707 = vshrl.u32 %v629, 16
      %v709 = vshll.u32 %v629, 16
      %v711 = vrot.slane %v709, 1
      %v712 = vor.u32 %v707, %v711
      %v714 = vshll.u32 %v630, 16
      %v716 = vrot.slane %v714, 1
      %v717 = vsel %vm657, %v712, %v716
      %v719 = vshrl.u32 %v631, 16
      %v721 = vshll.u32 %v631, 16
      %v723 = vrot.slane %v721, 1
      %v724 = vor.u32 %v719, %v723
      %v726 = vshll.u32 %v632, 16
      %v728 = vrot.slane %v726, 1
      %v729 = vsel %vm657, %v724, %v728
      %v731 = vshrl.u32 %v633, 16
      %v733 = vshll.u32 %v633, 16
      %v735 = vrot.slane %v733, 1
      %v736 = vor.u32 %v731, %v735
      %v738 = vshll.u32 %v634, 16
      %v740 = vrot.slane %v738, 1
      %v741 = vsel %vm657, %v736, %v740
      %v743 = vshrl.u32 %v635, 16
      %v745 = vshll.u32 %v635, 16
      %v747 = vrot.slane %v745, 1
      %v748 = vor.u32 %v743, %v747
      %v750 = vshll.u32 %v636, 16
      %v752 = vrot.slane %v750, 1
      %v753 = vsel %vm657, %v748, %v752
      %v755 = vshrl.u32 %v637, 16
      %v757 = vshll.u32 %v637, 16
      %v759 = vrot.slane %v757, 1
      %v760 = vor.u32 %v755, %v759
      %v762 = vshll.u32 %v638, 16
      %v764 = vrot.slane %v762, 1
      %v765 = vsel %vm657, %v760, %v764
      %v767 = vshrl.u32 %v639, 16
      %v769 = vshll.u32 %v639, 16
      %v771 = vrot.slane %v769, 1
      %v772 = vor.u32 %v767, %v771
      %v774 = vshll.u32 %v640, 16
      %v776 = vrot.slane %v774, 1
      %v777 = vsel %vm657, %v772, %v776
      %v779 = vshrl.u32 %v641, 16
      %v781 = vshll.u32 %v641, 16
      %v783 = vrot.slane %v781, 1
      %v784 = vor.u32 %v779, %v783
      %v786 = vshll.u32 %v642, 16
      %v788 = vrot.slane %v786, 1
      %v789 = vsel %vm657, %v784, %v788
      %v791 = vshrl.u32 %v643, 16
      %v793 = vshll.u32 %v643, 16
      %v795 = vrot.slane %v793, 1
      %v796 = vor.u32 %v791, %v795
      %v798 = vshll.u32 %v644, 16
      %v800 = vrot.slane %v798, 1
      %v801 = vsel %vm657, %v796, %v800
      %v803 = vshrl.u32 %v645, 16
      %v805 = vshll.u32 %v645, 16
      %v807 = vrot.slane %v805, 1
      %v808 = vor.u32 %v803, %v807
      %v810 = vshll.u32 %v646, 16
      %v812 = vrot.slane %v810, 1
      %v813 = vsel %vm657, %v808, %v812
      %v815 = vshrl.u32 %v647, 16
      %v817 = vshll.u32 %v647, 16
      %v819 = vrot.slane %v817, 1
      %v820 = vor.u32 %v815, %v819
      %v822 = vshll.u32 %v648, 16
      %v824 = vrot.slane %v822, 1
      %v825 = vsel %vm657, %v820, %v824
      %v827 = vshrl.u32 %v649, 16
      %v829 = vshll.u32 %v649, 16
      %v831 = vrot.slane %v829, 1
      %v832 = vor.u32 %v827, %v831
      %v834 = vshll.u32 %v650, 16
      %v836 = vrot.slane %v834, 1
      %v837 = vsel %vm657, %v832, %v836
      %v839 = vshrl.u32 %v651, 16
      %v841 = vshll.u32 %v651, 16
      %v843 = vrot.slane %v841, 1
      %v844 = vor.u32 %v839, %v843
      %v846 = vshll.u32 %v652, 16
      %v848 = vrot.slane %v846, 1
      %v849 = vsel %vm657, %v844, %v848
      %vm898 = vcmask 1046528
      %v899 = vrot.slane %v621, 1
      %v900 = vrot.slane %v622, 1
      %v901 = vsel %vm898, %v899, %v900
      %v902 = vrot.slane %v623, 1
      %v903 = vrot.slane %v624, 1
      %v904 = vsel %vm898, %v902, %v903
      %v905 = vrot.slane %v625, 1
      %v906 = vrot.slane %v626, 1
      %v907 = vsel %vm898, %v905, %v906
      %v908 = vrot.slane %v627, 1
      %v909 = vrot.slane %v628, 1
      %v910 = vsel %vm898, %v908, %v909
      %v911 = vrot.slane %v629, 1
      %v912 = vrot.slane %v630, 1
      %v913 = vsel %vm898, %v911, %v912
      %v914 = vrot.slane %v631, 1
      %v915 = vrot.slane %v632, 1
      %v916 = vsel %vm898, %v914, %v915
      %v917 = vrot.slane %v633, 1
      %v918 = vrot.slane %v634, 1
      %v919 = vsel %vm898, %v917, %v918
      %v920 = vrot.slane %v635, 1
      %v921 = vrot.slane %v636, 1
      %v922 = vsel %vm898, %v920, %v921
      %v923 = vrot.slane %v637, 1
      %v924 = vrot.slane %v638, 1
      %v925 = vsel %vm898, %v923, %v924
      %v926 = vrot.slane %v639, 1
      %v927 = vrot.slane %v640, 1
      %v928 = vsel %vm898, %v926, %v927
      %v929 = vrot.slane %v641, 1
      %v930 = vrot.slane %v642, 1
      %v931 = vsel %vm898, %v929, %v930
      %v932 = vrot.slane %v643, 1
      %v933 = vrot.slane %v644, 1
      %v934 = vsel %vm898, %v932, %v933
      %v935 = vrot.slane %v645, 1
      %v936 = vrot.slane %v646, 1
      %v937 = vsel %vm898, %v935, %v936
      %v938 = vrot.slane %v647, 1
      %v939 = vrot.slane %v648, 1
      %v940 = vsel %vm898, %v938, %v939
      %v941 = vrot.slane %v649, 1
      %v942 = vrot.slane %v650, 1
      %v943 = vsel %vm898, %v941, %v942
      %v944 = vrot.slane %v651, 1
      %v945 = vrot.slane %v652, 1
      %v946 = vsel %vm898, %v944, %v945
      %v964 = vshrl.u32 %v653, 16
      %v966 = vshll.u32 %v653, 16
      %v968 = vrot.slane %v966, 1
      %v969 = vor.u32 %v964, %v968
      %v971 = vshll.u32 %v654, 16
      %v973 = vrot.slane %v971, 1
      %v974 = vsel %vm657, %v969, %v973
      %v978 = vrot.slane %v653, 1
      %v979 = vrot.slane %v654, 1
      %v980 = vsel %vm898, %v978, %v979
      %v983 = vshrl.u32 %v655, 16
      %v985 = vshll.u32 %v655, 16
      %v987 = vrot.slane %v985, 1
      %v988 = vor.u32 %v983, %v987
      %v990 = vshll.u32 %v656, 16
      %v992 = vrot.slane %v990, 1
      %v993 = vsel %vm657, %v988, %v992
      %v997 = vrot.slane %v655, 1
      %v998 = vrot.slane %v656, 1
      %v999 = vsel %vm898, %v997, %v998
      %v1001 = vld [vmem:[%s1] sm:$0xf]
      %v1002 = vld [vmem:[%s1 + $0x4] sm:$0xf]
      %v1003 = vld [vmem:[%s1 + $0x8] sm:$0xf]
      %v1004 = vld [vmem:[%s1 + $0xc] sm:$0xf]
      %v1005 = vld [vmem:[%s1 + $0x10] sm:$0xf]
      %v1006 = vld [vmem:[%s1 + $0x14] sm:$0xf]
      %v1007 = vld [vmem:[%s1 + $0x18] sm:$0xf]
      %v1008 = vld [vmem:[%s1 + $0x1c] sm:$0xf]
      %v1009 = vld [vmem:[%s1 + $0x20] sm:$0xf]
      %v1010 = vld [vmem:[%s1 + $0x24] sm:$0xf]
      %v1011 = vld [vmem:[%s1 + $0x28] sm:$0xf]
      %v1012 = vld [vmem:[%s1 + $0x2c] sm:$0xf]
      %v1013 = vld [vmem:[%s1 + $0x30] sm:$0xf]
      %v1014 = vld [vmem:[%s1 + $0x34] sm:$0xf]
      %v1015 = vld [vmem:[%s1 + $0x38] sm:$0xf]
      %v1016 = vld [vmem:[%s1 + $0x3c] sm:$0xf]
      %v1017 = vld [vmem:[%s1 + $0x40] sm:$0xf]
      %v1018 = vld [vmem:[%s1 + $0x44] sm:$0xf]
      %v1019 = vld [vmem:[%s1 + $0x48] sm:$0xf]
      %v1020 = vld [vmem:[%s1 + $0x4c] sm:$0xf]
      %v1021 = vld [vmem:[%s1 + $0x50] sm:$0xf]
      %v1022 = vld [vmem:[%s1 + $0x54] sm:$0xf]
      %v1023 = vld [vmem:[%s1 + $0x58] sm:$0xf]
      %v1024 = vld [vmem:[%s1 + $0x5c] sm:$0xf]
      %v1025 = vld [vmem:[%s1 + $0x60] sm:$0xf]
      %v1026 = vld [vmem:[%s1 + $0x64] sm:$0xf]
      %v1027 = vld [vmem:[%s1 + $0x68] sm:$0xf]
      %v1028 = vld [vmem:[%s1 + $0x6c] sm:$0xf]
      %v1029 = vld [vmem:[%s1 + $0x70] sm:$0xf]
      %v1030 = vld [vmem:[%s1 + $0x74] sm:$0xf]
      %v1031 = vld [vmem:[%s1 + $0x78] sm:$0xf]
      %v1032 = vld [vmem:[%s1 + $0x7c] sm:$0xf]
      %v1033 = vld [vmem:[%s1 + $0x80] sm:$0xf]
      %v1034 = vld [vmem:[%s1 + $0x84] sm:$0xf]
      %v1035 = vld [vmem:[%s1 + $0x88] sm:$0xf]
      %v1036 = vld [vmem:[%s1 + $0x8c] sm:$0xf]
      %v1037 = vld [vmem:[%s1 + $0x90] sm:$0xf]
      %v1038 = vld [vmem:[%s1 + $0x94] sm:$0xf]
      %v1039 = vld [vmem:[%s1 + $0x98] sm:$0xf]
      %v1040 = vld [vmem:[%s1 + $0x9c] sm:$0xf]
      %v1041 = vld [vmem:[%s1 + $0xa0] sm:$0xf]
      %v1042 = vld [vmem:[%s1 + $0xa4] sm:$0xf]
      %v1043 = vld [vmem:[%s1 + $0xa8] sm:$0xf]
      %v1044 = vld [vmem:[%s1 + $0xac] sm:$0xf]
      %v1045 = vld [vmem:[%s1 + $0xb0] sm:$0xf]
      %v1046 = vld [vmem:[%s1 + $0xb4] sm:$0xf]
      %v1047 = vld [vmem:[%s1 + $0xb8] sm:$0xf]
      %v1048 = vld [vmem:[%s1 + $0xbc] sm:$0xf]
      %v1049 = vld [vmem:[%s1 + $0xc0] sm:$0xf]
      %v1050 = vld [vmem:[%s1 + $0xc4] sm:$0xf]
      %v1051 = vld [vmem:[%s1 + $0xc8] sm:$0xf]
      %v1052 = vld [vmem:[%s1 + $0xcc] sm:$0xf]
      %v1053 = vld [vmem:[%s1 + $0xd0] sm:$0xf]
      %v1054 = vld [vmem:[%s1 + $0xd4] sm:$0xf]
      %v1055 = vld [vmem:[%s1 + $0xd8] sm:$0xf]
      %v1056 = vld [vmem:[%s1 + $0xdc] sm:$0xf]
      %v1057 = vld [vmem:[%s1 + $0xe0] sm:$0xf]
      %v1058 = vld [vmem:[%s1 + $0xe4] sm:$0xf]
      %v1059 = vld [vmem:[%s1 + $0xe8] sm:$0xf]
      %v1060 = vld [vmem:[%s1 + $0xec] sm:$0xf]
      %v1061 = vld [vmem:[%s1 + $0xf0] sm:$0xf]
      %v1062 = vld [vmem:[%s1 + $0xf4] sm:$0xf]
      %v1063 = vld [vmem:[%s1 + $0xf8] sm:$0xf]
      %v1064 = vld [vmem:[%s1 + $0xfc] sm:$0xf]
      %v1065 = vld [vmem:[%s1 + $0x100] sm:$0xf]
      %v1066 = vld [vmem:[%s1 + $0x104] sm:$0xf]
      %v1067 = vld [vmem:[%s1 + $0x108] sm:$0xf]
      %v1068 = vld [vmem:[%s1 + $0x10c] sm:$0xf]
      %v1069 = vld [vmem:[%s1 + $0x110] sm:$0xf]
      %v1070 = vld [vmem:[%s1 + $0x114] sm:$0xf]
      %v1071 = vld [vmem:[%s1 + $0x118] sm:$0xf]
      %v1072 = vld [vmem:[%s1 + $0x11c] sm:$0xf]
      %v1073 = vld [vmem:[%s1 + $0x120] sm:$0xf]
      %v1074 = vld [vmem:[%s1 + $0x124] sm:$0xf]
      %v1075 = vld [vmem:[%s1 + $0x128] sm:$0xf]
      %v1076 = vld [vmem:[%s1 + $0x12c] sm:$0xf]
      %v1077 = vld [vmem:[%s1 + $0x130] sm:$0xf]
      %v1078 = vld [vmem:[%s1 + $0x134] sm:$0xf]
      %v1079 = vld [vmem:[%s1 + $0x138] sm:$0xf]
      %v1080 = vld [vmem:[%s1 + $0x13c] sm:$0xf]
      %v1081 = vld [vmem:[%s1 + $0x140] sm:$0xf]
      %v1082 = vld [vmem:[%s1 + $0x144] sm:$0xf]
      %v1083 = vld [vmem:[%s1 + $0x148] sm:$0xf]
      %v1084 = vld [vmem:[%s1 + $0x14c] sm:$0xf]
      %v1085 = vld [vmem:[%s1 + $0x150] sm:$0xf]
      %v1086 = vld [vmem:[%s1 + $0x154] sm:$0xf]
      %v1087 = vld [vmem:[%s1 + $0x158] sm:$0xf]
      %v1088 = vld [vmem:[%s1 + $0x15c] sm:$0xf]
      %v1089 = vld [vmem:[%s1 + $0x160] sm:$0xf]
      %v1090 = vld [vmem:[%s1 + $0x164] sm:$0xf]
      %v1091 = vld [vmem:[%s1 + $0x168] sm:$0xf]
      %v1092 = vld [vmem:[%s1 + $0x16c] sm:$0xf]
      %v1093 = vld [vmem:[%s1 + $0x170] sm:$0xf]
      %v1094 = vld [vmem:[%s1 + $0x174] sm:$0xf]
      %v1095 = vld [vmem:[%s1 + $0x178] sm:$0xf]
      %v1096 = vld [vmem:[%s1 + $0x17c] sm:$0xf]
      %v1097 = vld [vmem:[%s1 + $0x180] sm:$0xf]
      %v1098 = vld [vmem:[%s1 + $0x184] sm:$0xf]
      %v1099 = vld [vmem:[%s1 + $0x188] sm:$0xf]
      %v1100 = vld [vmem:[%s1 + $0x18c] sm:$0xf]
      %v1101 = vld [vmem:[%s1 + $0x190] sm:$0xf]
      %v1102 = vld [vmem:[%s1 + $0x194] sm:$0xf]
      %v1103 = vld [vmem:[%s1 + $0x198] sm:$0xf]
      %v1104 = vld [vmem:[%s1 + $0x19c] sm:$0xf]
      %v1105 = vld [vmem:[%s1 + $0x1a0] sm:$0xf]
      %v1106 = vld [vmem:[%s1 + $0x1a4] sm:$0xf]
      %v1107 = vld [vmem:[%s1 + $0x1a8] sm:$0xf]
      %v1108 = vld [vmem:[%s1 + $0x1ac] sm:$0xf]
      %v1109 = vld [vmem:[%s1 + $0x1b0] sm:$0xf]
      %v1110 = vld [vmem:[%s1 + $0x1b4] sm:$0xf]
      %v1111 = vld [vmem:[%s1 + $0x1b8] sm:$0xf]
      %v1112 = vld [vmem:[%s1 + $0x1bc] sm:$0xf]
      %v1113 = vld [vmem:[%s1 + $0x1c0] sm:$0xf]
      %v1114 = vld [vmem:[%s1 + $0x1c4] sm:$0xf]
      %v1115 = vld [vmem:[%s1 + $0x1c8] sm:$0xf]
      %v1116 = vld [vmem:[%s1 + $0x1cc] sm:$0xf]
      %v1117 = vld [vmem:[%s1 + $0x1d0] sm:$0xf]
      %v1118 = vld [vmem:[%s1 + $0x1d4] sm:$0xf]
      %v1119 = vld [vmem:[%s1 + $0x1d8] sm:$0xf]
      %v1120 = vld [vmem:[%s1 + $0x1dc] sm:$0xf]
      %v1121 = vld [vmem:[%s1 + $0x1e0] sm:$0xf]
      %v1122 = vld [vmem:[%s1 + $0x1e4] sm:$0xf]
      %v1123 = vld [vmem:[%s1 + $0x1e8] sm:$0xf]
      %v1124 = vld [vmem:[%s1 + $0x1ec] sm:$0xf]
      %v1125 = vld [vmem:[%s1 + $0x1f0] sm:$0xf]
      %v1126 = vld [vmem:[%s1 + $0x1f4] sm:$0xf]
      %v1127 = vld [vmem:[%s1 + $0x1f8] sm:$0xf]
      %v1128 = vld [vmem:[%s1 + $0x1fc] sm:$0xf]
      %v1129 = vld [vmem:[%s1 + $0x200] sm:$0xf]
      %v1130 = vld [vmem:[%s1 + $0x204] sm:$0xf]
      %v1131 = vld [vmem:[%s1 + $0x208] sm:$0xf]
      %v1132 = vld [vmem:[%s1 + $0x20c] sm:$0xf]
      %v1133 = vld [vmem:[%s1 + $0x210] sm:$0xf]
      %v1134 = vld [vmem:[%s1 + $0x214] sm:$0xf]
      %v1135 = vld [vmem:[%s1 + $0x218] sm:$0xf]
      %v1136 = vld [vmem:[%s1 + $0x21c] sm:$0xf]
      %v1137 = vld [vmem:[%s1 + $0x220] sm:$0xf]
      %v1138 = vld [vmem:[%s1 + $0x224] sm:$0xf]
      %v1139 = vld [vmem:[%s1 + $0x228] sm:$0xf]
      %v1140 = vld [vmem:[%s1 + $0x22c] sm:$0xf]
      %v1141 = vld [vmem:[%s1 + $0x230] sm:$0xf]
      %v1142 = vld [vmem:[%s1 + $0x234] sm:$0xf]
      %v1143 = vld [vmem:[%s1 + $0x238] sm:$0xf]
      %v1144 = vld [vmem:[%s1 + $0x23c] sm:$0xf]
      %v1145 = vld [vmem:[%s2] sm:$0x1]
      %v1147 = vlaneseq
      %v1148 = vshrl.u32 %v1147, 7
      %v1149 = vsub.s32 0, %v1148
      %v1150 = vrot.slane %v1145, %v1149
      %v1296 = vunpack.c.l.b16 %v1001
      %v1297 = vunpack.c.l.b16 %v1002
      %v1298 = vunpack.c.l.b16 %v1003
      %v1299 = vunpack.c.l.b16 %v1004
      %v1300 = vunpack.c.l.b16 %v1005
      %v1301 = vunpack.c.l.b16 %v1006
      %v1302 = vunpack.c.l.b16 %v1007
      %v1303 = vunpack.c.l.b16 %v1008
      %v1304 = vunpack.c.l.b16 %v1009
      %v1305 = vunpack.c.l.b16 %v1010
      %v1306 = vunpack.c.l.b16 %v1011
      %v1307 = vunpack.c.l.b16 %v1012
      %v1308 = vunpack.c.l.b16 %v1013
      %v1309 = vunpack.c.l.b16 %v1014
      %v1310 = vunpack.c.l.b16 %v1015
      %v1311 = vunpack.c.l.b16 %v1016
      %v1312 = vunpack.c.l.b16 %v1017
      %v1313 = vunpack.c.l.b16 %v1018
      %v1314 = vunpack.c.l.b16 %v1019
      %v1315 = vunpack.c.l.b16 %v1020
      %v1316 = vunpack.c.l.b16 %v1021
      %v1317 = vunpack.c.l.b16 %v1022
      %v1318 = vunpack.c.l.b16 %v1023
      %v1319 = vunpack.c.l.b16 %v1024
      %v1320 = vunpack.c.l.b16 %v1025
      %v1321 = vunpack.c.l.b16 %v1026
      %v1322 = vunpack.c.l.b16 %v1027
      %v1323 = vunpack.c.l.b16 %v1028
      %v1324 = vunpack.c.l.b16 %v1029
      %v1325 = vunpack.c.l.b16 %v1030
      %v1326 = vunpack.c.l.b16 %v1031
      %v1327 = vunpack.c.l.b16 %v1032
      %v1328 = vunpack.c.l.b16 %v1033
      %v1329 = vunpack.c.l.b16 %v1034
      %v1330 = vunpack.c.l.b16 %v1035
      %v1331 = vunpack.c.l.b16 %v1036
      %v1332 = vunpack.c.l.b16 %v1037
      %v1333 = vunpack.c.l.b16 %v1038
      %v1334 = vunpack.c.l.b16 %v1039
      %v1335 = vunpack.c.l.b16 %v1040
      %v1336 = vunpack.c.l.b16 %v1041
      %v1337 = vunpack.c.l.b16 %v1042
      %v1338 = vunpack.c.l.b16 %v1043
      %v1339 = vunpack.c.l.b16 %v1044
      %v1340 = vunpack.c.l.b16 %v1045
      %v1341 = vunpack.c.l.b16 %v1046
      %v1342 = vunpack.c.l.b16 %v1047
      %v1343 = vunpack.c.l.b16 %v1048
      %v1344 = vunpack.c.l.b16 %v1049
      %v1345 = vunpack.c.l.b16 %v1050
      %v1346 = vunpack.c.l.b16 %v1051
      %v1347 = vunpack.c.l.b16 %v1052
      %v1348 = vunpack.c.l.b16 %v1053
      %v1349 = vunpack.c.l.b16 %v1054
      %v1350 = vunpack.c.l.b16 %v1055
      %v1351 = vunpack.c.l.b16 %v1056
      %v1352 = vunpack.c.l.b16 %v1057
      %v1353 = vunpack.c.l.b16 %v1058
      %v1354 = vunpack.c.l.b16 %v1059
      %v1355 = vunpack.c.l.b16 %v1060
      %v1356 = vunpack.c.l.b16 %v1061
      %v1357 = vunpack.c.l.b16 %v1062
      %v1358 = vunpack.c.l.b16 %v1063
      %v1359 = vunpack.c.l.b16 %v1064
      %v1360 = vunpack.c.l.b16 %v1065
      %v1361 = vunpack.c.l.b16 %v1066
      %v1362 = vunpack.c.l.b16 %v1067
      %v1363 = vunpack.c.l.b16 %v1068
      %v1364 = vunpack.c.l.b16 %v1069
      %v1365 = vunpack.c.l.b16 %v1070
      %v1366 = vunpack.c.l.b16 %v1071
      %v1367 = vunpack.c.l.b16 %v1072
      %v1368 = vunpack.c.l.b16 %v1073
      %v1369 = vunpack.c.l.b16 %v1074
      %v1370 = vunpack.c.l.b16 %v1075
      %v1371 = vunpack.c.l.b16 %v1076
      %v1372 = vunpack.c.l.b16 %v1077
      %v1373 = vunpack.c.l.b16 %v1078
      %v1374 = vunpack.c.l.b16 %v1079
      %v1375 = vunpack.c.l.b16 %v1080
      %v1376 = vunpack.c.l.b16 %v1081
      %v1377 = vunpack.c.l.b16 %v1082
      %v1378 = vunpack.c.l.b16 %v1083
      %v1379 = vunpack.c.l.b16 %v1084
      %v1380 = vunpack.c.l.b16 %v1085
      %v1381 = vunpack.c.l.b16 %v1086
      %v1382 = vunpack.c.l.b16 %v1087
      %v1383 = vunpack.c.l.b16 %v1088
      %v1384 = vunpack.c.l.b16 %v1089
      %v1385 = vunpack.c.l.b16 %v1090
      %v1386 = vunpack.c.l.b16 %v1091
      %v1387 = vunpack.c.l.b16 %v1092
      %v1388 = vunpack.c.l.b16 %v1093
      %v1389 = vunpack.c.l.b16 %v1094
      %v1390 = vunpack.c.l.b16 %v1095
      %v1391 = vunpack.c.l.b16 %v1096
      %v1392 = vunpack.c.l.b16 %v1097
      %v1393 = vunpack.c.l.b16 %v1098
      %v1394 = vunpack.c.l.b16 %v1099
      %v1395 = vunpack.c.l.b16 %v1100
      %v1396 = vunpack.c.l.b16 %v1101
      %v1397 = vunpack.c.l.b16 %v1102
      %v1398 = vunpack.c.l.b16 %v1103
      %v1399 = vunpack.c.l.b16 %v1104
      %v1400 = vunpack.c.l.b16 %v1105
      %v1401 = vunpack.c.l.b16 %v1106
      %v1402 = vunpack.c.l.b16 %v1107
      %v1403 = vunpack.c.l.b16 %v1108
      %v1404 = vunpack.c.l.b16 %v1109
      %v1405 = vunpack.c.l.b16 %v1110
      %v1406 = vunpack.c.l.b16 %v1111
      %v1407 = vunpack.c.l.b16 %v1112
      %v1408 = vunpack.c.l.b16 %v1113
      %v1409 = vunpack.c.l.b16 %v1114
      %v1410 = vunpack.c.l.b16 %v1115
      %v1411 = vunpack.c.l.b16 %v1116
      %v1412 = vunpack.c.l.b16 %v1117
      %v1413 = vunpack.c.l.b16 %v1118
      %v1414 = vunpack.c.l.b16 %v1119
      %v1415 = vunpack.c.l.b16 %v1120
      %v1416 = vunpack.c.l.b16 %v1121
      %v1417 = vunpack.c.l.b16 %v1122
      %v1418 = vunpack.c.l.b16 %v1123
      %v1419 = vunpack.c.l.b16 %v1124
      %v1420 = vunpack.c.l.b16 %v1125
      %v1421 = vunpack.c.l.b16 %v1126
      %v1422 = vunpack.c.l.b16 %v1127
      %v1423 = vunpack.c.l.b16 %v1128
      %v1424 = vunpack.c.l.b16 %v1129
      %v1425 = vunpack.c.l.b16 %v1130
      %v1426 = vunpack.c.l.b16 %v1131
      %v1427 = vunpack.c.l.b16 %v1132
      %v1428 = vunpack.c.l.b16 %v1133
      %v1429 = vunpack.c.l.b16 %v1134
      %v1430 = vunpack.c.l.b16 %v1135
      %v1431 = vunpack.c.l.b16 %v1136
      %v1432 = vunpack.c.l.b16 %v1137
      %v1433 = vunpack.c.l.b16 %v1138
      %v1434 = vunpack.c.l.b16 %v1139
      %v1435 = vunpack.c.l.b16 %v1140
      %v1436 = vunpack.c.l.b16 %v1141
      %v1437 = vunpack.c.l.b16 %v1142
      %v1438 = vunpack.c.l.b16 %v1143
      %v1439 = vunpack.c.l.b16 %v1144
      %v1440 = vpack.c.b16 %v1297, %v1296
      %v1441 = vpack.c.b16 %v1299, %v1298
      %v1442 = vpack.c.b16 %v1301, %v1300
      %v1443 = vpack.c.b16 %v1303, %v1302
      %v1444 = vpack.c.b16 %v1305, %v1304
      %v1445 = vpack.c.b16 %v1307, %v1306
      %v1446 = vpack.c.b16 %v1309, %v1308
      %v1447 = vpack.c.b16 %v1311, %v1310
      %v1448 = vpack.c.b16 %v1313, %v1312
      %v1449 = vpack.c.b16 %v1315, %v1314
      %v1450 = vpack.c.b16 %v1317, %v1316
      %v1451 = vpack.c.b16 %v1319, %v1318
      %v1452 = vpack.c.b16 %v1321, %v1320
      %v1453 = vpack.c.b16 %v1323, %v1322
      %v1454 = vpack.c.b16 %v1325, %v1324
      %v1455 = vpack.c.b16 %v1327, %v1326
      %v1456 = vpack.c.b16 %v1329, %v1328
      %v1457 = vpack.c.b16 %v1331, %v1330
      %v1458 = vpack.c.b16 %v1333, %v1332
      %v1459 = vpack.c.b16 %v1335, %v1334
      %v1460 = vpack.c.b16 %v1337, %v1336
      %v1461 = vpack.c.b16 %v1339, %v1338
      %v1462 = vpack.c.b16 %v1341, %v1340
      %v1463 = vpack.c.b16 %v1343, %v1342
      %v1464 = vpack.c.b16 %v1345, %v1344
      %v1465 = vpack.c.b16 %v1347, %v1346
      %v1466 = vpack.c.b16 %v1349, %v1348
      %v1467 = vpack.c.b16 %v1351, %v1350
      %v1468 = vpack.c.b16 %v1353, %v1352
      %v1469 = vpack.c.b16 %v1355, %v1354
      %v1470 = vpack.c.b16 %v1357, %v1356
      %v1471 = vpack.c.b16 %v1359, %v1358
      %v1472 = vpack.c.b16 %v1361, %v1360
      %v1473 = vpack.c.b16 %v1363, %v1362
      %v1474 = vpack.c.b16 %v1365, %v1364
      %v1475 = vpack.c.b16 %v1367, %v1366
      %v1476 = vpack.c.b16 %v1369, %v1368
      %v1477 = vpack.c.b16 %v1371, %v1370
      %v1478 = vpack.c.b16 %v1373, %v1372
      %v1479 = vpack.c.b16 %v1375, %v1374
      %v1480 = vpack.c.b16 %v1377, %v1376
      %v1481 = vpack.c.b16 %v1379, %v1378
      %v1482 = vpack.c.b16 %v1381, %v1380
      %v1483 = vpack.c.b16 %v1383, %v1382
      %v1484 = vpack.c.b16 %v1385, %v1384
      %v1485 = vpack.c.b16 %v1387, %v1386
      %v1486 = vpack.c.b16 %v1389, %v1388
      %v1487 = vpack.c.b16 %v1391, %v1390
      %v1488 = vpack.c.b16 %v1393, %v1392
      %v1489 = vpack.c.b16 %v1395, %v1394
      %v1490 = vpack.c.b16 %v1397, %v1396
      %v1491 = vpack.c.b16 %v1399, %v1398
      %v1492 = vpack.c.b16 %v1401, %v1400
      %v1493 = vpack.c.b16 %v1403, %v1402
      %v1494 = vpack.c.b16 %v1405, %v1404
      %v1495 = vpack.c.b16 %v1407, %v1406
      %v1496 = vpack.c.b16 %v1409, %v1408
      %v1497 = vpack.c.b16 %v1411, %v1410
      %v1498 = vpack.c.b16 %v1413, %v1412
      %v1499 = vpack.c.b16 %v1415, %v1414
      %v1500 = vpack.c.b16 %v1417, %v1416
      %v1501 = vpack.c.b16 %v1419, %v1418
      %v1502 = vpack.c.b16 %v1421, %v1420
      %v1503 = vpack.c.b16 %v1423, %v1422
      %v1504 = vpack.c.b16 %v1425, %v1424
      %v1505 = vpack.c.b16 %v1427, %v1426
      %v1506 = vpack.c.b16 %v1429, %v1428
      %v1507 = vpack.c.b16 %v1431, %v1430
      %v1508 = vpack.c.b16 %v1433, %v1432
      %v1509 = vpack.c.b16 %v1435, %v1434
      %v1510 = vpack.c.b16 %v1437, %v1436
      %v1511 = vpack.c.b16 %v1439, %v1438
      %1584 = vmatprep.subr.bf16.mxu0 0
      %1585 = vmatpush1.bf16.msra.mxu0 %v1440
      %1586 = vmatprep.subr.bf16.mxu0 0
      %1587 = vmatpush1.bf16.msra.mxu0 %v1441
      %1588 = vmatprep.subr.bf16.mxu0 0
      %1589 = vmatpush1.bf16.msra.mxu0 %v1442
      %1590 = vmatprep.subr.bf16.mxu0 0
      %1591 = vmatpush1.bf16.msra.mxu0 %v1443
      %1592 = vmatprep.subr.bf16.mxu0 0
      %1593 = vmatpush1.bf16.msra.mxu0 %v1444
      %1594 = vmatprep.subr.bf16.mxu0 0
      %1595 = vmatpush1.bf16.msra.mxu0 %v1445
      %1596 = vmatprep.subr.bf16.mxu0 0
      %1597 = vmatpush1.bf16.msra.mxu0 %v1446
      %1598 = vmatprep.subr.bf16.mxu0 0
      %1599 = vmatpush1.bf16.msra.mxu0 %v1447
      %1600 = vmatprep.subr.bf16.mxu0 0
      %1601 = vmatpush1.bf16.msra.mxu0 %v1448
      %1602 = vmatprep.subr.bf16.mxu0 0
      %1603 = vmatpush1.bf16.msra.mxu0 %v1449
      %1604 = vmatprep.subr.bf16.mxu0 0
      %1605 = vmatpush1.bf16.msra.mxu0 %v1450
      %1606 = vmatprep.subr.bf16.mxu0 0
      %1607 = vmatpush1.bf16.msra.mxu0 %v1451
      %1608 = vmatprep.subr.bf16.mxu0 0
      %1609 = vmatpush1.bf16.msra.mxu0 %v1452
      %1610 = vmatprep.subr.bf16.mxu0 0
      %1611 = vmatpush1.bf16.msra.mxu0 %v1453
      %1612 = vmatprep.subr.bf16.mxu0 0
      %1613 = vmatpush1.bf16.msra.mxu0 %v1454
      %1614 = vmatprep.subr.bf16.mxu0 0
      %1615 = vmatpush1.bf16.msra.mxu0 %v1455
      %1616 = vmatprep.mubr.bf16.mxu0 %v669
      %1617 = vmatmul.mubr.bf16.gmra.mrb[0].mxu0 %v621
      %v1618 = vpop.f32.mrb[0].mxu0
      %v1619 = vadd.f32 %v1150, %v1618
      %v1620 = vpop.f32.mrb[0].mxu0
      %v1621 = vpop.f32.mrb[0].mxu0
      %v1622 = vadd.f32 %v1150, %v1621
      %v1623 = vpop.f32.mrb[0].mxu0
      %1624 = vmatprep.mubr.bf16.mxu0 %v681
      %1625 = vmatmul.mubr.bf16.gmra.mrb[0].mxu0 %v623
      %v1626 = vpop.f32.mrb[0].mxu0
      %v1627 = vadd.f32 %v1150, %v1626
      %v1628 = vpop.f32.mrb[0].mxu0
      %v1629 = vpop.f32.mrb[0].mxu0
      %v1630 = vadd.f32 %v1150, %v1629
      %v1631 = vpop.f32.mrb[0].mxu0
      %1632 = vmatprep.mubr.bf16.mxu0 %v693
      %1633 = vmatmul.mubr.bf16.gmra.mrb[0].mxu0 %v625
      %v1634 = vpop.f32.mrb[0].mxu0
      %v1635 = vadd.f32 %v1150, %v1634
      %v1636 = vpop.f32.mrb[0].mxu0
      %v1637 = vpop.f32.mrb[0].mxu0
      %v1638 = vadd.f32 %v1150, %v1637
      %v1639 = vpop.f32.mrb[0].mxu0
      %1640 = vmatprep.mubr.bf16.mxu0 %v705
      %1641 = vmatmul.mubr.bf16.gmra.mrb[0].mxu0 %v627
      %v1642 = vpop.f32.mrb[0].mxu0
      %v1643 = vadd.f32 %v1150, %v1642
      %v1644 = vpop.f32.mrb[0].mxu0
      %v1645 = vpop.f32.mrb[0].mxu0
      %v1646 = vadd.f32 %v1150, %v1645
      %v1647 = vpop.f32.mrb[0].mxu0
      %1648 = vmatprep.mubr.bf16.mxu0 %v717
      %1649 = vmatmul.mubr.bf16.gmra.mrb[0].mxu0 %v629
      %v1650 = vpop.f32.mrb[0].mxu0
      %v1651 = vadd.f32 %v1150, %v1650
      %v1652 = vpop.f32.mrb[0].mxu0
      %v1653 = vpop.f32.mrb[0].mxu0
      %v1654 = vadd.f32 %v1150, %v1653
      %v1655 = vpop.f32.mrb[0].mxu0
      %1656 = vmatprep.mubr.bf16.mxu0 %v729
      %1657 = vmatmul.mubr.bf16.gmra.mrb[0].mxu0 %v631
      %v1658 = vpop.f32.mrb[0].mxu0
      %v1659 = vadd.f32 %v1150, %v1658
      %v1660 = vpop.f32.mrb[0].mxu0
      %v1661 = vpop.f32.mrb[0].mxu0
      %v1662 = vadd.f32 %v1150, %v1661
      %v1663 = vpop.f32.mrb[0].mxu0
      %1664 = vmatprep.mubr.bf16.mxu0 %v741
      %1665 = vmatmul.mubr.bf16.gmra.mrb[0].mxu0 %v633
      %v1666 = vpop.f32.mrb[0].mxu0
      %v1667 = vadd.f32 %v1150, %v1666
      %v1668 = vpop.f32.mrb[0].mxu0
      %v1669 = vpop.f32.mrb[0].mxu0
      %v1670 = vadd.f32 %v1150, %v1669
      %v1671 = vpop.f32.mrb[0].mxu0
      %1672 = vmatprep.mubr.bf16.mxu0 %v753
      %1673 = vmatmul.mubr.bf16.gmra.mrb[0].mxu0 %v635
      %v1674 = vpop.f32.mrb[0].mxu0
      %v1675 = vadd.f32 %v1150, %v1674
      %v1676 = vpop.f32.mrb[0].mxu0
      %v1677 = vpop.f32.mrb[0].mxu0
      %v1678 = vadd.f32 %v1150, %v1677
      %v1679 = vpop.f32.mrb[0].mxu0
      %1680 = vmatprep.mubr.bf16.mxu0 %v765
      %1681 = vmatmul.mubr.bf16.gmra.mrb[0].mxu0 %v637
      %v1682 = vpop.f32.mrb[0].mxu0
      %v1683 = vadd.f32 %v1150, %v1682
      %v1684 = vpop.f32.mrb[0].mxu0
      %v1685 = vpop.f32.mrb[0].mxu0
      %v1686 = vadd.f32 %v1150, %v1685
      %v1687 = vpop.f32.mrb[0].mxu0
      %1688 = vmatprep.mubr.bf16.mxu0 %v777
      %1689 = vmatmul.mubr.bf16.gmra.mrb[0].mxu0 %v639
      %v1690 = vpop.f32.mrb[0].mxu0
      %v1691 = vadd.f32 %v1150, %v1690
      %v1692 = vpop.f32.mrb[0].mxu0
      %v1693 = vpop.f32.mrb[0].mxu0
      %v1694 = vadd.f32 %v1150, %v1693
      %v1695 = vpop.f32.mrb[0].mxu0
      %1696 = vmatprep.mubr.bf16.mxu0 %v789
      %1697 = vmatmul.mubr.bf16.gmra.mrb[0].mxu0 %v641
      %v1698 = vpop.f32.mrb[0].mxu0
      %v1699 = vadd.f32 %v1150, %v1698
      %v1700 = vpop.f32.mrb[0].mxu0
      %v1701 = vpop.f32.mrb[0].mxu0
      %v1702 = vadd.f32 %v1150, %v1701
      %v1703 = vpop.f32.mrb[0].mxu0
      %1704 = vmatprep.mubr.bf16.mxu0 %v801
      %1705 = vmatmul.mubr.bf16.gmra.mrb[0].mxu0 %v643
      %v1706 = vpop.f32.mrb[0].mxu0
      %v1707 = vadd.f32 %v1150, %v1706
      %v1708 = vpop.f32.mrb[0].mxu0
      %v1709 = vpop.f32.mrb[0].mxu0
      %v1710 = vadd.f32 %v1150, %v1709
      %v1711 = vpop.f32.mrb[0].mxu0
      %1712 = vmatprep.mubr.bf16.mxu0 %v813
      %1713 = vmatmul.mubr.bf16.gmra.mrb[0].mxu0 %v645
      %v1714 = vpop.f32.mrb[0].mxu0
      %v1715 = vadd.f32 %v1150, %v1714
      %v1716 = vpop.f32.mrb[0].mxu0
      %v1717 = vpop.f32.mrb[0].mxu0
      %v1718 = vadd.f32 %v1150, %v1717
      %v1719 = vpop.f32.mrb[0].mxu0
      %1720 = vmatprep.mubr.bf16.mxu0 %v825
      %1721 = vmatmul.mubr.bf16.gmra.mrb[0].mxu0 %v647
      %v1722 = vpop.f32.mrb[0].mxu0
      %v1723 = vadd.f32 %v1150, %v1722
      %v1724 = vpop.f32.mrb[0].mxu0
      %v1725 = vpop.f32.mrb[0].mxu0
      %v1726 = vadd.f32 %v1150, %v1725
      %v1727 = vpop.f32.mrb[0].mxu0
      %1728 = vmatprep.mubr.bf16.mxu0 %v837
      %1729 = vmatmul.mubr.bf16.gmra.mrb[0].mxu0 %v649
      %v1730 = vpop.f32.mrb[0].mxu0
      %v1731 = vadd.f32 %v1150, %v1730
      %v1732 = vpop.f32.mrb[0].mxu0
      %v1733 = vpop.f32.mrb[0].mxu0
      %v1734 = vadd.f32 %v1150, %v1733
      %v1735 = vpop.f32.mrb[0].mxu0
      %1736 = vmatprep.mubr.bf16.mxu0 %v849
      %1737 = vmatmul.mubr.bf16.gmra.mrb[0].mxu0 %v651
      %v1738 = vpop.f32.mrb[0].mxu0
      %v1739 = vadd.f32 %v1150, %v1738
      %v1740 = vpop.f32.mrb[0].mxu0
      %v1741 = vpop.f32.mrb[0].mxu0
      %v1742 = vadd.f32 %v1150, %v1741
      %v1743 = vpop.f32.mrb[0].mxu0
      %1744 = vdwg.mxu0
      %1745 = vmatprep.subr.bf16.mxu0 0
      %1746 = vmatpush1.bf16.msra.mxu0 %v1456
      %1747 = vmatprep.subr.bf16.mxu0 0
      %1748 = vmatpush1.bf16.msra.mxu0 %v1457
      %1749 = vmatprep.subr.bf16.mxu0 0
      %1750 = vmatpush1.bf16.msra.mxu0 %v1458
      %1751 = vmatprep.subr.bf16.mxu0 0
      %1752 = vmatpush1.bf16.msra.mxu0 %v1459
      %1753 = vmatprep.subr.bf16.mxu0 0
      %1754 = vmatpush1.bf16.msra.mxu0 %v1460
      %1755 = vmatprep.subr.bf16.mxu0 0
      %1756 = vmatpush1.bf16.msra.mxu0 %v1461
      %1757 = vmatprep.subr.bf16.mxu0 0
      %1758 = vmatpush1.bf16.msra.mxu0 %v1462
      %1759 = vmatprep.subr.bf16.mxu0 0
      %1760 = vmatpush1.bf16.msra.mxu0 %v1463
      %1761 = vmatprep.subr.bf16.mxu0 0
      %1762 = vmatpush1.bf16.msra.mxu0 %v1464
      %1763 = vmatprep.subr.bf16.mxu0 0
      %1764 = vmatpush1.bf16.msra.mxu0 %v1465
      %1765 = vmatprep.subr.bf16.mxu0 0
      %1766 = vmatpush1.bf16.msra.mxu0 %v1466
      %1767 = vmatprep.subr.bf16.mxu0 0
      %1768 = vmatpush1.bf16.msra.mxu0 %v1467
      %1769 = vmatprep.subr.bf16.mxu0 0
      %1770 = vmatpush1.bf16.msra.mxu0 %v1468
      %1771 = vmatprep.subr.bf16.mxu0 0
      %1772 = vmatpush1.bf16.msra.mxu0 %v1469
      %1773 = vmatprep.subr.bf16.mxu0 0
      %1774 = vmatpush1.bf16.msra.mxu0 %v1470
      %1775 = vmatprep.subr.bf16.mxu0 0
      %1776 = vmatpush1.bf16.msra.mxu0 %v1471
      %1777 = vmatprep.mubr.bf16.mxu0 %v623
      %1778 = vmatmul.mubr.bf16.gmra.mrb[0].mxu0 %v901
      %v1779 = vpop.f32.mrb[0].mxu0
      %v1780 = vadd.f32 %v1619, %v1779
      %v1781 = vpop.f32.mrb[0].mxu0
      %v1782 = vpop.f32.mrb[0].mxu0
      %v1783 = vadd.f32 %v1622, %v1782
      %v1784 = vpop.f32.mrb[0].mxu0
      %1785 = vmatprep.mubr.bf16.mxu0 %v625
      %1786 = vmatmul.mubr.bf16.gmra.mrb[0].mxu0 %v904
      %v1787 = vpop.f32.mrb[0].mxu0
      %v1788 = vadd.f32 %v1627, %v1787
      %v1789 = vpop.f32.mrb[0].mxu0
      %v1790 = vpop.f32.mrb[0].mxu0
      %v1791 = vadd.f32 %v1630, %v1790
      %v1792 = vpop.f32.mrb[0].mxu0
      %1793 = vmatprep.mubr.bf16.mxu0 %v627
      %1794 = vmatmul.mubr.bf16.gmra.mrb[0].mxu0 %v907
      %v1795 = vpop.f32.mrb[0].mxu0
      %v1796 = vadd.f32 %v1635, %v1795
      %v1797 = vpop.f32.mrb[0].mxu0
      %v1798 = vpop.f32.mrb[0].mxu0
      %v1799 = vadd.f32 %v1638, %v1798
      %v1800 = vpop.f32.mrb[0].mxu0
      %1801 = vmatprep.mubr.bf16.mxu0 %v629
      %1802 = vmatmul.mubr.bf16.gmra.mrb[0].mxu0 %v910
      %v1803 = vpop.f32.mrb[0].mxu0
      %v1804 = vadd.f32 %v1643, %v1803
      %v1805 = vpop.f32.mrb[0].mxu0
      %v1806 = vpop.f32.mrb[0].mxu0
      %v1807 = vadd.f32 %v1646, %v1806
      %v1808 = vpop.f32.mrb[0].mxu0
      %1809 = vmatprep.mubr.bf16.mxu0 %v631
      %1810 = vmatmul.mubr.bf16.gmra.mrb[0].mxu0 %v913
      %v1811 = vpop.f32.mrb[0].mxu0
      %v1812 = vadd.f32 %v1651, %v1811
      %v1813 = vpop.f32.mrb[0].mxu0
      %v1814 = vpop.f32.mrb[0].mxu0
      %v1815 = vadd.f32 %v1654, %v1814
      %v1816 = vpop.f32.mrb[0].mxu0
      %1817 = vmatprep.mubr.bf16.mxu0 %v633
      %1818 = vmatmul.mubr.bf16.gmra.mrb[0].mxu0 %v916
      %v1819 = vpop.f32.mrb[0].mxu0
      %v1820 = vadd.f32 %v1659, %v1819
      %v1821 = vpop.f32.mrb[0].mxu0
      %v1822 = vpop.f32.mrb[0].mxu0
      %v1823 = vadd.f32 %v1662, %v1822
      %v1824 = vpop.f32.mrb[0].mxu0
      %1825 = vmatprep.mubr.bf16.mxu0 %v635
      %1826 = vmatmul.mubr.bf16.gmra.mrb[0].mxu0 %v919
      %v1827 = vpop.f32.mrb[0].mxu0
      %v1828 = vadd.f32 %v1667, %v1827
      %v1829 = vpop.f32.mrb[0].mxu0
      %v1830 = vpop.f32.mrb[0].mxu0
      %v1831 = vadd.f32 %v1670, %v1830
      %v1832 = vpop.f32.mrb[0].mxu0
      %1833 = vmatprep.mubr.bf16.mxu0 %v637
      %1834 = vmatmul.mubr.bf16.gmra.mrb[0].mxu0 %v922
      %v1835 = vpop.f32.mrb[0].mxu0
      %v1836 = vadd.f32 %v1675, %v1835
      %v1837 = vpop.f32.mrb[0].mxu0
      %v1838 = vpop.f32.mrb[0].mxu0
      %v1839 = vadd.f32 %v1678, %v1838
      %v1840 = vpop.f32.mrb[0].mxu0
      %1841 = vmatprep.mubr.bf16.mxu0 %v639
      %1842 = vmatmul.mubr.bf16.gmra.mrb[0].mxu0 %v925
      %v1843 = vpop.f32.mrb[0].mxu0
      %v1844 = vadd.f32 %v1683, %v1843
      %v1845 = vpop.f32.mrb[0].mxu0
      %v1846 = vpop.f32.mrb[0].mxu0
      %v1847 = vadd.f32 %v1686, %v1846
      %v1848 = vpop.f32.mrb[0].mxu0
      %1849 = vmatprep.mubr.bf16.mxu0 %v641
      %1850 = vmatmul.mubr.bf16.gmra.mrb[0].mxu0 %v928
      %v1851 = vpop.f32.mrb[0].mxu0
      %v1852 = vadd.f32 %v1691, %v1851
      %v1853 = vpop.f32.mrb[0].mxu0
      %v1854 = vpop.f32.mrb[0].mxu0
      %v1855 = vadd.f32 %v1694, %v1854
      %v1856 = vpop.f32.mrb[0].mxu0
      %1857 = vmatprep.mubr.bf16.mxu0 %v643
      %1858 = vmatmul.mubr.bf16.gmra.mrb[0].mxu0 %v931
      %v1859 = vpop.f32.mrb[0].mxu0
      %v1860 = vadd.f32 %v1699, %v1859
      %v1861 = vpop.f32.mrb[0].mxu0
      %v1862 = vpop.f32.mrb[0].mxu0
      %v1863 = vadd.f32 %v1702, %v1862
      %v1864 = vpop.f32.mrb[0].mxu0
      %1865 = vmatprep.mubr.bf16.mxu0 %v645
      %1866 = vmatmul.mubr.bf16.gmra.mrb[0].mxu0 %v934
      %v1867 = vpop.f32.mrb[0].mxu0
      %v1868 = vadd.f32 %v1707, %v1867
      %v1869 = vpop.f32.mrb[0].mxu0
      %v1870 = vpop.f32.mrb[0].mxu0
      %v1871 = vadd.f32 %v1710, %v1870
      %v1872 = vpop.f32.mrb[0].mxu0
      %1873 = vmatprep.mubr.bf16.mxu0 %v647
      %1874 = vmatmul.mubr.bf16.gmra.mrb[0].mxu0 %v937
      %v1875 = vpop.f32.mrb[0].mxu0
      %v1876 = vadd.f32 %v1715, %v1875
      %v1877 = vpop.f32.mrb[0].mxu0
      %v1878 = vpop.f32.mrb[0].mxu0
      %v1879 = vadd.f32 %v1718, %v1878
      %v1880 = vpop.f32.mrb[0].mxu0
      %1881 = vmatprep.mubr.bf16.mxu0 %v649
      %1882 = vmatmul.mubr.bf16.gmra.mrb[0].mxu0 %v940
      %v1883 = vpop.f32.mrb[0].mxu0
      %v1884 = vadd.f32 %v1723, %v1883
      %v1885 = vpop.f32.mrb[0].mxu0
      %v1886 = vpop.f32.mrb[0].mxu0
      %v1887 = vadd.f32 %v1726, %v1886
      %v1888 = vpop.f32.mrb[0].mxu0
      %1889 = vmatprep.mubr.bf16.mxu0 %v651
      %1890 = vmatmul.mubr.bf16.gmra.mrb[0].mxu0 %v943
      %v1891 = vpop.f32.mrb[0].mxu0
      %v1892 = vadd.f32 %v1731, %v1891
      %v1893 = vpop.f32.mrb[0].mxu0
      %v1894 = vpop.f32.mrb[0].mxu0
      %v1895 = vadd.f32 %v1734, %v1894
      %v1896 = vpop.f32.mrb[0].mxu0
      %1897 = vmatprep.mubr.bf16.mxu0 %v653
      %1898 = vmatmul.mubr.bf16.gmra.mrb[0].mxu0 %v946
      %v1899 = vpop.f32.mrb[0].mxu0
      %v1900 = vadd.f32 %v1739, %v1899
      %v1901 = vpop.f32.mrb[0].mxu0
      %v1902 = vpop.f32.mrb[0].mxu0
      %v1903 = vadd.f32 %v1742, %v1902
      %v1904 = vpop.f32.mrb[0].mxu0
      %1905 = vdwg.mxu0
      %1906 = vmatprep.subr.bf16.mxu0 0
      %1907 = vmatpush1.bf16.msra.mxu0 %v1472
      %1908 = vmatprep.subr.bf16.mxu0 0
      %1909 = vmatpush1.bf16.msra.mxu0 %v1473
      %1910 = vmatprep.subr.bf16.mxu0 0
      %1911 = vmatpush1.bf16.msra.mxu0 %v1474
      %1912 = vmatprep.subr.bf16.mxu0 0
      %1913 = vmatpush1.bf16.msra.mxu0 %v1475
      %1914 = vmatprep.subr.bf16.mxu0 0
      %1915 = vmatpush1.bf16.msra.mxu0 %v1476
      %1916 = vmatprep.subr.bf16.mxu0 0
      %1917 = vmatpush1.bf16.msra.mxu0 %v1477
      %1918 = vmatprep.subr.bf16.mxu0 0
      %1919 = vmatpush1.bf16.msra.mxu0 %v1478
      %1920 = vmatprep.subr.bf16.mxu0 0
      %1921 = vmatpush1.bf16.msra.mxu0 %v1479
      %1922 = vmatprep.subr.bf16.mxu0 0
      %1923 = vmatpush1.bf16.msra.mxu0 %v1480
      %1924 = vmatprep.subr.bf16.mxu0 0
      %1925 = vmatpush1.bf16.msra.mxu0 %v1481
      %1926 = vmatprep.subr.bf16.mxu0 0
      %1927 = vmatpush1.bf16.msra.mxu0 %v1482
      %1928 = vmatprep.subr.bf16.mxu0 0
      %1929 = vmatpush1.bf16.msra.mxu0 %v1483
      %1930 = vmatprep.subr.bf16.mxu0 0
      %1931 = vmatpush1.bf16.msra.mxu0 %v1484
      %1932 = vmatprep.subr.bf16.mxu0 0
      %1933 = vmatpush1.bf16.msra.mxu0 %v1485
      %1934 = vmatprep.subr.bf16.mxu0 0
      %1935 = vmatpush1.bf16.msra.mxu0 %v1486
      %1936 = vmatprep.subr.bf16.mxu0 0
      %1937 = vmatpush1.bf16.msra.mxu0 %v1487
      %1938 = vmatprep.mubr.bf16.mxu0 %v904
      %1939 = vmatmul.mubr.bf16.gmra.mrb[0].mxu0 %v681
      %v1940 = vpop.f32.mrb[0].mxu0
      %v1941 = vadd.f32 %v1780, %v1940
      %v1942 = vpop.f32.mrb[0].mxu0
      %v1943 = vpop.f32.mrb[0].mxu0
      %v1944 = vadd.f32 %v1783, %v1943
      %v1945 = vpop.f32.mrb[0].mxu0
      %1946 = vmatprep.mubr.bf16.mxu0 %v907
      %1947 = vmatmul.mubr.bf16.gmra.mrb[0].mxu0 %v693
      %v1948 = vpop.f32.mrb[0].mxu0
      %v1949 = vadd.f32 %v1788, %v1948
      %v1950 = vpop.f32.mrb[0].mxu0
      %v1951 = vpop.f32.mrb[0].mxu0
      %v1952 = vadd.f32 %v1791, %v1951
      %v1953 = vpop.f32.mrb[0].mxu0
      %1954 = vmatprep.mubr.bf16.mxu0 %v910
      %1955 = vmatmul.mubr.bf16.gmra.mrb[0].mxu0 %v705
      %v1956 = vpop.f32.mrb[0].mxu0
      %v1957 = vadd.f32 %v1796, %v1956
      %v1958 = vpop.f32.mrb[0].mxu0
      %v1959 = vpop.f32.mrb[0].mxu0
      %v1960 = vadd.f32 %v1799, %v1959
      %v1961 = vpop.f32.mrb[0].mxu0
      %1962 = vmatprep.mubr.bf16.mxu0 %v913
      %1963 = vmatmul.mubr.bf16.gmra.mrb[0].mxu0 %v717
      %v1964 = vpop.f32.mrb[0].mxu0
      %v1965 = vadd.f32 %v1804, %v1964
      %v1966 = vpop.f32.mrb[0].mxu0
      %v1967 = vpop.f32.mrb[0].mxu0
      %v1968 = vadd.f32 %v1807, %v1967
      %v1969 = vpop.f32.mrb[0].mxu0
      %1970 = vmatprep.mubr.bf16.mxu0 %v916
      %1971 = vmatmul.mubr.bf16.gmra.mrb[0].mxu0 %v729
      %v1972 = vpop.f32.mrb[0].mxu0
      %v1973 = vadd.f32 %v1812, %v1972
      %v1974 = vpop.f32.mrb[0].mxu0
      %v1975 = vpop.f32.mrb[0].mxu0
      %v1976 = vadd.f32 %v1815, %v1975
      %v1977 = vpop.f32.mrb[0].mxu0
      %1978 = vmatprep.mubr.bf16.mxu0 %v919
      %1979 = vmatmul.mubr.bf16.gmra.mrb[0].mxu0 %v741
      %v1980 = vpop.f32.mrb[0].mxu0
      %v1981 = vadd.f32 %v1820, %v1980
      %v1982 = vpop.f32.mrb[0].mxu0
      %v1983 = vpop.f32.mrb[0].mxu0
      %v1984 = vadd.f32 %v1823, %v1983
      %v1985 = vpop.f32.mrb[0].mxu0
      %1986 = vmatprep.mubr.bf16.mxu0 %v922
      %1987 = vmatmul.mubr.bf16.gmra.mrb[0].mxu0 %v753
      %v1988 = vpop.f32.mrb[0].mxu0
      %v1989 = vadd.f32 %v1828, %v1988
      %v1990 = vpop.f32.mrb[0].mxu0
      %v1991 = vpop.f32.mrb[0].mxu0
      %v1992 = vadd.f32 %v1831, %v1991
      %v1993 = vpop.f32.mrb[0].mxu0
      %1994 = vmatprep.mubr.bf16.mxu0 %v925
      %1995 = vmatmul.mubr.bf16.gmra.mrb[0].mxu0 %v765
      %v1996 = vpop.f32.mrb[0].mxu0
      %v1997 = vadd.f32 %v1836, %v1996
      %v1998 = vpop.f32.mrb[0].mxu0
      %v1999 = vpop.f32.mrb[0].mxu0
      %v2000 = vadd.f32 %v1839, %v1999
      %v2001 = vpop.f32.mrb[0].mxu0
      %2002 = vmatprep.mubr.bf16.mxu0 %v928
      %2003 = vmatmul.mubr.bf16.gmra.mrb[0].mxu0 %v777
      %v2004 = vpop.f32.mrb[0].mxu0
      %v2005 = vadd.f32 %v1844, %v2004
      %v2006 = vpop.f32.mrb[0].mxu0
      %v2007 = vpop.f32.mrb[0].mxu0
      %v2008 = vadd.f32 %v1847, %v2007
      %v2009 = vpop.f32.mrb[0].mxu0
      %2010 = vmatprep.mubr.bf16.mxu0 %v931
      %2011 = vmatmul.mubr.bf16.gmra.mrb[0].mxu0 %v789
      %v2012 = vpop.f32.mrb[0].mxu0
      %v2013 = vadd.f32 %v1852, %v2012
      %v2014 = vpop.f32.mrb[0].mxu0
      %v2015 = vpop.f32.mrb[0].mxu0
      %v2016 = vadd.f32 %v1855, %v2015
      %v2017 = vpop.f32.mrb[0].mxu0
      %2018 = vmatprep.mubr.bf16.mxu0 %v934
      %2019 = vmatmul.mubr.bf16.gmra.mrb[0].mxu0 %v801
      %v2020 = vpop.f32.mrb[0].mxu0
      %v2021 = vadd.f32 %v1860, %v2020
      %v2022 = vpop.f32.mrb[0].mxu0
      %v2023 = vpop.f32.mrb[0].mxu0
      %v2024 = vadd.f32 %v1863, %v2023
      %v2025 = vpop.f32.mrb[0].mxu0
      %2026 = vmatprep.mubr.bf16.mxu0 %v937
      %2027 = vmatmul.mubr.bf16.gmra.mrb[0].mxu0 %v813
      %v2028 = vpop.f32.mrb[0].mxu0
      %v2029 = vadd.f32 %v1868, %v2028
      %v2030 = vpop.f32.mrb[0].mxu0
      %v2031 = vpop.f32.mrb[0].mxu0
      %v2032 = vadd.f32 %v1871, %v2031
      %v2033 = vpop.f32.mrb[0].mxu0
      %2034 = vmatprep.mubr.bf16.mxu0 %v940
      %2035 = vmatmul.mubr.bf16.gmra.mrb[0].mxu0 %v825
      %v2036 = vpop.f32.mrb[0].mxu0
      %v2037 = vadd.f32 %v1876, %v2036
      %v2038 = vpop.f32.mrb[0].mxu0
      %v2039 = vpop.f32.mrb[0].mxu0
      %v2040 = vadd.f32 %v1879, %v2039
      %v2041 = vpop.f32.mrb[0].mxu0
      %2042 = vmatprep.mubr.bf16.mxu0 %v943
      %2043 = vmatmul.mubr.bf16.gmra.mrb[0].mxu0 %v837
      %v2044 = vpop.f32.mrb[0].mxu0
      %v2045 = vadd.f32 %v1884, %v2044
      %v2046 = vpop.f32.mrb[0].mxu0
      %v2047 = vpop.f32.mrb[0].mxu0
      %v2048 = vadd.f32 %v1887, %v2047
      %v2049 = vpop.f32.mrb[0].mxu0
      %2050 = vmatprep.mubr.bf16.mxu0 %v946
      %2051 = vmatmul.mubr.bf16.gmra.mrb[0].mxu0 %v849
      %v2052 = vpop.f32.mrb[0].mxu0
      %v2053 = vadd.f32 %v1892, %v2052
      %v2054 = vpop.f32.mrb[0].mxu0
      %v2055 = vpop.f32.mrb[0].mxu0
      %v2056 = vadd.f32 %v1895, %v2055
      %v2057 = vpop.f32.mrb[0].mxu0
      %2058 = vmatprep.mubr.bf16.mxu0 %v980
      %2059 = vmatmul.mubr.bf16.gmra.mrb[0].mxu0 %v974
      %v2060 = vpop.f32.mrb[0].mxu0
      %v2061 = vadd.f32 %v1900, %v2060
      %v2062 = vpop.f32.mrb[0].mxu0
      %v2063 = vpop.f32.mrb[0].mxu0
      %v2064 = vadd.f32 %v1903, %v2063
      %v2065 = vpop.f32.mrb[0].mxu0
      %2066 = vdwg.mxu0
      %2067 = vmatprep.subr.bf16.mxu0 0
      %2068 = vmatpush1.bf16.msra.mxu0 %v1488
      %2069 = vmatprep.subr.bf16.mxu0 0
      %2070 = vmatpush1.bf16.msra.mxu0 %v1489
      %2071 = vmatprep.subr.bf16.mxu0 0
      %2072 = vmatpush1.bf16.msra.mxu0 %v1490
      %2073 = vmatprep.subr.bf16.mxu0 0
      %2074 = vmatpush1.bf16.msra.mxu0 %v1491
      %2075 = vmatprep.subr.bf16.mxu0 0
      %2076 = vmatpush1.bf16.msra.mxu0 %v1492
      %2077 = vmatprep.subr.bf16.mxu0 0
      %2078 = vmatpush1.bf16.msra.mxu0 %v1493
      %2079 = vmatprep.subr.bf16.mxu0 0
      %2080 = vmatpush1.bf16.msra.mxu0 %v1494
      %2081 = vmatprep.subr.bf16.mxu0 0
      %2082 = vmatpush1.bf16.msra.mxu0 %v1495
      %2083 = vmatprep.subr.bf16.mxu0 0
      %2084 = vmatpush1.bf16.msra.mxu0 %v1496
      %2085 = vmatprep.subr.bf16.mxu0 0
      %2086 = vmatpush1.bf16.msra.mxu0 %v1497
      %2087 = vmatprep.subr.bf16.mxu0 0
      %2088 = vmatpush1.bf16.msra.mxu0 %v1498
      %2089 = vmatprep.subr.bf16.mxu0 0
      %2090 = vmatpush1.bf16.msra.mxu0 %v1499
      %2091 = vmatprep.subr.bf16.mxu0 0
      %2092 = vmatpush1.bf16.msra.mxu0 %v1500
      %2093 = vmatprep.subr.bf16.mxu0 0
      %2094 = vmatpush1.bf16.msra.mxu0 %v1501
      %2095 = vmatprep.subr.bf16.mxu0 0
      %2096 = vmatpush1.bf16.msra.mxu0 %v1502
      %2097 = vmatprep.subr.bf16.mxu0 0
      %2098 = vmatpush1.bf16.msra.mxu0 %v1503
      %2099 = vmatprep.mubr.bf16.mxu0 %v693
      %2100 = vmatmul.mubr.bf16.gmra.mrb[0].mxu0 %v625
      %v2101 = vpop.f32.mrb[0].mxu0
      %v2102 = vadd.f32 %v1941, %v2101
      %v2103 = vpop.f32.mrb[0].mxu0
      %v2104 = vpop.f32.mrb[0].mxu0
      %v2105 = vadd.f32 %v1944, %v2104
      %v2106 = vpop.f32.mrb[0].mxu0
      %2107 = vmatprep.mubr.bf16.mxu0 %v705
      %2108 = vmatmul.mubr.bf16.gmra.mrb[0].mxu0 %v627
      %v2109 = vpop.f32.mrb[0].mxu0
      %v2110 = vadd.f32 %v1949, %v2109
      %v2111 = vpop.f32.mrb[0].mxu0
      %v2112 = vpop.f32.mrb[0].mxu0
      %v2113 = vadd.f32 %v1952, %v2112
      %v2114 = vpop.f32.mrb[0].mxu0
      %2115 = vmatprep.mubr.bf16.mxu0 %v717
      %2116 = vmatmul.mubr.bf16.gmra.mrb[0].mxu0 %v629
      %v2117 = vpop.f32.mrb[0].mxu0
      %v2118 = vadd.f32 %v1957, %v2117
      %v2119 = vpop.f32.mrb[0].mxu0
      %v2120 = vpop.f32.mrb[0].mxu0
      %v2121 = vadd.f32 %v1960, %v2120
      %v2122 = vpop.f32.mrb[0].mxu0
      %2123 = vmatprep.mubr.bf16.mxu0 %v729
      %2124 = vmatmul.mubr.bf16.gmra.mrb[0].mxu0 %v631
      %v2125 = vpop.f32.mrb[0].mxu0
      %v2126 = vadd.f32 %v1965, %v2125
      %v2127 = vpop.f32.mrb[0].mxu0
      %v2128 = vpop.f32.mrb[0].mxu0
      %v2129 = vadd.f32 %v1968, %v2128
      %v2130 = vpop.f32.mrb[0].mxu0
      %2131 = vmatprep.mubr.bf16.mxu0 %v741
      %2132 = vmatmul.mubr.bf16.gmra.mrb[0].mxu0 %v633
      %v2133 = vpop.f32.mrb[0].mxu0
      %v2134 = vadd.f32 %v1973, %v2133
      %v2135 = vpop.f32.mrb[0].mxu0
      %v2136 = vpop.f32.mrb[0].mxu0
      %v2137 = vadd.f32 %v1976, %v2136
      %v2138 = vpop.f32.mrb[0].mxu0
      %2139 = vmatprep.mubr.bf16.mxu0 %v753
      %2140 = vmatmul.mubr.bf16.gmra.mrb[0].mxu0 %v635
      %v2141 = vpop.f32.mrb[0].mxu0
      %v2142 = vadd.f32 %v1981, %v2141
      %v2143 = vpop.f32.mrb[0].mxu0
      %v2144 = vpop.f32.mrb[0].mxu0
      %v2145 = vadd.f32 %v1984, %v2144
      %v2146 = vpop.f32.mrb[0].mxu0
      %2147 = vmatprep.mubr.bf16.mxu0 %v765
      %2148 = vmatmul.mubr.bf16.gmra.mrb[0].mxu0 %v637
      %v2149 = vpop.f32.mrb[0].mxu0
      %v2150 = vadd.f32 %v1989, %v2149
      %v2151 = vpop.f32.mrb[0].mxu0
      %v2152 = vpop.f32.mrb[0].mxu0
      %v2153 = vadd.f32 %v1992, %v2152
      %v2154 = vpop.f32.mrb[0].mxu0
      %2155 = vmatprep.mubr.bf16.mxu0 %v777
      %2156 = vmatmul.mubr.bf16.gmra.mrb[0].mxu0 %v639
      %v2157 = vpop.f32.mrb[0].mxu0
      %v2158 = vadd.f32 %v1997, %v2157
      %v2159 = vpop.f32.mrb[0].mxu0
      %v2160 = vpop.f32.mrb[0].mxu0
      %v2161 = vadd.f32 %v2000, %v2160
      %v2162 = vpop.f32.mrb[0].mxu0
      %2163 = vmatprep.mubr.bf16.mxu0 %v789
      %2164 = vmatmul.mubr.bf16.gmra.mrb[0].mxu0 %v641
      %v2165 = vpop.f32.mrb[0].mxu0
      %v2166 = vadd.f32 %v2005, %v2165
      %v2167 = vpop.f32.mrb[0].mxu0
      %v2168 = vpop.f32.mrb[0].mxu0
      %v2169 = vadd.f32 %v2008, %v2168
      %v2170 = vpop.f32.mrb[0].mxu0
      %2171 = vmatprep.mubr.bf16.mxu0 %v801
      %2172 = vmatmul.mubr.bf16.gmra.mrb[0].mxu0 %v643
      %v2173 = vpop.f32.mrb[0].mxu0
      %v2174 = vadd.f32 %v2013, %v2173
      %v2175 = vpop.f32.mrb[0].mxu0
      %v2176 = vpop.f32.mrb[0].mxu0
      %v2177 = vadd.f32 %v2016, %v2176
      %v2178 = vpop.f32.mrb[0].mxu0
      %2179 = vmatprep.mubr.bf16.mxu0 %v813
      %2180 = vmatmul.mubr.bf16.gmra.mrb[0].mxu0 %v645
      %v2181 = vpop.f32.mrb[0].mxu0
      %v2182 = vadd.f32 %v2021, %v2181
      %v2183 = vpop.f32.mrb[0].mxu0
      %v2184 = vpop.f32.mrb[0].mxu0
      %v2185 = vadd.f32 %v2024, %v2184
      %v2186 = vpop.f32.mrb[0].mxu0
      %2187 = vmatprep.mubr.bf16.mxu0 %v825
      %2188 = vmatmul.mubr.bf16.gmra.mrb[0].mxu0 %v647
      %v2189 = vpop.f32.mrb[0].mxu0
      %v2190 = vadd.f32 %v2029, %v2189
      %v2191 = vpop.f32.mrb[0].mxu0
      %v2192 = vpop.f32.mrb[0].mxu0
      %v2193 = vadd.f32 %v2032, %v2192
      %v2194 = vpop.f32.mrb[0].mxu0
      %2195 = vmatprep.mubr.bf16.mxu0 %v837
      %2196 = vmatmul.mubr.bf16.gmra.mrb[0].mxu0 %v649
      %v2197 = vpop.f32.mrb[0].mxu0
      %v2198 = vadd.f32 %v2037, %v2197
      %v2199 = vpop.f32.mrb[0].mxu0
      %v2200 = vpop.f32.mrb[0].mxu0
      %v2201 = vadd.f32 %v2040, %v2200
      %v2202 = vpop.f32.mrb[0].mxu0
      %2203 = vmatprep.mubr.bf16.mxu0 %v849
      %2204 = vmatmul.mubr.bf16.gmra.mrb[0].mxu0 %v651
      %v2205 = vpop.f32.mrb[0].mxu0
      %v2206 = vadd.f32 %v2045, %v2205
      %v2207 = vpop.f32.mrb[0].mxu0
      %v2208 = vpop.f32.mrb[0].mxu0
      %v2209 = vadd.f32 %v2048, %v2208
      %v2210 = vpop.f32.mrb[0].mxu0
      %2211 = vmatprep.mubr.bf16.mxu0 %v974
      %2212 = vmatmul.mubr.bf16.gmra.mrb[0].mxu0 %v653
      %v2213 = vpop.f32.mrb[0].mxu0
      %v2214 = vadd.f32 %v2053, %v2213
      %v2215 = vpop.f32.mrb[0].mxu0
      %v2216 = vpop.f32.mrb[0].mxu0
      %v2217 = vadd.f32 %v2056, %v2216
      %v2218 = vpop.f32.mrb[0].mxu0
      %2219 = vmatprep.mubr.bf16.mxu0 %v993
      %2220 = vmatmul.mubr.bf16.gmra.mrb[0].mxu0 %v655
      %v2221 = vpop.f32.mrb[0].mxu0
      %v2222 = vadd.f32 %v2061, %v2221
      %v2223 = vpop.f32.mrb[0].mxu0
      %v2224 = vpop.f32.mrb[0].mxu0
      %v2225 = vadd.f32 %v2064, %v2224
      %v2226 = vpop.f32.mrb[0].mxu0
      %2227 = vdwg.mxu0
      %2228 = vmatprep.subr.bf16.mxu0 0
      %2229 = vmatpush1.bf16.msra.mxu0 %v1504
      %2230 = vmatprep.subr.bf16.mxu0 0
      %2231 = vmatpush1.bf16.msra.mxu0 %v1505
      %2232 = vmatprep.subr.bf16.mxu0 0
      %2233 = vmatpush1.bf16.msra.mxu0 %v1506
      %2234 = vmatprep.subr.bf16.mxu0 0
      %2235 = vmatpush1.bf16.msra.mxu0 %v1507
      %2236 = vmatprep.subr.bf16.mxu0 0
      %2237 = vmatpush1.bf16.msra.mxu0 %v1508
      %2238 = vmatprep.subr.bf16.mxu0 0
      %2239 = vmatpush1.bf16.msra.mxu0 %v1509
      %2240 = vmatprep.subr.bf16.mxu0 0
      %2241 = vmatpush1.bf16.msra.mxu0 %v1510
      %2242 = vmatprep.subr.bf16.mxu0 0
      %2243 = vmatpush1.bf16.msra.mxu0 %v1511
      %2244 = vmatprep.subr.bf16.mxu0 0
      %2245 = vmatpush1.bf16.msra.mxu0 0
      %2246 = vmatprep.subr.bf16.mxu0 0
      %2247 = vmatpush1.bf16.msra.mxu0 0
      %2248 = vmatprep.subr.bf16.mxu0 0
      %2249 = vmatpush1.bf16.msra.mxu0 0
      %2250 = vmatprep.subr.bf16.mxu0 0
      %2251 = vmatpush1.bf16.msra.mxu0 0
      %2252 = vmatprep.subr.bf16.mxu0 0
      %2253 = vmatpush1.bf16.msra.mxu0 0
      %2254 = vmatprep.subr.bf16.mxu0 0
      %2255 = vmatpush1.bf16.msra.mxu0 0
      %2256 = vmatprep.subr.bf16.mxu0 0
      %2257 = vmatpush1.bf16.msra.mxu0 0
      %2258 = vmatprep.subr.bf16.mxu0 0
      %2259 = vmatpush1.bf16.msra.mxu0 0
      %2260 = vmatprep.mubr.bf16.mxu0 0
      %2261 = vmatmul.mubr.bf16.gmra.mrb[0].mxu0 %v907
      %v2262 = vpop.f32.mrb[0].mxu0
      %v2263 = vadd.f32 %v2102, %v2262
      %v2264 = vpop.f32.mrb[0].mxu0
      %v2265 = vpop.f32.mrb[0].mxu0
      %v2266 = vadd.f32 %v2105, %v2265
      %v2267 = vpop.f32.mrb[0].mxu0
      %2268 = vmatprep.mubr.bf16.mxu0 0
      %2269 = vmatmul.mubr.bf16.gmra.mrb[0].mxu0 %v910
      %v2270 = vpop.f32.mrb[0].mxu0
      %v2271 = vadd.f32 %v2110, %v2270
      %v2272 = vpop.f32.mrb[0].mxu0
      %v2273 = vpop.f32.mrb[0].mxu0
      %v2274 = vadd.f32 %v2113, %v2273
      %v2275 = vpop.f32.mrb[0].mxu0
      %2276 = vmatprep.mubr.bf16.mxu0 0
      %2277 = vmatmul.mubr.bf16.gmra.mrb[0].mxu0 %v913
      %v2278 = vpop.f32.mrb[0].mxu0
      %v2279 = vadd.f32 %v2118, %v2278
      %v2280 = vpop.f32.mrb[0].mxu0
      %v2281 = vpop.f32.mrb[0].mxu0
      %v2282 = vadd.f32 %v2121, %v2281
      %v2283 = vpop.f32.mrb[0].mxu0
      %2284 = vmatprep.mubr.bf16.mxu0 0
      %2285 = vmatmul.mubr.bf16.gmra.mrb[0].mxu0 %v916
      %v2286 = vpop.f32.mrb[0].mxu0
      %v2287 = vadd.f32 %v2126, %v2286
      %v2288 = vpop.f32.mrb[0].mxu0
      %v2289 = vpop.f32.mrb[0].mxu0
      %v2290 = vadd.f32 %v2129, %v2289
      %v2291 = vpop.f32.mrb[0].mxu0
      %2292 = vmatprep.mubr.bf16.mxu0 0
      %2293 = vmatmul.mubr.bf16.gmra.mrb[0].mxu0 %v919
      %v2294 = vpop.f32.mrb[0].mxu0
      %v2295 = vadd.f32 %v2134, %v2294
      %v2296 = vpop.f32.mrb[0].mxu0
      %v2297 = vpop.f32.mrb[0].mxu0
      %v2298 = vadd.f32 %v2137, %v2297
      %v2299 = vpop.f32.mrb[0].mxu0
      %2300 = vmatprep.mubr.bf16.mxu0 0
      %2301 = vmatmul.mubr.bf16.gmra.mrb[0].mxu0 %v922
      %v2302 = vpop.f32.mrb[0].mxu0
      %v2303 = vadd.f32 %v2142, %v2302
      %v2304 = vpop.f32.mrb[0].mxu0
      %v2305 = vpop.f32.mrb[0].mxu0
      %v2306 = vadd.f32 %v2145, %v2305
      %v2307 = vpop.f32.mrb[0].mxu0
      %2308 = vmatprep.mubr.bf16.mxu0 0
      %2309 = vmatmul.mubr.bf16.gmra.mrb[0].mxu0 %v925
      %v2310 = vpop.f32.mrb[0].mxu0
      %v2311 = vadd.f32 %v2150, %v2310
      %v2312 = vpop.f32.mrb[0].mxu0
      %v2313 = vpop.f32.mrb[0].mxu0
      %v2314 = vadd.f32 %v2153, %v2313
      %v2315 = vpop.f32.mrb[0].mxu0
      %2316 = vmatprep.mubr.bf16.mxu0 0
      %2317 = vmatmul.mubr.bf16.gmra.mrb[0].mxu0 %v928
      %v2318 = vpop.f32.mrb[0].mxu0
      %v2319 = vadd.f32 %v2158, %v2318
      %v2320 = vpop.f32.mrb[0].mxu0
      %v2321 = vpop.f32.mrb[0].mxu0
      %v2322 = vadd.f32 %v2161, %v2321
      %v2323 = vpop.f32.mrb[0].mxu0
      %2324 = vmatprep.mubr.bf16.mxu0 0
      %2325 = vmatmul.mubr.bf16.gmra.mrb[0].mxu0 %v931
      %v2326 = vpop.f32.mrb[0].mxu0
      %v2327 = vadd.f32 %v2166, %v2326
      %v2328 = vpop.f32.mrb[0].mxu0
      %v2329 = vpop.f32.mrb[0].mxu0
      %v2330 = vadd.f32 %v2169, %v2329
      %v2331 = vpop.f32.mrb[0].mxu0
      %2332 = vmatprep.mubr.bf16.mxu0 0
      %2333 = vmatmul.mubr.bf16.gmra.mrb[0].mxu0 %v934
      %v2334 = vpop.f32.mrb[0].mxu0
      %v2335 = vadd.f32 %v2174, %v2334
      %v2336 = vpop.f32.mrb[0].mxu0
      %v2337 = vpop.f32.mrb[0].mxu0
      %v2338 = vadd.f32 %v2177, %v2337
      %v2339 = vpop.f32.mrb[0].mxu0
      %2340 = vmatprep.mubr.bf16.mxu0 0
      %2341 = vmatmul.mubr.bf16.gmra.mrb[0].mxu0 %v937
      %v2342 = vpop.f32.mrb[0].mxu0
      %v2343 = vadd.f32 %v2182, %v2342
      %v2344 = vpop.f32.mrb[0].mxu0
      %v2345 = vpop.f32.mrb[0].mxu0
      %v2346 = vadd.f32 %v2185, %v2345
      %v2347 = vpop.f32.mrb[0].mxu0
      %2348 = vmatprep.mubr.bf16.mxu0 0
      %2349 = vmatmul.mubr.bf16.gmra.mrb[0].mxu0 %v940
      %v2350 = vpop.f32.mrb[0].mxu0
      %v2351 = vadd.f32 %v2190, %v2350
      %v2352 = vpop.f32.mrb[0].mxu0
      %v2353 = vpop.f32.mrb[0].mxu0
      %v2354 = vadd.f32 %v2193, %v2353
      %v2355 = vpop.f32.mrb[0].mxu0
      %2356 = vmatprep.mubr.bf16.mxu0 0
      %2357 = vmatmul.mubr.bf16.gmra.mrb[0].mxu0 %v943
      %v2358 = vpop.f32.mrb[0].mxu0
      %v2359 = vadd.f32 %v2198, %v2358
      %v2360 = vpop.f32.mrb[0].mxu0
      %v2361 = vpop.f32.mrb[0].mxu0
      %v2362 = vadd.f32 %v2201, %v2361
      %v2363 = vpop.f32.mrb[0].mxu0
      %2364 = vmatprep.mubr.bf16.mxu0 0
      %2365 = vmatmul.mubr.bf16.gmra.mrb[0].mxu0 %v946
      %v2366 = vpop.f32.mrb[0].mxu0
      %v2367 = vadd.f32 %v2206, %v2366
      %v2368 = vpop.f32.mrb[0].mxu0
      %v2369 = vpop.f32.mrb[0].mxu0
      %v2370 = vadd.f32 %v2209, %v2369
      %v2371 = vpop.f32.mrb[0].mxu0
      %2372 = vmatprep.mubr.bf16.mxu0 0
      %2373 = vmatmul.mubr.bf16.gmra.mrb[0].mxu0 %v980
      %v2374 = vpop.f32.mrb[0].mxu0
      %v2375 = vadd.f32 %v2214, %v2374
      %v2376 = vpop.f32.mrb[0].mxu0
      %v2377 = vpop.f32.mrb[0].mxu0
      %v2378 = vadd.f32 %v2217, %v2377
      %v2379 = vpop.f32.mrb[0].mxu0
      %2380 = vmatprep.mubr.bf16.mxu0 0
      %2381 = vmatmul.mubr.bf16.gmra.mrb[0].mxu0 %v999
      %v2382 = vpop.f32.mrb[0].mxu0
      %v2383 = vadd.f32 %v2222, %v2382
      %v2384 = vpop.f32.mrb[0].mxu0
      %v2385 = vpop.f32.mrb[0].mxu0
      %v2386 = vadd.f32 %v2225, %v2385
      %v2387 = vpop.f32.mrb[0].mxu0
      %2388 = vdwg.mxu0
      %v2389 = vadd.f32 %v2263, %v2266
      %v2390 = vadd.f32 %v2389, %v2271
      %v2391 = vadd.f32 %v2390, %v2274
      %v2392 = vadd.f32 %v2391, %v2279
      %v2393 = vadd.f32 %v2392, %v2282
      %v2394 = vadd.f32 %v2393, %v2287
      %v2395 = vadd.f32 %v2394, %v2290
      %v2396 = vadd.f32 %v2395, %v2295
      %v2397 = vadd.f32 %v2396, %v2298
      %v2398 = vadd.f32 %v2397, %v2303
      %v2399 = vadd.f32 %v2398, %v2306
      %v2400 = vadd.f32 %v2399, %v2311
      %v2401 = vadd.f32 %v2400, %v2314
      %v2402 = vadd.f32 %v2401, %v2319
      %v2403 = vadd.f32 %v2402, %v2322
      %v2404 = vadd.f32 %v2403, %v2327
      %v2405 = vadd.f32 %v2404, %v2330
      %v2406 = vadd.f32 %v2405, %v2335
      %v2407 = vadd.f32 %v2406, %v2338
      %v2408 = vadd.f32 %v2407, %v2343
      %v2409 = vadd.f32 %v2408, %v2346
      %v2410 = vadd.f32 %v2409, %v2351
      %v2411 = vadd.f32 %v2410, %v2354
      %v2412 = vadd.f32 %v2411, %v2359
      %v2413 = vadd.f32 %v2412, %v2362
      %v2414 = vadd.f32 %v2413, %v2367
      %v2415 = vadd.f32 %v2414, %v2370
      %v2416 = vadd.f32 %v2415, %v2375
      %v2417 = vadd.f32 %v2416, %v2378
      %v2418 = vadd.f32 %v2417, %v2383
      %v2419 = vadd.f32 %v2418, %v2386
      %v2420 = vrot.slane %v2419, 4
      %v2421 = vadd.f32 %v2419, %v2420
      %v2422 = vrot.slane %v2421, 2
      %v2423 = vadd.f32 %v2421, %v2422
      %v2424 = vrot.slane %v2423, 1
      %v2425 = vadd.f32 %v2423, %v2424
      %2426 = vst [vmem:[%s292] sm:$0x1] %v2425
      %v2427 = vmul.f32 %v2263, %v2263
      %v2428 = vmul.f32 %v2266, %v2266
      %v2429 = vmul.f32 %v2271, %v2271
      %v2430 = vmul.f32 %v2274, %v2274
      %v2431 = vmul.f32 %v2279, %v2279
      %v2432 = vmul.f32 %v2282, %v2282
      %v2433 = vmul.f32 %v2287, %v2287
      %v2434 = vmul.f32 %v2290, %v2290
      %v2435 = vmul.f32 %v2295, %v2295
      %v2436 = vmul.f32 %v2298, %v2298
      %v2437 = vmul.f32 %v2303, %v2303
      %v2438 = vmul.f32 %v2306, %v2306
      %v2439 = vmul.f32 %v2311, %v2311
      %v2440 = vmul.f32 %v2314, %v2314
      %v2441 = vmul.f32 %v2319, %v2319
      %v2442 = vmul.f32 %v2322, %v2322
      %v2443 = vmul.f32 %v2327, %v2327
      %v2444 = vmul.f32 %v2330, %v2330
      %v2445 = vmul.f32 %v2335, %v2335
      %v2446 = vmul.f32 %v2338, %v2338
      %v2447 = vmul.f32 %v2343, %v2343
      %v2448 = vmul.f32 %v2346, %v2346
      %v2449 = vmul.f32 %v2351, %v2351
      %v2450 = vmul.f32 %v2354, %v2354
      %v2451 = vmul.f32 %v2359, %v2359
      %v2452 = vmul.f32 %v2362, %v2362
      %v2453 = vmul.f32 %v2367, %v2367
      %v2454 = vmul.f32 %v2370, %v2370
      %v2455 = vmul.f32 %v2375, %v2375
      %v2456 = vmul.f32 %v2378, %v2378
      %v2457 = vmul.f32 %v2383, %v2383
      %v2458 = vmul.f32 %v2386, %v2386
      %v2459 = vadd.f32 %v2427, %v2428
      %v2460 = vadd.f32 %v2459, %v2429
      %v2461 = vadd.f32 %v2460, %v2430
      %v2462 = vadd.f32 %v2461, %v2431
      %v2463 = vadd.f32 %v2462, %v2432
      %v2464 = vadd.f32 %v2463, %v2433
      %v2465 = vadd.f32 %v2464, %v2434
      %v2466 = vadd.f32 %v2465, %v2435
      %v2467 = vadd.f32 %v2466, %v2436
      %v2468 = vadd.f32 %v2467, %v2437
      %v2469 = vadd.f32 %v2468, %v2438
      %v2470 = vadd.f32 %v2469, %v2439
      %v2471 = vadd.f32 %v2470, %v2440
      %v2472 = vadd.f32 %v2471, %v2441
      %v2473 = vadd.f32 %v2472, %v2442
      %v2474 = vadd.f32 %v2473, %v2443
      %v2475 = vadd.f32 %v2474, %v2444
      %v2476 = vadd.f32 %v2475, %v2445
      %v2477 = vadd.f32 %v2476, %v2446
      %v2478 = vadd.f32 %v2477, %v2447
      %v2479 = vadd.f32 %v2478, %v2448
      %v2480 = vadd.f32 %v2479, %v2449
      %v2481 = vadd.f32 %v2480, %v2450
      %v2482 = vadd.f32 %v2481, %v2451
      %v2483 = vadd.f32 %v2482, %v2452
      %v2484 = vadd.f32 %v2483, %v2453
      %v2485 = vadd.f32 %v2484, %v2454
      %v2486 = vadd.f32 %v2485, %v2455
      %v2487 = vadd.f32 %v2486, %v2456
      %v2488 = vadd.f32 %v2487, %v2457
      %v2489 = vadd.f32 %v2488, %v2458
      %v2490 = vrot.slane %v2489, 4
      %v2491 = vadd.f32 %v2489, %v2490
      %v2492 = vrot.slane %v2491, 2
      %v2493 = vadd.f32 %v2491, %v2492
      %v2494 = vrot.slane %v2493, 1
      %v2495 = vadd.f32 %v2493, %v2494
      %2496 = vst [vmem:[%s295] sm:$0x1] %v2495
      %v2497 = vpack.c.bf16 %v2266, %v2263
      %v2498 = vpack.c.bf16 %v2274, %v2271
      %v2499 = vpack.c.bf16 %v2282, %v2279
      %v2500 = vpack.c.bf16 %v2290, %v2287
      %v2501 = vpack.c.bf16 %v2298, %v2295
      %v2502 = vpack.c.bf16 %v2306, %v2303
      %v2503 = vpack.c.bf16 %v2314, %v2311
      %v2504 = vpack.c.bf16 %v2322, %v2319
      %v2505 = vpack.c.bf16 %v2330, %v2327
      %v2506 = vpack.c.bf16 %v2338, %v2335
      %v2507 = vpack.c.bf16 %v2346, %v2343
      %v2508 = vpack.c.bf16 %v2354, %v2351
      %v2509 = vpack.c.bf16 %v2362, %v2359
      %v2510 = vpack.c.bf16 %v2370, %v2367
      %v2511 = vpack.c.bf16 %v2378, %v2375
      %v2512 = vpack.c.bf16 %v2386, %v2383
      %v2529 = vunpack.c.l.b16 %v2497
      %v2530 = vunpack.c.h.b16 %v2497
      %v2531 = vunpack.c.l.b16 %v2498
      %v2532 = vunpack.c.h.b16 %v2498
      %v2533 = vunpack.c.l.b16 %v2499
      %v2534 = vunpack.c.h.b16 %v2499
      %v2535 = vunpack.c.l.b16 %v2500
      %v2536 = vunpack.c.h.b16 %v2500
      %v2537 = vunpack.c.l.b16 %v2501
      %v2538 = vunpack.c.h.b16 %v2501
      %v2539 = vunpack.c.l.b16 %v2502
      %v2540 = vunpack.c.h.b16 %v2502
      %v2541 = vunpack.c.l.b16 %v2503
      %v2542 = vunpack.c.h.b16 %v2503
      %v2543 = vunpack.c.l.b16 %v2504
      %v2544 = vunpack.c.h.b16 %v2504
      %v2545 = vunpack.c.l.b16 %v2505
      %v2546 = vunpack.c.h.b16 %v2505
      %v2547 = vunpack.c.l.b16 %v2506
      %v2548 = vunpack.c.h.b16 %v2506
      %v2549 = vunpack.c.l.b16 %v2507
      %v2550 = vunpack.c.h.b16 %v2507
      %v2551 = vunpack.c.l.b16 %v2508
      %v2552 = vunpack.c.h.b16 %v2508
      %v2553 = vunpack.c.l.b16 %v2509
      %v2554 = vunpack.c.h.b16 %v2509
      %v2555 = vunpack.c.l.b16 %v2510
      %v2556 = vunpack.c.h.b16 %v2510
      %v2557 = vunpack.c.l.b16 %v2511
      %v2558 = vunpack.c.h.b16 %v2511
      %v2559 = vunpack.c.l.b16 %v2512
      %v2560 = vunpack.c.h.b16 %v2512
      %v2561 = vpack.c.b16 %v2529, %v2529
      %v2562 = vpack.c.b16 %v2530, %v2530
      %v2563 = vpack.c.b16 %v2531, %v2531
      %v2564 = vpack.c.b16 %v2532, %v2532
      %v2565 = vpack.c.b16 %v2533, %v2533
      %v2566 = vpack.c.b16 %v2534, %v2534
      %v2567 = vpack.c.b16 %v2535, %v2535
      %v2568 = vpack.c.b16 %v2536, %v2536
      %v2569 = vpack.c.b16 %v2537, %v2537
      %v2570 = vpack.c.b16 %v2538, %v2538
      %v2571 = vpack.c.b16 %v2539, %v2539
      %v2572 = vpack.c.b16 %v2540, %v2540
      %v2573 = vpack.c.b16 %v2541, %v2541
      %v2574 = vpack.c.b16 %v2542, %v2542
      %v2575 = vpack.c.b16 %v2543, %v2543
      %v2576 = vpack.c.b16 %v2544, %v2544
      %v2577 = vpack.c.b16 %v2545, %v2545
      %v2578 = vpack.c.b16 %v2546, %v2546
      %v2579 = vpack.c.b16 %v2547, %v2547
      %v2580 = vpack.c.b16 %v2548, %v2548
      %v2581 = vpack.c.b16 %v2549, %v2549
      %v2582 = vpack.c.b16 %v2550, %v2550
      %v2583 = vpack.c.b16 %v2551, %v2551
      %v2584 = vpack.c.b16 %v2552, %v2552
      %v2585 = vpack.c.b16 %v2553, %v2553
      %v2586 = vpack.c.b16 %v2554, %v2554
      %v2587 = vpack.c.b16 %v2555, %v2555
      %v2588 = vpack.c.b16 %v2556, %v2556
      %v2589 = vpack.c.b16 %v2557, %v2557
      %v2590 = vpack.c.b16 %v2558, %v2558
      %v2591 = vpack.c.b16 %v2559, %v2559
      %v2592 = vpack.c.b16 %v2560, %v2560
      %2625 = vst [vmem:[%s289] sm:$0xf] %v2561
      %2626 = vst [vmem:[%s289 + $0x4] sm:$0xf] %v2562
      %2627 = vst [vmem:[%s289 + $0x8] sm:$0xf] %v2563
      %2628 = vst [vmem:[%s289 + $0xc] sm:$0xf] %v2564
      %2629 = vst [vmem:[%s289 + $0x10] sm:$0xf] %v2565
      %2630 = vst [vmem:[%s289 + $0x14] sm:$0xf] %v2566
      %2631 = vst [vmem:[%s289 + $0x18] sm:$0xf] %v2567
      %2632 = vst [vmem:[%s289 + $0x1c] sm:$0xf] %v2568
      %2633 = vst [vmem:[%s289 + $0x20] sm:$0xf] %v2569
      %2634 = vst [vmem:[%s289 + $0x24] sm:$0xf] %v2570
      %2635 = vst [vmem:[%s289 + $0x28] sm:$0xf] %v2571
      %2636 = vst [vmem:[%s289 + $0x2c] sm:$0xf] %v2572
      %2637 = vst [vmem:[%s289 + $0x30] sm:$0xf] %v2573
      %2638 = vst [vmem:[%s289 + $0x34] sm:$0xf] %v2574
      %2639 = vst [vmem:[%s289 + $0x38] sm:$0xf] %v2575
      %2640 = vst [vmem:[%s289 + $0x3c] sm:$0xf] %v2576
      %2641 = vst [vmem:[%s289 + $0x40] sm:$0xf] %v2577
      %2642 = vst [vmem:[%s289 + $0x44] sm:$0xf] %v2578
      %2643 = vst [vmem:[%s289 + $0x48] sm:$0xf] %v2579
      %2644 = vst [vmem:[%s289 + $0x4c] sm:$0xf] %v2580
      %2645 = vst [vmem:[%s289 + $0x50] sm:$0xf] %v2581
      %2646 = vst [vmem:[%s289 + $0x54] sm:$0xf] %v2582
      %2647 = vst [vmem:[%s289 + $0x58] sm:$0xf] %v2583
      %2648 = vst [vmem:[%s289 + $0x5c] sm:$0xf] %v2584
      %2649 = vst [vmem:[%s289 + $0x60] sm:$0xf] %v2585
      %2650 = vst [vmem:[%s289 + $0x64] sm:$0xf] %v2586
      %2651 = vst [vmem:[%s289 + $0x68] sm:$0xf] %v2587
      %2652 = vst [vmem:[%s289 + $0x6c] sm:$0xf] %v2588
      %2653 = vst [vmem:[%s289 + $0x70] sm:$0xf] %v2589
      %2654 = vst [vmem:[%s289 + $0x74] sm:$0xf] %v2590
      %2655 = vst [vmem:[%s289 + $0x78] sm:$0xf] %v2591
      %2656 = vst [vmem:[%s289 + $0x7c] sm:$0xf] %v2592
      %p2657 = scmp.lt.s32.totalorder %s19, 1
      %s2658 = scalar_select %p2657, %s19, 1
      %s2659 = smul.addr %s2658, 32
      %s2660 = smul.addr %s2659, 4
      %s2661 = scalar_lea.vmem %s5, %s2660
      %p2662 = scmp.lt.s32.totalorder %s19, 1
      %s2663 = scalar_select %p2662, %s19, 1
      %s2664 = scalar_lea.vmem %s6, %s2663
      %p2665 = scmp.lt.s32.totalorder %s19, 1
      %s2666 = scalar_select %p2665, %s19, 1
      %s2667 = scalar_lea.vmem %s7, %s2666
      // Predicated region
      $region41: #{generator_forward.6} parent=39 // pred_check
        %p2668 = pneg %p147
      $region42: #{generator_forward.6} parent=39 // pred_check_branch
        %2670 = sbr.rel (%p2668) target = $region44
      $region43: #{generator_forward.6} parent=39 // pred_region
        _
      $region44: #{generator_forward.6} parent=39 // pred_fallthru
        _
      // Predicated region
      $region45: #{generator_forward.6} parent=39 // pred_check
        %p2671 = pneg %p173
      $region46: #{generator_forward.6} parent=39 // pred_check_branch
        %2673 = sbr.rel (%p2671) target = $region48
      $region47: #{generator_forward.6} parent=39 // pred_region
        _
      $region48: #{generator_forward.6} parent=39 // pred_fallthru
        _
      // Predicated region
      $region49: #{generator_forward.6} parent=39 // pred_check
        %p2674 = pneg %p199
      $region50: #{generator_forward.6} parent=39 // pred_check_branch
        %2676 = sbr.rel (%p2674) target = $region52
      $region51: #{generator_forward.6} parent=39 // pred_region
        _
      $region52: #{generator_forward.6} parent=39 // pred_fallthru
        _
    $region40: #{generator_forward.6} parent=5 // pred_fallthru
      _
    %p2677 = scmp.le.s32.totalorder 2, %s14
    // Predicated region
    $region53: #{generator_forward.6} parent=5 // pred_check
      %p2678 = pneg %p2677
    $region54: #{generator_forward.6} parent=5 // pred_check_branch
      %2680 = sbr.rel (%p2678) target = $region56
    $region55: #{generator_forward.6} parent=5 // pred_region
      %s2681 = ssub.s32 %s14, 2
      // Predicated region
      $region57: #{generator_forward.6} parent=55 // pred_check
        %p2682 = pneg %p153
      $region58: #{generator_forward.6} parent=55 // pred_check_branch
        %2684 = sbr.rel (%p2682) target = $region60
      $region59: #{generator_forward.6} parent=55 // pred_region
        %p2685 = scmp.lt.s32.totalorder %s20, 1
        %s2686 = scalar_select %p2685, %s20, 1
        %s2687 = smul.addr %s2686, 32
        %s2688 = smul.addr %s2687, 4
        %s2689 = scalar_lea.vmem %s5, %s2688
      $region60: #{generator_forward.6} parent=55 // pred_fallthru
        _
      // Predicated region
      $region61: #{generator_forward.6} parent=55 // pred_check
        %p2690 = pneg %p179
      $region62: #{generator_forward.6} parent=55 // pred_check_branch
        %2692 = sbr.rel (%p2690) target = $region64
      $region63: #{generator_forward.6} parent=55 // pred_region
        %p2693 = scmp.lt.s32.totalorder %s20, 1
        %s2694 = scalar_select %p2693, %s20, 1
        %s2695 = scalar_lea.vmem %s6, %s2694
      $region64: #{generator_forward.6} parent=55 // pred_fallthru
        _
      // Predicated region
      $region65: #{generator_forward.6} parent=55 // pred_check
        %p2696 = pneg %p205
      $region66: #{generator_forward.6} parent=55 // pred_check_branch
        %2698 = sbr.rel (%p2696) target = $region68
      $region67: #{generator_forward.6} parent=55 // pred_region
        %p2699 = scmp.lt.s32.totalorder %s20, 1
        %s2700 = scalar_select %p2699, %s20, 1
        %s2701 = scalar_lea.vmem %s7, %s2700
      $region68: #{generator_forward.6} parent=55 // pred_fallthru
        _
    $region56: #{generator_forward.6} parent=5 // pred_fallthru
      _
  $region6: #{generator_forward.6} parent=0 // loop_footer
    %s18 = sadd.s32 1, %s14
  $region7: #{generator_forward.6} parent=0 // loop_footer_branch
    %13 = sbr.rel target = $region3
  $region8: #{generator_forward.6} parent=0 // loop_exit
    _

// kernel: generator_forward.7
$region0: #{generator_forward.7}
  #allocation0 [shape = 'u32[]', space=smem, size = 0x4, offset = 0x4, fixed_abs, tag = 'smem constant byte address 0x4 - core index']
  #allocation1 [shape = 'u32[144,128]{1,0:T(1,128)}', space=vmem, size = 0x12000, scoped, tag = 'internal scratch']
  #allocation2 [shape = 'f32[1,1]{1,0:T(1,128)S(1)}', space=vmem, size = 0x200, scoped, tag = 'scoped memory for generator_forward.7']
  %s0 = inlined_call_operand.vmem [shape: bf16[2,18,18,128], index: 0, kind: input, shape index: {}]
  %s1 = inlined_call_operand.vmem [shape: f32[9,128], index: 1, kind: input, shape index: {}]
  %s2 = inlined_call_operand.<no memory space> [shape: f32[1,1], index: 2, kind: input, shape index: {}]
  %s3 = inlined_call_operand.vmem [shape: f32[1,128], index: 3, kind: input, shape index: {}]
  %s4 = inlined_call_operand.vmem [shape: f32[1,128], index: 4, kind: input, shape index: {}]
  %s5 = inlined_call_operand.vmem [shape: f32[2,16,16,1], index: 5, kind: output, shape index: {}]
  %s6 = sld [smem:[#allocation0]]
  $region53: #{generator_forward.7} parent=0
    _
  %s8 = ssub.s32 1, %s6
  %s9 = scalar_select 0, %s8, %s6
  %v10 = vstv %s2
  %11 = vst [vmem:[#allocation2] sm:$0x1] %v10
  loop: start=0, step=1, limit=4
  $region2: #{generator_forward.7} parent=0 // loop_pre_header
    _
  $region3: #{generator_forward.7} parent=0 // loop_header
    %s13 = sphi 0, %s17
    %p14 = scmp.ge.s32.totalorder %s13, 4
    %s23 = sphi 0, %s25
    %s26 = sphi 0, %s23
    %s27 = sphi 0, %s26
    %s43 = sphi 0, %s27
    %s47 = sphi 0, %s47
    %s49 = sphi 0, %s47
    %s50 = sphi 0, %s49
    %s64 = sphi 0, %s50
    %s68 = sphi 0, %s68
    %s70 = sphi 0, %s68
    %s71 = sphi 0, %s70
    %s85 = sphi 0, %s71
    %s89 = sphi 0, %s89
    %s91 = sphi 0, %s89
    %s92 = sphi 0, %s91
    %s106 = sphi 0, %s92
    %s110 = sphi 0, %s110
    %s112 = sphi 0, %s110
    %s113 = sphi 0, %s112
    %s127 = sphi 0, %s113
    %s133 = sphi 0, %s135
    %s136 = sphi 0, %s133
    %s137 = sphi 0, %s136
    %s153 = sphi 0, %s137
  $region4: #{generator_forward.7} parent=0 // loop_header_branch
    %16 = sbr.rel (%p14) target = $region8
  $region5: #{generator_forward.7} parent=0 // loop_body
    %s18 = ssub.s32 %s13, 1
    %s19 = ssub.s32 %s13, 2
    %s20 = sadd.s32 %s13, 1
    %s21 = ssub.s32 %s13, %s20
    %p22 = scmp.eq.s32.totalorder %s21, 0
    %s24 = sadd.s32 %s23, 1
    %s25 = scalar_select %p22, %s23, %s24
    %p28 = pneg %p22
    %p29 = scmp.eq.s32.totalorder %s13, 1
    %p30 = por %p28, %p29
    %p31 = scmp.ne.s32.totalorder %s23, %s26
    %p32 = scmp.eq.s32.totalorder %s13, 0
    %p33 = por %p31, %p32
    %p34 = scmp.ne.s32.totalorder %s23, %s26
    %p35 = scmp.eq.s32.totalorder %s18, 1
    %p36 = por %p34, %p35
    %p37 = scmp.ne.s32.totalorder %s26, %s27
    %p38 = scmp.eq.s32.totalorder %s18, 0
    %p39 = por %p37, %p38
    %p40 = scmp.ne.s32.totalorder %s26, %s27
    %p41 = scmp.eq.s32.totalorder %s19, 1
    %p42 = por %p40, %p41
    %p44 = scmp.ne.s32.totalorder %s27, %s43
    %p45 = scmp.eq.s32.totalorder %s19, 0
    %p46 = por %p44, %p45
    %s48 = sadd.s32 %s47, 1
    %p51 = scmp.eq.s32.totalorder %s13, 1
    %p52 = scmp.ne.s32.totalorder %s47, %s49
    %p53 = scmp.eq.s32.totalorder %s13, 0
    %p54 = por %p52, %p53
    %p55 = scmp.ne.s32.totalorder %s47, %s49
    %p56 = scmp.eq.s32.totalorder %s18, 1
    %p57 = por %p55, %p56
    %p58 = scmp.ne.s32.totalorder %s49, %s50
    %p59 = scmp.eq.s32.totalorder %s18, 0
    %p60 = por %p58, %p59
    %p61 = scmp.ne.s32.totalorder %s49, %s50
    %p62 = scmp.eq.s32.totalorder %s19, 1
    %p63 = por %p61, %p62
    %p65 = scmp.ne.s32.totalorder %s50, %s64
    %p66 = scmp.eq.s32.totalorder %s19, 0
    %p67 = por %p65, %p66
    %s69 = sadd.s32 %s68, 1
    %p72 = scmp.eq.s32.totalorder %s13, 1
    %p73 = scmp.ne.s32.totalorder %s68, %s70
    %p74 = scmp.eq.s32.totalorder %s13, 0
    %p75 = por %p73, %p74
    %p76 = scmp.ne.s32.totalorder %s68, %s70
    %p77 = scmp.eq.s32.totalorder %s18, 1
    %p78 = por %p76, %p77
    %p79 = scmp.ne.s32.totalorder %s70, %s71
    %p80 = scmp.eq.s32.totalorder %s18, 0
    %p81 = por %p79, %p80
    %p82 = scmp.ne.s32.totalorder %s70, %s71
    %p83 = scmp.eq.s32.totalorder %s19, 1
    %p84 = por %p82, %p83
    %p86 = scmp.ne.s32.totalorder %s71, %s85
    %p87 = scmp.eq.s32.totalorder %s19, 0
    %p88 = por %p86, %p87
    %s90 = sadd.s32 %s89, 1
    %p93 = scmp.eq.s32.totalorder %s13, 1
    %p94 = scmp.ne.s32.totalorder %s89, %s91
    %p95 = scmp.eq.s32.totalorder %s13, 0
    %p96 = por %p94, %p95
    %p97 = scmp.ne.s32.totalorder %s89, %s91
    %p98 = scmp.eq.s32.totalorder %s18, 1
    %p99 = por %p97, %p98
    %p100 = scmp.ne.s32.totalorder %s91, %s92
    %p101 = scmp.eq.s32.totalorder %s18, 0
    %p102 = por %p100, %p101
    %p103 = scmp.ne.s32.totalorder %s91, %s92
    %p104 = scmp.eq.s32.totalorder %s19, 1
    %p105 = por %p103, %p104
    %p107 = scmp.ne.s32.totalorder %s92, %s106
    %p108 = scmp.eq.s32.totalorder %s19, 0
    %p109 = por %p107, %p108
    %s111 = sadd.s32 %s110, 1
    %p114 = scmp.eq.s32.totalorder %s13, 1
    %p115 = scmp.ne.s32.totalorder %s110, %s112
    %p116 = scmp.eq.s32.totalorder %s13, 0
    %p117 = por %p115, %p116
    %p118 = scmp.ne.s32.totalorder %s110, %s112
    %p119 = scmp.eq.s32.totalorder %s18, 1
    %p120 = por %p118, %p119
    %p121 = scmp.ne.s32.totalorder %s112, %s113
    %p122 = scmp.eq.s32.totalorder %s18, 0
    %p123 = por %p121, %p122
    %p124 = scmp.ne.s32.totalorder %s112, %s113
    %p125 = scmp.eq.s32.totalorder %s19, 1
    %p126 = por %p124, %p125
    %p128 = scmp.ne.s32.totalorder %s113, %s127
    %p129 = scmp.eq.s32.totalorder %s19, 0
    %p130 = por %p128, %p129
    %s131 = ssub.s32 %s13, %s20
    %p132 = scmp.eq.s32.totalorder %s131, 0
    %s134 = sadd.s32 %s133, 1
    %s135 = scalar_select %p132, %s133, %s134
    %p138 = pneg %p132
    %p139 = scmp.eq.s32.totalorder %s13, 1
    %p140 = por %p138, %p139
    %p141 = scmp.ne.s32.totalorder %s133, %s136
    %p142 = scmp.eq.s32.totalorder %s13, 0
    %p143 = por %p141, %p142
    %p144 = scmp.ne.s32.totalorder %s133, %s136
    %p145 = scmp.eq.s32.totalorder %s18, 1
    %p146 = por %p144, %p145
    %p147 = scmp.ne.s32.totalorder %s136, %s137
    %p148 = scmp.eq.s32.totalorder %s18, 0
    %p149 = por %p147, %p148
    %p150 = scmp.ne.s32.totalorder %s136, %s137
    %p151 = scmp.eq.s32.totalorder %s19, 1
    %p152 = por %p150, %p151
    %p154 = scmp.ne.s32.totalorder %s137, %s153
    %p155 = scmp.eq.s32.totalorder %s19, 0
    %p156 = por %p154, %p155
    %p157 = scmp.le.s32.totalorder 1, %s13
    %p158 = scmp.lt.s32.totalorder %s13, 3
    %p159 = pnand %p157, %p158
    %p160 = pneg %p159
    // Predicated region
    $region9: #{generator_forward.7} parent=5 // pred_check
      _
    $region10: #{generator_forward.7} parent=5 // pred_check_branch
      %162 = sbr.rel (%p159) target = $region12
    $region11: #{generator_forward.7} parent=5 // pred_region
      %s163 = ssub.s32 %s13, 1
      // Predicated region
      $region13: #{generator_forward.7} parent=11 // pred_check
        %p164 = pneg %p60
      $region14: #{generator_forward.7} parent=11 // pred_check_branch
        %166 = sbr.rel (%p164) target = $region16
      $region15: #{generator_forward.7} parent=11 // pred_region
        _
      $region16: #{generator_forward.7} parent=11 // pred_fallthru
        _
      // Predicated region
      $region17: #{generator_forward.7} parent=11 // pred_check
        %p167 = pneg %p81
      $region18: #{generator_forward.7} parent=11 // pred_check_branch
        %169 = sbr.rel (%p167) target = $region20
      $region19: #{generator_forward.7} parent=11 // pred_region
        _
      $region20: #{generator_forward.7} parent=11 // pred_fallthru
        _
      // Predicated region
      $region21: #{generator_forward.7} parent=11 // pred_check
        %p170 = pneg %p102
      $region22: #{generator_forward.7} parent=11 // pred_check_branch
        %172 = sbr.rel (%p170) target = $region24
      $region23: #{generator_forward.7} parent=11 // pred_region
        _
      $region24: #{generator_forward.7} parent=11 // pred_fallthru
        _
      // Predicated region
      $region25: #{generator_forward.7} parent=11 // pred_check
        %p173 = pneg %p123
      $region26: #{generator_forward.7} parent=11 // pred_check_branch
        %175 = sbr.rel (%p173) target = $region28
      $region27: #{generator_forward.7} parent=11 // pred_region
        _
      $region28: #{generator_forward.7} parent=11 // pred_fallthru
        _
    $region12: #{generator_forward.7} parent=5 // pred_fallthru
      _
    %p176 = scmp.lt.s32.totalorder %s13, 2
    // Predicated region
    $region29: #{generator_forward.7} parent=5 // pred_check
      %p177 = pneg %p176
    $region30: #{generator_forward.7} parent=5 // pred_check_branch
      %179 = sbr.rel (%p177) target = $region32
    $region31: #{generator_forward.7} parent=5 // pred_region
      // Predicated region
      $region33: #{generator_forward.7} parent=31 // pred_check
        %p180 = pneg %p33
      $region34: #{generator_forward.7} parent=31 // pred_check_branch
        %182 = sbr.rel (%p180) target = $region36
      $region35: #{generator_forward.7} parent=31 // pred_region
        %p183 = scmp.lt.s32.totalorder %s13, 1
        %s184 = scalar_select %p183, %s13, 1
        %s185 = smul.addr %s184, 54
        %s186 = smul.addr %s185, 4
        %s187 = scalar_lea.vmem %s0, %s186
      $region36: #{generator_forward.7} parent=31 // pred_fallthru
        _
    $region32: #{generator_forward.7} parent=5 // pred_fallthru
      _
    %p188 = scmp.le.s32.totalorder 1, %s13
    %p189 = scmp.lt.s32.totalorder %s13, 3
    %p190 = pnand %p188, %p189
    %p191 = pneg %p190
    // Predicated region
    $region37: #{generator_forward.7} parent=5 // pred_check
      _
    $region38: #{generator_forward.7} parent=5 // pred_check_branch
      %193 = sbr.rel (%p190) target = $region40
    $region39: #{generator_forward.7} parent=5 // pred_region
      %s194 = ssub.s32 %s13, 1
      %p195 = scmp.lt.s32.totalorder %s18, 1
      %s196 = scalar_select %p195, %s18, 1
      %s197 = smul.addr %s196, 54
      %s198 = smul.addr %s197, 4
      %s199 = scalar_lea.vmem %s0, %s198
      %p200 = pneg %p39
      %p201 = pneg %p36
      %p202 = pneg %p60
      %p203 = pneg %p57
      %p204 = pneg %p81
      %p205 = pneg %p78
      %p206 = pneg %p102
      %p207 = pneg %p99
      %p208 = pneg %p123
      %p209 = pneg %p120
      %p210 = pneg %p149
      %p211 = pneg %p146
      %p212 = scmp.lt.s32.totalorder %s18, 1
      %s213 = scalar_select %p212, %s18, 1
      %s214 = smul.addr %s213, 32
      %s215 = smul.addr %s214, 8
      %s216 = scalar_lea.vmem %s5, %s215
      %p217 = scmp.lt.s32.totalorder %s18, 1
      %s218 = scalar_select %p217, %s18, 1
      %s219 = smul.addr %s218, 54
      %s220 = smul.addr %s219, 4
      %s221 = scalar_lea.vmem %s0, %s220
      %p222 = scmp.lt.s32.totalorder %s18, 1
      %s223 = scalar_select %p222, %s18, 1
      %s224 = smul.addr %s223, 32
      %s225 = smul.addr %s224, 8
      %s226 = scalar_lea.vmem %s5, %s225
      %v227 = vld [vmem:[%s221] sm:$0xf]
      %v228 = vld [vmem:[%s221 + $0x4] sm:$0xf]
      %v229 = vld [vmem:[%s221 + $0x8] sm:$0x1]
      %v230 = vld [vmem:[%s221 + $0xc] sm:$0xf]
      %v231 = vld [vmem:[%s221 + $0x10] sm:$0xf]
      %v232 = vld [vmem:[%s221 + $0x14] sm:$0x1]
      %v233 = vld [vmem:[%s221 + $0x18] sm:$0xf]
      %v234 = vld [vmem:[%s221 + $0x1c] sm:$0xf]
      %v235 = vld [vmem:[%s221 + $0x20] sm:$0x1]
      %v236 = vld [vmem:[%s221 + $0x24] sm:$0xf]
      %v237 = vld [vmem:[%s221 + $0x28] sm:$0xf]
      %v238 = vld [vmem:[%s221 + $0x2c] sm:$0x1]
      %v239 = vld [vmem:[%s221 + $0x30] sm:$0xf]
      %v240 = vld [vmem:[%s221 + $0x34] sm:$0xf]
      %v241 = vld [vmem:[%s221 + $0x38] sm:$0x1]
      %v242 = vld [vmem:[%s221 + $0x3c] sm:$0xf]
      %v243 = vld [vmem:[%s221 + $0x40] sm:$0xf]
      %v244 = vld [vmem:[%s221 + $0x44] sm:$0x1]
      %v245 = vld [vmem:[%s221 + $0x48] sm:$0xf]
      %v246 = vld [vmem:[%s221 + $0x4c] sm:$0xf]
      %v247 = vld [vmem:[%s221 + $0x50] sm:$0x1]
      %v248 = vld [vmem:[%s221 + $0x54] sm:$0xf]
      %v249 = vld [vmem:[%s221 + $0x58] sm:$0xf]
      %v250 = vld [vmem:[%s221 + $0x5c] sm:$0x1]
      %v251 = vld [vmem:[%s221 + $0x60] sm:$0xf]
      %v252 = vld [vmem:[%s221 + $0x64] sm:$0xf]
      %v253 = vld [vmem:[%s221 + $0x68] sm:$0x1]
      %v254 = vld [vmem:[%s221 + $0x6c] sm:$0xf]
      %v255 = vld [vmem:[%s221 + $0x70] sm:$0xf]
      %v256 = vld [vmem:[%s221 + $0x74] sm:$0x1]
      %v257 = vld [vmem:[%s221 + $0x78] sm:$0xf]
      %v258 = vld [vmem:[%s221 + $0x7c] sm:$0xf]
      %v259 = vld [vmem:[%s221 + $0x80] sm:$0x1]
      %v260 = vld [vmem:[%s221 + $0x84] sm:$0xf]
      %v261 = vld [vmem:[%s221 + $0x88] sm:$0xf]
      %v262 = vld [vmem:[%s221 + $0x8c] sm:$0x1]
      %v263 = vld [vmem:[%s221 + $0x90] sm:$0xf]
      %v264 = vld [vmem:[%s221 + $0x94] sm:$0xf]
      %v265 = vld [vmem:[%s221 + $0x98] sm:$0x1]
      %v266 = vld [vmem:[%s221 + $0x9c] sm:$0xf]
      %v267 = vld [vmem:[%s221 + $0xa0] sm:$0xf]
      %v268 = vld [vmem:[%s221 + $0xa4] sm:$0x1]
      %v269 = vld [vmem:[%s221 + $0xa8] sm:$0xf]
      %v270 = vld [vmem:[%s221 + $0xac] sm:$0xf]
      %v271 = vld [vmem:[%s221 + $0xb0] sm:$0x1]
      %v272 = vld [vmem:[%s221 + $0xb4] sm:$0xf]
      %v273 = vld [vmem:[%s221 + $0xb8] sm:$0xf]
      %v274 = vld [vmem:[%s221 + $0xbc] sm:$0x1]
      %v275 = vld [vmem:[%s221 + $0xc0] sm:$0xf]
      %v276 = vld [vmem:[%s221 + $0xc4] sm:$0xf]
      %v277 = vld [vmem:[%s221 + $0xc8] sm:$0x1]
      %v278 = vld [vmem:[%s221 + $0xcc] sm:$0xf]
      %v279 = vld [vmem:[%s221 + $0xd0] sm:$0xf]
      %v280 = vld [vmem:[%s221 + $0xd4] sm:$0x1]
      %v281 = vunpack.c.l.bf16 %v227
      %v282 = vunpack.c.l.bf16 %v228
      %v283 = vunpack.c.l.bf16 %v229
      %v284 = vunpack.c.l.bf16 %v230
      %v285 = vunpack.c.l.bf16 %v231
      %v286 = vunpack.c.l.bf16 %v232
      %v287 = vunpack.c.l.bf16 %v233
      %v288 = vunpack.c.l.bf16 %v234
      %v289 = vunpack.c.l.bf16 %v235
      %v290 = vunpack.c.l.bf16 %v236
      %v291 = vunpack.c.l.bf16 %v237
      %v292 = vunpack.c.l.bf16 %v238
      %v293 = vunpack.c.l.bf16 %v239
      %v294 = vunpack.c.l.bf16 %v240
      %v295 = vunpack.c.l.bf16 %v241
      %v296 = vunpack.c.l.bf16 %v242
      %v297 = vunpack.c.l.bf16 %v243
      %v298 = vunpack.c.l.bf16 %v244
      %v299 = vunpack.c.l.bf16 %v245
      %v300 = vunpack.c.l.bf16 %v246
      %v301 = vunpack.c.l.bf16 %v247
      %v302 = vunpack.c.l.bf16 %v248
      %v303 = vunpack.c.l.bf16 %v249
      %v304 = vunpack.c.l.bf16 %v250
      %v305 = vunpack.c.l.bf16 %v251
      %v306 = vunpack.c.l.bf16 %v252
      %v307 = vunpack.c.l.bf16 %v253
      %v308 = vunpack.c.l.bf16 %v254
      %v309 = vunpack.c.l.bf16 %v255
      %v310 = vunpack.c.l.bf16 %v256
      %v311 = vunpack.c.l.bf16 %v257
      %v312 = vunpack.c.l.bf16 %v258
      %v313 = vunpack.c.l.bf16 %v259
      %v314 = vunpack.c.l.bf16 %v260
      %v315 = vunpack.c.l.bf16 %v261
      %v316 = vunpack.c.l.bf16 %v262
      %v317 = vunpack.c.l.bf16 %v263
      %v318 = vunpack.c.l.bf16 %v264
      %v319 = vunpack.c.l.bf16 %v265
      %v320 = vunpack.c.l.bf16 %v266
      %v321 = vunpack.c.l.bf16 %v267
      %v322 = vunpack.c.l.bf16 %v268
      %v323 = vunpack.c.l.bf16 %v269
      %v324 = vunpack.c.l.bf16 %v270
      %v325 = vunpack.c.l.bf16 %v271
      %v326 = vunpack.c.l.bf16 %v272
      %v327 = vunpack.c.l.bf16 %v273
      %v328 = vunpack.c.l.bf16 %v274
      %v329 = vunpack.c.l.bf16 %v275
      %v330 = vunpack.c.l.bf16 %v276
      %v331 = vunpack.c.l.bf16 %v277
      %v332 = vunpack.c.l.bf16 %v278
      %v333 = vunpack.c.l.bf16 %v279
      %v334 = vunpack.c.l.bf16 %v280
      %v335 = vlaneseq
      %v336 = vshrl.u32 %v335, 7
      %v337 = vadd.s32 %v336, 8
      %v338 = vadd.s32 %v336, 16
      %vm339 = vcmp.ge.s32.totalorder %v336, 1
      %vm340 = vcmp.ge.s32.totalorder %v337, 1
      %vm341 = vcmp.ge.s32.totalorder %v338, 1
      %vm342 = vmand 0, %vm339
      %vm343 = vmand 0, %vm340
      %vm344 = vmand 0, %vm341
      %vm345 = vmand 1, %vm339
      %vm346 = vmand 1, %vm340
      %vm347 = vmand 1, %vm341
      %vm348 = vcmp.le.s32.totalorder %v336, 16
      %vm349 = vcmp.le.s32.totalorder %v337, 16
      %vm350 = vcmp.le.s32.totalorder %v338, 16
      %vm351 = vmand %vm342, %vm348
      %vm352 = vmand %vm343, %vm349
      %vm353 = vmand %vm344, %vm350
      %vm354 = vmand %vm345, %vm348
      %vm355 = vmand %vm346, %vm349
      %vm356 = vmand %vm347, %vm350
      %v357 = vsel %vm351, 1, 0
      %v358 = vsel %vm352, 1, 0
      %v359 = vsel %vm353, 1, 0
      %v360 = vsel %vm354, 1, 0
      %v361 = vsel %vm355, 1, 0
      %v362 = vsel %vm356, 1, 0
      %v363 = vcvt.s32.f32 %v357
      %v364 = vcvt.s32.f32 %v358
      %v365 = vcvt.s32.f32 %v359
      %v366 = vcvt.s32.f32 %v360
      %v367 = vcvt.s32.f32 %v361
      %v368 = vcvt.s32.f32 %v362
      %v369 = vld [vmem:[%s3] sm:$0x1]
      %v371 = vlaneseq
      %v372 = vshrl.u32 %v371, 7
      %v373 = vsub.s32 0, %v372
      %v374 = vrot.slane %v369, %v373
      %v376 = vmul.f32 %v281, %v374
      %v377 = vmul.f32 %v282, %v374
      %v378 = vmul.f32 %v283, %v374
      %v379 = vmul.f32 %v284, %v374
      %v380 = vmul.f32 %v285, %v374
      %v381 = vmul.f32 %v286, %v374
      %v382 = vmul.f32 %v287, %v374
      %v383 = vmul.f32 %v288, %v374
      %v384 = vmul.f32 %v289, %v374
      %v385 = vmul.f32 %v290, %v374
      %v386 = vmul.f32 %v291, %v374
      %v387 = vmul.f32 %v292, %v374
      %v388 = vmul.f32 %v293, %v374
      %v389 = vmul.f32 %v294, %v374
      %v390 = vmul.f32 %v295, %v374
      %v391 = vmul.f32 %v296, %v374
      %v392 = vmul.f32 %v297, %v374
      %v393 = vmul.f32 %v298, %v374
      %v394 = vmul.f32 %v299, %v374
      %v395 = vmul.f32 %v300, %v374
      %v396 = vmul.f32 %v301, %v374
      %v397 = vmul.f32 %v302, %v374
      %v398 = vmul.f32 %v303, %v374
      %v399 = vmul.f32 %v304, %v374
      %v400 = vmul.f32 %v305, %v374
      %v401 = vmul.f32 %v306, %v374
      %v402 = vmul.f32 %v307, %v374
      %v403 = vmul.f32 %v308, %v374
      %v404 = vmul.f32 %v309, %v374
      %v405 = vmul.f32 %v310, %v374
      %v406 = vmul.f32 %v311, %v374
      %v407 = vmul.f32 %v312, %v374
      %v408 = vmul.f32 %v313, %v374
      %v409 = vmul.f32 %v314, %v374
      %v410 = vmul.f32 %v315, %v374
      %v411 = vmul.f32 %v316, %v374
      %v412 = vmul.f32 %v317, %v374
      %v413 = vmul.f32 %v318, %v374
      %v414 = vmul.f32 %v319, %v374
      %v415 = vmul.f32 %v320, %v374
      %v416 = vmul.f32 %v321, %v374
      %v417 = vmul.f32 %v322, %v374
      %v418 = vmul.f32 %v323, %v374
      %v419 = vmul.f32 %v324, %v374
      %v420 = vmul.f32 %v325, %v374
      %v421 = vmul.f32 %v326, %v374
      %v422 = vmul.f32 %v327, %v374
      %v423 = vmul.f32 %v328, %v374
      %v424 = vmul.f32 %v329, %v374
      %v425 = vmul.f32 %v330, %v374
      %v426 = vmul.f32 %v331, %v374
      %v427 = vmul.f32 %v332, %v374
      %v428 = vmul.f32 %v333, %v374
      %v429 = vmul.f32 %v334, %v374
      %v430 = vld [vmem:[%s4] sm:$0x1]
      %v432 = vlaneseq
      %v433 = vshrl.u32 %v432, 7
      %v434 = vsub.s32 0, %v433
      %v435 = vrot.slane %v430, %v434
      %v437 = vmul.f32 %v435, %v363
      %v438 = vmul.f32 %v435, %v364
      %v439 = vmul.f32 %v435, %v365
      %v440 = vmul.f32 %v435, %v366
      %v441 = vmul.f32 %v435, %v367
      %v442 = vmul.f32 %v435, %v368
      %v443 = vadd.f32 %v376, %v437
      %v444 = vadd.f32 %v377, %v438
      %v445 = vadd.f32 %v378, %v439
      %v446 = vadd.f32 %v379, %v440
      %v447 = vadd.f32 %v380, %v441
      %v448 = vadd.f32 %v381, %v442
      %v449 = vadd.f32 %v382, %v440
      %v450 = vadd.f32 %v383, %v441
      %v451 = vadd.f32 %v384, %v442
      %v452 = vadd.f32 %v385, %v440
      %v453 = vadd.f32 %v386, %v441
      %v454 = vadd.f32 %v387, %v442
      %v455 = vadd.f32 %v388, %v440
      %v456 = vadd.f32 %v389, %v441
      %v457 = vadd.f32 %v390, %v442
      %v458 = vadd.f32 %v391, %v440
      %v459 = vadd.f32 %v392, %v441
      %v460 = vadd.f32 %v393, %v442
      %v461 = vadd.f32 %v394, %v440
      %v462 = vadd.f32 %v395, %v441
      %v463 = vadd.f32 %v396, %v442
      %v464 = vadd.f32 %v397, %v440
      %v465 = vadd.f32 %v398, %v441
      %v466 = vadd.f32 %v399, %v442
      %v467 = vadd.f32 %v400, %v440
      %v468 = vadd.f32 %v401, %v441
      %v469 = vadd.f32 %v402, %v442
      %v470 = vadd.f32 %v403, %v440
      %v471 = vadd.f32 %v404, %v441
      %v472 = vadd.f32 %v405, %v442
      %v473 = vadd.f32 %v406, %v440
      %v474 = vadd.f32 %v407, %v441
      %v475 = vadd.f32 %v408, %v442
      %v476 = vadd.f32 %v409, %v440
      %v477 = vadd.f32 %v410, %v441
      %v478 = vadd.f32 %v411, %v442
      %v479 = vadd.f32 %v412, %v440
      %v480 = vadd.f32 %v413, %v441
      %v481 = vadd.f32 %v414, %v442
      %v482 = vadd.f32 %v415, %v440
      %v483 = vadd.f32 %v416, %v441
      %v484 = vadd.f32 %v417, %v442
      %v485 = vadd.f32 %v418, %v440
      %v486 = vadd.f32 %v419, %v441
      %v487 = vadd.f32 %v420, %v442
      %v488 = vadd.f32 %v421, %v440
      %v489 = vadd.f32 %v422, %v441
      %v490 = vadd.f32 %v423, %v442
      %v491 = vadd.f32 %v424, %v440
      %v492 = vadd.f32 %v425, %v441
      %v493 = vadd.f32 %v426, %v442
      %v494 = vadd.f32 %v427, %v437
      %v495 = vadd.f32 %v428, %v438
      %v496 = vadd.f32 %v429, %v439
      %v497 = vmax.f32 %v443, 0.0
      %v498 = vmax.f32 %v444, 0.0
      %v499 = vmax.f32 %v445, 0.0
      %v500 = vmax.f32 %v446, 0.0
      %v501 = vmax.f32 %v447, 0.0
      %v502 = vmax.f32 %v448, 0.0
      %v503 = vmax.f32 %v449, 0.0
      %v504 = vmax.f32 %v450, 0.0
      %v505 = vmax.f32 %v451, 0.0
      %v506 = vmax.f32 %v452, 0.0
      %v507 = vmax.f32 %v453, 0.0
      %v508 = vmax.f32 %v454, 0.0
      %v509 = vmax.f32 %v455, 0.0
      %v510 = vmax.f32 %v456, 0.0
      %v511 = vmax.f32 %v457, 0.0
      %v512 = vmax.f32 %v458, 0.0
      %v513 = vmax.f32 %v459, 0.0
      %v514 = vmax.f32 %v460, 0.0
      %v515 = vmax.f32 %v461, 0.0
      %v516 = vmax.f32 %v462, 0.0
      %v517 = vmax.f32 %v463, 0.0
      %v518 = vmax.f32 %v464, 0.0
      %v519 = vmax.f32 %v465, 0.0
      %v520 = vmax.f32 %v466, 0.0
      %v521 = vmax.f32 %v467, 0.0
      %v522 = vmax.f32 %v468, 0.0
      %v523 = vmax.f32 %v469, 0.0
      %v524 = vmax.f32 %v470, 0.0
      %v525 = vmax.f32 %v471, 0.0
      %v526 = vmax.f32 %v472, 0.0
      %v527 = vmax.f32 %v473, 0.0
      %v528 = vmax.f32 %v474, 0.0
      %v529 = vmax.f32 %v475, 0.0
      %v530 = vmax.f32 %v476, 0.0
      %v531 = vmax.f32 %v477, 0.0
      %v532 = vmax.f32 %v478, 0.0
      %v533 = vmax.f32 %v479, 0.0
      %v534 = vmax.f32 %v480, 0.0
      %v535 = vmax.f32 %v481, 0.0
      %v536 = vmax.f32 %v482, 0.0
      %v537 = vmax.f32 %v483, 0.0
      %v538 = vmax.f32 %v484, 0.0
      %v539 = vmax.f32 %v485, 0.0
      %v540 = vmax.f32 %v486, 0.0
      %v541 = vmax.f32 %v487, 0.0
      %v542 = vmax.f32 %v488, 0.0
      %v543 = vmax.f32 %v489, 0.0
      %v544 = vmax.f32 %v490, 0.0
      %v545 = vmax.f32 %v491, 0.0
      %v546 = vmax.f32 %v492, 0.0
      %v547 = vmax.f32 %v493, 0.0
      %v548 = vmax.f32 %v494, 0.0
      %v549 = vmax.f32 %v495, 0.0
      %v550 = vmax.f32 %v496, 0.0
      %v551 = vld [vmem:[%s1] sm:$0xff]
      %v552 = vld [vmem:[%s1 + $0x8] sm:$0x1]
      %v553 = vlaneseq
      %v554 = vshrl.u32 %v553, 7
      %v555 = vsub.s32 0, %v554
      %v556 = vrot.slane %v551, %v555
      %v557 = vmul.f32 %v497, %v556
      %v558 = vmul.f32 %v498, %v556
      %v559 = vmul.f32 %v500, %v556
      %v560 = vmul.f32 %v501, %v556
      %v561 = vmul.f32 %v503, %v556
      %v562 = vmul.f32 %v504, %v556
      %v563 = vmul.f32 %v506, %v556
      %v564 = vmul.f32 %v507, %v556
      %v565 = vmul.f32 %v509, %v556
      %v566 = vmul.f32 %v510, %v556
      %v567 = vmul.f32 %v512, %v556
      %v568 = vmul.f32 %v513, %v556
      %v569 = vmul.f32 %v515, %v556
      %v570 = vmul.f32 %v516, %v556
      %v571 = vmul.f32 %v518, %v556
      %v572 = vmul.f32 %v519, %v556
      %v573 = vmul.f32 %v521, %v556
      %v574 = vmul.f32 %v522, %v556
      %v575 = vmul.f32 %v524, %v556
      %v576 = vmul.f32 %v525, %v556
      %v577 = vmul.f32 %v527, %v556
      %v578 = vmul.f32 %v528, %v556
      %v579 = vmul.f32 %v530, %v556
      %v580 = vmul.f32 %v531, %v556
      %v581 = vmul.f32 %v533, %v556
      %v582 = vmul.f32 %v534, %v556
      %v583 = vmul.f32 %v536, %v556
      %v584 = vmul.f32 %v537, %v556
      %v585 = vmul.f32 %v539, %v556
      %v586 = vmul.f32 %v540, %v556
      %v587 = vmul.f32 %v542, %v556
      %v588 = vmul.f32 %v543, %v556
      %589 = vadd.xlane.f32.xlu0 %v557
      %v590 = vpop.xlane.xlu0 %589
      %591 = vadd.xlane.f32.xlu0 %v558
      %v592 = vpop.xlane.xlu0 %591
      %593 = vadd.xlane.f32.xlu0 %v559
      %v594 = vpop.xlane.xlu0 %593
      %595 = vadd.xlane.f32.xlu0 %v560
      %v596 = vpop.xlane.xlu0 %595
      %597 = vadd.xlane.f32.xlu0 %v561
      %v598 = vpop.xlane.xlu0 %597
      %599 = vadd.xlane.f32.xlu0 %v562
      %v600 = vpop.xlane.xlu0 %599
      %601 = vadd.xlane.f32.xlu0 %v563
      %v602 = vpop.xlane.xlu0 %601
      %603 = vadd.xlane.f32.xlu0 %v564
      %v604 = vpop.xlane.xlu0 %603
      %605 = vadd.xlane.f32.xlu0 %v565
      %v606 = vpop.xlane.xlu0 %605
      %607 = vadd.xlane.f32.xlu0 %v566
      %v608 = vpop.xlane.xlu0 %607
      %609 = vadd.xlane.f32.xlu0 %v567
      %v610 = vpop.xlane.xlu0 %609
      %611 = vadd.xlane.f32.xlu0 %v568
      %v612 = vpop.xlane.xlu0 %611
      %613 = vadd.xlane.f32.xlu0 %v569
      %v614 = vpop.xlane.xlu0 %613
      %615 = vadd.xlane.f32.xlu0 %v570
      %v616 = vpop.xlane.xlu0 %615
      %617 = vadd.xlane.f32.xlu0 %v571
      %v618 = vpop.xlane.xlu0 %617
      %619 = vadd.xlane.f32.xlu0 %v572
      %v620 = vpop.xlane.xlu0 %619
      %621 = vadd.xlane.f32.xlu0 %v573
      %v622 = vpop.xlane.xlu0 %621
      %623 = vadd.xlane.f32.xlu0 %v574
      %v624 = vpop.xlane.xlu0 %623
      %625 = vadd.xlane.f32.xlu0 %v575
      %v626 = vpop.xlane.xlu0 %625
      %627 = vadd.xlane.f32.xlu0 %v576
      %v628 = vpop.xlane.xlu0 %627
      %629 = vadd.xlane.f32.xlu0 %v577
      %v630 = vpop.xlane.xlu0 %629
      %631 = vadd.xlane.f32.xlu0 %v578
      %v632 = vpop.xlane.xlu0 %631
      %633 = vadd.xlane.f32.xlu0 %v579
      %v634 = vpop.xlane.xlu0 %633
      %635 = vadd.xlane.f32.xlu0 %v580
      %v636 = vpop.xlane.xlu0 %635
      %637 = vadd.xlane.f32.xlu0 %v581
      %v638 = vpop.xlane.xlu0 %637
      %639 = vadd.xlane.f32.xlu0 %v582
      %v640 = vpop.xlane.xlu0 %639
      %641 = vadd.xlane.f32.xlu0 %v583
      %v642 = vpop.xlane.xlu0 %641
      %643 = vadd.xlane.f32.xlu0 %v584
      %v644 = vpop.xlane.xlu0 %643
      %645 = vadd.xlane.f32.xlu0 %v585
      %v646 = vpop.xlane.xlu0 %645
      %647 = vadd.xlane.f32.xlu0 %v586
      %v648 = vpop.xlane.xlu0 %647
      %649 = vadd.xlane.f32.xlu0 %v587
      %v650 = vpop.xlane.xlu0 %649
      %651 = vadd.xlane.f32.xlu0 %v588
      %v652 = vpop.xlane.xlu0 %651
      %v653 = vadd.f32 %v590, 0.0
      %v654 = vadd.f32 %v592, 0.0
      %v655 = vadd.f32 %v594, 0.0
      %v656 = vadd.f32 %v596, 0.0
      %v657 = vadd.f32 %v598, 0.0
      %v658 = vadd.f32 %v600, 0.0
      %v659 = vadd.f32 %v602, 0.0
      %v660 = vadd.f32 %v604, 0.0
      %v661 = vadd.f32 %v606, 0.0
      %v662 = vadd.f32 %v608, 0.0
      %v663 = vadd.f32 %v610, 0.0
      %v664 = vadd.f32 %v612, 0.0
      %v665 = vadd.f32 %v614, 0.0
      %v666 = vadd.f32 %v616, 0.0
      %v667 = vadd.f32 %v618, 0.0
      %v668 = vadd.f32 %v620, 0.0
      %v669 = vadd.f32 %v622, 0.0
      %v670 = vadd.f32 %v624, 0.0
      %v671 = vadd.f32 %v626, 0.0
      %v672 = vadd.f32 %v628, 0.0
      %v673 = vadd.f32 %v630, 0.0
      %v674 = vadd.f32 %v632, 0.0
      %v675 = vadd.f32 %v634, 0.0
      %v676 = vadd.f32 %v636, 0.0
      %v677 = vadd.f32 %v638, 0.0
      %v678 = vadd.f32 %v640, 0.0
      %v679 = vadd.f32 %v642, 0.0
      %v680 = vadd.f32 %v644, 0.0
      %v681 = vadd.f32 %v646, 0.0
      %v682 = vadd.f32 %v648, 0.0
      %v683 = vadd.f32 %v650, 0.0
      %v684 = vadd.f32 %v652, 0.0
      %v685 = vlaneseq
      %v686 = vshrl.u32 %v685, 7
      %v687 = vsub.s32 1, %v686
      %v688 = vrot.slane %v551, %v687
      %v689 = vmul.f32 %v497, %v688
      %v690 = vmul.f32 %v498, %v688
      %v691 = vmul.f32 %v499, %v688
      %v692 = vmul.f32 %v500, %v688
      %v693 = vmul.f32 %v501, %v688
      %v694 = vmul.f32 %v502, %v688
      %v695 = vmul.f32 %v503, %v688
      %v696 = vmul.f32 %v504, %v688
      %v697 = vmul.f32 %v505, %v688
      %v698 = vmul.f32 %v506, %v688
      %v699 = vmul.f32 %v507, %v688
      %v700 = vmul.f32 %v508, %v688
      %v701 = vmul.f32 %v509, %v688
      %v702 = vmul.f32 %v510, %v688
      %v703 = vmul.f32 %v511, %v688
      %v704 = vmul.f32 %v512, %v688
      %v705 = vmul.f32 %v513, %v688
      %v706 = vmul.f32 %v514, %v688
      %v707 = vmul.f32 %v515, %v688
      %v708 = vmul.f32 %v516, %v688
      %v709 = vmul.f32 %v517, %v688
      %v710 = vmul.f32 %v518, %v688
      %v711 = vmul.f32 %v519, %v688
      %v712 = vmul.f32 %v520, %v688
      %v713 = vmul.f32 %v521, %v688
      %v714 = vmul.f32 %v522, %v688
      %v715 = vmul.f32 %v523, %v688
      %v716 = vmul.f32 %v524, %v688
      %v717 = vmul.f32 %v525, %v688
      %v718 = vmul.f32 %v526, %v688
      %v719 = vmul.f32 %v527, %v688
      %v720 = vmul.f32 %v528, %v688
      %v721 = vmul.f32 %v529, %v688
      %v722 = vmul.f32 %v530, %v688
      %v723 = vmul.f32 %v531, %v688
      %v724 = vmul.f32 %v532, %v688
      %v725 = vmul.f32 %v533, %v688
      %v726 = vmul.f32 %v534, %v688
      %v727 = vmul.f32 %v535, %v688
      %v728 = vmul.f32 %v536, %v688
      %v729 = vmul.f32 %v537, %v688
      %v730 = vmul.f32 %v538, %v688
      %v731 = vmul.f32 %v539, %v688
      %v732 = vmul.f32 %v540, %v688
      %v733 = vmul.f32 %v541, %v688
      %v734 = vmul.f32 %v542, %v688
      %v735 = vmul.f32 %v543, %v688
      %v736 = vmul.f32 %v544, %v688
      %vm737 = vcmask 1047553
      %v738 = vsel %vm737, %v689, 0.0
      %739 = vadd.xlane.f32.xlu0 %v738
      %v740 = vpop.xlane.xlu0 %739
      %741 = vadd.xlane.f32.xlu0 %v690
      %v742 = vpop.xlane.xlu0 %741
      %vm743 = vcmask 1040384
      %v744 = vsel %vm743, %v691, 0.0
      %745 = vadd.xlane.f32.xlu0 %v744
      %v746 = vpop.xlane.xlu0 %745
      %v747 = vsel %vm737, %v692, 0.0
      %748 = vadd.xlane.f32.xlu0 %v747
      %v749 = vpop.xlane.xlu0 %748
      %750 = vadd.xlane.f32.xlu0 %v693
      %v751 = vpop.xlane.xlu0 %750
      %v752 = vsel %vm743, %v694, 0.0
      %753 = vadd.xlane.f32.xlu0 %v752
      %v754 = vpop.xlane.xlu0 %753
      %v755 = vsel %vm737, %v695, 0.0
      %756 = vadd.xlane.f32.xlu0 %v755
      %v757 = vpop.xlane.xlu0 %756
      %758 = vadd.xlane.f32.xlu0 %v696
      %v759 = vpop.xlane.xlu0 %758
      %v760 = vsel %vm743, %v697, 0.0
      %761 = vadd.xlane.f32.xlu0 %v760
      %v762 = vpop.xlane.xlu0 %761
      %v763 = vsel %vm737, %v698, 0.0
      %764 = vadd.xlane.f32.xlu0 %v763
      %v765 = vpop.xlane.xlu0 %764
      %766 = vadd.xlane.f32.xlu0 %v699
      %v767 = vpop.xlane.xlu0 %766
      %v768 = vsel %vm743, %v700, 0.0
      %769 = vadd.xlane.f32.xlu0 %v768
      %v770 = vpop.xlane.xlu0 %769
      %v771 = vsel %vm737, %v701, 0.0
      %772 = vadd.xlane.f32.xlu0 %v771
      %v773 = vpop.xlane.xlu0 %772
      %774 = vadd.xlane.f32.xlu0 %v702
      %v775 = vpop.xlane.xlu0 %774
      %v776 = vsel %vm743, %v703, 0.0
      %777 = vadd.xlane.f32.xlu0 %v776
      %v778 = vpop.xlane.xlu0 %777
      %v779 = vsel %vm737, %v704, 0.0
      %780 = vadd.xlane.f32.xlu0 %v779
      %v781 = vpop.xlane.xlu0 %780
      %782 = vadd.xlane.f32.xlu0 %v705
      %v783 = vpop.xlane.xlu0 %782
      %v784 = vsel %vm743, %v706, 0.0
      %785 = vadd.xlane.f32.xlu0 %v784
      %v786 = vpop.xlane.xlu0 %785
      %v787 = vsel %vm737, %v707, 0.0
      %788 = vadd.xlane.f32.xlu0 %v787
      %v789 = vpop.xlane.xlu0 %788
      %790 = vadd.xlane.f32.xlu0 %v708
      %v791 = vpop.xlane.xlu0 %790
      %v792 = vsel %vm743, %v709, 0.0
      %793 = vadd.xlane.f32.xlu0 %v792
      %v794 = vpop.xlane.xlu0 %793
      %v795 = vsel %vm737, %v710, 0.0
      %796 = vadd.xlane.f32.xlu0 %v795
      %v797 = vpop.xlane.xlu0 %796
      %798 = vadd.xlane.f32.xlu0 %v711
      %v799 = vpop.xlane.xlu0 %798
      %v800 = vsel %vm743, %v712, 0.0
      %801 = vadd.xlane.f32.xlu0 %v800
      %v802 = vpop.xlane.xlu0 %801
      %v803 = vsel %vm737, %v713, 0.0
      %804 = vadd.xlane.f32.xlu0 %v803
      %v805 = vpop.xlane.xlu0 %804
      %806 = vadd.xlane.f32.xlu0 %v714
      %v807 = vpop.xlane.xlu0 %806
      %v808 = vsel %vm743, %v715, 0.0
      %809 = vadd.xlane.f32.xlu0 %v808
      %v810 = vpop.xlane.xlu0 %809
      %v811 = vsel %vm737, %v716, 0.0
      %812 = vadd.xlane.f32.xlu0 %v811
      %v813 = vpop.xlane.xlu0 %812
      %814 = vadd.xlane.f32.xlu0 %v717
      %v815 = vpop.xlane.xlu0 %814
      %v816 = vsel %vm743, %v718, 0.0
      %817 = vadd.xlane.f32.xlu0 %v816
      %v818 = vpop.xlane.xlu0 %817
      %v819 = vsel %vm737, %v719, 0.0
      %820 = vadd.xlane.f32.xlu0 %v819
      %v821 = vpop.xlane.xlu0 %820
      %822 = vadd.xlane.f32.xlu0 %v720
      %v823 = vpop.xlane.xlu0 %822
      %v824 = vsel %vm743, %v721, 0.0
      %825 = vadd.xlane.f32.xlu0 %v824
      %v826 = vpop.xlane.xlu0 %825
      %v827 = vsel %vm737, %v722, 0.0
      %828 = vadd.xlane.f32.xlu0 %v827
      %v829 = vpop.xlane.xlu0 %828
      %830 = vadd.xlane.f32.xlu0 %v723
      %v831 = vpop.xlane.xlu0 %830
      %v832 = vsel %vm743, %v724, 0.0
      %833 = vadd.xlane.f32.xlu0 %v832
      %v834 = vpop.xlane.xlu0 %833
      %v835 = vsel %vm737, %v725, 0.0
      %836 = vadd.xlane.f32.xlu0 %v835
      %v837 = vpop.xlane.xlu0 %836
      %838 = vadd.xlane.f32.xlu0 %v726
      %v839 = vpop.xlane.xlu0 %838
      %v840 = vsel %vm743, %v727, 0.0
      %841 = vadd.xlane.f32.xlu0 %v840
      %v842 = vpop.xlane.xlu0 %841
      %v843 = vsel %vm737, %v728, 0.0
      %844 = vadd.xlane.f32.xlu0 %v843
      %v845 = vpop.xlane.xlu0 %844
      %846 = vadd.xlane.f32.xlu0 %v729
      %v847 = vpop.xlane.xlu0 %846
      %v848 = vsel %vm743, %v730, 0.0
      %849 = vadd.xlane.f32.xlu0 %v848
      %v850 = vpop.xlane.xlu0 %849
      %v851 = vsel %vm737, %v731, 0.0
      %852 = vadd.xlane.f32.xlu0 %v851
      %v853 = vpop.xlane.xlu0 %852
      %854 = vadd.xlane.f32.xlu0 %v732
      %v855 = vpop.xlane.xlu0 %854
      %v856 = vsel %vm743, %v733, 0.0
      %857 = vadd.xlane.f32.xlu0 %v856
      %v858 = vpop.xlane.xlu0 %857
      %v859 = vsel %vm737, %v734, 0.0
      %860 = vadd.xlane.f32.xlu0 %v859
      %v861 = vpop.xlane.xlu0 %860
      %862 = vadd.xlane.f32.xlu0 %v735
      %v863 = vpop.xlane.xlu0 %862
      %v864 = vsel %vm743, %v736, 0.0
      %865 = vadd.xlane.f32.xlu0 %v864
      %v866 = vpop.xlane.xlu0 %865
      %vm915 = vcmask 1046528
      %v916 = vrot.slane %v740, 1
      %v917 = vrot.slane %v742, 1
      %v918 = vsel %vm915, %v916, %v917
      %v919 = vrot.slane %v746, 1
      %v920 = vsel %vm915, %v917, %v919
      %v921 = vrot.slane %v749, 1
      %v922 = vrot.slane %v751, 1
      %v923 = vsel %vm915, %v921, %v922
      %v924 = vrot.slane %v754, 1
      %v925 = vsel %vm915, %v922, %v924
      %v926 = vrot.slane %v757, 1
      %v927 = vrot.slane %v759, 1
      %v928 = vsel %vm915, %v926, %v927
      %v929 = vrot.slane %v762, 1
      %v930 = vsel %vm915, %v927, %v929
      %v931 = vrot.slane %v765, 1
      %v932 = vrot.slane %v767, 1
      %v933 = vsel %vm915, %v931, %v932
      %v934 = vrot.slane %v770, 1
      %v935 = vsel %vm915, %v932, %v934
      %v936 = vrot.slane %v773, 1
      %v937 = vrot.slane %v775, 1
      %v938 = vsel %vm915, %v936, %v937
      %v939 = vrot.slane %v778, 1
      %v940 = vsel %vm915, %v937, %v939
      %v941 = vrot.slane %v781, 1
      %v942 = vrot.slane %v783, 1
      %v943 = vsel %vm915, %v941, %v942
      %v944 = vrot.slane %v786, 1
      %v945 = vsel %vm915, %v942, %v944
      %v946 = vrot.slane %v789, 1
      %v947 = vrot.slane %v791, 1
      %v948 = vsel %vm915, %v946, %v947
      %v949 = vrot.slane %v794, 1
      %v950 = vsel %vm915, %v947, %v949
      %v951 = vrot.slane %v797, 1
      %v952 = vrot.slane %v799, 1
      %v953 = vsel %vm915, %v951, %v952
      %v954 = vrot.slane %v802, 1
      %v955 = vsel %vm915, %v952, %v954
      %v956 = vrot.slane %v805, 1
      %v957 = vrot.slane %v807, 1
      %v958 = vsel %vm915, %v956, %v957
      %v959 = vrot.slane %v810, 1
      %v960 = vsel %vm915, %v957, %v959
      %v961 = vrot.slane %v813, 1
      %v962 = vrot.slane %v815, 1
      %v963 = vsel %vm915, %v961, %v962
      %v964 = vrot.slane %v818, 1
      %v965 = vsel %vm915, %v962, %v964
      %v966 = vrot.slane %v821, 1
      %v967 = vrot.slane %v823, 1
      %v968 = vsel %vm915, %v966, %v967
      %v969 = vrot.slane %v826, 1
      %v970 = vsel %vm915, %v967, %v969
      %v971 = vrot.slane %v829, 1
      %v972 = vrot.slane %v831, 1
      %v973 = vsel %vm915, %v971, %v972
      %v974 = vrot.slane %v834, 1
      %v975 = vsel %vm915, %v972, %v974
      %v976 = vrot.slane %v837, 1
      %v977 = vrot.slane %v839, 1
      %v978 = vsel %vm915, %v976, %v977
      %v979 = vrot.slane %v842, 1
      %v980 = vsel %vm915, %v977, %v979
      %v981 = vrot.slane %v845, 1
      %v982 = vrot.slane %v847, 1
      %v983 = vsel %vm915, %v981, %v982
      %v984 = vrot.slane %v850, 1
      %v985 = vsel %vm915, %v982, %v984
      %v986 = vrot.slane %v853, 1
      %v987 = vrot.slane %v855, 1
      %v988 = vsel %vm915, %v986, %v987
      %v989 = vrot.slane %v858, 1
      %v990 = vsel %vm915, %v987, %v989
      %v991 = vrot.slane %v861, 1
      %v992 = vrot.slane %v863, 1
      %v993 = vsel %vm915, %v991, %v992
      %v994 = vrot.slane %v866, 1
      %v995 = vsel %vm915, %v992, %v994
      %v1028 = vadd.f32 %v653, %v918
      %v1029 = vadd.f32 %v654, %v920
      %v1030 = vadd.f32 %v655, %v923
      %v1031 = vadd.f32 %v656, %v925
      %v1032 = vadd.f32 %v657, %v928
      %v1033 = vadd.f32 %v658, %v930
      %v1034 = vadd.f32 %v659, %v933
      %v1035 = vadd.f32 %v660, %v935
      %v1036 = vadd.f32 %v661, %v938
      %v1037 = vadd.f32 %v662, %v940
      %v1038 = vadd.f32 %v663, %v943
      %v1039 = vadd.f32 %v664, %v945
      %v1040 = vadd.f32 %v665, %v948
      %v1041 = vadd.f32 %v666, %v950
      %v1042 = vadd.f32 %v667, %v953
      %v1043 = vadd.f32 %v668, %v955
      %v1044 = vadd.f32 %v669, %v958
      %v1045 = vadd.f32 %v670, %v960
      %v1046 = vadd.f32 %v671, %v963
      %v1047 = vadd.f32 %v672, %v965
      %v1048 = vadd.f32 %v673, %v968
      %v1049 = vadd.f32 %v674, %v970
      %v1050 = vadd.f32 %v675, %v973
      %v1051 = vadd.f32 %v676, %v975
      %v1052 = vadd.f32 %v677, %v978
      %v1053 = vadd.f32 %v678, %v980
      %v1054 = vadd.f32 %v679, %v983
      %v1055 = vadd.f32 %v680, %v985
      %v1056 = vadd.f32 %v681, %v988
      %v1057 = vadd.f32 %v682, %v990
      %v1058 = vadd.f32 %v683, %v993
      %v1059 = vadd.f32 %v684, %v995
      %v1060 = vlaneseq
      %v1061 = vshrl.u32 %v1060, 7
      %v1062 = vsub.s32 2, %v1061
      %v1063 = vrot.slane %v551, %v1062
      %v1064 = vmul.f32 %v497, %v1063
      %v1065 = vmul.f32 %v498, %v1063
      %v1066 = vmul.f32 %v499, %v1063
      %v1067 = vmul.f32 %v500, %v1063
      %v1068 = vmul.f32 %v501, %v1063
      %v1069 = vmul.f32 %v502, %v1063
      %v1070 = vmul.f32 %v503, %v1063
      %v1071 = vmul.f32 %v504, %v1063
      %v1072 = vmul.f32 %v505, %v1063
      %v1073 = vmul.f32 %v506, %v1063
      %v1074 = vmul.f32 %v507, %v1063
      %v1075 = vmul.f32 %v508, %v1063
      %v1076 = vmul.f32 %v509, %v1063
      %v1077 = vmul.f32 %v510, %v1063
      %v1078 = vmul.f32 %v511, %v1063
      %v1079 = vmul.f32 %v512, %v1063
      %v1080 = vmul.f32 %v513, %v1063
      %v1081 = vmul.f32 %v514, %v1063
      %v1082 = vmul.f32 %v515, %v1063
      %v1083 = vmul.f32 %v516, %v1063
      %v1084 = vmul.f32 %v517, %v1063
      %v1085 = vmul.f32 %v518, %v1063
      %v1086 = vmul.f32 %v519, %v1063
      %v1087 = vmul.f32 %v520, %v1063
      %v1088 = vmul.f32 %v521, %v1063
      %v1089 = vmul.f32 %v522, %v1063
      %v1090 = vmul.f32 %v523, %v1063
      %v1091 = vmul.f32 %v524, %v1063
      %v1092 = vmul.f32 %v525, %v1063
      %v1093 = vmul.f32 %v526, %v1063
      %v1094 = vmul.f32 %v527, %v1063
      %v1095 = vmul.f32 %v528, %v1063
      %v1096 = vmul.f32 %v529, %v1063
      %v1097 = vmul.f32 %v530, %v1063
      %v1098 = vmul.f32 %v531, %v1063
      %v1099 = vmul.f32 %v532, %v1063
      %v1100 = vmul.f32 %v533, %v1063
      %v1101 = vmul.f32 %v534, %v1063
      %v1102 = vmul.f32 %v535, %v1063
      %v1103 = vmul.f32 %v536, %v1063
      %v1104 = vmul.f32 %v537, %v1063
      %v1105 = vmul.f32 %v538, %v1063
      %v1106 = vmul.f32 %v539, %v1063
      %v1107 = vmul.f32 %v540, %v1063
      %v1108 = vmul.f32 %v541, %v1063
      %v1109 = vmul.f32 %v542, %v1063
      %v1110 = vmul.f32 %v543, %v1063
      %v1111 = vmul.f32 %v544, %v1063
      %vm1112 = vcmask 1047554
      %v1113 = vsel %vm1112, %v1064, 0.0
      %1114 = vadd.xlane.f32.xlu0 %v1113
      %v1115 = vpop.xlane.xlu0 %1114
      %1116 = vadd.xlane.f32.xlu0 %v1065
      %v1117 = vpop.xlane.xlu0 %1116
      %vm1118 = vcmask 1041408
      %v1119 = vsel %vm1118, %v1066, 0.0
      %1120 = vadd.xlane.f32.xlu0 %v1119
      %v1121 = vpop.xlane.xlu0 %1120
      %v1122 = vsel %vm1112, %v1067, 0.0
      %1123 = vadd.xlane.f32.xlu0 %v1122
      %v1124 = vpop.xlane.xlu0 %1123
      %1125 = vadd.xlane.f32.xlu0 %v1068
      %v1126 = vpop.xlane.xlu0 %1125
      %v1127 = vsel %vm1118, %v1069, 0.0
      %1128 = vadd.xlane.f32.xlu0 %v1127
      %v1129 = vpop.xlane.xlu0 %1128
      %v1130 = vsel %vm1112, %v1070, 0.0
      %1131 = vadd.xlane.f32.xlu0 %v1130
      %v1132 = vpop.xlane.xlu0 %1131
      %1133 = vadd.xlane.f32.xlu0 %v1071
      %v1134 = vpop.xlane.xlu0 %1133
      %v1135 = vsel %vm1118, %v1072, 0.0
      %1136 = vadd.xlane.f32.xlu0 %v1135
      %v1137 = vpop.xlane.xlu0 %1136
      %v1138 = vsel %vm1112, %v1073, 0.0
      %1139 = vadd.xlane.f32.xlu0 %v1138
      %v1140 = vpop.xlane.xlu0 %1139
      %1141 = vadd.xlane.f32.xlu0 %v1074
      %v1142 = vpop.xlane.xlu0 %1141
      %v1143 = vsel %vm1118, %v1075, 0.0
      %1144 = vadd.xlane.f32.xlu0 %v1143
      %v1145 = vpop.xlane.xlu0 %1144
      %v1146 = vsel %vm1112, %v1076, 0.0
      %1147 = vadd.xlane.f32.xlu0 %v1146
      %v1148 = vpop.xlane.xlu0 %1147
      %1149 = vadd.xlane.f32.xlu0 %v1077
      %v1150 = vpop.xlane.xlu0 %1149
      %v1151 = vsel %vm1118, %v1078, 0.0
      %1152 = vadd.xlane.f32.xlu0 %v1151
      %v1153 = vpop.xlane.xlu0 %1152
      %v1154 = vsel %vm1112, %v1079, 0.0
      %1155 = vadd.xlane.f32.xlu0 %v1154
      %v1156 = vpop.xlane.xlu0 %1155
      %1157 = vadd.xlane.f32.xlu0 %v1080
      %v1158 = vpop.xlane.xlu0 %1157
      %v1159 = vsel %vm1118, %v1081, 0.0
      %1160 = vadd.xlane.f32.xlu0 %v1159
      %v1161 = vpop.xlane.xlu0 %1160
      %v1162 = vsel %vm1112, %v1082, 0.0
      %1163 = vadd.xlane.f32.xlu0 %v1162
      %v1164 = vpop.xlane.xlu0 %1163
      %1165 = vadd.xlane.f32.xlu0 %v1083
      %v1166 = vpop.xlane.xlu0 %1165
      %v1167 = vsel %vm1118, %v1084, 0.0
      %1168 = vadd.xlane.f32.xlu0 %v1167
      %v1169 = vpop.xlane.xlu0 %1168
      %v1170 = vsel %vm1112, %v1085, 0.0
      %1171 = vadd.xlane.f32.xlu0 %v1170
      %v1172 = vpop.xlane.xlu0 %1171
      %1173 = vadd.xlane.f32.xlu0 %v1086
      %v1174 = vpop.xlane.xlu0 %1173
      %v1175 = vsel %vm1118, %v1087, 0.0
      %1176 = vadd.xlane.f32.xlu0 %v1175
      %v1177 = vpop.xlane.xlu0 %1176
      %v1178 = vsel %vm1112, %v1088, 0.0
      %1179 = vadd.xlane.f32.xlu0 %v1178
      %v1180 = vpop.xlane.xlu0 %1179
      %1181 = vadd.xlane.f32.xlu0 %v1089
      %v1182 = vpop.xlane.xlu0 %1181
      %v1183 = vsel %vm1118, %v1090, 0.0
      %1184 = vadd.xlane.f32.xlu0 %v1183
      %v1185 = vpop.xlane.xlu0 %1184
      %v1186 = vsel %vm1112, %v1091, 0.0
      %1187 = vadd.xlane.f32.xlu0 %v1186
      %v1188 = vpop.xlane.xlu0 %1187
      %1189 = vadd.xlane.f32.xlu0 %v1092
      %v1190 = vpop.xlane.xlu0 %1189
      %v1191 = vsel %vm1118, %v1093, 0.0
      %1192 = vadd.xlane.f32.xlu0 %v1191
      %v1193 = vpop.xlane.xlu0 %1192
      %v1194 = vsel %vm1112, %v1094, 0.0
      %1195 = vadd.xlane.f32.xlu0 %v1194
      %v1196 = vpop.xlane.xlu0 %1195
      %1197 = vadd.xlane.f32.xlu0 %v1095
      %v1198 = vpop.xlane.xlu0 %1197
      %v1199 = vsel %vm1118, %v1096, 0.0
      %1200 = vadd.xlane.f32.xlu0 %v1199
      %v1201 = vpop.xlane.xlu0 %1200
      %v1202 = vsel %vm1112, %v1097, 0.0
      %1203 = vadd.xlane.f32.xlu0 %v1202
      %v1204 = vpop.xlane.xlu0 %1203
      %1205 = vadd.xlane.f32.xlu0 %v1098
      %v1206 = vpop.xlane.xlu0 %1205
      %v1207 = vsel %vm1118, %v1099, 0.0
      %1208 = vadd.xlane.f32.xlu0 %v1207
      %v1209 = vpop.xlane.xlu0 %1208
      %v1210 = vsel %vm1112, %v1100, 0.0
      %1211 = vadd.xlane.f32.xlu0 %v1210
      %v1212 = vpop.xlane.xlu0 %1211
      %1213 = vadd.xlane.f32.xlu0 %v1101
      %v1214 = vpop.xlane.xlu0 %1213
      %v1215 = vsel %vm1118, %v1102, 0.0
      %1216 = vadd.xlane.f32.xlu0 %v1215
      %v1217 = vpop.xlane.xlu0 %1216
      %v1218 = vsel %vm1112, %v1103, 0.0
      %1219 = vadd.xlane.f32.xlu0 %v1218
      %v1220 = vpop.xlane.xlu0 %1219
      %1221 = vadd.xlane.f32.xlu0 %v1104
      %v1222 = vpop.xlane.xlu0 %1221
      %v1223 = vsel %vm1118, %v1105, 0.0
      %1224 = vadd.xlane.f32.xlu0 %v1223
      %v1225 = vpop.xlane.xlu0 %1224
      %v1226 = vsel %vm1112, %v1106, 0.0
      %1227 = vadd.xlane.f32.xlu0 %v1226
      %v1228 = vpop.xlane.xlu0 %1227
      %1229 = vadd.xlane.f32.xlu0 %v1107
      %v1230 = vpop.xlane.xlu0 %1229
      %v1231 = vsel %vm1118, %v1108, 0.0
      %1232 = vadd.xlane.f32.xlu0 %v1231
      %v1233 = vpop.xlane.xlu0 %1232
      %v1234 = vsel %vm1112, %v1109, 0.0
      %1235 = vadd.xlane.f32.xlu0 %v1234
      %v1236 = vpop.xlane.xlu0 %1235
      %1237 = vadd.xlane.f32.xlu0 %v1110
      %v1238 = vpop.xlane.xlu0 %1237
      %v1239 = vsel %vm1118, %v1111, 0.0
      %1240 = vadd.xlane.f32.xlu0 %v1239
      %v1241 = vpop.xlane.xlu0 %1240
      %vm1290 = vcmask 1045504
      %v1291 = vrot.slane %v1115, 2
      %v1292 = vrot.slane %v1117, 2
      %v1293 = vsel %vm1290, %v1291, %v1292
      %v1294 = vrot.slane %v1121, 2
      %v1295 = vsel %vm1290, %v1292, %v1294
      %v1296 = vrot.slane %v1124, 2
      %v1297 = vrot.slane %v1126, 2
      %v1298 = vsel %vm1290, %v1296, %v1297
      %v1299 = vrot.slane %v1129, 2
      %v1300 = vsel %vm1290, %v1297, %v1299
      %v1301 = vrot.slane %v1132, 2
      %v1302 = vrot.slane %v1134, 2
      %v1303 = vsel %vm1290, %v1301, %v1302
      %v1304 = vrot.slane %v1137, 2
      %v1305 = vsel %vm1290, %v1302, %v1304
      %v1306 = vrot.slane %v1140, 2
      %v1307 = vrot.slane %v1142, 2
      %v1308 = vsel %vm1290, %v1306, %v1307
      %v1309 = vrot.slane %v1145, 2
      %v1310 = vsel %vm1290, %v1307, %v1309
      %v1311 = vrot.slane %v1148, 2
      %v1312 = vrot.slane %v1150, 2
      %v1313 = vsel %vm1290, %v1311, %v1312
      %v1314 = vrot.slane %v1153, 2
      %v1315 = vsel %vm1290, %v1312, %v1314
      %v1316 = vrot.slane %v1156, 2
      %v1317 = vrot.slane %v1158, 2
      %v1318 = vsel %vm1290, %v1316, %v1317
      %v1319 = vrot.slane %v1161, 2
      %v1320 = vsel %vm1290, %v1317, %v1319
      %v1321 = vrot.slane %v1164, 2
      %v1322 = vrot.slane %v1166, 2
      %v1323 = vsel %vm1290, %v1321, %v1322
      %v1324 = vrot.slane %v1169, 2
      %v1325 = vsel %vm1290, %v1322, %v1324
      %v1326 = vrot.slane %v1172, 2
      %v1327 = vrot.slane %v1174, 2
      %v1328 = vsel %vm1290, %v1326, %v1327
      %v1329 = vrot.slane %v1177, 2
      %v1330 = vsel %vm1290, %v1327, %v1329
      %v1331 = vrot.slane %v1180, 2
      %v1332 = vrot.slane %v1182, 2
      %v1333 = vsel %vm1290, %v1331, %v1332
      %v1334 = vrot.slane %v1185, 2
      %v1335 = vsel %vm1290, %v1332, %v1334
      %v1336 = vrot.slane %v1188, 2
      %v1337 = vrot.slane %v1190, 2
      %v1338 = vsel %vm1290, %v1336, %v1337
      %v1339 = vrot.slane %v1193, 2
      %v1340 = vsel %vm1290, %v1337, %v1339
      %v1341 = vrot.slane %v1196, 2
      %v1342 = vrot.slane %v1198, 2
      %v1343 = vsel %vm1290, %v1341, %v1342
      %v1344 = vrot.slane %v1201, 2
      %v1345 = vsel %vm1290, %v1342, %v1344
      %v1346 = vrot.slane %v1204, 2
      %v1347 = vrot.slane %v1206, 2
      %v1348 = vsel %vm1290, %v1346, %v1347
      %v1349 = vrot.slane %v1209, 2
      %v1350 = vsel %vm1290, %v1347, %v1349
      %v1351 = vrot.slane %v1212, 2
      %v1352 = vrot.slane %v1214, 2
      %v1353 = vsel %vm1290, %v1351, %v1352
      %v1354 = vrot.slane %v1217, 2
      %v1355 = vsel %vm1290, %v1352, %v1354
      %v1356 = vrot.slane %v1220, 2
      %v1357 = vrot.slane %v1222, 2
      %v1358 = vsel %vm1290, %v1356, %v1357
      %v1359 = vrot.slane %v1225, 2
      %v1360 = vsel %vm1290, %v1357, %v1359
      %v1361 = vrot.slane %v1228, 2
      %v1362 = vrot.slane %v1230, 2
      %v1363 = vsel %vm1290, %v1361, %v1362
      %v1364 = vrot.slane %v1233, 2
      %v1365 = vsel %vm1290, %v1362, %v1364
      %v1366 = vrot.slane %v1236, 2
      %v1367 = vrot.slane %v1238, 2
      %v1368 = vsel %vm1290, %v1366, %v1367
      %v1369 = vrot.slane %v1241, 2
      %v1370 = vsel %vm1290, %v1367, %v1369
      %v1403 = vadd.f32 %v1028, %v1293
      %v1404 = vadd.f32 %v1029, %v1295
      %v1405 = vadd.f32 %v1030, %v1298
      %v1406 = vadd.f32 %v1031, %v1300
      %v1407 = vadd.f32 %v1032, %v1303
      %v1408 = vadd.f32 %v1033, %v1305
      %v1409 = vadd.f32 %v1034, %v1308
      %v1410 = vadd.f32 %v1035, %v1310
      %v1411 = vadd.f32 %v1036, %v1313
      %v1412 = vadd.f32 %v1037, %v1315
      %v1413 = vadd.f32 %v1038, %v1318
      %v1414 = vadd.f32 %v1039, %v1320
      %v1415 = vadd.f32 %v1040, %v1323
      %v1416 = vadd.f32 %v1041, %v1325
      %v1417 = vadd.f32 %v1042, %v1328
      %v1418 = vadd.f32 %v1043, %v1330
      %v1419 = vadd.f32 %v1044, %v1333
      %v1420 = vadd.f32 %v1045, %v1335
      %v1421 = vadd.f32 %v1046, %v1338
      %v1422 = vadd.f32 %v1047, %v1340
      %v1423 = vadd.f32 %v1048, %v1343
      %v1424 = vadd.f32 %v1049, %v1345
      %v1425 = vadd.f32 %v1050, %v1348
      %v1426 = vadd.f32 %v1051, %v1350
      %v1427 = vadd.f32 %v1052, %v1353
      %v1428 = vadd.f32 %v1053, %v1355
      %v1429 = vadd.f32 %v1054, %v1358
      %v1430 = vadd.f32 %v1055, %v1360
      %v1431 = vadd.f32 %v1056, %v1363
      %v1432 = vadd.f32 %v1057, %v1365
      %v1433 = vadd.f32 %v1058, %v1368
      %v1434 = vadd.f32 %v1059, %v1370
      %v1435 = vlaneseq
      %v1436 = vshrl.u32 %v1435, 7
      %v1437 = vsub.s32 3, %v1436
      %v1438 = vrot.slane %v551, %v1437
      %v1439 = vmul.f32 %v500, %v1438
      %v1440 = vmul.f32 %v501, %v1438
      %v1441 = vmul.f32 %v503, %v1438
      %v1442 = vmul.f32 %v504, %v1438
      %v1443 = vmul.f32 %v506, %v1438
      %v1444 = vmul.f32 %v507, %v1438
      %v1445 = vmul.f32 %v509, %v1438
      %v1446 = vmul.f32 %v510, %v1438
      %v1447 = vmul.f32 %v512, %v1438
      %v1448 = vmul.f32 %v513, %v1438
      %v1449 = vmul.f32 %v515, %v1438
      %v1450 = vmul.f32 %v516, %v1438
      %v1451 = vmul.f32 %v518, %v1438
      %v1452 = vmul.f32 %v519, %v1438
      %v1453 = vmul.f32 %v521, %v1438
      %v1454 = vmul.f32 %v522, %v1438
      %v1455 = vmul.f32 %v524, %v1438
      %v1456 = vmul.f32 %v525, %v1438
      %v1457 = vmul.f32 %v527, %v1438
      %v1458 = vmul.f32 %v528, %v1438
      %v1459 = vmul.f32 %v530, %v1438
      %v1460 = vmul.f32 %v531, %v1438
      %v1461 = vmul.f32 %v533, %v1438
      %v1462 = vmul.f32 %v534, %v1438
      %v1463 = vmul.f32 %v536, %v1438
      %v1464 = vmul.f32 %v537, %v1438
      %v1465 = vmul.f32 %v539, %v1438
      %v1466 = vmul.f32 %v540, %v1438
      %v1467 = vmul.f32 %v542, %v1438
      %v1468 = vmul.f32 %v543, %v1438
      %v1469 = vmul.f32 %v545, %v1438
      %v1470 = vmul.f32 %v546, %v1438
      %1471 = vadd.xlane.f32.xlu0 %v1439
      %v1472 = vpop.xlane.xlu0 %1471
      %1473 = vadd.xlane.f32.xlu0 %v1440
      %v1474 = vpop.xlane.xlu0 %1473
      %1475 = vadd.xlane.f32.xlu0 %v1441
      %v1476 = vpop.xlane.xlu0 %1475
      %1477 = vadd.xlane.f32.xlu0 %v1442
      %v1478 = vpop.xlane.xlu0 %1477
      %1479 = vadd.xlane.f32.xlu0 %v1443
      %v1480 = vpop.xlane.xlu0 %1479
      %1481 = vadd.xlane.f32.xlu0 %v1444
      %v1482 = vpop.xlane.xlu0 %1481
      %1483 = vadd.xlane.f32.xlu0 %v1445
      %v1484 = vpop.xlane.xlu0 %1483
      %1485 = vadd.xlane.f32.xlu0 %v1446
      %v1486 = vpop.xlane.xlu0 %1485
      %1487 = vadd.xlane.f32.xlu0 %v1447
      %v1488 = vpop.xlane.xlu0 %1487
      %1489 = vadd.xlane.f32.xlu0 %v1448
      %v1490 = vpop.xlane.xlu0 %1489
      %1491 = vadd.xlane.f32.xlu0 %v1449
      %v1492 = vpop.xlane.xlu0 %1491
      %1493 = vadd.xlane.f32.xlu0 %v1450
      %v1494 = vpop.xlane.xlu0 %1493
      %1495 = vadd.xlane.f32.xlu0 %v1451
      %v1496 = vpop.xlane.xlu0 %1495
      %1497 = vadd.xlane.f32.xlu0 %v1452
      %v1498 = vpop.xlane.xlu0 %1497
      %1499 = vadd.xlane.f32.xlu0 %v1453
      %v1500 = vpop.xlane.xlu0 %1499
      %1501 = vadd.xlane.f32.xlu0 %v1454
      %v1502 = vpop.xlane.xlu0 %1501
      %1503 = vadd.xlane.f32.xlu0 %v1455
      %v1504 = vpop.xlane.xlu0 %1503
      %1505 = vadd.xlane.f32.xlu0 %v1456
      %v1506 = vpop.xlane.xlu0 %1505
      %1507 = vadd.xlane.f32.xlu0 %v1457
      %v1508 = vpop.xlane.xlu0 %1507
      %1509 = vadd.xlane.f32.xlu0 %v1458
      %v1510 = vpop.xlane.xlu0 %1509
      %1511 = vadd.xlane.f32.xlu0 %v1459
      %v1512 = vpop.xlane.xlu0 %1511
      %1513 = vadd.xlane.f32.xlu0 %v1460
      %v1514 = vpop.xlane.xlu0 %1513
      %1515 = vadd.xlane.f32.xlu0 %v1461
      %v1516 = vpop.xlane.xlu0 %1515
      %1517 = vadd.xlane.f32.xlu0 %v1462
      %v1518 = vpop.xlane.xlu0 %1517
      %1519 = vadd.xlane.f32.xlu0 %v1463
      %v1520 = vpop.xlane.xlu0 %1519
      %1521 = vadd.xlane.f32.xlu0 %v1464
      %v1522 = vpop.xlane.xlu0 %1521
      %1523 = vadd.xlane.f32.xlu0 %v1465
      %v1524 = vpop.xlane.xlu0 %1523
      %1525 = vadd.xlane.f32.xlu0 %v1466
      %v1526 = vpop.xlane.xlu0 %1525
      %1527 = vadd.xlane.f32.xlu0 %v1467
      %v1528 = vpop.xlane.xlu0 %1527
      %1529 = vadd.xlane.f32.xlu0 %v1468
      %v1530 = vpop.xlane.xlu0 %1529
      %1531 = vadd.xlane.f32.xlu0 %v1469
      %v1532 = vpop.xlane.xlu0 %1531
      %1533 = vadd.xlane.f32.xlu0 %v1470
      %v1534 = vpop.xlane.xlu0 %1533
      %v1535 = vadd.f32 %v1403, %v1472
      %v1536 = vadd.f32 %v1404, %v1474
      %v1537 = vadd.f32 %v1405, %v1476
      %v1538 = vadd.f32 %v1406, %v1478
      %v1539 = vadd.f32 %v1407, %v1480
      %v1540 = vadd.f32 %v1408, %v1482
      %v1541 = vadd.f32 %v1409, %v1484
      %v1542 = vadd.f32 %v1410, %v1486
      %v1543 = vadd.f32 %v1411, %v1488
      %v1544 = vadd.f32 %v1412, %v1490
      %v1545 = vadd.f32 %v1413, %v1492
      %v1546 = vadd.f32 %v1414, %v1494
      %v1547 = vadd.f32 %v1415, %v1496
      %v1548 = vadd.f32 %v1416, %v1498
      %v1549 = vadd.f32 %v1417, %v1500
      %v1550 = vadd.f32 %v1418, %v1502
      %v1551 = vadd.f32 %v1419, %v1504
      %v1552 = vadd.f32 %v1420, %v1506
      %v1553 = vadd.f32 %v1421, %v1508
      %v1554 = vadd.f32 %v1422, %v1510
      %v1555 = vadd.f32 %v1423, %v1512
      %v1556 = vadd.f32 %v1424, %v1514
      %v1557 = vadd.f32 %v1425, %v1516
      %v1558 = vadd.f32 %v1426, %v1518
      %v1559 = vadd.f32 %v1427, %v1520
      %v1560 = vadd.f32 %v1428, %v1522
      %v1561 = vadd.f32 %v1429, %v1524
      %v1562 = vadd.f32 %v1430, %v1526
      %v1563 = vadd.f32 %v1431, %v1528
      %v1564 = vadd.f32 %v1432, %v1530
      %v1565 = vadd.f32 %v1433, %v1532
      %v1566 = vadd.f32 %v1434, %v1534
      %v1567 = vlaneseq
      %v1568 = vshrl.u32 %v1567, 7
      %v1569 = vsub.s32 4, %v1568
      %v1570 = vrot.slane %v551, %v1569
      %v1571 = vmul.f32 %v500, %v1570
      %v1572 = vmul.f32 %v501, %v1570
      %v1573 = vmul.f32 %v502, %v1570
      %v1574 = vmul.f32 %v503, %v1570
      %v1575 = vmul.f32 %v504, %v1570
      %v1576 = vmul.f32 %v505, %v1570
      %v1577 = vmul.f32 %v506, %v1570
      %v1578 = vmul.f32 %v507, %v1570
      %v1579 = vmul.f32 %v508, %v1570
      %v1580 = vmul.f32 %v509, %v1570
      %v1581 = vmul.f32 %v510, %v1570
      %v1582 = vmul.f32 %v511, %v1570
      %v1583 = vmul.f32 %v512, %v1570
      %v1584 = vmul.f32 %v513, %v1570
      %v1585 = vmul.f32 %v514, %v1570
      %v1586 = vmul.f32 %v515, %v1570
      %v1587 = vmul.f32 %v516, %v1570
      %v1588 = vmul.f32 %v517, %v1570
      %v1589 = vmul.f32 %v518, %v1570
      %v1590 = vmul.f32 %v519, %v1570
      %v1591 = vmul.f32 %v520, %v1570
      %v1592 = vmul.f32 %v521, %v1570
      %v1593 = vmul.f32 %v522, %v1570
      %v1594 = vmul.f32 %v523, %v1570
      %v1595 = vmul.f32 %v524, %v1570
      %v1596 = vmul.f32 %v525, %v1570
      %v1597 = vmul.f32 %v526, %v1570
      %v1598 = vmul.f32 %v527, %v1570
      %v1599 = vmul.f32 %v528, %v1570
      %v1600 = vmul.f32 %v529, %v1570
      %v1601 = vmul.f32 %v530, %v1570
      %v1602 = vmul.f32 %v531, %v1570
      %v1603 = vmul.f32 %v532, %v1570
      %v1604 = vmul.f32 %v533, %v1570
      %v1605 = vmul.f32 %v534, %v1570
      %v1606 = vmul.f32 %v535, %v1570
      %v1607 = vmul.f32 %v536, %v1570
      %v1608 = vmul.f32 %v537, %v1570
      %v1609 = vmul.f32 %v538, %v1570
      %v1610 = vmul.f32 %v539, %v1570
      %v1611 = vmul.f32 %v540, %v1570
      %v1612 = vmul.f32 %v541, %v1570
      %v1613 = vmul.f32 %v542, %v1570
      %v1614 = vmul.f32 %v543, %v1570
      %v1615 = vmul.f32 %v544, %v1570
      %v1616 = vmul.f32 %v545, %v1570
      %v1617 = vmul.f32 %v546, %v1570
      %v1618 = vmul.f32 %v547, %v1570
      %v1619 = vsel %vm737, %v1571, 0.0
      %1620 = vadd.xlane.f32.xlu0 %v1619
      %v1621 = vpop.xlane.xlu0 %1620
      %1622 = vadd.xlane.f32.xlu0 %v1572
      %v1623 = vpop.xlane.xlu0 %1622
      %v1624 = vsel %vm743, %v1573, 0.0
      %1625 = vadd.xlane.f32.xlu0 %v1624
      %v1626 = vpop.xlane.xlu0 %1625
      %v1627 = vsel %vm737, %v1574, 0.0
      %1628 = vadd.xlane.f32.xlu0 %v1627
      %v1629 = vpop.xlane.xlu0 %1628
      %1630 = vadd.xlane.f32.xlu0 %v1575
      %v1631 = vpop.xlane.xlu0 %1630
      %v1632 = vsel %vm743, %v1576, 0.0
      %1633 = vadd.xlane.f32.xlu0 %v1632
      %v1634 = vpop.xlane.xlu0 %1633
      %v1635 = vsel %vm737, %v1577, 0.0
      %1636 = vadd.xlane.f32.xlu0 %v1635
      %v1637 = vpop.xlane.xlu0 %1636
      %1638 = vadd.xlane.f32.xlu0 %v1578
      %v1639 = vpop.xlane.xlu0 %1638
      %v1640 = vsel %vm743, %v1579, 0.0
      %1641 = vadd.xlane.f32.xlu0 %v1640
      %v1642 = vpop.xlane.xlu0 %1641
      %v1643 = vsel %vm737, %v1580, 0.0
      %1644 = vadd.xlane.f32.xlu0 %v1643
      %v1645 = vpop.xlane.xlu0 %1644
      %1646 = vadd.xlane.f32.xlu0 %v1581
      %v1647 = vpop.xlane.xlu0 %1646
      %v1648 = vsel %vm743, %v1582, 0.0
      %1649 = vadd.xlane.f32.xlu0 %v1648
      %v1650 = vpop.xlane.xlu0 %1649
      %v1651 = vsel %vm737, %v1583, 0.0
      %1652 = vadd.xlane.f32.xlu0 %v1651
      %v1653 = vpop.xlane.xlu0 %1652
      %1654 = vadd.xlane.f32.xlu0 %v1584
      %v1655 = vpop.xlane.xlu0 %1654
      %v1656 = vsel %vm743, %v1585, 0.0
      %1657 = vadd.xlane.f32.xlu0 %v1656
      %v1658 = vpop.xlane.xlu0 %1657
      %v1659 = vsel %vm737, %v1586, 0.0
      %1660 = vadd.xlane.f32.xlu0 %v1659
      %v1661 = vpop.xlane.xlu0 %1660
      %1662 = vadd.xlane.f32.xlu0 %v1587
      %v1663 = vpop.xlane.xlu0 %1662
      %v1664 = vsel %vm743, %v1588, 0.0
      %1665 = vadd.xlane.f32.xlu0 %v1664
      %v1666 = vpop.xlane.xlu0 %1665
      %v1667 = vsel %vm737, %v1589, 0.0
      %1668 = vadd.xlane.f32.xlu0 %v1667
      %v1669 = vpop.xlane.xlu0 %1668
      %1670 = vadd.xlane.f32.xlu0 %v1590
      %v1671 = vpop.xlane.xlu0 %1670
      %v1672 = vsel %vm743, %v1591, 0.0
      %1673 = vadd.xlane.f32.xlu0 %v1672
      %v1674 = vpop.xlane.xlu0 %1673
      %v1675 = vsel %vm737, %v1592, 0.0
      %1676 = vadd.xlane.f32.xlu0 %v1675
      %v1677 = vpop.xlane.xlu0 %1676
      %1678 = vadd.xlane.f32.xlu0 %v1593
      %v1679 = vpop.xlane.xlu0 %1678
      %v1680 = vsel %vm743, %v1594, 0.0
      %1681 = vadd.xlane.f32.xlu0 %v1680
      %v1682 = vpop.xlane.xlu0 %1681
      %v1683 = vsel %vm737, %v1595, 0.0
      %1684 = vadd.xlane.f32.xlu0 %v1683
      %v1685 = vpop.xlane.xlu0 %1684
      %1686 = vadd.xlane.f32.xlu0 %v1596
      %v1687 = vpop.xlane.xlu0 %1686
      %v1688 = vsel %vm743, %v1597, 0.0
      %1689 = vadd.xlane.f32.xlu0 %v1688
      %v1690 = vpop.xlane.xlu0 %1689
      %v1691 = vsel %vm737, %v1598, 0.0
      %1692 = vadd.xlane.f32.xlu0 %v1691
      %v1693 = vpop.xlane.xlu0 %1692
      %1694 = vadd.xlane.f32.xlu0 %v1599
      %v1695 = vpop.xlane.xlu0 %1694
      %v1696 = vsel %vm743, %v1600, 0.0
      %1697 = vadd.xlane.f32.xlu0 %v1696
      %v1698 = vpop.xlane.xlu0 %1697
      %v1699 = vsel %vm737, %v1601, 0.0
      %1700 = vadd.xlane.f32.xlu0 %v1699
      %v1701 = vpop.xlane.xlu0 %1700
      %1702 = vadd.xlane.f32.xlu0 %v1602
      %v1703 = vpop.xlane.xlu0 %1702
      %v1704 = vsel %vm743, %v1603, 0.0
      %1705 = vadd.xlane.f32.xlu0 %v1704
      %v1706 = vpop.xlane.xlu0 %1705
      %v1707 = vsel %vm737, %v1604, 0.0
      %1708 = vadd.xlane.f32.xlu0 %v1707
      %v1709 = vpop.xlane.xlu0 %1708
      %1710 = vadd.xlane.f32.xlu0 %v1605
      %v1711 = vpop.xlane.xlu0 %1710
      %v1712 = vsel %vm743, %v1606, 0.0
      %1713 = vadd.xlane.f32.xlu0 %v1712
      %v1714 = vpop.xlane.xlu0 %1713
      %v1715 = vsel %vm737, %v1607, 0.0
      %1716 = vadd.xlane.f32.xlu0 %v1715
      %v1717 = vpop.xlane.xlu0 %1716
      %1718 = vadd.xlane.f32.xlu0 %v1608
      %v1719 = vpop.xlane.xlu0 %1718
      %v1720 = vsel %vm743, %v1609, 0.0
      %1721 = vadd.xlane.f32.xlu0 %v1720
      %v1722 = vpop.xlane.xlu0 %1721
      %v1723 = vsel %vm737, %v1610, 0.0
      %1724 = vadd.xlane.f32.xlu0 %v1723
      %v1725 = vpop.xlane.xlu0 %1724
      %1726 = vadd.xlane.f32.xlu0 %v1611
      %v1727 = vpop.xlane.xlu0 %1726
      %v1728 = vsel %vm743, %v1612, 0.0
      %1729 = vadd.xlane.f32.xlu0 %v1728
      %v1730 = vpop.xlane.xlu0 %1729
      %v1731 = vsel %vm737, %v1613, 0.0
      %1732 = vadd.xlane.f32.xlu0 %v1731
      %v1733 = vpop.xlane.xlu0 %1732
      %1734 = vadd.xlane.f32.xlu0 %v1614
      %v1735 = vpop.xlane.xlu0 %1734
      %v1736 = vsel %vm743, %v1615, 0.0
      %1737 = vadd.xlane.f32.xlu0 %v1736
      %v1738 = vpop.xlane.xlu0 %1737
      %v1739 = vsel %vm737, %v1616, 0.0
      %1740 = vadd.xlane.f32.xlu0 %v1739
      %v1741 = vpop.xlane.xlu0 %1740
      %1742 = vadd.xlane.f32.xlu0 %v1617
      %v1743 = vpop.xlane.xlu0 %1742
      %v1744 = vsel %vm743, %v1618, 0.0
      %1745 = vadd.xlane.f32.xlu0 %v1744
      %v1746 = vpop.xlane.xlu0 %1745
      %v1795 = vrot.slane %v1621, 1
      %v1796 = vrot.slane %v1623, 1
      %v1797 = vsel %vm915, %v1795, %v1796
      %v1798 = vrot.slane %v1626, 1
      %v1799 = vsel %vm915, %v1796, %v1798
      %v1800 = vrot.slane %v1629, 1
      %v1801 = vrot.slane %v1631, 1
      %v1802 = vsel %vm915, %v1800, %v1801
      %v1803 = vrot.slane %v1634, 1
      %v1804 = vsel %vm915, %v1801, %v1803
      %v1805 = vrot.slane %v1637, 1
      %v1806 = vrot.slane %v1639, 1
      %v1807 = vsel %vm915, %v1805, %v1806
      %v1808 = vrot.slane %v1642, 1
      %v1809 = vsel %vm915, %v1806, %v1808
      %v1810 = vrot.slane %v1645, 1
      %v1811 = vrot.slane %v1647, 1
      %v1812 = vsel %vm915, %v1810, %v1811
      %v1813 = vrot.slane %v1650, 1
      %v1814 = vsel %vm915, %v1811, %v1813
      %v1815 = vrot.slane %v1653, 1
      %v1816 = vrot.slane %v1655, 1
      %v1817 = vsel %vm915, %v1815, %v1816
      %v1818 = vrot.slane %v1658, 1
      %v1819 = vsel %vm915, %v1816, %v1818
      %v1820 = vrot.slane %v1661, 1
      %v1821 = vrot.slane %v1663, 1
      %v1822 = vsel %vm915, %v1820, %v1821
      %v1823 = vrot.slane %v1666, 1
      %v1824 = vsel %vm915, %v1821, %v1823
      %v1825 = vrot.slane %v1669, 1
      %v1826 = vrot.slane %v1671, 1
      %v1827 = vsel %vm915, %v1825, %v1826
      %v1828 = vrot.slane %v1674, 1
      %v1829 = vsel %vm915, %v1826, %v1828
      %v1830 = vrot.slane %v1677, 1
      %v1831 = vrot.slane %v1679, 1
      %v1832 = vsel %vm915, %v1830, %v1831
      %v1833 = vrot.slane %v1682, 1
      %v1834 = vsel %vm915, %v1831, %v1833
      %v1835 = vrot.slane %v1685, 1
      %v1836 = vrot.slane %v1687, 1
      %v1837 = vsel %vm915, %v1835, %v1836
      %v1838 = vrot.slane %v1690, 1
      %v1839 = vsel %vm915, %v1836, %v1838
      %v1840 = vrot.slane %v1693, 1
      %v1841 = vrot.slane %v1695, 1
      %v1842 = vsel %vm915, %v1840, %v1841
      %v1843 = vrot.slane %v1698, 1
      %v1844 = vsel %vm915, %v1841, %v1843
      %v1845 = vrot.slane %v1701, 1
      %v1846 = vrot.slane %v1703, 1
      %v1847 = vsel %vm915, %v1845, %v1846
      %v1848 = vrot.slane %v1706, 1
      %v1849 = vsel %vm915, %v1846, %v1848
      %v1850 = vrot.slane %v1709, 1
      %v1851 = vrot.slane %v1711, 1
      %v1852 = vsel %vm915, %v1850, %v1851
      %v1853 = vrot.slane %v1714, 1
      %v1854 = vsel %vm915, %v1851, %v1853
      %v1855 = vrot.slane %v1717, 1
      %v1856 = vrot.slane %v1719, 1
      %v1857 = vsel %vm915, %v1855, %v1856
      %v1858 = vrot.slane %v1722, 1
      %v1859 = vsel %vm915, %v1856, %v1858
      %v1860 = vrot.slane %v1725, 1
      %v1861 = vrot.slane %v1727, 1
      %v1862 = vsel %vm915, %v1860, %v1861
      %v1863 = vrot.slane %v1730, 1
      %v1864 = vsel %vm915, %v1861, %v1863
      %v1865 = vrot.slane %v1733, 1
      %v1866 = vrot.slane %v1735, 1
      %v1867 = vsel %vm915, %v1865, %v1866
      %v1868 = vrot.slane %v1738, 1
      %v1869 = vsel %vm915, %v1866, %v1868
      %v1870 = vrot.slane %v1741, 1
      %v1871 = vrot.slane %v1743, 1
      %v1872 = vsel %vm915, %v1870, %v1871
      %v1873 = vrot.slane %v1746, 1
      %v1874 = vsel %vm915, %v1871, %v1873
      %v1907 = vadd.f32 %v1535, %v1797
      %v1908 = vadd.f32 %v1536, %v1799
      %v1909 = vadd.f32 %v1537, %v1802
      %v1910 = vadd.f32 %v1538, %v1804
      %v1911 = vadd.f32 %v1539, %v1807
      %v1912 = vadd.f32 %v1540, %v1809
      %v1913 = vadd.f32 %v1541, %v1812
      %v1914 = vadd.f32 %v1542, %v1814
      %v1915 = vadd.f32 %v1543, %v1817
      %v1916 = vadd.f32 %v1544, %v1819
      %v1917 = vadd.f32 %v1545, %v1822
      %v1918 = vadd.f32 %v1546, %v1824
      %v1919 = vadd.f32 %v1547, %v1827
      %v1920 = vadd.f32 %v1548, %v1829
      %v1921 = vadd.f32 %v1549, %v1832
      %v1922 = vadd.f32 %v1550, %v1834
      %v1923 = vadd.f32 %v1551, %v1837
      %v1924 = vadd.f32 %v1552, %v1839
      %v1925 = vadd.f32 %v1553, %v1842
      %v1926 = vadd.f32 %v1554, %v1844
      %v1927 = vadd.f32 %v1555, %v1847
      %v1928 = vadd.f32 %v1556, %v1849
      %v1929 = vadd.f32 %v1557, %v1852
      %v1930 = vadd.f32 %v1558, %v1854
      %v1931 = vadd.f32 %v1559, %v1857
      %v1932 = vadd.f32 %v1560, %v1859
      %v1933 = vadd.f32 %v1561, %v1862
      %v1934 = vadd.f32 %v1562, %v1864
      %v1935 = vadd.f32 %v1563, %v1867
      %v1936 = vadd.f32 %v1564, %v1869
      %v1937 = vadd.f32 %v1565, %v1872
      %v1938 = vadd.f32 %v1566, %v1874
      %v1939 = vlaneseq
      %v1940 = vshrl.u32 %v1939, 7
      %v1941 = vsub.s32 5, %v1940
      %v1942 = vrot.slane %v551, %v1941
      %v1943 = vmul.f32 %v500, %v1942
      %v1944 = vmul.f32 %v501, %v1942
      %v1945 = vmul.f32 %v502, %v1942
      %v1946 = vmul.f32 %v503, %v1942
      %v1947 = vmul.f32 %v504, %v1942
      %v1948 = vmul.f32 %v505, %v1942
      %v1949 = vmul.f32 %v506, %v1942
      %v1950 = vmul.f32 %v507, %v1942
      %v1951 = vmul.f32 %v508, %v1942
      %v1952 = vmul.f32 %v509, %v1942
      %v1953 = vmul.f32 %v510, %v1942
      %v1954 = vmul.f32 %v511, %v1942
      %v1955 = vmul.f32 %v512, %v1942
      %v1956 = vmul.f32 %v513, %v1942
      %v1957 = vmul.f32 %v514, %v1942
      %v1958 = vmul.f32 %v515, %v1942
      %v1959 = vmul.f32 %v516, %v1942
      %v1960 = vmul.f32 %v517, %v1942
      %v1961 = vmul.f32 %v518, %v1942
      %v1962 = vmul.f32 %v519, %v1942
      %v1963 = vmul.f32 %v520, %v1942
      %v1964 = vmul.f32 %v521, %v1942
      %v1965 = vmul.f32 %v522, %v1942
      %v1966 = vmul.f32 %v523, %v1942
      %v1967 = vmul.f32 %v524, %v1942
      %v1968 = vmul.f32 %v525, %v1942
      %v1969 = vmul.f32 %v526, %v1942
      %v1970 = vmul.f32 %v527, %v1942
      %v1971 = vmul.f32 %v528, %v1942
      %v1972 = vmul.f32 %v529, %v1942
      %v1973 = vmul.f32 %v530, %v1942
      %v1974 = vmul.f32 %v531, %v1942
      %v1975 = vmul.f32 %v532, %v1942
      %v1976 = vmul.f32 %v533, %v1942
      %v1977 = vmul.f32 %v534, %v1942
      %v1978 = vmul.f32 %v535, %v1942
      %v1979 = vmul.f32 %v536, %v1942
      %v1980 = vmul.f32 %v537, %v1942
      %v1981 = vmul.f32 %v538, %v1942
      %v1982 = vmul.f32 %v539, %v1942
      %v1983 = vmul.f32 %v540, %v1942
      %v1984 = vmul.f32 %v541, %v1942
      %v1985 = vmul.f32 %v542, %v1942
      %v1986 = vmul.f32 %v543, %v1942
      %v1987 = vmul.f32 %v544, %v1942
      %v1988 = vmul.f32 %v545, %v1942
      %v1989 = vmul.f32 %v546, %v1942
      %v1990 = vmul.f32 %v547, %v1942
      %v1991 = vsel %vm1112, %v1943, 0.0
      %1992 = vadd.xlane.f32.xlu0 %v1991
      %v1993 = vpop.xlane.xlu0 %1992
      %1994 = vadd.xlane.f32.xlu0 %v1944
      %v1995 = vpop.xlane.xlu0 %1994
      %v1996 = vsel %vm1118, %v1945, 0.0
      %1997 = vadd.xlane.f32.xlu0 %v1996
      %v1998 = vpop.xlane.xlu0 %1997
      %v1999 = vsel %vm1112, %v1946, 0.0
      %2000 = vadd.xlane.f32.xlu0 %v1999
      %v2001 = vpop.xlane.xlu0 %2000
      %2002 = vadd.xlane.f32.xlu0 %v1947
      %v2003 = vpop.xlane.xlu0 %2002
      %v2004 = vsel %vm1118, %v1948, 0.0
      %2005 = vadd.xlane.f32.xlu0 %v2004
      %v2006 = vpop.xlane.xlu0 %2005
      %v2007 = vsel %vm1112, %v1949, 0.0
      %2008 = vadd.xlane.f32.xlu0 %v2007
      %v2009 = vpop.xlane.xlu0 %2008
      %2010 = vadd.xlane.f32.xlu0 %v1950
      %v2011 = vpop.xlane.xlu0 %2010
      %v2012 = vsel %vm1118, %v1951, 0.0
      %2013 = vadd.xlane.f32.xlu0 %v2012
      %v2014 = vpop.xlane.xlu0 %2013
      %v2015 = vsel %vm1112, %v1952, 0.0
      %2016 = vadd.xlane.f32.xlu0 %v2015
      %v2017 = vpop.xlane.xlu0 %2016
      %2018 = vadd.xlane.f32.xlu0 %v1953
      %v2019 = vpop.xlane.xlu0 %2018
      %v2020 = vsel %vm1118, %v1954, 0.0
      %2021 = vadd.xlane.f32.xlu0 %v2020
      %v2022 = vpop.xlane.xlu0 %2021
      %v2023 = vsel %vm1112, %v1955, 0.0
      %2024 = vadd.xlane.f32.xlu0 %v2023
      %v2025 = vpop.xlane.xlu0 %2024
      %2026 = vadd.xlane.f32.xlu0 %v1956
      %v2027 = vpop.xlane.xlu0 %2026
      %v2028 = vsel %vm1118, %v1957, 0.0
      %2029 = vadd.xlane.f32.xlu0 %v2028
      %v2030 = vpop.xlane.xlu0 %2029
      %v2031 = vsel %vm1112, %v1958, 0.0
      %2032 = vadd.xlane.f32.xlu0 %v2031
      %v2033 = vpop.xlane.xlu0 %2032
      %2034 = vadd.xlane.f32.xlu0 %v1959
      %v2035 = vpop.xlane.xlu0 %2034
      %v2036 = vsel %vm1118, %v1960, 0.0
      %2037 = vadd.xlane.f32.xlu0 %v2036
      %v2038 = vpop.xlane.xlu0 %2037
      %v2039 = vsel %vm1112, %v1961, 0.0
      %2040 = vadd.xlane.f32.xlu0 %v2039
      %v2041 = vpop.xlane.xlu0 %2040
      %2042 = vadd.xlane.f32.xlu0 %v1962
      %v2043 = vpop.xlane.xlu0 %2042
      %v2044 = vsel %vm1118, %v1963, 0.0
      %2045 = vadd.xlane.f32.xlu0 %v2044
      %v2046 = vpop.xlane.xlu0 %2045
      %v2047 = vsel %vm1112, %v1964, 0.0
      %2048 = vadd.xlane.f32.xlu0 %v2047
      %v2049 = vpop.xlane.xlu0 %2048
      %2050 = vadd.xlane.f32.xlu0 %v1965
      %v2051 = vpop.xlane.xlu0 %2050
      %v2052 = vsel %vm1118, %v1966, 0.0
      %2053 = vadd.xlane.f32.xlu0 %v2052
      %v2054 = vpop.xlane.xlu0 %2053
      %v2055 = vsel %vm1112, %v1967, 0.0
      %2056 = vadd.xlane.f32.xlu0 %v2055
      %v2057 = vpop.xlane.xlu0 %2056
      %2058 = vadd.xlane.f32.xlu0 %v1968
      %v2059 = vpop.xlane.xlu0 %2058
      %v2060 = vsel %vm1118, %v1969, 0.0
      %2061 = vadd.xlane.f32.xlu0 %v2060
      %v2062 = vpop.xlane.xlu0 %2061
      %v2063 = vsel %vm1112, %v1970, 0.0
      %2064 = vadd.xlane.f32.xlu0 %v2063
      %v2065 = vpop.xlane.xlu0 %2064
      %2066 = vadd.xlane.f32.xlu0 %v1971
      %v2067 = vpop.xlane.xlu0 %2066
      %v2068 = vsel %vm1118, %v1972, 0.0
      %2069 = vadd.xlane.f32.xlu0 %v2068
      %v2070 = vpop.xlane.xlu0 %2069
      %v2071 = vsel %vm1112, %v1973, 0.0
      %2072 = vadd.xlane.f32.xlu0 %v2071
      %v2073 = vpop.xlane.xlu0 %2072
      %2074 = vadd.xlane.f32.xlu0 %v1974
      %v2075 = vpop.xlane.xlu0 %2074
      %v2076 = vsel %vm1118, %v1975, 0.0
      %2077 = vadd.xlane.f32.xlu0 %v2076
      %v2078 = vpop.xlane.xlu0 %2077
      %v2079 = vsel %vm1112, %v1976, 0.0
      %2080 = vadd.xlane.f32.xlu0 %v2079
      %v2081 = vpop.xlane.xlu0 %2080
      %2082 = vadd.xlane.f32.xlu0 %v1977
      %v2083 = vpop.xlane.xlu0 %2082
      %v2084 = vsel %vm1118, %v1978, 0.0
      %2085 = vadd.xlane.f32.xlu0 %v2084
      %v2086 = vpop.xlane.xlu0 %2085
      %v2087 = vsel %vm1112, %v1979, 0.0
      %2088 = vadd.xlane.f32.xlu0 %v2087
      %v2089 = vpop.xlane.xlu0 %2088
      %2090 = vadd.xlane.f32.xlu0 %v1980
      %v2091 = vpop.xlane.xlu0 %2090
      %v2092 = vsel %vm1118, %v1981, 0.0
      %2093 = vadd.xlane.f32.xlu0 %v2092
      %v2094 = vpop.xlane.xlu0 %2093
      %v2095 = vsel %vm1112, %v1982, 0.0
      %2096 = vadd.xlane.f32.xlu0 %v2095
      %v2097 = vpop.xlane.xlu0 %2096
      %2098 = vadd.xlane.f32.xlu0 %v1983
      %v2099 = vpop.xlane.xlu0 %2098
      %v2100 = vsel %vm1118, %v1984, 0.0
      %2101 = vadd.xlane.f32.xlu0 %v2100
      %v2102 = vpop.xlane.xlu0 %2101
      %v2103 = vsel %vm1112, %v1985, 0.0
      %2104 = vadd.xlane.f32.xlu0 %v2103
      %v2105 = vpop.xlane.xlu0 %2104
      %2106 = vadd.xlane.f32.xlu0 %v1986
      %v2107 = vpop.xlane.xlu0 %2106
      %v2108 = vsel %vm1118, %v1987, 0.0
      %2109 = vadd.xlane.f32.xlu0 %v2108
      %v2110 = vpop.xlane.xlu0 %2109
      %v2111 = vsel %vm1112, %v1988, 0.0
      %2112 = vadd.xlane.f32.xlu0 %v2111
      %v2113 = vpop.xlane.xlu0 %2112
      %2114 = vadd.xlane.f32.xlu0 %v1989
      %v2115 = vpop.xlane.xlu0 %2114
      %v2116 = vsel %vm1118, %v1990, 0.0
      %2117 = vadd.xlane.f32.xlu0 %v2116
      %v2118 = vpop.xlane.xlu0 %2117
      %v2167 = vrot.slane %v1993, 2
      %v2168 = vrot.slane %v1995, 2
      %v2169 = vsel %vm1290, %v2167, %v2168
      %v2170 = vrot.slane %v1998, 2
      %v2171 = vsel %vm1290, %v2168, %v2170
      %v2172 = vrot.slane %v2001, 2
      %v2173 = vrot.slane %v2003, 2
      %v2174 = vsel %vm1290, %v2172, %v2173
      %v2175 = vrot.slane %v2006, 2
      %v2176 = vsel %vm1290, %v2173, %v2175
      %v2177 = vrot.slane %v2009, 2
      %v2178 = vrot.slane %v2011, 2
      %v2179 = vsel %vm1290, %v2177, %v2178
      %v2180 = vrot.slane %v2014, 2
      %v2181 = vsel %vm1290, %v2178, %v2180
      %v2182 = vrot.slane %v2017, 2
      %v2183 = vrot.slane %v2019, 2
      %v2184 = vsel %vm1290, %v2182, %v2183
      %v2185 = vrot.slane %v2022, 2
      %v2186 = vsel %vm1290, %v2183, %v2185
      %v2187 = vrot.slane %v2025, 2
      %v2188 = vrot.slane %v2027, 2
      %v2189 = vsel %vm1290, %v2187, %v2188
      %v2190 = vrot.slane %v2030, 2
      %v2191 = vsel %vm1290, %v2188, %v2190
      %v2192 = vrot.slane %v2033, 2
      %v2193 = vrot.slane %v2035, 2
      %v2194 = vsel %vm1290, %v2192, %v2193
      %v2195 = vrot.slane %v2038, 2
      %v2196 = vsel %vm1290, %v2193, %v2195
      %v2197 = vrot.slane %v2041, 2
      %v2198 = vrot.slane %v2043, 2
      %v2199 = vsel %vm1290, %v2197, %v2198
      %v2200 = vrot.slane %v2046, 2
      %v2201 = vsel %vm1290, %v2198, %v2200
      %v2202 = vrot.slane %v2049, 2
      %v2203 = vrot.slane %v2051, 2
      %v2204 = vsel %vm1290, %v2202, %v2203
      %v2205 = vrot.slane %v2054, 2
      %v2206 = vsel %vm1290, %v2203, %v2205
      %v2207 = vrot.slane %v2057, 2
      %v2208 = vrot.slane %v2059, 2
      %v2209 = vsel %vm1290, %v2207, %v2208
      %v2210 = vrot.slane %v2062, 2
      %v2211 = vsel %vm1290, %v2208, %v2210
      %v2212 = vrot.slane %v2065, 2
      %v2213 = vrot.slane %v2067, 2
      %v2214 = vsel %vm1290, %v2212, %v2213
      %v2215 = vrot.slane %v2070, 2
      %v2216 = vsel %vm1290, %v2213, %v2215
      %v2217 = vrot.slane %v2073, 2
      %v2218 = vrot.slane %v2075, 2
      %v2219 = vsel %vm1290, %v2217, %v2218
      %v2220 = vrot.slane %v2078, 2
      %v2221 = vsel %vm1290, %v2218, %v2220
      %v2222 = vrot.slane %v2081, 2
      %v2223 = vrot.slane %v2083, 2
      %v2224 = vsel %vm1290, %v2222, %v2223
      %v2225 = vrot.slane %v2086, 2
      %v2226 = vsel %vm1290, %v2223, %v2225
      %v2227 = vrot.slane %v2089, 2
      %v2228 = vrot.slane %v2091, 2
      %v2229 = vsel %vm1290, %v2227, %v2228
      %v2230 = vrot.slane %v2094, 2
      %v2231 = vsel %vm1290, %v2228, %v2230
      %v2232 = vrot.slane %v2097, 2
      %v2233 = vrot.slane %v2099, 2
      %v2234 = vsel %vm1290, %v2232, %v2233
      %v2235 = vrot.slane %v2102, 2
      %v2236 = vsel %vm1290, %v2233, %v2235
      %v2237 = vrot.slane %v2105, 2
      %v2238 = vrot.slane %v2107, 2
      %v2239 = vsel %vm1290, %v2237, %v2238
      %v2240 = vrot.slane %v2110, 2
      %v2241 = vsel %vm1290, %v2238, %v2240
      %v2242 = vrot.slane %v2113, 2
      %v2243 = vrot.slane %v2115, 2
      %v2244 = vsel %vm1290, %v2242, %v2243
      %v2245 = vrot.slane %v2118, 2
      %v2246 = vsel %vm1290, %v2243, %v2245
      %v2279 = vadd.f32 %v1907, %v2169
      %v2280 = vadd.f32 %v1908, %v2171
      %v2281 = vadd.f32 %v1909, %v2174
      %v2282 = vadd.f32 %v1910, %v2176
      %v2283 = vadd.f32 %v1911, %v2179
      %v2284 = vadd.f32 %v1912, %v2181
      %v2285 = vadd.f32 %v1913, %v2184
      %v2286 = vadd.f32 %v1914, %v2186
      %v2287 = vadd.f32 %v1915, %v2189
      %v2288 = vadd.f32 %v1916, %v2191
      %v2289 = vadd.f32 %v1917, %v2194
      %v2290 = vadd.f32 %v1918, %v2196
      %v2291 = vadd.f32 %v1919, %v2199
      %v2292 = vadd.f32 %v1920, %v2201
      %v2293 = vadd.f32 %v1921, %v2204
      %v2294 = vadd.f32 %v1922, %v2206
      %v2295 = vadd.f32 %v1923, %v2209
      %v2296 = vadd.f32 %v1924, %v2211
      %v2297 = vadd.f32 %v1925, %v2214
      %v2298 = vadd.f32 %v1926, %v2216
      %v2299 = vadd.f32 %v1927, %v2219
      %v2300 = vadd.f32 %v1928, %v2221
      %v2301 = vadd.f32 %v1929, %v2224
      %v2302 = vadd.f32 %v1930, %v2226
      %v2303 = vadd.f32 %v1931, %v2229
      %v2304 = vadd.f32 %v1932, %v2231
      %v2305 = vadd.f32 %v1933, %v2234
      %v2306 = vadd.f32 %v1934, %v2236
      %v2307 = vadd.f32 %v1935, %v2239
      %v2308 = vadd.f32 %v1936, %v2241
      %v2309 = vadd.f32 %v1937, %v2244
      %v2310 = vadd.f32 %v1938, %v2246
      %v2311 = vlaneseq
      %v2312 = vshrl.u32 %v2311, 7
      %v2313 = vsub.s32 6, %v2312
      %v2314 = vrot.slane %v551, %v2313
      %v2315 = vmul.f32 %v503, %v2314
      %v2316 = vmul.f32 %v504, %v2314
      %v2317 = vmul.f32 %v506, %v2314
      %v2318 = vmul.f32 %v507, %v2314
      %v2319 = vmul.f32 %v509, %v2314
      %v2320 = vmul.f32 %v510, %v2314
      %v2321 = vmul.f32 %v512, %v2314
      %v2322 = vmul.f32 %v513, %v2314
      %v2323 = vmul.f32 %v515, %v2314
      %v2324 = vmul.f32 %v516, %v2314
      %v2325 = vmul.f32 %v518, %v2314
      %v2326 = vmul.f32 %v519, %v2314
      %v2327 = vmul.f32 %v521, %v2314
      %v2328 = vmul.f32 %v522, %v2314
      %v2329 = vmul.f32 %v524, %v2314
      %v2330 = vmul.f32 %v525, %v2314
      %v2331 = vmul.f32 %v527, %v2314
      %v2332 = vmul.f32 %v528, %v2314
      %v2333 = vmul.f32 %v530, %v2314
      %v2334 = vmul.f32 %v531, %v2314
      %v2335 = vmul.f32 %v533, %v2314
      %v2336 = vmul.f32 %v534, %v2314
      %v2337 = vmul.f32 %v536, %v2314
      %v2338 = vmul.f32 %v537, %v2314
      %v2339 = vmul.f32 %v539, %v2314
      %v2340 = vmul.f32 %v540, %v2314
      %v2341 = vmul.f32 %v542, %v2314
      %v2342 = vmul.f32 %v543, %v2314
      %v2343 = vmul.f32 %v545, %v2314
      %v2344 = vmul.f32 %v546, %v2314
      %v2345 = vmul.f32 %v548, %v2314
      %v2346 = vmul.f32 %v549, %v2314
      %2347 = vadd.xlane.f32.xlu0 %v2315
      %v2348 = vpop.xlane.xlu0 %2347
      %2349 = vadd.xlane.f32.xlu0 %v2316
      %v2350 = vpop.xlane.xlu0 %2349
      %2351 = vadd.xlane.f32.xlu0 %v2317
      %v2352 = vpop.xlane.xlu0 %2351
      %2353 = vadd.xlane.f32.xlu0 %v2318
      %v2354 = vpop.xlane.xlu0 %2353
      %2355 = vadd.xlane.f32.xlu0 %v2319
      %v2356 = vpop.xlane.xlu0 %2355
      %2357 = vadd.xlane.f32.xlu0 %v2320
      %v2358 = vpop.xlane.xlu0 %2357
      %2359 = vadd.xlane.f32.xlu0 %v2321
      %v2360 = vpop.xlane.xlu0 %2359
      %2361 = vadd.xlane.f32.xlu0 %v2322
      %v2362 = vpop.xlane.xlu0 %2361
      %2363 = vadd.xlane.f32.xlu0 %v2323
      %v2364 = vpop.xlane.xlu0 %2363
      %2365 = vadd.xlane.f32.xlu0 %v2324
      %v2366 = vpop.xlane.xlu0 %2365
      %2367 = vadd.xlane.f32.xlu0 %v2325
      %v2368 = vpop.xlane.xlu0 %2367
      %2369 = vadd.xlane.f32.xlu0 %v2326
      %v2370 = vpop.xlane.xlu0 %2369
      %2371 = vadd.xlane.f32.xlu0 %v2327
      %v2372 = vpop.xlane.xlu0 %2371
      %2373 = vadd.xlane.f32.xlu0 %v2328
      %v2374 = vpop.xlane.xlu0 %2373
      %2375 = vadd.xlane.f32.xlu0 %v2329
      %v2376 = vpop.xlane.xlu0 %2375
      %2377 = vadd.xlane.f32.xlu0 %v2330
      %v2378 = vpop.xlane.xlu0 %2377
      %2379 = vadd.xlane.f32.xlu0 %v2331
      %v2380 = vpop.xlane.xlu0 %2379
      %2381 = vadd.xlane.f32.xlu0 %v2332
      %v2382 = vpop.xlane.xlu0 %2381
      %2383 = vadd.xlane.f32.xlu0 %v2333
      %v2384 = vpop.xlane.xlu0 %2383
      %2385 = vadd.xlane.f32.xlu0 %v2334
      %v2386 = vpop.xlane.xlu0 %2385
      %2387 = vadd.xlane.f32.xlu0 %v2335
      %v2388 = vpop.xlane.xlu0 %2387
      %2389 = vadd.xlane.f32.xlu0 %v2336
      %v2390 = vpop.xlane.xlu0 %2389
      %2391 = vadd.xlane.f32.xlu0 %v2337
      %v2392 = vpop.xlane.xlu0 %2391
      %2393 = vadd.xlane.f32.xlu0 %v2338
      %v2394 = vpop.xlane.xlu0 %2393
      %2395 = vadd.xlane.f32.xlu0 %v2339
      %v2396 = vpop.xlane.xlu0 %2395
      %2397 = vadd.xlane.f32.xlu0 %v2340
      %v2398 = vpop.xlane.xlu0 %2397
      %2399 = vadd.xlane.f32.xlu0 %v2341
      %v2400 = vpop.xlane.xlu0 %2399
      %2401 = vadd.xlane.f32.xlu0 %v2342
      %v2402 = vpop.xlane.xlu0 %2401
      %2403 = vadd.xlane.f32.xlu0 %v2343
      %v2404 = vpop.xlane.xlu0 %2403
      %2405 = vadd.xlane.f32.xlu0 %v2344
      %v2406 = vpop.xlane.xlu0 %2405
      %2407 = vadd.xlane.f32.xlu0 %v2345
      %v2408 = vpop.xlane.xlu0 %2407
      %2409 = vadd.xlane.f32.xlu0 %v2346
      %v2410 = vpop.xlane.xlu0 %2409
      %v2411 = vadd.f32 %v2279, %v2348
      %v2412 = vadd.f32 %v2280, %v2350
      %v2413 = vadd.f32 %v2281, %v2352
      %v2414 = vadd.f32 %v2282, %v2354
      %v2415 = vadd.f32 %v2283, %v2356
      %v2416 = vadd.f32 %v2284, %v2358
      %v2417 = vadd.f32 %v2285, %v2360
      %v2418 = vadd.f32 %v2286, %v2362
      %v2419 = vadd.f32 %v2287, %v2364
      %v2420 = vadd.f32 %v2288, %v2366
      %v2421 = vadd.f32 %v2289, %v2368
      %v2422 = vadd.f32 %v2290, %v2370
      %v2423 = vadd.f32 %v2291, %v2372
      %v2424 = vadd.f32 %v2292, %v2374
      %v2425 = vadd.f32 %v2293, %v2376
      %v2426 = vadd.f32 %v2294, %v2378
      %v2427 = vadd.f32 %v2295, %v2380
      %v2428 = vadd.f32 %v2296, %v2382
      %v2429 = vadd.f32 %v2297, %v2384
      %v2430 = vadd.f32 %v2298, %v2386
      %v2431 = vadd.f32 %v2299, %v2388
      %v2432 = vadd.f32 %v2300, %v2390
      %v2433 = vadd.f32 %v2301, %v2392
      %v2434 = vadd.f32 %v2302, %v2394
      %v2435 = vadd.f32 %v2303, %v2396
      %v2436 = vadd.f32 %v2304, %v2398
      %v2437 = vadd.f32 %v2305, %v2400
      %v2438 = vadd.f32 %v2306, %v2402
      %v2439 = vadd.f32 %v2307, %v2404
      %v2440 = vadd.f32 %v2308, %v2406
      %v2441 = vadd.f32 %v2309, %v2408
      %v2442 = vadd.f32 %v2310, %v2410
      %v2443 = vlaneseq
      %v2444 = vshrl.u32 %v2443, 7
      %v2445 = vsub.s32 7, %v2444
      %v2446 = vrot.slane %v551, %v2445
      %v2447 = vmul.f32 %v503, %v2446
      %v2448 = vmul.f32 %v504, %v2446
      %v2449 = vmul.f32 %v505, %v2446
      %v2450 = vmul.f32 %v506, %v2446
      %v2451 = vmul.f32 %v507, %v2446
      %v2452 = vmul.f32 %v508, %v2446
      %v2453 = vmul.f32 %v509, %v2446
      %v2454 = vmul.f32 %v510, %v2446
      %v2455 = vmul.f32 %v511, %v2446
      %v2456 = vmul.f32 %v512, %v2446
      %v2457 = vmul.f32 %v513, %v2446
      %v2458 = vmul.f32 %v514, %v2446
      %v2459 = vmul.f32 %v515, %v2446
      %v2460 = vmul.f32 %v516, %v2446
      %v2461 = vmul.f32 %v517, %v2446
      %v2462 = vmul.f32 %v518, %v2446
      %v2463 = vmul.f32 %v519, %v2446
      %v2464 = vmul.f32 %v520, %v2446
      %v2465 = vmul.f32 %v521, %v2446
      %v2466 = vmul.f32 %v522, %v2446
      %v2467 = vmul.f32 %v523, %v2446
      %v2468 = vmul.f32 %v524, %v2446
      %v2469 = vmul.f32 %v525, %v2446
      %v2470 = vmul.f32 %v526, %v2446
      %v2471 = vmul.f32 %v527, %v2446
      %v2472 = vmul.f32 %v528, %v2446
      %v2473 = vmul.f32 %v529, %v2446
      %v2474 = vmul.f32 %v530, %v2446
      %v2475 = vmul.f32 %v531, %v2446
      %v2476 = vmul.f32 %v532, %v2446
      %v2477 = vmul.f32 %v533, %v2446
      %v2478 = vmul.f32 %v534, %v2446
      %v2479 = vmul.f32 %v535, %v2446
      %v2480 = vmul.f32 %v536, %v2446
      %v2481 = vmul.f32 %v537, %v2446
      %v2482 = vmul.f32 %v538, %v2446
      %v2483 = vmul.f32 %v539, %v2446
      %v2484 = vmul.f32 %v540, %v2446
      %v2485 = vmul.f32 %v541, %v2446
      %v2486 = vmul.f32 %v542, %v2446
      %v2487 = vmul.f32 %v543, %v2446
      %v2488 = vmul.f32 %v544, %v2446
      %v2489 = vmul.f32 %v545, %v2446
      %v2490 = vmul.f32 %v546, %v2446
      %v2491 = vmul.f32 %v547, %v2446
      %v2492 = vmul.f32 %v548, %v2446
      %v2493 = vmul.f32 %v549, %v2446
      %v2494 = vmul.f32 %v550, %v2446
      %v2495 = vsel %vm737, %v2447, 0.0
      %2496 = vadd.xlane.f32.xlu0 %v2495
      %v2497 = vpop.xlane.xlu0 %2496
      %2498 = vadd.xlane.f32.xlu0 %v2448
      %v2499 = vpop.xlane.xlu0 %2498
      %v2500 = vsel %vm743, %v2449, 0.0
      %2501 = vadd.xlane.f32.xlu0 %v2500
      %v2502 = vpop.xlane.xlu0 %2501
      %v2503 = vsel %vm737, %v2450, 0.0
      %2504 = vadd.xlane.f32.xlu0 %v2503
      %v2505 = vpop.xlane.xlu0 %2504
      %2506 = vadd.xlane.f32.xlu0 %v2451
      %v2507 = vpop.xlane.xlu0 %2506
      %v2508 = vsel %vm743, %v2452, 0.0
      %2509 = vadd.xlane.f32.xlu0 %v2508
      %v2510 = vpop.xlane.xlu0 %2509
      %v2511 = vsel %vm737, %v2453, 0.0
      %2512 = vadd.xlane.f32.xlu0 %v2511
      %v2513 = vpop.xlane.xlu0 %2512
      %2514 = vadd.xlane.f32.xlu0 %v2454
      %v2515 = vpop.xlane.xlu0 %2514
      %v2516 = vsel %vm743, %v2455, 0.0
      %2517 = vadd.xlane.f32.xlu0 %v2516
      %v2518 = vpop.xlane.xlu0 %2517
      %v2519 = vsel %vm737, %v2456, 0.0
      %2520 = vadd.xlane.f32.xlu0 %v2519
      %v2521 = vpop.xlane.xlu0 %2520
      %2522 = vadd.xlane.f32.xlu0 %v2457
      %v2523 = vpop.xlane.xlu0 %2522
      %v2524 = vsel %vm743, %v2458, 0.0
      %2525 = vadd.xlane.f32.xlu0 %v2524
      %v2526 = vpop.xlane.xlu0 %2525
      %v2527 = vsel %vm737, %v2459, 0.0
      %2528 = vadd.xlane.f32.xlu0 %v2527
      %v2529 = vpop.xlane.xlu0 %2528
      %2530 = vadd.xlane.f32.xlu0 %v2460
      %v2531 = vpop.xlane.xlu0 %2530
      %v2532 = vsel %vm743, %v2461, 0.0
      %2533 = vadd.xlane.f32.xlu0 %v2532
      %v2534 = vpop.xlane.xlu0 %2533
      %v2535 = vsel %vm737, %v2462, 0.0
      %2536 = vadd.xlane.f32.xlu0 %v2535
      %v2537 = vpop.xlane.xlu0 %2536
      %2538 = vadd.xlane.f32.xlu0 %v2463
      %v2539 = vpop.xlane.xlu0 %2538
      %v2540 = vsel %vm743, %v2464, 0.0
      %2541 = vadd.xlane.f32.xlu0 %v2540
      %v2542 = vpop.xlane.xlu0 %2541
      %v2543 = vsel %vm737, %v2465, 0.0
      %2544 = vadd.xlane.f32.xlu0 %v2543
      %v2545 = vpop.xlane.xlu0 %2544
      %2546 = vadd.xlane.f32.xlu0 %v2466
      %v2547 = vpop.xlane.xlu0 %2546
      %v2548 = vsel %vm743, %v2467, 0.0
      %2549 = vadd.xlane.f32.xlu0 %v2548
      %v2550 = vpop.xlane.xlu0 %2549
      %v2551 = vsel %vm737, %v2468, 0.0
      %2552 = vadd.xlane.f32.xlu0 %v2551
      %v2553 = vpop.xlane.xlu0 %2552
      %2554 = vadd.xlane.f32.xlu0 %v2469
      %v2555 = vpop.xlane.xlu0 %2554
      %v2556 = vsel %vm743, %v2470, 0.0
      %2557 = vadd.xlane.f32.xlu0 %v2556
      %v2558 = vpop.xlane.xlu0 %2557
      %v2559 = vsel %vm737, %v2471, 0.0
      %2560 = vadd.xlane.f32.xlu0 %v2559
      %v2561 = vpop.xlane.xlu0 %2560
      %2562 = vadd.xlane.f32.xlu0 %v2472
      %v2563 = vpop.xlane.xlu0 %2562
      %v2564 = vsel %vm743, %v2473, 0.0
      %2565 = vadd.xlane.f32.xlu0 %v2564
      %v2566 = vpop.xlane.xlu0 %2565
      %v2567 = vsel %vm737, %v2474, 0.0
      %2568 = vadd.xlane.f32.xlu0 %v2567
      %v2569 = vpop.xlane.xlu0 %2568
      %2570 = vadd.xlane.f32.xlu0 %v2475
      %v2571 = vpop.xlane.xlu0 %2570
      %v2572 = vsel %vm743, %v2476, 0.0
      %2573 = vadd.xlane.f32.xlu0 %v2572
      %v2574 = vpop.xlane.xlu0 %2573
      %v2575 = vsel %vm737, %v2477, 0.0
      %2576 = vadd.xlane.f32.xlu0 %v2575
      %v2577 = vpop.xlane.xlu0 %2576
      %2578 = vadd.xlane.f32.xlu0 %v2478
      %v2579 = vpop.xlane.xlu0 %2578
      %v2580 = vsel %vm743, %v2479, 0.0
      %2581 = vadd.xlane.f32.xlu0 %v2580
      %v2582 = vpop.xlane.xlu0 %2581
      %v2583 = vsel %vm737, %v2480, 0.0
      %2584 = vadd.xlane.f32.xlu0 %v2583
      %v2585 = vpop.xlane.xlu0 %2584
      %2586 = vadd.xlane.f32.xlu0 %v2481
      %v2587 = vpop.xlane.xlu0 %2586
      %v2588 = vsel %vm743, %v2482, 0.0
      %2589 = vadd.xlane.f32.xlu0 %v2588
      %v2590 = vpop.xlane.xlu0 %2589
      %v2591 = vsel %vm737, %v2483, 0.0
      %2592 = vadd.xlane.f32.xlu0 %v2591
      %v2593 = vpop.xlane.xlu0 %2592
      %2594 = vadd.xlane.f32.xlu0 %v2484
      %v2595 = vpop.xlane.xlu0 %2594
      %v2596 = vsel %vm743, %v2485, 0.0
      %2597 = vadd.xlane.f32.xlu0 %v2596
      %v2598 = vpop.xlane.xlu0 %2597
      %v2599 = vsel %vm737, %v2486, 0.0
      %2600 = vadd.xlane.f32.xlu0 %v2599
      %v2601 = vpop.xlane.xlu0 %2600
      %2602 = vadd.xlane.f32.xlu0 %v2487
      %v2603 = vpop.xlane.xlu0 %2602
      %v2604 = vsel %vm743, %v2488, 0.0
      %2605 = vadd.xlane.f32.xlu0 %v2604
      %v2606 = vpop.xlane.xlu0 %2605
      %v2607 = vsel %vm737, %v2489, 0.0
      %2608 = vadd.xlane.f32.xlu0 %v2607
      %v2609 = vpop.xlane.xlu0 %2608
      %2610 = vadd.xlane.f32.xlu0 %v2490
      %v2611 = vpop.xlane.xlu0 %2610
      %v2612 = vsel %vm743, %v2491, 0.0
      %2613 = vadd.xlane.f32.xlu0 %v2612
      %v2614 = vpop.xlane.xlu0 %2613
      %v2615 = vsel %vm737, %v2492, 0.0
      %2616 = vadd.xlane.f32.xlu0 %v2615
      %v2617 = vpop.xlane.xlu0 %2616
      %2618 = vadd.xlane.f32.xlu0 %v2493
      %v2619 = vpop.xlane.xlu0 %2618
      %v2620 = vsel %vm743, %v2494, 0.0
      %2621 = vadd.xlane.f32.xlu0 %v2620
      %v2622 = vpop.xlane.xlu0 %2621
      %v2671 = vrot.slane %v2497, 1
      %v2672 = vrot.slane %v2499, 1
      %v2673 = vsel %vm915, %v2671, %v2672
      %v2674 = vrot.slane %v2502, 1
      %v2675 = vsel %vm915, %v2672, %v2674
      %v2676 = vrot.slane %v2505, 1
      %v2677 = vrot.slane %v2507, 1
      %v2678 = vsel %vm915, %v2676, %v2677
      %v2679 = vrot.slane %v2510, 1
      %v2680 = vsel %vm915, %v2677, %v2679
      %v2681 = vrot.slane %v2513, 1
      %v2682 = vrot.slane %v2515, 1
      %v2683 = vsel %vm915, %v2681, %v2682
      %v2684 = vrot.slane %v2518, 1
      %v2685 = vsel %vm915, %v2682, %v2684
      %v2686 = vrot.slane %v2521, 1
      %v2687 = vrot.slane %v2523, 1
      %v2688 = vsel %vm915, %v2686, %v2687
      %v2689 = vrot.slane %v2526, 1
      %v2690 = vsel %vm915, %v2687, %v2689
      %v2691 = vrot.slane %v2529, 1
      %v2692 = vrot.slane %v2531, 1
      %v2693 = vsel %vm915, %v2691, %v2692
      %v2694 = vrot.slane %v2534, 1
      %v2695 = vsel %vm915, %v2692, %v2694
      %v2696 = vrot.slane %v2537, 1
      %v2697 = vrot.slane %v2539, 1
      %v2698 = vsel %vm915, %v2696, %v2697
      %v2699 = vrot.slane %v2542, 1
      %v2700 = vsel %vm915, %v2697, %v2699
      %v2701 = vrot.slane %v2545, 1
      %v2702 = vrot.slane %v2547, 1
      %v2703 = vsel %vm915, %v2701, %v2702
      %v2704 = vrot.slane %v2550, 1
      %v2705 = vsel %vm915, %v2702, %v2704
      %v2706 = vrot.slane %v2553, 1
      %v2707 = vrot.slane %v2555, 1
      %v2708 = vsel %vm915, %v2706, %v2707
      %v2709 = vrot.slane %v2558, 1
      %v2710 = vsel %vm915, %v2707, %v2709
      %v2711 = vrot.slane %v2561, 1
      %v2712 = vrot.slane %v2563, 1
      %v2713 = vsel %vm915, %v2711, %v2712
      %v2714 = vrot.slane %v2566, 1
      %v2715 = vsel %vm915, %v2712, %v2714
      %v2716 = vrot.slane %v2569, 1
      %v2717 = vrot.slane %v2571, 1
      %v2718 = vsel %vm915, %v2716, %v2717
      %v2719 = vrot.slane %v2574, 1
      %v2720 = vsel %vm915, %v2717, %v2719
      %v2721 = vrot.slane %v2577, 1
      %v2722 = vrot.slane %v2579, 1
      %v2723 = vsel %vm915, %v2721, %v2722
      %v2724 = vrot.slane %v2582, 1
      %v2725 = vsel %vm915, %v2722, %v2724
      %v2726 = vrot.slane %v2585, 1
      %v2727 = vrot.slane %v2587, 1
      %v2728 = vsel %vm915, %v2726, %v2727
      %v2729 = vrot.slane %v2590, 1
      %v2730 = vsel %vm915, %v2727, %v2729
      %v2731 = vrot.slane %v2593, 1
      %v2732 = vrot.slane %v2595, 1
      %v2733 = vsel %vm915, %v2731, %v2732
      %v2734 = vrot.slane %v2598, 1
      %v2735 = vsel %vm915, %v2732, %v2734
      %v2736 = vrot.slane %v2601, 1
      %v2737 = vrot.slane %v2603, 1
      %v2738 = vsel %vm915, %v2736, %v2737
      %v2739 = vrot.slane %v2606, 1
      %v2740 = vsel %vm915, %v2737, %v2739
      %v2741 = vrot.slane %v2609, 1
      %v2742 = vrot.slane %v2611, 1
      %v2743 = vsel %vm915, %v2741, %v2742
      %v2744 = vrot.slane %v2614, 1
      %v2745 = vsel %vm915, %v2742, %v2744
      %v2746 = vrot.slane %v2617, 1
      %v2747 = vrot.slane %v2619, 1
      %v2748 = vsel %vm915, %v2746, %v2747
      %v2749 = vrot.slane %v2622, 1
      %v2750 = vsel %vm915, %v2747, %v2749
      %v2783 = vadd.f32 %v2411, %v2673
      %v2784 = vadd.f32 %v2412, %v2675
      %v2785 = vadd.f32 %v2413, %v2678
      %v2786 = vadd.f32 %v2414, %v2680
      %v2787 = vadd.f32 %v2415, %v2683
      %v2788 = vadd.f32 %v2416, %v2685
      %v2789 = vadd.f32 %v2417, %v2688
      %v2790 = vadd.f32 %v2418, %v2690
      %v2791 = vadd.f32 %v2419, %v2693
      %v2792 = vadd.f32 %v2420, %v2695
      %v2793 = vadd.f32 %v2421, %v2698
      %v2794 = vadd.f32 %v2422, %v2700
      %v2795 = vadd.f32 %v2423, %v2703
      %v2796 = vadd.f32 %v2424, %v2705
      %v2797 = vadd.f32 %v2425, %v2708
      %v2798 = vadd.f32 %v2426, %v2710
      %v2799 = vadd.f32 %v2427, %v2713
      %v2800 = vadd.f32 %v2428, %v2715
      %v2801 = vadd.f32 %v2429, %v2718
      %v2802 = vadd.f32 %v2430, %v2720
      %v2803 = vadd.f32 %v2431, %v2723
      %v2804 = vadd.f32 %v2432, %v2725
      %v2805 = vadd.f32 %v2433, %v2728
      %v2806 = vadd.f32 %v2434, %v2730
      %v2807 = vadd.f32 %v2435, %v2733
      %v2808 = vadd.f32 %v2436, %v2735
      %v2809 = vadd.f32 %v2437, %v2738
      %v2810 = vadd.f32 %v2438, %v2740
      %v2811 = vadd.f32 %v2439, %v2743
      %v2812 = vadd.f32 %v2440, %v2745
      %v2813 = vadd.f32 %v2441, %v2748
      %v2814 = vadd.f32 %v2442, %v2750
      %v2815 = vlaneseq
      %v2816 = vshrl.u32 %v2815, 7
      %v2817 = vsub.s32 0, %v2816
      %v2818 = vrot.slane %v552, %v2817
      %v2819 = vmul.f32 %v503, %v2818
      %v2820 = vmul.f32 %v504, %v2818
      %v2821 = vmul.f32 %v505, %v2818
      %v2822 = vmul.f32 %v506, %v2818
      %v2823 = vmul.f32 %v507, %v2818
      %v2824 = vmul.f32 %v508, %v2818
      %v2825 = vmul.f32 %v509, %v2818
      %v2826 = vmul.f32 %v510, %v2818
      %v2827 = vmul.f32 %v511, %v2818
      %v2828 = vmul.f32 %v512, %v2818
      %v2829 = vmul.f32 %v513, %v2818
      %v2830 = vmul.f32 %v514, %v2818
      %v2831 = vmul.f32 %v515, %v2818
      %v2832 = vmul.f32 %v516, %v2818
      %v2833 = vmul.f32 %v517, %v2818
      %v2834 = vmul.f32 %v518, %v2818
      %v2835 = vmul.f32 %v519, %v2818
      %v2836 = vmul.f32 %v520, %v2818
      %v2837 = vmul.f32 %v521, %v2818
      %v2838 = vmul.f32 %v522, %v2818
      %v2839 = vmul.f32 %v523, %v2818
      %v2840 = vmul.f32 %v524, %v2818
      %v2841 = vmul.f32 %v525, %v2818
      %v2842 = vmul.f32 %v526, %v2818
      %v2843 = vmul.f32 %v527, %v2818
      %v2844 = vmul.f32 %v528, %v2818
      %v2845 = vmul.f32 %v529, %v2818
      %v2846 = vmul.f32 %v530, %v2818
      %v2847 = vmul.f32 %v531, %v2818
      %v2848 = vmul.f32 %v532, %v2818
      %v2849 = vmul.f32 %v533, %v2818
      %v2850 = vmul.f32 %v534, %v2818
      %v2851 = vmul.f32 %v535, %v2818
      %v2852 = vmul.f32 %v536, %v2818
      %v2853 = vmul.f32 %v537, %v2818
      %v2854 = vmul.f32 %v538, %v2818
      %v2855 = vmul.f32 %v539, %v2818
      %v2856 = vmul.f32 %v540, %v2818
      %v2857 = vmul.f32 %v541, %v2818
      %v2858 = vmul.f32 %v542, %v2818
      %v2859 = vmul.f32 %v543, %v2818
      %v2860 = vmul.f32 %v544, %v2818
      %v2861 = vmul.f32 %v545, %v2818
      %v2862 = vmul.f32 %v546, %v2818
      %v2863 = vmul.f32 %v547, %v2818
      %v2864 = vmul.f32 %v548, %v2818
      %v2865 = vmul.f32 %v549, %v2818
      %v2866 = vmul.f32 %v550, %v2818
      %v2867 = vsel %vm1112, %v2819, 0.0
      %2868 = vadd.xlane.f32.xlu0 %v2867
      %v2869 = vpop.xlane.xlu0 %2868
      %2870 = vadd.xlane.f32.xlu0 %v2820
      %v2871 = vpop.xlane.xlu0 %2870
      %v2872 = vsel %vm1118, %v2821, 0.0
      %2873 = vadd.xlane.f32.xlu0 %v2872
      %v2874 = vpop.xlane.xlu0 %2873
      %v2875 = vsel %vm1112, %v2822, 0.0
      %2876 = vadd.xlane.f32.xlu0 %v2875
      %v2877 = vpop.xlane.xlu0 %2876
      %2878 = vadd.xlane.f32.xlu0 %v2823
      %v2879 = vpop.xlane.xlu0 %2878
      %v2880 = vsel %vm1118, %v2824, 0.0
      %2881 = vadd.xlane.f32.xlu0 %v2880
      %v2882 = vpop.xlane.xlu0 %2881
      %v2883 = vsel %vm1112, %v2825, 0.0
      %2884 = vadd.xlane.f32.xlu0 %v2883
      %v2885 = vpop.xlane.xlu0 %2884
      %2886 = vadd.xlane.f32.xlu0 %v2826
      %v2887 = vpop.xlane.xlu0 %2886
      %v2888 = vsel %vm1118, %v2827, 0.0
      %2889 = vadd.xlane.f32.xlu0 %v2888
      %v2890 = vpop.xlane.xlu0 %2889
      %v2891 = vsel %vm1112, %v2828, 0.0
      %2892 = vadd.xlane.f32.xlu0 %v2891
      %v2893 = vpop.xlane.xlu0 %2892
      %2894 = vadd.xlane.f32.xlu0 %v2829
      %v2895 = vpop.xlane.xlu0 %2894
      %v2896 = vsel %vm1118, %v2830, 0.0
      %2897 = vadd.xlane.f32.xlu0 %v2896
      %v2898 = vpop.xlane.xlu0 %2897
      %v2899 = vsel %vm1112, %v2831, 0.0
      %2900 = vadd.xlane.f32.xlu0 %v2899
      %v2901 = vpop.xlane.xlu0 %2900
      %2902 = vadd.xlane.f32.xlu0 %v2832
      %v2903 = vpop.xlane.xlu0 %2902
      %v2904 = vsel %vm1118, %v2833, 0.0
      %2905 = vadd.xlane.f32.xlu0 %v2904
      %v2906 = vpop.xlane.xlu0 %2905
      %v2907 = vsel %vm1112, %v2834, 0.0
      %2908 = vadd.xlane.f32.xlu0 %v2907
      %v2909 = vpop.xlane.xlu0 %2908
      %2910 = vadd.xlane.f32.xlu0 %v2835
      %v2911 = vpop.xlane.xlu0 %2910
      %v2912 = vsel %vm1118, %v2836, 0.0
      %2913 = vadd.xlane.f32.xlu0 %v2912
      %v2914 = vpop.xlane.xlu0 %2913
      %v2915 = vsel %vm1112, %v2837, 0.0
      %2916 = vadd.xlane.f32.xlu0 %v2915
      %v2917 = vpop.xlane.xlu0 %2916
      %2918 = vadd.xlane.f32.xlu0 %v2838
      %v2919 = vpop.xlane.xlu0 %2918
      %v2920 = vsel %vm1118, %v2839, 0.0
      %2921 = vadd.xlane.f32.xlu0 %v2920
      %v2922 = vpop.xlane.xlu0 %2921
      %v2923 = vsel %vm1112, %v2840, 0.0
      %2924 = vadd.xlane.f32.xlu0 %v2923
      %v2925 = vpop.xlane.xlu0 %2924
      %2926 = vadd.xlane.f32.xlu0 %v2841
      %v2927 = vpop.xlane.xlu0 %2926
      %v2928 = vsel %vm1118, %v2842, 0.0
      %2929 = vadd.xlane.f32.xlu0 %v2928
      %v2930 = vpop.xlane.xlu0 %2929
      %v2931 = vsel %vm1112, %v2843, 0.0
      %2932 = vadd.xlane.f32.xlu0 %v2931
      %v2933 = vpop.xlane.xlu0 %2932
      %2934 = vadd.xlane.f32.xlu0 %v2844
      %v2935 = vpop.xlane.xlu0 %2934
      %v2936 = vsel %vm1118, %v2845, 0.0
      %2937 = vadd.xlane.f32.xlu0 %v2936
      %v2938 = vpop.xlane.xlu0 %2937
      %v2939 = vsel %vm1112, %v2846, 0.0
      %2940 = vadd.xlane.f32.xlu0 %v2939
      %v2941 = vpop.xlane.xlu0 %2940
      %2942 = vadd.xlane.f32.xlu0 %v2847
      %v2943 = vpop.xlane.xlu0 %2942
      %v2944 = vsel %vm1118, %v2848, 0.0
      %2945 = vadd.xlane.f32.xlu0 %v2944
      %v2946 = vpop.xlane.xlu0 %2945
      %v2947 = vsel %vm1112, %v2849, 0.0
      %2948 = vadd.xlane.f32.xlu0 %v2947
      %v2949 = vpop.xlane.xlu0 %2948
      %2950 = vadd.xlane.f32.xlu0 %v2850
      %v2951 = vpop.xlane.xlu0 %2950
      %v2952 = vsel %vm1118, %v2851, 0.0
      %2953 = vadd.xlane.f32.xlu0 %v2952
      %v2954 = vpop.xlane.xlu0 %2953
      %v2955 = vsel %vm1112, %v2852, 0.0
      %2956 = vadd.xlane.f32.xlu0 %v2955
      %v2957 = vpop.xlane.xlu0 %2956
      %2958 = vadd.xlane.f32.xlu0 %v2853
      %v2959 = vpop.xlane.xlu0 %2958
      %v2960 = vsel %vm1118, %v2854, 0.0
      %2961 = vadd.xlane.f32.xlu0 %v2960
      %v2962 = vpop.xlane.xlu0 %2961
      %v2963 = vsel %vm1112, %v2855, 0.0
      %2964 = vadd.xlane.f32.xlu0 %v2963
      %v2965 = vpop.xlane.xlu0 %2964
      %2966 = vadd.xlane.f32.xlu0 %v2856
      %v2967 = vpop.xlane.xlu0 %2966
      %v2968 = vsel %vm1118, %v2857, 0.0
      %2969 = vadd.xlane.f32.xlu0 %v2968
      %v2970 = vpop.xlane.xlu0 %2969
      %v2971 = vsel %vm1112, %v2858, 0.0
      %2972 = vadd.xlane.f32.xlu0 %v2971
      %v2973 = vpop.xlane.xlu0 %2972
      %2974 = vadd.xlane.f32.xlu0 %v2859
      %v2975 = vpop.xlane.xlu0 %2974
      %v2976 = vsel %vm1118, %v2860, 0.0
      %2977 = vadd.xlane.f32.xlu0 %v2976
      %v2978 = vpop.xlane.xlu0 %2977
      %v2979 = vsel %vm1112, %v2861, 0.0
      %2980 = vadd.xlane.f32.xlu0 %v2979
      %v2981 = vpop.xlane.xlu0 %2980
      %2982 = vadd.xlane.f32.xlu0 %v2862
      %v2983 = vpop.xlane.xlu0 %2982
      %v2984 = vsel %vm1118, %v2863, 0.0
      %2985 = vadd.xlane.f32.xlu0 %v2984
      %v2986 = vpop.xlane.xlu0 %2985
      %v2987 = vsel %vm1112, %v2864, 0.0
      %2988 = vadd.xlane.f32.xlu0 %v2987
      %v2989 = vpop.xlane.xlu0 %2988
      %2990 = vadd.xlane.f32.xlu0 %v2865
      %v2991 = vpop.xlane.xlu0 %2990
      %v2992 = vsel %vm1118, %v2866, 0.0
      %2993 = vadd.xlane.f32.xlu0 %v2992
      %v2994 = vpop.xlane.xlu0 %2993
      %v3043 = vrot.slane %v2869, 2
      %v3044 = vrot.slane %v2871, 2
      %v3045 = vsel %vm1290, %v3043, %v3044
      %v3046 = vrot.slane %v2874, 2
      %v3047 = vsel %vm1290, %v3044, %v3046
      %v3048 = vrot.slane %v2877, 2
      %v3049 = vrot.slane %v2879, 2
      %v3050 = vsel %vm1290, %v3048, %v3049
      %v3051 = vrot.slane %v2882, 2
      %v3052 = vsel %vm1290, %v3049, %v3051
      %v3053 = vrot.slane %v2885, 2
      %v3054 = vrot.slane %v2887, 2
      %v3055 = vsel %vm1290, %v3053, %v3054
      %v3056 = vrot.slane %v2890, 2
      %v3057 = vsel %vm1290, %v3054, %v3056
      %v3058 = vrot.slane %v2893, 2
      %v3059 = vrot.slane %v2895, 2
      %v3060 = vsel %vm1290, %v3058, %v3059
      %v3061 = vrot.slane %v2898, 2
      %v3062 = vsel %vm1290, %v3059, %v3061
      %v3063 = vrot.slane %v2901, 2
      %v3064 = vrot.slane %v2903, 2
      %v3065 = vsel %vm1290, %v3063, %v3064
      %v3066 = vrot.slane %v2906, 2
      %v3067 = vsel %vm1290, %v3064, %v3066
      %v3068 = vrot.slane %v2909, 2
      %v3069 = vrot.slane %v2911, 2
      %v3070 = vsel %vm1290, %v3068, %v3069
      %v3071 = vrot.slane %v2914, 2
      %v3072 = vsel %vm1290, %v3069, %v3071
      %v3073 = vrot.slane %v2917, 2
      %v3074 = vrot.slane %v2919, 2
      %v3075 = vsel %vm1290, %v3073, %v3074
      %v3076 = vrot.slane %v2922, 2
      %v3077 = vsel %vm1290, %v3074, %v3076
      %v3078 = vrot.slane %v2925, 2
      %v3079 = vrot.slane %v2927, 2
      %v3080 = vsel %vm1290, %v3078, %v3079
      %v3081 = vrot.slane %v2930, 2
      %v3082 = vsel %vm1290, %v3079, %v3081
      %v3083 = vrot.slane %v2933, 2
      %v3084 = vrot.slane %v2935, 2
      %v3085 = vsel %vm1290, %v3083, %v3084
      %v3086 = vrot.slane %v2938, 2
      %v3087 = vsel %vm1290, %v3084, %v3086
      %v3088 = vrot.slane %v2941, 2
      %v3089 = vrot.slane %v2943, 2
      %v3090 = vsel %vm1290, %v3088, %v3089
      %v3091 = vrot.slane %v2946, 2
      %v3092 = vsel %vm1290, %v3089, %v3091
      %v3093 = vrot.slane %v2949, 2
      %v3094 = vrot.slane %v2951, 2
      %v3095 = vsel %vm1290, %v3093, %v3094
      %v3096 = vrot.slane %v2954, 2
      %v3097 = vsel %vm1290, %v3094, %v3096
      %v3098 = vrot.slane %v2957, 2
      %v3099 = vrot.slane %v2959, 2
      %v3100 = vsel %vm1290, %v3098, %v3099
      %v3101 = vrot.slane %v2962, 2
      %v3102 = vsel %vm1290, %v3099, %v3101
      %v3103 = vrot.slane %v2965, 2
      %v3104 = vrot.slane %v2967, 2
      %v3105 = vsel %vm1290, %v3103, %v3104
      %v3106 = vrot.slane %v2970, 2
      %v3107 = vsel %vm1290, %v3104, %v3106
      %v3108 = vrot.slane %v2973, 2
      %v3109 = vrot.slane %v2975, 2
      %v3110 = vsel %vm1290, %v3108, %v3109
      %v3111 = vrot.slane %v2978, 2
      %v3112 = vsel %vm1290, %v3109, %v3111
      %v3113 = vrot.slane %v2981, 2
      %v3114 = vrot.slane %v2983, 2
      %v3115 = vsel %vm1290, %v3113, %v3114
      %v3116 = vrot.slane %v2986, 2
      %v3117 = vsel %vm1290, %v3114, %v3116
      %v3118 = vrot.slane %v2989, 2
      %v3119 = vrot.slane %v2991, 2
      %v3120 = vsel %vm1290, %v3118, %v3119
      %v3121 = vrot.slane %v2994, 2
      %v3122 = vsel %vm1290, %v3119, %v3121
      %v3155 = vadd.f32 %v2783, %v3045
      %v3156 = vadd.f32 %v2784, %v3047
      %v3157 = vadd.f32 %v2785, %v3050
      %v3158 = vadd.f32 %v2786, %v3052
      %v3159 = vadd.f32 %v2787, %v3055
      %v3160 = vadd.f32 %v2788, %v3057
      %v3161 = vadd.f32 %v2789, %v3060
      %v3162 = vadd.f32 %v2790, %v3062
      %v3163 = vadd.f32 %v2791, %v3065
      %v3164 = vadd.f32 %v2792, %v3067
      %v3165 = vadd.f32 %v2793, %v3070
      %v3166 = vadd.f32 %v2794, %v3072
      %v3167 = vadd.f32 %v2795, %v3075
      %v3168 = vadd.f32 %v2796, %v3077
      %v3169 = vadd.f32 %v2797, %v3080
      %v3170 = vadd.f32 %v2798, %v3082
      %v3171 = vadd.f32 %v2799, %v3085
      %v3172 = vadd.f32 %v2800, %v3087
      %v3173 = vadd.f32 %v2801, %v3090
      %v3174 = vadd.f32 %v2802, %v3092
      %v3175 = vadd.f32 %v2803, %v3095
      %v3176 = vadd.f32 %v2804, %v3097
      %v3177 = vadd.f32 %v2805, %v3100
      %v3178 = vadd.f32 %v2806, %v3102
      %v3179 = vadd.f32 %v2807, %v3105
      %v3180 = vadd.f32 %v2808, %v3107
      %v3181 = vadd.f32 %v2809, %v3110
      %v3182 = vadd.f32 %v2810, %v3112
      %v3183 = vadd.f32 %v2811, %v3115
      %v3184 = vadd.f32 %v2812, %v3117
      %v3185 = vadd.f32 %v2813, %v3120
      %v3186 = vadd.f32 %v2814, %v3122
      %v3187 = vld [vmem:[#allocation2] sm:$0x1]
      %v3189 = vlaneseq
      %v3190 = vshrl.u32 %v3189, 7
      %v3191 = vsub.s32 0, %v3190
      %v3192 = vrot.slane %v3187, %v3191
      %v3194 = vadd.f32 %v3155, %v3192
      %v3195 = vadd.f32 %v3156, %v3192
      %v3196 = vadd.f32 %v3157, %v3192
      %v3197 = vadd.f32 %v3158, %v3192
      %v3198 = vadd.f32 %v3159, %v3192
      %v3199 = vadd.f32 %v3160, %v3192
      %v3200 = vadd.f32 %v3161, %v3192
      %v3201 = vadd.f32 %v3162, %v3192
      %v3202 = vadd.f32 %v3163, %v3192
      %v3203 = vadd.f32 %v3164, %v3192
      %v3204 = vadd.f32 %v3165, %v3192
      %v3205 = vadd.f32 %v3166, %v3192
      %v3206 = vadd.f32 %v3167, %v3192
      %v3207 = vadd.f32 %v3168, %v3192
      %v3208 = vadd.f32 %v3169, %v3192
      %v3209 = vadd.f32 %v3170, %v3192
      %v3210 = vadd.f32 %v3171, %v3192
      %v3211 = vadd.f32 %v3172, %v3192
      %v3212 = vadd.f32 %v3173, %v3192
      %v3213 = vadd.f32 %v3174, %v3192
      %v3214 = vadd.f32 %v3175, %v3192
      %v3215 = vadd.f32 %v3176, %v3192
      %v3216 = vadd.f32 %v3177, %v3192
      %v3217 = vadd.f32 %v3178, %v3192
      %v3218 = vadd.f32 %v3179, %v3192
      %v3219 = vadd.f32 %v3180, %v3192
      %v3220 = vadd.f32 %v3181, %v3192
      %v3221 = vadd.f32 %v3182, %v3192
      %v3222 = vadd.f32 %v3183, %v3192
      %v3223 = vadd.f32 %v3184, %v3192
      %v3224 = vadd.f32 %v3185, %v3192
      %v3225 = vadd.f32 %v3186, %v3192
      %v3226 = vtanh.pop %v3194
      %v3227 = vtanh.pop %v3195
      %v3228 = vtanh.pop %v3196
      %v3229 = vtanh.pop %v3197
      %v3230 = vtanh.pop %v3198
      %v3231 = vtanh.pop %v3199
      %v3232 = vtanh.pop %v3200
      %v3233 = vtanh.pop %v3201
      %v3234 = vtanh.pop %v3202
      %v3235 = vtanh.pop %v3203
      %v3236 = vtanh.pop %v3204
      %v3237 = vtanh.pop %v3205
      %v3238 = vtanh.pop %v3206
      %v3239 = vtanh.pop %v3207
      %v3240 = vtanh.pop %v3208
      %v3241 = vtanh.pop %v3209
      %v3242 = vtanh.pop %v3210
      %v3243 = vtanh.pop %v3211
      %v3244 = vtanh.pop %v3212
      %v3245 = vtanh.pop %v3213
      %v3246 = vtanh.pop %v3214
      %v3247 = vtanh.pop %v3215
      %v3248 = vtanh.pop %v3216
      %v3249 = vtanh.pop %v3217
      %v3250 = vtanh.pop %v3218
      %v3251 = vtanh.pop %v3219
      %v3252 = vtanh.pop %v3220
      %v3253 = vtanh.pop %v3221
      %v3254 = vtanh.pop %v3222
      %v3255 = vtanh.pop %v3223
      %v3256 = vtanh.pop %v3224
      %v3257 = vtanh.pop %v3225
      %vm3258 = vcmask 7168
      %3259 = vst.msk [vmem:[%s226] sm:$0xff] %vm3258, %v3226
      %3260 = vst.msk [vmem:[%s226 + $0x8] sm:$0xff] %vm3258, %v3227
      %3261 = vst.msk [vmem:[%s226 + $0x10] sm:$0xff] %vm3258, %v3228
      %3262 = vst.msk [vmem:[%s226 + $0x18] sm:$0xff] %vm3258, %v3229
      %3263 = vst.msk [vmem:[%s226 + $0x20] sm:$0xff] %vm3258, %v3230
      %3264 = vst.msk [vmem:[%s226 + $0x28] sm:$0xff] %vm3258, %v3231
      %3265 = vst.msk [vmem:[%s226 + $0x30] sm:$0xff] %vm3258, %v3232
      %3266 = vst.msk [vmem:[%s226 + $0x38] sm:$0xff] %vm3258, %v3233
      %3267 = vst.msk [vmem:[%s226 + $0x40] sm:$0xff] %vm3258, %v3234
      %3268 = vst.msk [vmem:[%s226 + $0x48] sm:$0xff] %vm3258, %v3235
      %3269 = vst.msk [vmem:[%s226 + $0x50] sm:$0xff] %vm3258, %v3236
      %3270 = vst.msk [vmem:[%s226 + $0x58] sm:$0xff] %vm3258, %v3237
      %3271 = vst.msk [vmem:[%s226 + $0x60] sm:$0xff] %vm3258, %v3238
      %3272 = vst.msk [vmem:[%s226 + $0x68] sm:$0xff] %vm3258, %v3239
      %3273 = vst.msk [vmem:[%s226 + $0x70] sm:$0xff] %vm3258, %v3240
      %3274 = vst.msk [vmem:[%s226 + $0x78] sm:$0xff] %vm3258, %v3241
      %3275 = vst.msk [vmem:[%s226 + $0x80] sm:$0xff] %vm3258, %v3242
      %3276 = vst.msk [vmem:[%s226 + $0x88] sm:$0xff] %vm3258, %v3243
      %3277 = vst.msk [vmem:[%s226 + $0x90] sm:$0xff] %vm3258, %v3244
      %3278 = vst.msk [vmem:[%s226 + $0x98] sm:$0xff] %vm3258, %v3245
      %3279 = vst.msk [vmem:[%s226 + $0xa0] sm:$0xff] %vm3258, %v3246
      %3280 = vst.msk [vmem:[%s226 + $0xa8] sm:$0xff] %vm3258, %v3247
      %3281 = vst.msk [vmem:[%s226 + $0xb0] sm:$0xff] %vm3258, %v3248
      %3282 = vst.msk [vmem:[%s226 + $0xb8] sm:$0xff] %vm3258, %v3249
      %3283 = vst.msk [vmem:[%s226 + $0xc0] sm:$0xff] %vm3258, %v3250
      %3284 = vst.msk [vmem:[%s226 + $0xc8] sm:$0xff] %vm3258, %v3251
      %3285 = vst.msk [vmem:[%s226 + $0xd0] sm:$0xff] %vm3258, %v3252
      %3286 = vst.msk [vmem:[%s226 + $0xd8] sm:$0xff] %vm3258, %v3253
      %3287 = vst.msk [vmem:[%s226 + $0xe0] sm:$0xff] %vm3258, %v3254
      %3288 = vst.msk [vmem:[%s226 + $0xe8] sm:$0xff] %vm3258, %v3255
      %3289 = vst.msk [vmem:[%s226 + $0xf0] sm:$0xff] %vm3258, %v3256
      %3290 = vst.msk [vmem:[%s226 + $0xf8] sm:$0xff] %vm3258, %v3257
      %p3291 = scmp.lt.s32.totalorder %s18, 1
      %s3292 = scalar_select %p3291, %s18, 1
      %s3293 = smul.addr %s3292, 32
      %s3294 = smul.addr %s3293, 8
      %s3295 = scalar_lea.vmem %s5, %s3294
      // Predicated region
      $region41: #{generator_forward.7} parent=39 // pred_check
        %p3296 = pneg %p146
      $region42: #{generator_forward.7} parent=39 // pred_check_branch
        %3298 = sbr.rel (%p3296) target = $region44
      $region43: #{generator_forward.7} parent=39 // pred_region
        _
      $region44: #{generator_forward.7} parent=39 // pred_fallthru
        _
    $region40: #{generator_forward.7} parent=5 // pred_fallthru
      _
    %p3299 = scmp.le.s32.totalorder 2, %s13
    // Predicated region
    $region45: #{generator_forward.7} parent=5 // pred_check
      %p3300 = pneg %p3299
    $region46: #{generator_forward.7} parent=5 // pred_check_branch
      %3302 = sbr.rel (%p3300) target = $region48
    $region47: #{generator_forward.7} parent=5 // pred_region
      %s3303 = ssub.s32 %s13, 2
      // Predicated region
      $region49: #{generator_forward.7} parent=47 // pred_check
        %p3304 = pneg %p152
      $region50: #{generator_forward.7} parent=47 // pred_check_branch
        %3306 = sbr.rel (%p3304) target = $region52
      $region51: #{generator_forward.7} parent=47 // pred_region
        %p3307 = scmp.lt.s32.totalorder %s19, 1
        %s3308 = scalar_select %p3307, %s19, 1
        %s3309 = smul.addr %s3308, 32
        %s3310 = smul.addr %s3309, 8
        %s3311 = scalar_lea.vmem %s5, %s3310
      $region52: #{generator_forward.7} parent=47 // pred_fallthru
        _
    $region48: #{generator_forward.7} parent=5 // pred_fallthru
      _
  $region6: #{generator_forward.7} parent=0 // loop_footer
    %s17 = sadd.s32 1, %s13
  $region7: #{generator_forward.7} parent=0 // loop_footer_branch
    %12 = sbr.rel target = $region3
  $region8: #{generator_forward.7} parent=0 // loop_exit
    _

</llo_original>
